<compile_context>
chip_gen: v5e
topology: v5e:2x2
jax: 0.10.0
libtpu: 0.0.40
codegen_flags: <defaults>
</compile_context>

<pallas_src>
import functools

import jax
import jax.numpy as jnp
from jax.experimental import pallas as pl
from jax.experimental.pallas import tpu as pltpu


def frap_move_forward(states, phase2movements, oshape, comp_mask, params,
                      block_b=None):
    f32 = jnp.float32
    B = states.shape[0]
    M = states.shape[1] - 1
    P = int(phase2movements.shape[0])
    assert oshape == P
    N = P * (P - 1)

    if block_b is None:
        # Bigger lane blocks amortize the ~0.35us/step overhead (v6e/v7x);
        # keep it modest for v5e's 16 MiB scoped VMEM and keep G >= 2 on v7x
        # when the batch allows it.
        block_b = 128 if B <= 256 else 256
    assert block_b % 128 == 0
    Bb = block_b
    G = -(-B // Bb)                   # grid steps
    B_pad = G * Bb
    Lm = M * Bb                       # movement-lane width
    Lp = P * Bb                       # phase-lane width (output)
    Ln = N * Bb                       # pair-lane width (relation features)
    Lj = (P - 1) * Bb                 # per-source-phase pair block width

    p2m = phase2movements.astype(f32)

    # ---- batch inputs, lane-packed, NOT replicated over phases --------------
    acts = states[:, 0].astype(jnp.int32)                        # [B]
    demand = states[:, 1:].astype(f32)                           # [B, M]
    conn = p2m[acts].astype(jnp.int32).astype(f32)               # [B, M] in {0,1}
    demand = jnp.pad(demand, ((0, B_pad - B), (0, 0)))
    conn = jnp.pad(conn, ((0, B_pad - B), (0, 0)))

    def to_lanes(x):                  # [B_pad, M] -> [G, M*Bb], lane = m*Bb + b
        return x.reshape(G, Bb, M).transpose(0, 2, 1).reshape(G, Lm)

    bx = jnp.stack([to_lanes(demand), to_lanes(conn)], axis=1)   # [G, 2, Lm]

    # ---- host-precomputed constants -----------------------------------------
    # relation branch is batch independent: relu(relation_conv(relu(r_emb[mask])))
    comp_idx = comp_mask.astype(jnp.int32).reshape(N)
    rel = jnp.maximum(params["r_emb"].astype(f32), 0.0)[comp_idx]           # [N, 4]
    f2 = jnp.maximum(rel @ params["w_rc"].astype(f32).T
                     + params["b_rc"].astype(f32), 0.0)                     # [N, 20]
    f2t = jnp.repeat(f2.T, Bb, axis=1)                                      # [20, N*Bb]

    spe = jax.nn.sigmoid(params["p_emb"].astype(f32)).T                     # [4, 2]
    w_le = params["w_le"].astype(f32)                                       # [16, 8]
    b_le = params["b_le"].reshape(16, 1).astype(f32)
    # lane-embedding contribution of a movement with p2m == 0 is a constant
    c_off = (w_le[:, :4] @ jax.nn.sigmoid(params["b_d"].reshape(4, 1).astype(f32))
             + b_le)                                                         # [16, 1]

    entries = [
        ("w_d",   params["w_d"].reshape(4, 1).astype(f32)),
        ("b_d",   params["b_d"].reshape(4, 1).astype(f32)),
        ("spe",   spe),
        ("w_led", w_le[:, :4]),                                 # demand half
        ("w_lep", w_le[:, 4:]),                                 # phase-embed half
        ("b_le",  b_le),
        ("c_off", c_off),
        ("w_lca", params["w_lc"][:, :16].astype(f32)),          # [20, 16]
        ("w_lcb", params["w_lc"][:, 16:].astype(f32)),          # [20, 16]
        ("b_lc",  params["b_lc"].reshape(20, 1).astype(f32)),
        ("w_h",   params["w_h"].astype(f32)),                   # [20, 20]
        ("b_h",   params["b_h"].reshape(20, 1).astype(f32)),
        ("w_bm",  params["w_bm"].reshape(1, 20).astype(f32)),
        ("b_bm",  float(P - 1) * params["b_bm"].reshape(1, 1).astype(f32)),
    ]
    off, rows, r0 = {}, [], 0
    for name, a in entries:           # 8-row-aligned offsets inside one slab
        off[name] = r0
        rpad = -(-a.shape[0] // 8) * 8
        rows.append(jnp.pad(a, ((0, rpad - a.shape[0]), (0, 128 - a.shape[1]))))
        r0 += rpad
    slab = jnp.concatenate(rows, axis=0)                         # [R, 128]
    R = r0

    p2m_i = p2m.astype(jnp.int32)     # [P, M] 0/1, scalar-prefetched into SMEM
    pairs_j = [[j for j in range(P) if j != i] for i in range(P)]

    # ---- kernel -------------------------------------------------------------
    def kernel(p2m_ref, bx_ref, f2t_ref, slab_ref, o_ref,
               agg_ref, a_ref, b_ref, c_ref):
        dot = functools.partial(jnp.dot, preferred_element_type=f32)
        relu = lambda x: jnp.maximum(x, 0.0)

        def w(name, r, c):
            return slab_ref[off[name]:off[name] + r, 0:c]

        sx = bx_ref[0]                     # [2, M*Bb]
        d_row = sx[0:1, :]                 # demand,        lane = m*Bb + b
        c_row = sx[1:2, :]                 # connectivity   (0/1)

        # demand branch (movement-active variant; the inactive variant is the
        # constant c_off baked into the slab) + phase-embedding blend.
        d4 = jax.nn.sigmoid(w("w_d", 4, 1) * d_row + w("b_d", 4, 1))       # [4, Lm]
        spe_t = w("spe", 4, 2)
        pe = c_row * spe_t[:, 1:2] + (1.0 - c_row) * spe_t[:, 0:1]         # [4, Lm]

        # split lane_embedding Linear(8 -> 16): demand half + phase half
        don = dot(w("w_led", 16, 4), d4) + w("b_le", 16, 1)                # [16, Lm]
        shared = dot(w("w_lep", 16, 4), pe)                                # [16, Lm]
        y_on = relu(shared + don)                                          # p2m == 1
        y_off = relu(shared + w("c_off", 16, 1))                           # p2m == 0

        # per-phase movement aggregation into VMEM scratch:
        #   agg[:, p] = sum_m y_off[:, m] + sum_{m: p2m[p,m]=1} (y_on - y_off)[:, m]
        ysum_off = y_off[:, 0:Bb]
        for m in range(1, M):
            ysum_off = ysum_off + y_off[:, m * Bb:(m + 1) * Bb]
        for p in range(P):
            agg_ref[:, p * Bb:(p + 1) * Bb] = ysum_off
        for m in range(M):
            diff = y_on[:, m * Bb:(m + 1) * Bb] - y_off[:, m * Bb:(m + 1) * Bb]
            for p in range(P):
                @pl.when(p2m_ref[p, m] > 0)
                def _(p=p, diff=diff):
                    agg_ref[:, p * Bb:(p + 1) * Bb] = (
                        agg_ref[:, p * Bb:(p + 1) * Bb] + diff)

        # lane_conv halves staged to VMEM scratch (b_lc folded into the i-half)
        a_ref[...] = dot(w("w_lca", 20, 16), agg_ref[...]) + w("b_lc", 20, 1)
        b_ref[...] = dot(w("w_lcb", 20, 16), agg_ref[...])

        w_h_t = w("w_h", 20, 20)
        w_bm_t = w("w_bm", 1, 20)
        bh = jnp.broadcast_to(w("b_h", 20, 1), (20, Lj))   # hoisted: one broadcast

        qs = []
        for i in range(P):                                   # per source phase
            a_i = a_ref[:, i * Bb:(i + 1) * Bb]
            for jj, j in enumerate(pairs_j[i]):
                k = i * (P - 1) + jj
                f1 = relu(a_i + b_ref[:, j * Bb:(j + 1) * Bb])            # lane_conv
                c_ref[:, jj * Bb:(jj + 1) * Bb] = (
                    f1 * f2t_ref[:, k * Bb:(k + 1) * Bb])                 # * relation
            h = relu(dot(w_h_t, c_ref[...]) + bh)                         # [20, Lj]
            hsum = h[:, 0:Bb]
            for jj in range(1, P - 1):                                    # sum over j
                hsum = hsum + h[:, jj * Bb:(jj + 1) * Bb]
            qs.append(dot(w_bm_t, hsum))                                  # [1, Bb]
        o_ref[0] = jnp.concatenate(qs, axis=1) + w("b_bm", 1, 1)          # [1, Lp]

    out = pl.pallas_call(
        kernel,
        out_shape=jax.ShapeDtypeStruct((G, 1, Lp), f32),
        grid_spec=pltpu.PrefetchScalarGridSpec(
            num_scalar_prefetch=1,
            grid=(G,),
            in_specs=[
                pl.BlockSpec((1, 2, Lm), lambda g, p2m: (g, 0, 0)),   # agents block
                pl.BlockSpec((20, Ln), lambda g, p2m: (0, 0)),        # relation feats
                pl.BlockSpec((R, 128), lambda g, p2m: (0, 0)),        # weight slab
            ],
            out_specs=pl.BlockSpec((1, 1, Lp), lambda g, p2m: (g, 0, 0)),
            scratch_shapes=[
                pltpu.VMEM((16, Lp), f32),     # agg accumulator
                pltpu.VMEM((20, Lp), f32),     # lane_conv i-half (+b_lc)
                pltpu.VMEM((20, Lp), f32),     # lane_conv j-half
                pltpu.VMEM((20, Lj), f32),     # per-i combined pair block
            ]),
        compiler_params=pltpu.CompilerParams(
            dimension_semantics=("parallel",)),
    )(p2m_i, bx, f2t, slab)

    q = out.reshape(G, P, Bb).transpose(0, 2, 1).reshape(B_pad, P)
    return q[:B]


def frap_reference(states, p2m, oshape, comp_mask, params):
    """Pure-JAX mirror of the PyTorch _forward, used for a sanity check."""
    B = states.shape[0]
    P = p2m.shape[0]
    acts = states[:, :1].astype(jnp.int32)                               # [B, 1]
    s_rep = jnp.repeat(states[:, 1:].astype(jnp.float32)[:, None, :], P, axis=1)
    connectivity = p2m[acts].astype(jnp.int32)                           # [B, 1, M]
    phase_embeds = jax.nn.sigmoid(params["p_emb"][connectivity])         # [B, 1, M, 4]
    apd = s_rep * p2m.astype(jnp.float32)                                # [B, P, M]
    apd4 = jax.nn.sigmoid(apd[..., None] * params["w_d"][:, 0] + params["b_d"])
    phase_demand = jnp.concatenate(
        [apd4, jnp.tile(phase_embeds, (1, P, 1, 1))], axis=-1)           # [B, P, M, 8]
    pde = jax.nn.relu(phase_demand @ params["w_le"].T + params["b_le"])  # [B, P, M, 16]
    agg = pde.sum(axis=2)                                                # [B, P, 16]
    rot = []
    for i in range(P):
        for j in range(P):
            if i != j:
                rot.append(jnp.concatenate([agg[:, i, :], agg[:, j, :]], axis=-1))
    rot = jnp.stack(rot, axis=1).reshape(B, P, P - 1, 32).transpose(0, 3, 1, 2)

    def conv1x1(x, w, b):
        return jnp.einsum("bchw,oc->bohw", x, w) + b[None, :, None, None]

    rp = jax.nn.relu(conv1x1(rot, params["w_lc"], params["b_lc"]))
    relations = jax.nn.relu(params["r_emb"][comp_mask.astype(jnp.int32)])  # [P, P-1, 4]
    relations = jnp.broadcast_to(relations[None], (B, P, P - 1, 4)).transpose(0, 3, 1, 2)
    rc = jax.nn.relu(conv1x1(relations, params["w_rc"], params["b_rc"]))
    comb = rp * rc
    hid = jax.nn.relu(conv1x1(comb, params["w_h"], params["b_h"]))
    bm = conv1x1(hid, params["w_bm"], params["b_bm"])                    # [B, 1, P, P-1]
    return bm.reshape(B, P, P - 1).sum(axis=2)


if __name__ == "__main__":
    B, P, M = 2, 8, 12        # batch, phases (= oshape), movements

    # deterministic parameter init (synthetic; matches module __init__ shapes)
    pkeys = jax.random.split(jax.random.PRNGKey(0), 14)

    def init(k, shape, scale=0.3):
        return jax.random.normal(k, shape, dtype=jnp.float32) * scale

    params = {
        "p_emb": init(pkeys[0], (2, 4)),       # nn.Embedding(2, 4)
        "w_d":   init(pkeys[1], (4, 1)),       # nn.Linear(1, 4)
        "b_d":   init(pkeys[2], (4,)),
        "w_le":  init(pkeys[3], (16, 8)),      # nn.Linear(8, 16)
        "b_le":  init(pkeys[4], (16,)),
        "w_lc":  init(pkeys[5], (20, 32)),     # Conv2d(32, 20, 1x1)
        "b_lc":  init(pkeys[6], (20,)),
        "r_emb": init(pkeys[7], (2, 4)),       # nn.Embedding(2, 4)
        "w_rc":  init(pkeys[8], (20, 4)),      # Conv2d(4, 20, 1x1)
        "b_rc":  init(pkeys[9], (20,)),
        "w_h":   init(pkeys[10], (20, 20)),    # Conv2d(20, 20, 1x1)
        "b_h":   init(pkeys[11], (20,)),
        "w_bm":  init(pkeys[12], (1, 20)),     # Conv2d(20, 1, 1x1)
        "b_bm":  init(pkeys[13], (1,)),
    }

    # deterministic example inputs
    ikeys = jax.random.split(jax.random.PRNGKey(1), 3)
    acts = jnp.array([3.0, 5.0], dtype=jnp.float32)[:B]                  # phase ids
    demands = jax.random.uniform(ikeys[0], (B, M), dtype=jnp.float32,
                                 minval=0.0, maxval=4.0)
    states = jnp.concatenate([acts[:, None], demands], axis=1)           # [B, 1+M]
    phase2movements = (jax.random.uniform(ikeys[1], (P, M)) < 0.5).astype(jnp.float32)
    comp_mask = (jax.random.uniform(ikeys[2], (P, P - 1)) < 0.5).astype(jnp.float32)

    q = frap_move_forward(states, phase2movements, P, comp_mask, params)
    q = jax.block_until_ready(q)

    q_ref = frap_reference(states, phase2movements, P, comp_mask, params)
    assert q.shape == (B, P)
    assert jnp.allclose(q, q_ref, atol=1e-2, rtol=1e-2)

    print("KERNEL_OK")
</pallas_src>

<mosaic_0001>
module attributes {stable_mosaic.version = 11 : i64} {
  func.func @kernel(%arg0: i32, %arg1: memref<8x12xi32, #tpu.memory_space<smem>>, %arg2: memref<1x2x1536xf32, #tpu.memory_space<vmem>>, %arg3: memref<20x7168xf32, #tpu.memory_space<vmem>>, %arg4: memref<224x128xf32, #tpu.memory_space<vmem>>, %arg5: memref<1x1x1024xf32, #tpu.memory_space<vmem>>, %arg6: memref<16x1024xf32, #tpu.memory_space<vmem>>, %arg7: memref<20x1024xf32, #tpu.memory_space<vmem>>, %arg8: memref<20x1024xf32, #tpu.memory_space<vmem>>, %arg9: memref<20x896xf32, #tpu.memory_space<vmem>>) attributes {dimension_semantics = [#tpu.dimension_semantics<parallel>], iteration_bounds = array<i64: 1>, scalar_prefetch = 1 : i64, scratch_operands = 4 : i64, tpu.core_type = #tpu.core_type<tc>, window_params = [{transform_indices = @transform_0, window_bounds = array<i64: 1, 2, 1536>}, {pipeline_mode = #tpu.pipeline_mode<synchronous>, transform_indices = @transform_1, window_bounds = array<i64: 20, 7168>}, {pipeline_mode = #tpu.pipeline_mode<synchronous>, transform_indices = @transform_2, window_bounds = array<i64: 224, 128>}, {transform_indices = @transform_3, window_bounds = array<i64: 1, 1, 1024>}]} {
    %c0 = arith.constant 0 : index
    %c0_0 = arith.constant 0 : index
    %c0_1 = arith.constant 0 : index
    %0 = vector.load %arg2[%c0, %c0_0, %c0_1] : memref<1x2x1536xf32, #tpu.memory_space<vmem>>, vector<1x2x1536xf32>
    %1 = vector.shape_cast %0 : vector<1x2x1536xf32> to vector<2x1536xf32>
    %2 = vector.extract_strided_slice %1 {offsets = [0, 0], sizes = [1, 1536], strides = [1, 1]} : vector<2x1536xf32> to vector<1x1536xf32>
    %3 = vector.extract_strided_slice %1 {offsets = [1, 0], sizes = [1, 1536], strides = [1, 1]} : vector<2x1536xf32> to vector<1x1536xf32>
    %c0_2 = arith.constant 0 : index
    %c0_3 = arith.constant 0 : index
    %4 = vector.load %arg4[%c0_2, %c0_3] : memref<224x128xf32, #tpu.memory_space<vmem>>, vector<4x1xf32>
    %5 = vector.broadcast %4 : vector<4x1xf32> to vector<4x1536xf32>
    %6 = vector.broadcast %2 : vector<1x1536xf32> to vector<4x1536xf32>
    %7 = arith.mulf %5, %6 : vector<4x1536xf32>
    %c8 = arith.constant 8 : index
    %c0_4 = arith.constant 0 : index
    %8 = vector.load %arg4[%c8, %c0_4] : memref<224x128xf32, #tpu.memory_space<vmem>>, vector<4x1xf32>
    %9 = vector.broadcast %8 : vector<4x1xf32> to vector<4x1536xf32>
    %10 = arith.addf %7, %9 : vector<4x1536xf32>
    %11 = arith.negf %10 : vector<4x1536xf32>
    %12 = math.exp %11 : vector<4x1536xf32>
    %cst = arith.constant 1.000000e+00 : f32
    %13 = vector.broadcast %cst : f32 to vector<4x1536xf32>
    %14 = arith.addf %13, %12 : vector<4x1536xf32>
    %15 = arith.divf %13, %14 : vector<4x1536xf32>
    %c16 = arith.constant 16 : index
    %c0_5 = arith.constant 0 : index
    %16 = vector.load %arg4[%c16, %c0_5] : memref<224x128xf32, #tpu.memory_space<vmem>>, vector<4x2xf32>
    %17 = vector.extract_strided_slice %16 {offsets = [0, 1], sizes = [4, 1], strides = [1, 1]} : vector<4x2xf32> to vector<4x1xf32>
    %18 = vector.broadcast %3 : vector<1x1536xf32> to vector<4x1536xf32>
    %19 = vector.broadcast %17 : vector<4x1xf32> to vector<4x1536xf32>
    %20 = arith.mulf %18, %19 : vector<4x1536xf32>
    %cst_6 = arith.constant 1.000000e+00 : f32
    %21 = vector.broadcast %cst_6 : f32 to vector<1x1536xf32>
    %22 = arith.subf %21, %3 : vector<1x1536xf32>
    %23 = vector.extract_strided_slice %16 {offsets = [0, 0], sizes = [4, 1], strides = [1, 1]} : vector<4x2xf32> to vector<4x1xf32>
    %24 = vector.broadcast %22 : vector<1x1536xf32> to vector<4x1536xf32>
    %25 = vector.broadcast %23 : vector<4x1xf32> to vector<4x1536xf32>
    %26 = arith.mulf %24, %25 : vector<4x1536xf32>
    %27 = arith.addf %20, %26 : vector<4x1536xf32>
    %c24 = arith.constant 24 : index
    %c0_7 = arith.constant 0 : index
    %28 = vector.load %arg4[%c24, %c0_7] : memref<224x128xf32, #tpu.memory_space<vmem>>, vector<16x4xf32>
    %cst_8 = arith.constant dense<0.000000e+00> : vector<16x1536xf32>
    %29 = tpu.matmul %28, %15, %cst_8 {dimension_numbers = #tpu.dot_dimension_numbers<[1], [0], [0], [1], [0, 0, 1, 1], [], []>} : vector<16x4xf32>, vector<4x1536xf32>, vector<16x1536xf32> -> vector<16x1536xf32>
    %c56 = arith.constant 56 : index
    %c0_9 = arith.constant 0 : index
    %30 = vector.load %arg4[%c56, %c0_9] : memref<224x128xf32, #tpu.memory_space<vmem>>, vector<16x1xf32>
    %31 = vector.broadcast %30 : vector<16x1xf32> to vector<16x1536xf32>
    %32 = arith.addf %29, %31 : vector<16x1536xf32>
    %c40 = arith.constant 40 : index
    %c0_10 = arith.constant 0 : index
    %33 = vector.load %arg4[%c40, %c0_10] : memref<224x128xf32, #tpu.memory_space<vmem>>, vector<16x4xf32>
    %cst_11 = arith.constant dense<0.000000e+00> : vector<16x1536xf32>
    %34 = tpu.matmul %33, %27, %cst_11 {dimension_numbers = #tpu.dot_dimension_numbers<[1], [0], [0], [1], [0, 0, 1, 1], [], []>} : vector<16x4xf32>, vector<4x1536xf32>, vector<16x1536xf32> -> vector<16x1536xf32>
    %35 = arith.addf %34, %32 : vector<16x1536xf32>
    %cst_12 = arith.constant 0.000000e+00 : f32
    %36 = vector.broadcast %cst_12 : f32 to vector<16x1536xf32>
    %37 = arith.maximumf %35, %36 : vector<16x1536xf32>
    %c72 = arith.constant 72 : index
    %c0_13 = arith.constant 0 : index
    %38 = vector.load %arg4[%c72, %c0_13] : memref<224x128xf32, #tpu.memory_space<vmem>>, vector<16x1xf32>
    %39 = vector.broadcast %38 : vector<16x1xf32> to vector<16x1536xf32>
    %40 = arith.addf %34, %39 : vector<16x1536xf32>
    %cst_14 = arith.constant 0.000000e+00 : f32
    %41 = vector.broadcast %cst_14 : f32 to vector<16x1536xf32>
    %42 = arith.maximumf %40, %41 : vector<16x1536xf32>
    %43 = vector.extract_strided_slice %42 {offsets = [0, 0], sizes = [16, 128], strides = [1, 1]} : vector<16x1536xf32> to vector<16x128xf32>
    %44 = vector.extract_strided_slice %42 {offsets = [0, 128], sizes = [16, 128], strides = [1, 1]} : vector<16x1536xf32> to vector<16x128xf32>
    %45 = arith.addf %43, %44 : vector<16x128xf32>
    %46 = vector.extract_strided_slice %42 {offsets = [0, 256], sizes = [16, 128], strides = [1, 1]} : vector<16x1536xf32> to vector<16x128xf32>
    %47 = arith.addf %45, %46 : vector<16x128xf32>
    %48 = vector.extract_strided_slice %42 {offsets = [0, 384], sizes = [16, 128], strides = [1, 1]} : vector<16x1536xf32> to vector<16x128xf32>
    %49 = arith.addf %47, %48 : vector<16x128xf32>
    %50 = vector.extract_strided_slice %42 {offsets = [0, 512], sizes = [16, 128], strides = [1, 1]} : vector<16x1536xf32> to vector<16x128xf32>
    %51 = arith.addf %49, %50 : vector<16x128xf32>
    %52 = vector.extract_strided_slice %42 {offsets = [0, 640], sizes = [16, 128], strides = [1, 1]} : vector<16x1536xf32> to vector<16x128xf32>
    %53 = arith.addf %51, %52 : vector<16x128xf32>
    %54 = vector.extract_strided_slice %42 {offsets = [0, 768], sizes = [16, 128], strides = [1, 1]} : vector<16x1536xf32> to vector<16x128xf32>
    %55 = arith.addf %53, %54 : vector<16x128xf32>
    %56 = vector.extract_strided_slice %42 {offsets = [0, 896], sizes = [16, 128], strides = [1, 1]} : vector<16x1536xf32> to vector<16x128xf32>
    %57 = arith.addf %55, %56 : vector<16x128xf32>
    %58 = vector.extract_strided_slice %42 {offsets = [0, 1024], sizes = [16, 128], strides = [1, 1]} : vector<16x1536xf32> to vector<16x128xf32>
    %59 = arith.addf %57, %58 : vector<16x128xf32>
    %60 = vector.extract_strided_slice %42 {offsets = [0, 1152], sizes = [16, 128], strides = [1, 1]} : vector<16x1536xf32> to vector<16x128xf32>
    %61 = arith.addf %59, %60 : vector<16x128xf32>
    %62 = vector.extract_strided_slice %42 {offsets = [0, 1280], sizes = [16, 128], strides = [1, 1]} : vector<16x1536xf32> to vector<16x128xf32>
    %63 = arith.addf %61, %62 : vector<16x128xf32>
    %64 = vector.extract_strided_slice %42 {offsets = [0, 1408], sizes = [16, 128], strides = [1, 1]} : vector<16x1536xf32> to vector<16x128xf32>
    %65 = arith.addf %63, %64 : vector<16x128xf32>
    %c0_15 = arith.constant 0 : index
    %c0_16 = arith.constant 0 : index
    %66 = vector.load %arg6[%c0_15, %c0_16] : memref<16x1024xf32, #tpu.memory_space<vmem>>, vector<16x128xf32>
    tpu.vector_store %arg6[%c0_15, %c0_16], %65 {strides = array<i32>} : memref<16x1024xf32, #tpu.memory_space<vmem>>, vector<16x128xf32>,
    %c0_17 = arith.constant 0 : index
    %c128 = arith.constant 128 : index
    %67 = vector.load %arg6[%c0_17, %c128] : memref<16x1024xf32, #tpu.memory_space<vmem>>, vector<16x128xf32>
    tpu.vector_store %arg6[%c0_17, %c128], %65 {strides = array<i32>} : memref<16x1024xf32, #tpu.memory_space<vmem>>, vector<16x128xf32>,
    %c0_18 = arith.constant 0 : index
    %c256 = arith.constant 256 : index
    %68 = vector.load %arg6[%c0_18, %c256] : memref<16x1024xf32, #tpu.memory_space<vmem>>, vector<16x128xf32>
    tpu.vector_store %arg6[%c0_18, %c256], %65 {strides = array<i32>} : memref<16x1024xf32, #tpu.memory_space<vmem>>, vector<16x128xf32>,
    %c0_19 = arith.constant 0 : index
    %c384 = arith.constant 384 : index
    %69 = vector.load %arg6[%c0_19, %c384] : memref<16x1024xf32, #tpu.memory_space<vmem>>, vector<16x128xf32>
    tpu.vector_store %arg6[%c0_19, %c384], %65 {strides = array<i32>} : memref<16x1024xf32, #tpu.memory_space<vmem>>, vector<16x128xf32>,
    %c0_20 = arith.constant 0 : index
    %c512 = arith.constant 512 : index
    %70 = vector.load %arg6[%c0_20, %c512] : memref<16x1024xf32, #tpu.memory_space<vmem>>, vector<16x128xf32>
    tpu.vector_store %arg6[%c0_20, %c512], %65 {strides = array<i32>} : memref<16x1024xf32, #tpu.memory_space<vmem>>, vector<16x128xf32>,
    %c0_21 = arith.constant 0 : index
    %c640 = arith.constant 640 : index
    %71 = vector.load %arg6[%c0_21, %c640] : memref<16x1024xf32, #tpu.memory_space<vmem>>, vector<16x128xf32>
    tpu.vector_store %arg6[%c0_21, %c640], %65 {strides = array<i32>} : memref<16x1024xf32, #tpu.memory_space<vmem>>, vector<16x128xf32>,
    %c0_22 = arith.constant 0 : index
    %c768 = arith.constant 768 : index
    %72 = vector.load %arg6[%c0_22, %c768] : memref<16x1024xf32, #tpu.memory_space<vmem>>, vector<16x128xf32>
    tpu.vector_store %arg6[%c0_22, %c768], %65 {strides = array<i32>} : memref<16x1024xf32, #tpu.memory_space<vmem>>, vector<16x128xf32>,
    %c0_23 = arith.constant 0 : index
    %c896 = arith.constant 896 : index
    %73 = vector.load %arg6[%c0_23, %c896] : memref<16x1024xf32, #tpu.memory_space<vmem>>, vector<16x128xf32>
    tpu.vector_store %arg6[%c0_23, %c896], %65 {strides = array<i32>} : memref<16x1024xf32, #tpu.memory_space<vmem>>, vector<16x128xf32>,
    %74 = vector.extract_strided_slice %37 {offsets = [0, 0], sizes = [16, 128], strides = [1, 1]} : vector<16x1536xf32> to vector<16x128xf32>
    %75 = vector.extract_strided_slice %42 {offsets = [0, 0], sizes = [16, 128], strides = [1, 1]} : vector<16x1536xf32> to vector<16x128xf32>
    %76 = arith.subf %74, %75 : vector<16x128xf32>
    %c0_24 = arith.constant 0 : index
    %c0_25 = arith.constant 0 : index
    %77 = memref.load %arg1[%c0_24, %c0_25] : memref<8x12xi32, #tpu.memory_space<smem>>
    %c0_i32 = arith.constant 0 : i32
    %78 = arith.cmpi sgt, %77, %c0_i32 : i32
    %79 = arith.extui %78 : i1 to i32
    %c0_i32_26 = arith.constant 0 : i32
    %80 = arith.cmpi ne, %79, %c0_i32_26 : i32
    scf.if %80 {
      %c0_817 = arith.constant 0 : index
      %c0_818 = arith.constant 0 : index
      %1069 = vector.load %arg6[%c0_817, %c0_818] : memref<16x1024xf32, #tpu.memory_space<vmem>>, vector<16x128xf32>
      %1070 = arith.addf %1069, %76 : vector<16x128xf32>
      %c0_819 = arith.constant 0 : index
      %c0_820 = arith.constant 0 : index
      %1071 = vector.load %arg6[%c0_819, %c0_820] : memref<16x1024xf32, #tpu.memory_space<vmem>>, vector<16x128xf32>
      tpu.vector_store %arg6[%c0_819, %c0_820], %1070 {strides = array<i32>} : memref<16x1024xf32, #tpu.memory_space<vmem>>, vector<16x128xf32>,
    } else {
    }
    %c1 = arith.constant 1 : index
    %c0_27 = arith.constant 0 : index
    %81 = memref.load %arg1[%c1, %c0_27] : memref<8x12xi32, #tpu.memory_space<smem>>
    %c0_i32_28 = arith.constant 0 : i32
    %82 = arith.cmpi sgt, %81, %c0_i32_28 : i32
    %83 = arith.extui %82 : i1 to i32
    %c0_i32_29 = arith.constant 0 : i32
    %84 = arith.cmpi ne, %83, %c0_i32_29 : i32
    scf.if %84 {
      %c0_817 = arith.constant 0 : index
      %c128_818 = arith.constant 128 : index
      %1069 = vector.load %arg6[%c0_817, %c128_818] : memref<16x1024xf32, #tpu.memory_space<vmem>>, vector<16x128xf32>
      %1070 = arith.addf %1069, %76 : vector<16x128xf32>
      %c0_819 = arith.constant 0 : index
      %c128_820 = arith.constant 128 : index
      %1071 = vector.load %arg6[%c0_819, %c128_820] : memref<16x1024xf32, #tpu.memory_space<vmem>>, vector<16x128xf32>
      tpu.vector_store %arg6[%c0_819, %c128_820], %1070 {strides = array<i32>} : memref<16x1024xf32, #tpu.memory_space<vmem>>, vector<16x128xf32>,
    } else {
    }
    %c2 = arith.constant 2 : index
    %c0_30 = arith.constant 0 : index
    %85 = memref.load %arg1[%c2, %c0_30] : memref<8x12xi32, #tpu.memory_space<smem>>
    %c0_i32_31 = arith.constant 0 : i32
    %86 = arith.cmpi sgt, %85, %c0_i32_31 : i32
    %87 = arith.extui %86 : i1 to i32
    %c0_i32_32 = arith.constant 0 : i32
    %88 = arith.cmpi ne, %87, %c0_i32_32 : i32
    scf.if %88 {
      %c0_817 = arith.constant 0 : index
      %c256_818 = arith.constant 256 : index
      %1069 = vector.load %arg6[%c0_817, %c256_818] : memref<16x1024xf32, #tpu.memory_space<vmem>>, vector<16x128xf32>
      %1070 = arith.addf %1069, %76 : vector<16x128xf32>
      %c0_819 = arith.constant 0 : index
      %c256_820 = arith.constant 256 : index
      %1071 = vector.load %arg6[%c0_819, %c256_820] : memref<16x1024xf32, #tpu.memory_space<vmem>>, vector<16x128xf32>
      tpu.vector_store %arg6[%c0_819, %c256_820], %1070 {strides = array<i32>} : memref<16x1024xf32, #tpu.memory_space<vmem>>, vector<16x128xf32>,
    } else {
    }
    %c3 = arith.constant 3 : index
    %c0_33 = arith.constant 0 : index
    %89 = memref.load %arg1[%c3, %c0_33] : memref<8x12xi32, #tpu.memory_space<smem>>
    %c0_i32_34 = arith.constant 0 : i32
    %90 = arith.cmpi sgt, %89, %c0_i32_34 : i32
    %91 = arith.extui %90 : i1 to i32
    %c0_i32_35 = arith.constant 0 : i32
    %92 = arith.cmpi ne, %91, %c0_i32_35 : i32
    scf.if %92 {
      %c0_817 = arith.constant 0 : index
      %c384_818 = arith.constant 384 : index
      %1069 = vector.load %arg6[%c0_817, %c384_818] : memref<16x1024xf32, #tpu.memory_space<vmem>>, vector<16x128xf32>
      %1070 = arith.addf %1069, %76 : vector<16x128xf32>
      %c0_819 = arith.constant 0 : index
      %c384_820 = arith.constant 384 : index
      %1071 = vector.load %arg6[%c0_819, %c384_820] : memref<16x1024xf32, #tpu.memory_space<vmem>>, vector<16x128xf32>
      tpu.vector_store %arg6[%c0_819, %c384_820], %1070 {strides = array<i32>} : memref<16x1024xf32, #tpu.memory_space<vmem>>, vector<16x128xf32>,
    } else {
    }
    %c4 = arith.constant 4 : index
    %c0_36 = arith.constant 0 : index
    %93 = memref.load %arg1[%c4, %c0_36] : memref<8x12xi32, #tpu.memory_space<smem>>
    %c0_i32_37 = arith.constant 0 : i32
    %94 = arith.cmpi sgt, %93, %c0_i32_37 : i32
    %95 = arith.extui %94 : i1 to i32
    %c0_i32_38 = arith.constant 0 : i32
    %96 = arith.cmpi ne, %95, %c0_i32_38 : i32
    scf.if %96 {
      %c0_817 = arith.constant 0 : index
      %c512_818 = arith.constant 512 : index
      %1069 = vector.load %arg6[%c0_817, %c512_818] : memref<16x1024xf32, #tpu.memory_space<vmem>>, vector<16x128xf32>
      %1070 = arith.addf %1069, %76 : vector<16x128xf32>
      %c0_819 = arith.constant 0 : index
      %c512_820 = arith.constant 512 : index
      %1071 = vector.load %arg6[%c0_819, %c512_820] : memref<16x1024xf32, #tpu.memory_space<vmem>>, vector<16x128xf32>
      tpu.vector_store %arg6[%c0_819, %c512_820], %1070 {strides = array<i32>} : memref<16x1024xf32, #tpu.memory_space<vmem>>, vector<16x128xf32>,
    } else {
    }
    %c5 = arith.constant 5 : index
    %c0_39 = arith.constant 0 : index
    %97 = memref.load %arg1[%c5, %c0_39] : memref<8x12xi32, #tpu.memory_space<smem>>
    %c0_i32_40 = arith.constant 0 : i32
    %98 = arith.cmpi sgt, %97, %c0_i32_40 : i32
    %99 = arith.extui %98 : i1 to i32
    %c0_i32_41 = arith.constant 0 : i32
    %100 = arith.cmpi ne, %99, %c0_i32_41 : i32
    scf.if %100 {
      %c0_817 = arith.constant 0 : index
      %c640_818 = arith.constant 640 : index
      %1069 = vector.load %arg6[%c0_817, %c640_818] : memref<16x1024xf32, #tpu.memory_space<vmem>>, vector<16x128xf32>
      %1070 = arith.addf %1069, %76 : vector<16x128xf32>
      %c0_819 = arith.constant 0 : index
      %c640_820 = arith.constant 640 : index
      %1071 = vector.load %arg6[%c0_819, %c640_820] : memref<16x1024xf32, #tpu.memory_space<vmem>>, vector<16x128xf32>
      tpu.vector_store %arg6[%c0_819, %c640_820], %1070 {strides = array<i32>} : memref<16x1024xf32, #tpu.memory_space<vmem>>, vector<16x128xf32>,
    } else {
    }
    %c6 = arith.constant 6 : index
    %c0_42 = arith.constant 0 : index
    %101 = memref.load %arg1[%c6, %c0_42] : memref<8x12xi32, #tpu.memory_space<smem>>
    %c0_i32_43 = arith.constant 0 : i32
    %102 = arith.cmpi sgt, %101, %c0_i32_43 : i32
    %103 = arith.extui %102 : i1 to i32
    %c0_i32_44 = arith.constant 0 : i32
    %104 = arith.cmpi ne, %103, %c0_i32_44 : i32
    scf.if %104 {
      %c0_817 = arith.constant 0 : index
      %c768_818 = arith.constant 768 : index
      %1069 = vector.load %arg6[%c0_817, %c768_818] : memref<16x1024xf32, #tpu.memory_space<vmem>>, vector<16x128xf32>
      %1070 = arith.addf %1069, %76 : vector<16x128xf32>
      %c0_819 = arith.constant 0 : index
      %c768_820 = arith.constant 768 : index
      %1071 = vector.load %arg6[%c0_819, %c768_820] : memref<16x1024xf32, #tpu.memory_space<vmem>>, vector<16x128xf32>
      tpu.vector_store %arg6[%c0_819, %c768_820], %1070 {strides = array<i32>} : memref<16x1024xf32, #tpu.memory_space<vmem>>, vector<16x128xf32>,
    } else {
    }
    %c7 = arith.constant 7 : index
    %c0_45 = arith.constant 0 : index
    %105 = memref.load %arg1[%c7, %c0_45] : memref<8x12xi32, #tpu.memory_space<smem>>
    %c0_i32_46 = arith.constant 0 : i32
    %106 = arith.cmpi sgt, %105, %c0_i32_46 : i32
    %107 = arith.extui %106 : i1 to i32
    %c0_i32_47 = arith.constant 0 : i32
    %108 = arith.cmpi ne, %107, %c0_i32_47 : i32
    scf.if %108 {
      %c0_817 = arith.constant 0 : index
      %c896_818 = arith.constant 896 : index
      %1069 = vector.load %arg6[%c0_817, %c896_818] : memref<16x1024xf32, #tpu.memory_space<vmem>>, vector<16x128xf32>
      %1070 = arith.addf %1069, %76 : vector<16x128xf32>
      %c0_819 = arith.constant 0 : index
      %c896_820 = arith.constant 896 : index
      %1071 = vector.load %arg6[%c0_819, %c896_820] : memref<16x1024xf32, #tpu.memory_space<vmem>>, vector<16x128xf32>
      tpu.vector_store %arg6[%c0_819, %c896_820], %1070 {strides = array<i32>} : memref<16x1024xf32, #tpu.memory_space<vmem>>, vector<16x128xf32>,
    } else {
    }
    %109 = vector.extract_strided_slice %37 {offsets = [0, 128], sizes = [16, 128], strides = [1, 1]} : vector<16x1536xf32> to vector<16x128xf32>
    %110 = vector.extract_strided_slice %42 {offsets = [0, 128], sizes = [16, 128], strides = [1, 1]} : vector<16x1536xf32> to vector<16x128xf32>
    %111 = arith.subf %109, %110 : vector<16x128xf32>
    %c0_48 = arith.constant 0 : index
    %c1_49 = arith.constant 1 : index
    %112 = memref.load %arg1[%c0_48, %c1_49] : memref<8x12xi32, #tpu.memory_space<smem>>
    %c0_i32_50 = arith.constant 0 : i32
    %113 = arith.cmpi sgt, %112, %c0_i32_50 : i32
    %114 = arith.extui %113 : i1 to i32
    %c0_i32_51 = arith.constant 0 : i32
    %115 = arith.cmpi ne, %114, %c0_i32_51 : i32
    scf.if %115 {
      %c0_817 = arith.constant 0 : index
      %c0_818 = arith.constant 0 : index
      %1069 = vector.load %arg6[%c0_817, %c0_818] : memref<16x1024xf32, #tpu.memory_space<vmem>>, vector<16x128xf32>
      %1070 = arith.addf %1069, %111 : vector<16x128xf32>
      %c0_819 = arith.constant 0 : index
      %c0_820 = arith.constant 0 : index
      %1071 = vector.load %arg6[%c0_819, %c0_820] : memref<16x1024xf32, #tpu.memory_space<vmem>>, vector<16x128xf32>
      tpu.vector_store %arg6[%c0_819, %c0_820], %1070 {strides = array<i32>} : memref<16x1024xf32, #tpu.memory_space<vmem>>, vector<16x128xf32>,
    } else {
    }
    %c1_52 = arith.constant 1 : index
    %c1_53 = arith.constant 1 : index
    %116 = memref.load %arg1[%c1_52, %c1_53] : memref<8x12xi32, #tpu.memory_space<smem>>
    %c0_i32_54 = arith.constant 0 : i32
    %117 = arith.cmpi sgt, %116, %c0_i32_54 : i32
    %118 = arith.extui %117 : i1 to i32
    %c0_i32_55 = arith.constant 0 : i32
    %119 = arith.cmpi ne, %118, %c0_i32_55 : i32
    scf.if %119 {
      %c0_817 = arith.constant 0 : index
      %c128_818 = arith.constant 128 : index
      %1069 = vector.load %arg6[%c0_817, %c128_818] : memref<16x1024xf32, #tpu.memory_space<vmem>>, vector<16x128xf32>
      %1070 = arith.addf %1069, %111 : vector<16x128xf32>
      %c0_819 = arith.constant 0 : index
      %c128_820 = arith.constant 128 : index
      %1071 = vector.load %arg6[%c0_819, %c128_820] : memref<16x1024xf32, #tpu.memory_space<vmem>>, vector<16x128xf32>
      tpu.vector_store %arg6[%c0_819, %c128_820], %1070 {strides = array<i32>} : memref<16x1024xf32, #tpu.memory_space<vmem>>, vector<16x128xf32>,
    } else {
    }
    %c2_56 = arith.constant 2 : index
    %c1_57 = arith.constant 1 : index
    %120 = memref.load %arg1[%c2_56, %c1_57] : memref<8x12xi32, #tpu.memory_space<smem>>
    %c0_i32_58 = arith.constant 0 : i32
    %121 = arith.cmpi sgt, %120, %c0_i32_58 : i32
    %122 = arith.extui %121 : i1 to i32
    %c0_i32_59 = arith.constant 0 : i32
    %123 = arith.cmpi ne, %122, %c0_i32_59 : i32
    scf.if %123 {
      %c0_817 = arith.constant 0 : index
      %c256_818 = arith.constant 256 : index
      %1069 = vector.load %arg6[%c0_817, %c256_818] : memref<16x1024xf32, #tpu.memory_space<vmem>>, vector<16x128xf32>
      %1070 = arith.addf %1069, %111 : vector<16x128xf32>
      %c0_819 = arith.constant 0 : index
      %c256_820 = arith.constant 256 : index
      %1071 = vector.load %arg6[%c0_819, %c256_820] : memref<16x1024xf32, #tpu.memory_space<vmem>>, vector<16x128xf32>
      tpu.vector_store %arg6[%c0_819, %c256_820], %1070 {strides = array<i32>} : memref<16x1024xf32, #tpu.memory_space<vmem>>, vector<16x128xf32>,
    } else {
    }
    %c3_60 = arith.constant 3 : index
    %c1_61 = arith.constant 1 : index
    %124 = memref.load %arg1[%c3_60, %c1_61] : memref<8x12xi32, #tpu.memory_space<smem>>
    %c0_i32_62 = arith.constant 0 : i32
    %125 = arith.cmpi sgt, %124, %c0_i32_62 : i32
    %126 = arith.extui %125 : i1 to i32
    %c0_i32_63 = arith.constant 0 : i32
    %127 = arith.cmpi ne, %126, %c0_i32_63 : i32
    scf.if %127 {
      %c0_817 = arith.constant 0 : index
      %c384_818 = arith.constant 384 : index
      %1069 = vector.load %arg6[%c0_817, %c384_818] : memref<16x1024xf32, #tpu.memory_space<vmem>>, vector<16x128xf32>
      %1070 = arith.addf %1069, %111 : vector<16x128xf32>
      %c0_819 = arith.constant 0 : index
      %c384_820 = arith.constant 384 : index
      %1071 = vector.load %arg6[%c0_819, %c384_820] : memref<16x1024xf32, #tpu.memory_space<vmem>>, vector<16x128xf32>
      tpu.vector_store %arg6[%c0_819, %c384_820], %1070 {strides = array<i32>} : memref<16x1024xf32, #tpu.memory_space<vmem>>, vector<16x128xf32>,
    } else {
    }
    %c4_64 = arith.constant 4 : index
    %c1_65 = arith.constant 1 : index
    %128 = memref.load %arg1[%c4_64, %c1_65] : memref<8x12xi32, #tpu.memory_space<smem>>
    %c0_i32_66 = arith.constant 0 : i32
    %129 = arith.cmpi sgt, %128, %c0_i32_66 : i32
    %130 = arith.extui %129 : i1 to i32
    %c0_i32_67 = arith.constant 0 : i32
    %131 = arith.cmpi ne, %130, %c0_i32_67 : i32
    scf.if %131 {
      %c0_817 = arith.constant 0 : index
      %c512_818 = arith.constant 512 : index
      %1069 = vector.load %arg6[%c0_817, %c512_818] : memref<16x1024xf32, #tpu.memory_space<vmem>>, vector<16x128xf32>
      %1070 = arith.addf %1069, %111 : vector<16x128xf32>
      %c0_819 = arith.constant 0 : index
      %c512_820 = arith.constant 512 : index
      %1071 = vector.load %arg6[%c0_819, %c512_820] : memref<16x1024xf32, #tpu.memory_space<vmem>>, vector<16x128xf32>
      tpu.vector_store %arg6[%c0_819, %c512_820], %1070 {strides = array<i32>} : memref<16x1024xf32, #tpu.memory_space<vmem>>, vector<16x128xf32>,
    } else {
    }
    %c5_68 = arith.constant 5 : index
    %c1_69 = arith.constant 1 : index
    %132 = memref.load %arg1[%c5_68, %c1_69] : memref<8x12xi32, #tpu.memory_space<smem>>
    %c0_i32_70 = arith.constant 0 : i32
    %133 = arith.cmpi sgt, %132, %c0_i32_70 : i32
    %134 = arith.extui %133 : i1 to i32
    %c0_i32_71 = arith.constant 0 : i32
    %135 = arith.cmpi ne, %134, %c0_i32_71 : i32
    scf.if %135 {
      %c0_817 = arith.constant 0 : index
      %c640_818 = arith.constant 640 : index
      %1069 = vector.load %arg6[%c0_817, %c640_818] : memref<16x1024xf32, #tpu.memory_space<vmem>>, vector<16x128xf32>
      %1070 = arith.addf %1069, %111 : vector<16x128xf32>
      %c0_819 = arith.constant 0 : index
      %c640_820 = arith.constant 640 : index
      %1071 = vector.load %arg6[%c0_819, %c640_820] : memref<16x1024xf32, #tpu.memory_space<vmem>>, vector<16x128xf32>
      tpu.vector_store %arg6[%c0_819, %c640_820], %1070 {strides = array<i32>} : memref<16x1024xf32, #tpu.memory_space<vmem>>, vector<16x128xf32>,
    } else {
    }
    %c6_72 = arith.constant 6 : index
    %c1_73 = arith.constant 1 : index
    %136 = memref.load %arg1[%c6_72, %c1_73] : memref<8x12xi32, #tpu.memory_space<smem>>
    %c0_i32_74 = arith.constant 0 : i32
    %137 = arith.cmpi sgt, %136, %c0_i32_74 : i32
    %138 = arith.extui %137 : i1 to i32
    %c0_i32_75 = arith.constant 0 : i32
    %139 = arith.cmpi ne, %138, %c0_i32_75 : i32
    scf.if %139 {
      %c0_817 = arith.constant 0 : index
      %c768_818 = arith.constant 768 : index
      %1069 = vector.load %arg6[%c0_817, %c768_818] : memref<16x1024xf32, #tpu.memory_space<vmem>>, vector<16x128xf32>
      %1070 = arith.addf %1069, %111 : vector<16x128xf32>
      %c0_819 = arith.constant 0 : index
      %c768_820 = arith.constant 768 : index
      %1071 = vector.load %arg6[%c0_819, %c768_820] : memref<16x1024xf32, #tpu.memory_space<vmem>>, vector<16x128xf32>
      tpu.vector_store %arg6[%c0_819, %c768_820], %1070 {strides = array<i32>} : memref<16x1024xf32, #tpu.memory_space<vmem>>, vector<16x128xf32>,
    } else {
    }
    %c7_76 = arith.constant 7 : index
    %c1_77 = arith.constant 1 : index
    %140 = memref.load %arg1[%c7_76, %c1_77] : memref<8x12xi32, #tpu.memory_space<smem>>
    %c0_i32_78 = arith.constant 0 : i32
    %141 = arith.cmpi sgt, %140, %c0_i32_78 : i32
    %142 = arith.extui %141 : i1 to i32
    %c0_i32_79 = arith.constant 0 : i32
    %143 = arith.cmpi ne, %142, %c0_i32_79 : i32
    scf.if %143 {
      %c0_817 = arith.constant 0 : index
      %c896_818 = arith.constant 896 : index
      %1069 = vector.load %arg6[%c0_817, %c896_818] : memref<16x1024xf32, #tpu.memory_space<vmem>>, vector<16x128xf32>
      %1070 = arith.addf %1069, %111 : vector<16x128xf32>
      %c0_819 = arith.constant 0 : index
      %c896_820 = arith.constant 896 : index
      %1071 = vector.load %arg6[%c0_819, %c896_820] : memref<16x1024xf32, #tpu.memory_space<vmem>>, vector<16x128xf32>
      tpu.vector_store %arg6[%c0_819, %c896_820], %1070 {strides = array<i32>} : memref<16x1024xf32, #tpu.memory_space<vmem>>, vector<16x128xf32>,
    } else {
    }
    %144 = vector.extract_strided_slice %37 {offsets = [0, 256], sizes = [16, 128], strides = [1, 1]} : vector<16x1536xf32> to vector<16x128xf32>
    %145 = vector.extract_strided_slice %42 {offsets = [0, 256], sizes = [16, 128], strides = [1, 1]} : vector<16x1536xf32> to vector<16x128xf32>
    %146 = arith.subf %144, %145 : vector<16x128xf32>
    %c0_80 = arith.constant 0 : index
    %c2_81 = arith.constant 2 : index
    %147 = memref.load %arg1[%c0_80, %c2_81] : memref<8x12xi32, #tpu.memory_space<smem>>
    %c0_i32_82 = arith.constant 0 : i32
    %148 = arith.cmpi sgt, %147, %c0_i32_82 : i32
    %149 = arith.extui %148 : i1 to i32
    %c0_i32_83 = arith.constant 0 : i32
    %150 = arith.cmpi ne, %149, %c0_i32_83 : i32
    scf.if %150 {
      %c0_817 = arith.constant 0 : index
      %c0_818 = arith.constant 0 : index
      %1069 = vector.load %arg6[%c0_817, %c0_818] : memref<16x1024xf32, #tpu.memory_space<vmem>>, vector<16x128xf32>
      %1070 = arith.addf %1069, %146 : vector<16x128xf32>
      %c0_819 = arith.constant 0 : index
      %c0_820 = arith.constant 0 : index
      %1071 = vector.load %arg6[%c0_819, %c0_820] : memref<16x1024xf32, #tpu.memory_space<vmem>>, vector<16x128xf32>
      tpu.vector_store %arg6[%c0_819, %c0_820], %1070 {strides = array<i32>} : memref<16x1024xf32, #tpu.memory_space<vmem>>, vector<16x128xf32>,
    } else {
    }
    %c1_84 = arith.constant 1 : index
    %c2_85 = arith.constant 2 : index
    %151 = memref.load %arg1[%c1_84, %c2_85] : memref<8x12xi32, #tpu.memory_space<smem>>
    %c0_i32_86 = arith.constant 0 : i32
    %152 = arith.cmpi sgt, %151, %c0_i32_86 : i32
    %153 = arith.extui %152 : i1 to i32
    %c0_i32_87 = arith.constant 0 : i32
    %154 = arith.cmpi ne, %153, %c0_i32_87 : i32
    scf.if %154 {
      %c0_817 = arith.constant 0 : index
      %c128_818 = arith.constant 128 : index
      %1069 = vector.load %arg6[%c0_817, %c128_818] : memref<16x1024xf32, #tpu.memory_space<vmem>>, vector<16x128xf32>
      %1070 = arith.addf %1069, %146 : vector<16x128xf32>
      %c0_819 = arith.constant 0 : index
      %c128_820 = arith.constant 128 : index
      %1071 = vector.load %arg6[%c0_819, %c128_820] : memref<16x1024xf32, #tpu.memory_space<vmem>>, vector<16x128xf32>
      tpu.vector_store %arg6[%c0_819, %c128_820], %1070 {strides = array<i32>} : memref<16x1024xf32, #tpu.memory_space<vmem>>, vector<16x128xf32>,
    } else {
    }
    %c2_88 = arith.constant 2 : index
    %c2_89 = arith.constant 2 : index
    %155 = memref.load %arg1[%c2_88, %c2_89] : memref<8x12xi32, #tpu.memory_space<smem>>
    %c0_i32_90 = arith.constant 0 : i32
    %156 = arith.cmpi sgt, %155, %c0_i32_90 : i32
    %157 = arith.extui %156 : i1 to i32
    %c0_i32_91 = arith.constant 0 : i32
    %158 = arith.cmpi ne, %157, %c0_i32_91 : i32
    scf.if %158 {
      %c0_817 = arith.constant 0 : index
      %c256_818 = arith.constant 256 : index
      %1069 = vector.load %arg6[%c0_817, %c256_818] : memref<16x1024xf32, #tpu.memory_space<vmem>>, vector<16x128xf32>
      %1070 = arith.addf %1069, %146 : vector<16x128xf32>
      %c0_819 = arith.constant 0 : index
      %c256_820 = arith.constant 256 : index
      %1071 = vector.load %arg6[%c0_819, %c256_820] : memref<16x1024xf32, #tpu.memory_space<vmem>>, vector<16x128xf32>
      tpu.vector_store %arg6[%c0_819, %c256_820], %1070 {strides = array<i32>} : memref<16x1024xf32, #tpu.memory_space<vmem>>, vector<16x128xf32>,
    } else {
    }
    %c3_92 = arith.constant 3 : index
    %c2_93 = arith.constant 2 : index
    %159 = memref.load %arg1[%c3_92, %c2_93] : memref<8x12xi32, #tpu.memory_space<smem>>
    %c0_i32_94 = arith.constant 0 : i32
    %160 = arith.cmpi sgt, %159, %c0_i32_94 : i32
    %161 = arith.extui %160 : i1 to i32
    %c0_i32_95 = arith.constant 0 : i32
    %162 = arith.cmpi ne, %161, %c0_i32_95 : i32
    scf.if %162 {
      %c0_817 = arith.constant 0 : index
      %c384_818 = arith.constant 384 : index
      %1069 = vector.load %arg6[%c0_817, %c384_818] : memref<16x1024xf32, #tpu.memory_space<vmem>>, vector<16x128xf32>
      %1070 = arith.addf %1069, %146 : vector<16x128xf32>
      %c0_819 = arith.constant 0 : index
      %c384_820 = arith.constant 384 : index
      %1071 = vector.load %arg6[%c0_819, %c384_820] : memref<16x1024xf32, #tpu.memory_space<vmem>>, vector<16x128xf32>
      tpu.vector_store %arg6[%c0_819, %c384_820], %1070 {strides = array<i32>} : memref<16x1024xf32, #tpu.memory_space<vmem>>, vector<16x128xf32>,
    } else {
    }
    %c4_96 = arith.constant 4 : index
    %c2_97 = arith.constant 2 : index
    %163 = memref.load %arg1[%c4_96, %c2_97] : memref<8x12xi32, #tpu.memory_space<smem>>
    %c0_i32_98 = arith.constant 0 : i32
    %164 = arith.cmpi sgt, %163, %c0_i32_98 : i32
    %165 = arith.extui %164 : i1 to i32
    %c0_i32_99 = arith.constant 0 : i32
    %166 = arith.cmpi ne, %165, %c0_i32_99 : i32
    scf.if %166 {
      %c0_817 = arith.constant 0 : index
      %c512_818 = arith.constant 512 : index
      %1069 = vector.load %arg6[%c0_817, %c512_818] : memref<16x1024xf32, #tpu.memory_space<vmem>>, vector<16x128xf32>
      %1070 = arith.addf %1069, %146 : vector<16x128xf32>
      %c0_819 = arith.constant 0 : index
      %c512_820 = arith.constant 512 : index
      %1071 = vector.load %arg6[%c0_819, %c512_820] : memref<16x1024xf32, #tpu.memory_space<vmem>>, vector<16x128xf32>
      tpu.vector_store %arg6[%c0_819, %c512_820], %1070 {strides = array<i32>} : memref<16x1024xf32, #tpu.memory_space<vmem>>, vector<16x128xf32>,
    } else {
    }
    %c5_100 = arith.constant 5 : index
    %c2_101 = arith.constant 2 : index
    %167 = memref.load %arg1[%c5_100, %c2_101] : memref<8x12xi32, #tpu.memory_space<smem>>
    %c0_i32_102 = arith.constant 0 : i32
    %168 = arith.cmpi sgt, %167, %c0_i32_102 : i32
    %169 = arith.extui %168 : i1 to i32
    %c0_i32_103 = arith.constant 0 : i32
    %170 = arith.cmpi ne, %169, %c0_i32_103 : i32
    scf.if %170 {
      %c0_817 = arith.constant 0 : index
      %c640_818 = arith.constant 640 : index
      %1069 = vector.load %arg6[%c0_817, %c640_818] : memref<16x1024xf32, #tpu.memory_space<vmem>>, vector<16x128xf32>
      %1070 = arith.addf %1069, %146 : vector<16x128xf32>
      %c0_819 = arith.constant 0 : index
      %c640_820 = arith.constant 640 : index
      %1071 = vector.load %arg6[%c0_819, %c640_820] : memref<16x1024xf32, #tpu.memory_space<vmem>>, vector<16x128xf32>
      tpu.vector_store %arg6[%c0_819, %c640_820], %1070 {strides = array<i32>} : memref<16x1024xf32, #tpu.memory_space<vmem>>, vector<16x128xf32>,
    } else {
    }
    %c6_104 = arith.constant 6 : index
    %c2_105 = arith.constant 2 : index
    %171 = memref.load %arg1[%c6_104, %c2_105] : memref<8x12xi32, #tpu.memory_space<smem>>
    %c0_i32_106 = arith.constant 0 : i32
    %172 = arith.cmpi sgt, %171, %c0_i32_106 : i32
    %173 = arith.extui %172 : i1 to i32
    %c0_i32_107 = arith.constant 0 : i32
    %174 = arith.cmpi ne, %173, %c0_i32_107 : i32
    scf.if %174 {
      %c0_817 = arith.constant 0 : index
      %c768_818 = arith.constant 768 : index
      %1069 = vector.load %arg6[%c0_817, %c768_818] : memref<16x1024xf32, #tpu.memory_space<vmem>>, vector<16x128xf32>
      %1070 = arith.addf %1069, %146 : vector<16x128xf32>
      %c0_819 = arith.constant 0 : index
      %c768_820 = arith.constant 768 : index
      %1071 = vector.load %arg6[%c0_819, %c768_820] : memref<16x1024xf32, #tpu.memory_space<vmem>>, vector<16x128xf32>
      tpu.vector_store %arg6[%c0_819, %c768_820], %1070 {strides = array<i32>} : memref<16x1024xf32, #tpu.memory_space<vmem>>, vector<16x128xf32>,
    } else {
    }
    %c7_108 = arith.constant 7 : index
    %c2_109 = arith.constant 2 : index
    %175 = memref.load %arg1[%c7_108, %c2_109] : memref<8x12xi32, #tpu.memory_space<smem>>
    %c0_i32_110 = arith.constant 0 : i32
    %176 = arith.cmpi sgt, %175, %c0_i32_110 : i32
    %177 = arith.extui %176 : i1 to i32
    %c0_i32_111 = arith.constant 0 : i32
    %178 = arith.cmpi ne, %177, %c0_i32_111 : i32
    scf.if %178 {
      %c0_817 = arith.constant 0 : index
      %c896_818 = arith.constant 896 : index
      %1069 = vector.load %arg6[%c0_817, %c896_818] : memref<16x1024xf32, #tpu.memory_space<vmem>>, vector<16x128xf32>
      %1070 = arith.addf %1069, %146 : vector<16x128xf32>
      %c0_819 = arith.constant 0 : index
      %c896_820 = arith.constant 896 : index
      %1071 = vector.load %arg6[%c0_819, %c896_820] : memref<16x1024xf32, #tpu.memory_space<vmem>>, vector<16x128xf32>
      tpu.vector_store %arg6[%c0_819, %c896_820], %1070 {strides = array<i32>} : memref<16x1024xf32, #tpu.memory_space<vmem>>, vector<16x128xf32>,
    } else {
    }
    %179 = vector.extract_strided_slice %37 {offsets = [0, 384], sizes = [16, 128], strides = [1, 1]} : vector<16x1536xf32> to vector<16x128xf32>
    %180 = vector.extract_strided_slice %42 {offsets = [0, 384], sizes = [16, 128], strides = [1, 1]} : vector<16x1536xf32> to vector<16x128xf32>
    %181 = arith.subf %179, %180 : vector<16x128xf32>
    %c0_112 = arith.constant 0 : index
    %c3_113 = arith.constant 3 : index
    %182 = memref.load %arg1[%c0_112, %c3_113] : memref<8x12xi32, #tpu.memory_space<smem>>
    %c0_i32_114 = arith.constant 0 : i32
    %183 = arith.cmpi sgt, %182, %c0_i32_114 : i32
    %184 = arith.extui %183 : i1 to i32
    %c0_i32_115 = arith.constant 0 : i32
    %185 = arith.cmpi ne, %184, %c0_i32_115 : i32
    scf.if %185 {
      %c0_817 = arith.constant 0 : index
      %c0_818 = arith.constant 0 : index
      %1069 = vector.load %arg6[%c0_817, %c0_818] : memref<16x1024xf32, #tpu.memory_space<vmem>>, vector<16x128xf32>
      %1070 = arith.addf %1069, %181 : vector<16x128xf32>
      %c0_819 = arith.constant 0 : index
      %c0_820 = arith.constant 0 : index
      %1071 = vector.load %arg6[%c0_819, %c0_820] : memref<16x1024xf32, #tpu.memory_space<vmem>>, vector<16x128xf32>
      tpu.vector_store %arg6[%c0_819, %c0_820], %1070 {strides = array<i32>} : memref<16x1024xf32, #tpu.memory_space<vmem>>, vector<16x128xf32>,
    } else {
    }
    %c1_116 = arith.constant 1 : index
    %c3_117 = arith.constant 3 : index
    %186 = memref.load %arg1[%c1_116, %c3_117] : memref<8x12xi32, #tpu.memory_space<smem>>
    %c0_i32_118 = arith.constant 0 : i32
    %187 = arith.cmpi sgt, %186, %c0_i32_118 : i32
    %188 = arith.extui %187 : i1 to i32
    %c0_i32_119 = arith.constant 0 : i32
    %189 = arith.cmpi ne, %188, %c0_i32_119 : i32
    scf.if %189 {
      %c0_817 = arith.constant 0 : index
      %c128_818 = arith.constant 128 : index
      %1069 = vector.load %arg6[%c0_817, %c128_818] : memref<16x1024xf32, #tpu.memory_space<vmem>>, vector<16x128xf32>
      %1070 = arith.addf %1069, %181 : vector<16x128xf32>
      %c0_819 = arith.constant 0 : index
      %c128_820 = arith.constant 128 : index
      %1071 = vector.load %arg6[%c0_819, %c128_820] : memref<16x1024xf32, #tpu.memory_space<vmem>>, vector<16x128xf32>
      tpu.vector_store %arg6[%c0_819, %c128_820], %1070 {strides = array<i32>} : memref<16x1024xf32, #tpu.memory_space<vmem>>, vector<16x128xf32>,
    } else {
    }
    %c2_120 = arith.constant 2 : index
    %c3_121 = arith.constant 3 : index
    %190 = memref.load %arg1[%c2_120, %c3_121] : memref<8x12xi32, #tpu.memory_space<smem>>
    %c0_i32_122 = arith.constant 0 : i32
    %191 = arith.cmpi sgt, %190, %c0_i32_122 : i32
    %192 = arith.extui %191 : i1 to i32
    %c0_i32_123 = arith.constant 0 : i32
    %193 = arith.cmpi ne, %192, %c0_i32_123 : i32
    scf.if %193 {
      %c0_817 = arith.constant 0 : index
      %c256_818 = arith.constant 256 : index
      %1069 = vector.load %arg6[%c0_817, %c256_818] : memref<16x1024xf32, #tpu.memory_space<vmem>>, vector<16x128xf32>
      %1070 = arith.addf %1069, %181 : vector<16x128xf32>
      %c0_819 = arith.constant 0 : index
      %c256_820 = arith.constant 256 : index
      %1071 = vector.load %arg6[%c0_819, %c256_820] : memref<16x1024xf32, #tpu.memory_space<vmem>>, vector<16x128xf32>
      tpu.vector_store %arg6[%c0_819, %c256_820], %1070 {strides = array<i32>} : memref<16x1024xf32, #tpu.memory_space<vmem>>, vector<16x128xf32>,
    } else {
    }
    %c3_124 = arith.constant 3 : index
    %c3_125 = arith.constant 3 : index
    %194 = memref.load %arg1[%c3_124, %c3_125] : memref<8x12xi32, #tpu.memory_space<smem>>
    %c0_i32_126 = arith.constant 0 : i32
    %195 = arith.cmpi sgt, %194, %c0_i32_126 : i32
    %196 = arith.extui %195 : i1 to i32
    %c0_i32_127 = arith.constant 0 : i32
    %197 = arith.cmpi ne, %196, %c0_i32_127 : i32
    scf.if %197 {
      %c0_817 = arith.constant 0 : index
      %c384_818 = arith.constant 384 : index
      %1069 = vector.load %arg6[%c0_817, %c384_818] : memref<16x1024xf32, #tpu.memory_space<vmem>>, vector<16x128xf32>
      %1070 = arith.addf %1069, %181 : vector<16x128xf32>
      %c0_819 = arith.constant 0 : index
      %c384_820 = arith.constant 384 : index
      %1071 = vector.load %arg6[%c0_819, %c384_820] : memref<16x1024xf32, #tpu.memory_space<vmem>>, vector<16x128xf32>
      tpu.vector_store %arg6[%c0_819, %c384_820], %1070 {strides = array<i32>} : memref<16x1024xf32, #tpu.memory_space<vmem>>, vector<16x128xf32>,
    } else {
    }
    %c4_128 = arith.constant 4 : index
    %c3_129 = arith.constant 3 : index
    %198 = memref.load %arg1[%c4_128, %c3_129] : memref<8x12xi32, #tpu.memory_space<smem>>
    %c0_i32_130 = arith.constant 0 : i32
    %199 = arith.cmpi sgt, %198, %c0_i32_130 : i32
    %200 = arith.extui %199 : i1 to i32
    %c0_i32_131 = arith.constant 0 : i32
    %201 = arith.cmpi ne, %200, %c0_i32_131 : i32
    scf.if %201 {
      %c0_817 = arith.constant 0 : index
      %c512_818 = arith.constant 512 : index
      %1069 = vector.load %arg6[%c0_817, %c512_818] : memref<16x1024xf32, #tpu.memory_space<vmem>>, vector<16x128xf32>
      %1070 = arith.addf %1069, %181 : vector<16x128xf32>
      %c0_819 = arith.constant 0 : index
      %c512_820 = arith.constant 512 : index
      %1071 = vector.load %arg6[%c0_819, %c512_820] : memref<16x1024xf32, #tpu.memory_space<vmem>>, vector<16x128xf32>
      tpu.vector_store %arg6[%c0_819, %c512_820], %1070 {strides = array<i32>} : memref<16x1024xf32, #tpu.memory_space<vmem>>, vector<16x128xf32>,
    } else {
    }
    %c5_132 = arith.constant 5 : index
    %c3_133 = arith.constant 3 : index
    %202 = memref.load %arg1[%c5_132, %c3_133] : memref<8x12xi32, #tpu.memory_space<smem>>
    %c0_i32_134 = arith.constant 0 : i32
    %203 = arith.cmpi sgt, %202, %c0_i32_134 : i32
    %204 = arith.extui %203 : i1 to i32
    %c0_i32_135 = arith.constant 0 : i32
    %205 = arith.cmpi ne, %204, %c0_i32_135 : i32
    scf.if %205 {
      %c0_817 = arith.constant 0 : index
      %c640_818 = arith.constant 640 : index
      %1069 = vector.load %arg6[%c0_817, %c640_818] : memref<16x1024xf32, #tpu.memory_space<vmem>>, vector<16x128xf32>
      %1070 = arith.addf %1069, %181 : vector<16x128xf32>
      %c0_819 = arith.constant 0 : index
      %c640_820 = arith.constant 640 : index
      %1071 = vector.load %arg6[%c0_819, %c640_820] : memref<16x1024xf32, #tpu.memory_space<vmem>>, vector<16x128xf32>
      tpu.vector_store %arg6[%c0_819, %c640_820], %1070 {strides = array<i32>} : memref<16x1024xf32, #tpu.memory_space<vmem>>, vector<16x128xf32>,
    } else {
    }
    %c6_136 = arith.constant 6 : index
    %c3_137 = arith.constant 3 : index
    %206 = memref.load %arg1[%c6_136, %c3_137] : memref<8x12xi32, #tpu.memory_space<smem>>
    %c0_i32_138 = arith.constant 0 : i32
    %207 = arith.cmpi sgt, %206, %c0_i32_138 : i32
    %208 = arith.extui %207 : i1 to i32
    %c0_i32_139 = arith.constant 0 : i32
    %209 = arith.cmpi ne, %208, %c0_i32_139 : i32
    scf.if %209 {
      %c0_817 = arith.constant 0 : index
      %c768_818 = arith.constant 768 : index
      %1069 = vector.load %arg6[%c0_817, %c768_818] : memref<16x1024xf32, #tpu.memory_space<vmem>>, vector<16x128xf32>
      %1070 = arith.addf %1069, %181 : vector<16x128xf32>
      %c0_819 = arith.constant 0 : index
      %c768_820 = arith.constant 768 : index
      %1071 = vector.load %arg6[%c0_819, %c768_820] : memref<16x1024xf32, #tpu.memory_space<vmem>>, vector<16x128xf32>
      tpu.vector_store %arg6[%c0_819, %c768_820], %1070 {strides = array<i32>} : memref<16x1024xf32, #tpu.memory_space<vmem>>, vector<16x128xf32>,
    } else {
    }
    %c7_140 = arith.constant 7 : index
    %c3_141 = arith.constant 3 : index
    %210 = memref.load %arg1[%c7_140, %c3_141] : memref<8x12xi32, #tpu.memory_space<smem>>
    %c0_i32_142 = arith.constant 0 : i32
    %211 = arith.cmpi sgt, %210, %c0_i32_142 : i32
    %212 = arith.extui %211 : i1 to i32
    %c0_i32_143 = arith.constant 0 : i32
    %213 = arith.cmpi ne, %212, %c0_i32_143 : i32
    scf.if %213 {
      %c0_817 = arith.constant 0 : index
      %c896_818 = arith.constant 896 : index
      %1069 = vector.load %arg6[%c0_817, %c896_818] : memref<16x1024xf32, #tpu.memory_space<vmem>>, vector<16x128xf32>
      %1070 = arith.addf %1069, %181 : vector<16x128xf32>
      %c0_819 = arith.constant 0 : index
      %c896_820 = arith.constant 896 : index
      %1071 = vector.load %arg6[%c0_819, %c896_820] : memref<16x1024xf32, #tpu.memory_space<vmem>>, vector<16x128xf32>
      tpu.vector_store %arg6[%c0_819, %c896_820], %1070 {strides = array<i32>} : memref<16x1024xf32, #tpu.memory_space<vmem>>, vector<16x128xf32>,
    } else {
    }
    %214 = vector.extract_strided_slice %37 {offsets = [0, 512], sizes = [16, 128], strides = [1, 1]} : vector<16x1536xf32> to vector<16x128xf32>
    %215 = vector.extract_strided_slice %42 {offsets = [0, 512], sizes = [16, 128], strides = [1, 1]} : vector<16x1536xf32> to vector<16x128xf32>
    %216 = arith.subf %214, %215 : vector<16x128xf32>
    %c0_144 = arith.constant 0 : index
    %c4_145 = arith.constant 4 : index
    %217 = memref.load %arg1[%c0_144, %c4_145] : memref<8x12xi32, #tpu.memory_space<smem>>
    %c0_i32_146 = arith.constant 0 : i32
    %218 = arith.cmpi sgt, %217, %c0_i32_146 : i32
    %219 = arith.extui %218 : i1 to i32
    %c0_i32_147 = arith.constant 0 : i32
    %220 = arith.cmpi ne, %219, %c0_i32_147 : i32
    scf.if %220 {
      %c0_817 = arith.constant 0 : index
      %c0_818 = arith.constant 0 : index
      %1069 = vector.load %arg6[%c0_817, %c0_818] : memref<16x1024xf32, #tpu.memory_space<vmem>>, vector<16x128xf32>
      %1070 = arith.addf %1069, %216 : vector<16x128xf32>
      %c0_819 = arith.constant 0 : index
      %c0_820 = arith.constant 0 : index
      %1071 = vector.load %arg6[%c0_819, %c0_820] : memref<16x1024xf32, #tpu.memory_space<vmem>>, vector<16x128xf32>
      tpu.vector_store %arg6[%c0_819, %c0_820], %1070 {strides = array<i32>} : memref<16x1024xf32, #tpu.memory_space<vmem>>, vector<16x128xf32>,
    } else {
    }
    %c1_148 = arith.constant 1 : index
    %c4_149 = arith.constant 4 : index
    %221 = memref.load %arg1[%c1_148, %c4_149] : memref<8x12xi32, #tpu.memory_space<smem>>
    %c0_i32_150 = arith.constant 0 : i32
    %222 = arith.cmpi sgt, %221, %c0_i32_150 : i32
    %223 = arith.extui %222 : i1 to i32
    %c0_i32_151 = arith.constant 0 : i32
    %224 = arith.cmpi ne, %223, %c0_i32_151 : i32
    scf.if %224 {
      %c0_817 = arith.constant 0 : index
      %c128_818 = arith.constant 128 : index
      %1069 = vector.load %arg6[%c0_817, %c128_818] : memref<16x1024xf32, #tpu.memory_space<vmem>>, vector<16x128xf32>
      %1070 = arith.addf %1069, %216 : vector<16x128xf32>
      %c0_819 = arith.constant 0 : index
      %c128_820 = arith.constant 128 : index
      %1071 = vector.load %arg6[%c0_819, %c128_820] : memref<16x1024xf32, #tpu.memory_space<vmem>>, vector<16x128xf32>
      tpu.vector_store %arg6[%c0_819, %c128_820], %1070 {strides = array<i32>} : memref<16x1024xf32, #tpu.memory_space<vmem>>, vector<16x128xf32>,
    } else {
    }
    %c2_152 = arith.constant 2 : index
    %c4_153 = arith.constant 4 : index
    %225 = memref.load %arg1[%c2_152, %c4_153] : memref<8x12xi32, #tpu.memory_space<smem>>
    %c0_i32_154 = arith.constant 0 : i32
    %226 = arith.cmpi sgt, %225, %c0_i32_154 : i32
    %227 = arith.extui %226 : i1 to i32
    %c0_i32_155 = arith.constant 0 : i32
    %228 = arith.cmpi ne, %227, %c0_i32_155 : i32
    scf.if %228 {
      %c0_817 = arith.constant 0 : index
      %c256_818 = arith.constant 256 : index
      %1069 = vector.load %arg6[%c0_817, %c256_818] : memref<16x1024xf32, #tpu.memory_space<vmem>>, vector<16x128xf32>
      %1070 = arith.addf %1069, %216 : vector<16x128xf32>
      %c0_819 = arith.constant 0 : index
      %c256_820 = arith.constant 256 : index
      %1071 = vector.load %arg6[%c0_819, %c256_820] : memref<16x1024xf32, #tpu.memory_space<vmem>>, vector<16x128xf32>
      tpu.vector_store %arg6[%c0_819, %c256_820], %1070 {strides = array<i32>} : memref<16x1024xf32, #tpu.memory_space<vmem>>, vector<16x128xf32>,
    } else {
    }
    %c3_156 = arith.constant 3 : index
    %c4_157 = arith.constant 4 : index
    %229 = memref.load %arg1[%c3_156, %c4_157] : memref<8x12xi32, #tpu.memory_space<smem>>
    %c0_i32_158 = arith.constant 0 : i32
    %230 = arith.cmpi sgt, %229, %c0_i32_158 : i32
    %231 = arith.extui %230 : i1 to i32
    %c0_i32_159 = arith.constant 0 : i32
    %232 = arith.cmpi ne, %231, %c0_i32_159 : i32
    scf.if %232 {
      %c0_817 = arith.constant 0 : index
      %c384_818 = arith.constant 384 : index
      %1069 = vector.load %arg6[%c0_817, %c384_818] : memref<16x1024xf32, #tpu.memory_space<vmem>>, vector<16x128xf32>
      %1070 = arith.addf %1069, %216 : vector<16x128xf32>
      %c0_819 = arith.constant 0 : index
      %c384_820 = arith.constant 384 : index
      %1071 = vector.load %arg6[%c0_819, %c384_820] : memref<16x1024xf32, #tpu.memory_space<vmem>>, vector<16x128xf32>
      tpu.vector_store %arg6[%c0_819, %c384_820], %1070 {strides = array<i32>} : memref<16x1024xf32, #tpu.memory_space<vmem>>, vector<16x128xf32>,
    } else {
    }
    %c4_160 = arith.constant 4 : index
    %c4_161 = arith.constant 4 : index
    %233 = memref.load %arg1[%c4_160, %c4_161] : memref<8x12xi32, #tpu.memory_space<smem>>
    %c0_i32_162 = arith.constant 0 : i32
    %234 = arith.cmpi sgt, %233, %c0_i32_162 : i32
    %235 = arith.extui %234 : i1 to i32
    %c0_i32_163 = arith.constant 0 : i32
    %236 = arith.cmpi ne, %235, %c0_i32_163 : i32
    scf.if %236 {
      %c0_817 = arith.constant 0 : index
      %c512_818 = arith.constant 512 : index
      %1069 = vector.load %arg6[%c0_817, %c512_818] : memref<16x1024xf32, #tpu.memory_space<vmem>>, vector<16x128xf32>
      %1070 = arith.addf %1069, %216 : vector<16x128xf32>
      %c0_819 = arith.constant 0 : index
      %c512_820 = arith.constant 512 : index
      %1071 = vector.load %arg6[%c0_819, %c512_820] : memref<16x1024xf32, #tpu.memory_space<vmem>>, vector<16x128xf32>
      tpu.vector_store %arg6[%c0_819, %c512_820], %1070 {strides = array<i32>} : memref<16x1024xf32, #tpu.memory_space<vmem>>, vector<16x128xf32>,
    } else {
    }
    %c5_164 = arith.constant 5 : index
    %c4_165 = arith.constant 4 : index
    %237 = memref.load %arg1[%c5_164, %c4_165] : memref<8x12xi32, #tpu.memory_space<smem>>
    %c0_i32_166 = arith.constant 0 : i32
    %238 = arith.cmpi sgt, %237, %c0_i32_166 : i32
    %239 = arith.extui %238 : i1 to i32
    %c0_i32_167 = arith.constant 0 : i32
    %240 = arith.cmpi ne, %239, %c0_i32_167 : i32
    scf.if %240 {
      %c0_817 = arith.constant 0 : index
      %c640_818 = arith.constant 640 : index
      %1069 = vector.load %arg6[%c0_817, %c640_818] : memref<16x1024xf32, #tpu.memory_space<vmem>>, vector<16x128xf32>
      %1070 = arith.addf %1069, %216 : vector<16x128xf32>
      %c0_819 = arith.constant 0 : index
      %c640_820 = arith.constant 640 : index
      %1071 = vector.load %arg6[%c0_819, %c640_820] : memref<16x1024xf32, #tpu.memory_space<vmem>>, vector<16x128xf32>
      tpu.vector_store %arg6[%c0_819, %c640_820], %1070 {strides = array<i32>} : memref<16x1024xf32, #tpu.memory_space<vmem>>, vector<16x128xf32>,
    } else {
    }
    %c6_168 = arith.constant 6 : index
    %c4_169 = arith.constant 4 : index
    %241 = memref.load %arg1[%c6_168, %c4_169] : memref<8x12xi32, #tpu.memory_space<smem>>
    %c0_i32_170 = arith.constant 0 : i32
    %242 = arith.cmpi sgt, %241, %c0_i32_170 : i32
    %243 = arith.extui %242 : i1 to i32
    %c0_i32_171 = arith.constant 0 : i32
    %244 = arith.cmpi ne, %243, %c0_i32_171 : i32
    scf.if %244 {
      %c0_817 = arith.constant 0 : index
      %c768_818 = arith.constant 768 : index
      %1069 = vector.load %arg6[%c0_817, %c768_818] : memref<16x1024xf32, #tpu.memory_space<vmem>>, vector<16x128xf32>
      %1070 = arith.addf %1069, %216 : vector<16x128xf32>
      %c0_819 = arith.constant 0 : index
      %c768_820 = arith.constant 768 : index
      %1071 = vector.load %arg6[%c0_819, %c768_820] : memref<16x1024xf32, #tpu.memory_space<vmem>>, vector<16x128xf32>
      tpu.vector_store %arg6[%c0_819, %c768_820], %1070 {strides = array<i32>} : memref<16x1024xf32, #tpu.memory_space<vmem>>, vector<16x128xf32>,
    } else {
    }
    %c7_172 = arith.constant 7 : index
    %c4_173 = arith.constant 4 : index
    %245 = memref.load %arg1[%c7_172, %c4_173] : memref<8x12xi32, #tpu.memory_space<smem>>
    %c0_i32_174 = arith.constant 0 : i32
    %246 = arith.cmpi sgt, %245, %c0_i32_174 : i32
    %247 = arith.extui %246 : i1 to i32
    %c0_i32_175 = arith.constant 0 : i32
    %248 = arith.cmpi ne, %247, %c0_i32_175 : i32
    scf.if %248 {
      %c0_817 = arith.constant 0 : index
      %c896_818 = arith.constant 896 : index
      %1069 = vector.load %arg6[%c0_817, %c896_818] : memref<16x1024xf32, #tpu.memory_space<vmem>>, vector<16x128xf32>
      %1070 = arith.addf %1069, %216 : vector<16x128xf32>
      %c0_819 = arith.constant 0 : index
      %c896_820 = arith.constant 896 : index
      %1071 = vector.load %arg6[%c0_819, %c896_820] : memref<16x1024xf32, #tpu.memory_space<vmem>>, vector<16x128xf32>
      tpu.vector_store %arg6[%c0_819, %c896_820], %1070 {strides = array<i32>} : memref<16x1024xf32, #tpu.memory_space<vmem>>, vector<16x128xf32>,
    } else {
    }
    %249 = vector.extract_strided_slice %37 {offsets = [0, 640], sizes = [16, 128], strides = [1, 1]} : vector<16x1536xf32> to vector<16x128xf32>
    %250 = vector.extract_strided_slice %42 {offsets = [0, 640], sizes = [16, 128], strides = [1, 1]} : vector<16x1536xf32> to vector<16x128xf32>
    %251 = arith.subf %249, %250 : vector<16x128xf32>
    %c0_176 = arith.constant 0 : index
    %c5_177 = arith.constant 5 : index
    %252 = memref.load %arg1[%c0_176, %c5_177] : memref<8x12xi32, #tpu.memory_space<smem>>
    %c0_i32_178 = arith.constant 0 : i32
    %253 = arith.cmpi sgt, %252, %c0_i32_178 : i32
    %254 = arith.extui %253 : i1 to i32
    %c0_i32_179 = arith.constant 0 : i32
    %255 = arith.cmpi ne, %254, %c0_i32_179 : i32
    scf.if %255 {
      %c0_817 = arith.constant 0 : index
      %c0_818 = arith.constant 0 : index
      %1069 = vector.load %arg6[%c0_817, %c0_818] : memref<16x1024xf32, #tpu.memory_space<vmem>>, vector<16x128xf32>
      %1070 = arith.addf %1069, %251 : vector<16x128xf32>
      %c0_819 = arith.constant 0 : index
      %c0_820 = arith.constant 0 : index
      %1071 = vector.load %arg6[%c0_819, %c0_820] : memref<16x1024xf32, #tpu.memory_space<vmem>>, vector<16x128xf32>
      tpu.vector_store %arg6[%c0_819, %c0_820], %1070 {strides = array<i32>} : memref<16x1024xf32, #tpu.memory_space<vmem>>, vector<16x128xf32>,
    } else {
    }
    %c1_180 = arith.constant 1 : index
    %c5_181 = arith.constant 5 : index
    %256 = memref.load %arg1[%c1_180, %c5_181] : memref<8x12xi32, #tpu.memory_space<smem>>
    %c0_i32_182 = arith.constant 0 : i32
    %257 = arith.cmpi sgt, %256, %c0_i32_182 : i32
    %258 = arith.extui %257 : i1 to i32
    %c0_i32_183 = arith.constant 0 : i32
    %259 = arith.cmpi ne, %258, %c0_i32_183 : i32
    scf.if %259 {
      %c0_817 = arith.constant 0 : index
      %c128_818 = arith.constant 128 : index
      %1069 = vector.load %arg6[%c0_817, %c128_818] : memref<16x1024xf32, #tpu.memory_space<vmem>>, vector<16x128xf32>
      %1070 = arith.addf %1069, %251 : vector<16x128xf32>
      %c0_819 = arith.constant 0 : index
      %c128_820 = arith.constant 128 : index
      %1071 = vector.load %arg6[%c0_819, %c128_820] : memref<16x1024xf32, #tpu.memory_space<vmem>>, vector<16x128xf32>
      tpu.vector_store %arg6[%c0_819, %c128_820], %1070 {strides = array<i32>} : memref<16x1024xf32, #tpu.memory_space<vmem>>, vector<16x128xf32>,
    } else {
    }
    %c2_184 = arith.constant 2 : index
    %c5_185 = arith.constant 5 : index
    %260 = memref.load %arg1[%c2_184, %c5_185] : memref<8x12xi32, #tpu.memory_space<smem>>
    %c0_i32_186 = arith.constant 0 : i32
    %261 = arith.cmpi sgt, %260, %c0_i32_186 : i32
    %262 = arith.extui %261 : i1 to i32
    %c0_i32_187 = arith.constant 0 : i32
    %263 = arith.cmpi ne, %262, %c0_i32_187 : i32
    scf.if %263 {
      %c0_817 = arith.constant 0 : index
      %c256_818 = arith.constant 256 : index
      %1069 = vector.load %arg6[%c0_817, %c256_818] : memref<16x1024xf32, #tpu.memory_space<vmem>>, vector<16x128xf32>
      %1070 = arith.addf %1069, %251 : vector<16x128xf32>
      %c0_819 = arith.constant 0 : index
      %c256_820 = arith.constant 256 : index
      %1071 = vector.load %arg6[%c0_819, %c256_820] : memref<16x1024xf32, #tpu.memory_space<vmem>>, vector<16x128xf32>
      tpu.vector_store %arg6[%c0_819, %c256_820], %1070 {strides = array<i32>} : memref<16x1024xf32, #tpu.memory_space<vmem>>, vector<16x128xf32>,
    } else {
    }
    %c3_188 = arith.constant 3 : index
    %c5_189 = arith.constant 5 : index
    %264 = memref.load %arg1[%c3_188, %c5_189] : memref<8x12xi32, #tpu.memory_space<smem>>
    %c0_i32_190 = arith.constant 0 : i32
    %265 = arith.cmpi sgt, %264, %c0_i32_190 : i32
    %266 = arith.extui %265 : i1 to i32
    %c0_i32_191 = arith.constant 0 : i32
    %267 = arith.cmpi ne, %266, %c0_i32_191 : i32
    scf.if %267 {
      %c0_817 = arith.constant 0 : index
      %c384_818 = arith.constant 384 : index
      %1069 = vector.load %arg6[%c0_817, %c384_818] : memref<16x1024xf32, #tpu.memory_space<vmem>>, vector<16x128xf32>
      %1070 = arith.addf %1069, %251 : vector<16x128xf32>
      %c0_819 = arith.constant 0 : index
      %c384_820 = arith.constant 384 : index
      %1071 = vector.load %arg6[%c0_819, %c384_820] : memref<16x1024xf32, #tpu.memory_space<vmem>>, vector<16x128xf32>
      tpu.vector_store %arg6[%c0_819, %c384_820], %1070 {strides = array<i32>} : memref<16x1024xf32, #tpu.memory_space<vmem>>, vector<16x128xf32>,
    } else {
    }
    %c4_192 = arith.constant 4 : index
    %c5_193 = arith.constant 5 : index
    %268 = memref.load %arg1[%c4_192, %c5_193] : memref<8x12xi32, #tpu.memory_space<smem>>
    %c0_i32_194 = arith.constant 0 : i32
    %269 = arith.cmpi sgt, %268, %c0_i32_194 : i32
    %270 = arith.extui %269 : i1 to i32
    %c0_i32_195 = arith.constant 0 : i32
    %271 = arith.cmpi ne, %270, %c0_i32_195 : i32
    scf.if %271 {
      %c0_817 = arith.constant 0 : index
      %c512_818 = arith.constant 512 : index
      %1069 = vector.load %arg6[%c0_817, %c512_818] : memref<16x1024xf32, #tpu.memory_space<vmem>>, vector<16x128xf32>
      %1070 = arith.addf %1069, %251 : vector<16x128xf32>
      %c0_819 = arith.constant 0 : index
      %c512_820 = arith.constant 512 : index
      %1071 = vector.load %arg6[%c0_819, %c512_820] : memref<16x1024xf32, #tpu.memory_space<vmem>>, vector<16x128xf32>
      tpu.vector_store %arg6[%c0_819, %c512_820], %1070 {strides = array<i32>} : memref<16x1024xf32, #tpu.memory_space<vmem>>, vector<16x128xf32>,
    } else {
    }
    %c5_196 = arith.constant 5 : index
    %c5_197 = arith.constant 5 : index
    %272 = memref.load %arg1[%c5_196, %c5_197] : memref<8x12xi32, #tpu.memory_space<smem>>
    %c0_i32_198 = arith.constant 0 : i32
    %273 = arith.cmpi sgt, %272, %c0_i32_198 : i32
    %274 = arith.extui %273 : i1 to i32
    %c0_i32_199 = arith.constant 0 : i32
    %275 = arith.cmpi ne, %274, %c0_i32_199 : i32
    scf.if %275 {
      %c0_817 = arith.constant 0 : index
      %c640_818 = arith.constant 640 : index
      %1069 = vector.load %arg6[%c0_817, %c640_818] : memref<16x1024xf32, #tpu.memory_space<vmem>>, vector<16x128xf32>
      %1070 = arith.addf %1069, %251 : vector<16x128xf32>
      %c0_819 = arith.constant 0 : index
      %c640_820 = arith.constant 640 : index
      %1071 = vector.load %arg6[%c0_819, %c640_820] : memref<16x1024xf32, #tpu.memory_space<vmem>>, vector<16x128xf32>
      tpu.vector_store %arg6[%c0_819, %c640_820], %1070 {strides = array<i32>} : memref<16x1024xf32, #tpu.memory_space<vmem>>, vector<16x128xf32>,
    } else {
    }
    %c6_200 = arith.constant 6 : index
    %c5_201 = arith.constant 5 : index
    %276 = memref.load %arg1[%c6_200, %c5_201] : memref<8x12xi32, #tpu.memory_space<smem>>
    %c0_i32_202 = arith.constant 0 : i32
    %277 = arith.cmpi sgt, %276, %c0_i32_202 : i32
    %278 = arith.extui %277 : i1 to i32
    %c0_i32_203 = arith.constant 0 : i32
    %279 = arith.cmpi ne, %278, %c0_i32_203 : i32
    scf.if %279 {
      %c0_817 = arith.constant 0 : index
      %c768_818 = arith.constant 768 : index
      %1069 = vector.load %arg6[%c0_817, %c768_818] : memref<16x1024xf32, #tpu.memory_space<vmem>>, vector<16x128xf32>
      %1070 = arith.addf %1069, %251 : vector<16x128xf32>
      %c0_819 = arith.constant 0 : index
      %c768_820 = arith.constant 768 : index
      %1071 = vector.load %arg6[%c0_819, %c768_820] : memref<16x1024xf32, #tpu.memory_space<vmem>>, vector<16x128xf32>
      tpu.vector_store %arg6[%c0_819, %c768_820], %1070 {strides = array<i32>} : memref<16x1024xf32, #tpu.memory_space<vmem>>, vector<16x128xf32>,
    } else {
    }
    %c7_204 = arith.constant 7 : index
    %c5_205 = arith.constant 5 : index
    %280 = memref.load %arg1[%c7_204, %c5_205] : memref<8x12xi32, #tpu.memory_space<smem>>
    %c0_i32_206 = arith.constant 0 : i32
    %281 = arith.cmpi sgt, %280, %c0_i32_206 : i32
    %282 = arith.extui %281 : i1 to i32
    %c0_i32_207 = arith.constant 0 : i32
    %283 = arith.cmpi ne, %282, %c0_i32_207 : i32
    scf.if %283 {
      %c0_817 = arith.constant 0 : index
      %c896_818 = arith.constant 896 : index
      %1069 = vector.load %arg6[%c0_817, %c896_818] : memref<16x1024xf32, #tpu.memory_space<vmem>>, vector<16x128xf32>
      %1070 = arith.addf %1069, %251 : vector<16x128xf32>
      %c0_819 = arith.constant 0 : index
      %c896_820 = arith.constant 896 : index
      %1071 = vector.load %arg6[%c0_819, %c896_820] : memref<16x1024xf32, #tpu.memory_space<vmem>>, vector<16x128xf32>
      tpu.vector_store %arg6[%c0_819, %c896_820], %1070 {strides = array<i32>} : memref<16x1024xf32, #tpu.memory_space<vmem>>, vector<16x128xf32>,
    } else {
    }
    %284 = vector.extract_strided_slice %37 {offsets = [0, 768], sizes = [16, 128], strides = [1, 1]} : vector<16x1536xf32> to vector<16x128xf32>
    %285 = vector.extract_strided_slice %42 {offsets = [0, 768], sizes = [16, 128], strides = [1, 1]} : vector<16x1536xf32> to vector<16x128xf32>
    %286 = arith.subf %284, %285 : vector<16x128xf32>
    %c0_208 = arith.constant 0 : index
    %c6_209 = arith.constant 6 : index
    %287 = memref.load %arg1[%c0_208, %c6_209] : memref<8x12xi32, #tpu.memory_space<smem>>
    %c0_i32_210 = arith.constant 0 : i32
    %288 = arith.cmpi sgt, %287, %c0_i32_210 : i32
    %289 = arith.extui %288 : i1 to i32
    %c0_i32_211 = arith.constant 0 : i32
    %290 = arith.cmpi ne, %289, %c0_i32_211 : i32
    scf.if %290 {
      %c0_817 = arith.constant 0 : index
      %c0_818 = arith.constant 0 : index
      %1069 = vector.load %arg6[%c0_817, %c0_818] : memref<16x1024xf32, #tpu.memory_space<vmem>>, vector<16x128xf32>
      %1070 = arith.addf %1069, %286 : vector<16x128xf32>
      %c0_819 = arith.constant 0 : index
      %c0_820 = arith.constant 0 : index
      %1071 = vector.load %arg6[%c0_819, %c0_820] : memref<16x1024xf32, #tpu.memory_space<vmem>>, vector<16x128xf32>
      tpu.vector_store %arg6[%c0_819, %c0_820], %1070 {strides = array<i32>} : memref<16x1024xf32, #tpu.memory_space<vmem>>, vector<16x128xf32>,
    } else {
    }
    %c1_212 = arith.constant 1 : index
    %c6_213 = arith.constant 6 : index
    %291 = memref.load %arg1[%c1_212, %c6_213] : memref<8x12xi32, #tpu.memory_space<smem>>
    %c0_i32_214 = arith.constant 0 : i32
    %292 = arith.cmpi sgt, %291, %c0_i32_214 : i32
    %293 = arith.extui %292 : i1 to i32
    %c0_i32_215 = arith.constant 0 : i32
    %294 = arith.cmpi ne, %293, %c0_i32_215 : i32
    scf.if %294 {
      %c0_817 = arith.constant 0 : index
      %c128_818 = arith.constant 128 : index
      %1069 = vector.load %arg6[%c0_817, %c128_818] : memref<16x1024xf32, #tpu.memory_space<vmem>>, vector<16x128xf32>
      %1070 = arith.addf %1069, %286 : vector<16x128xf32>
      %c0_819 = arith.constant 0 : index
      %c128_820 = arith.constant 128 : index
      %1071 = vector.load %arg6[%c0_819, %c128_820] : memref<16x1024xf32, #tpu.memory_space<vmem>>, vector<16x128xf32>
      tpu.vector_store %arg6[%c0_819, %c128_820], %1070 {strides = array<i32>} : memref<16x1024xf32, #tpu.memory_space<vmem>>, vector<16x128xf32>,
    } else {
    }
    %c2_216 = arith.constant 2 : index
    %c6_217 = arith.constant 6 : index
    %295 = memref.load %arg1[%c2_216, %c6_217] : memref<8x12xi32, #tpu.memory_space<smem>>
    %c0_i32_218 = arith.constant 0 : i32
    %296 = arith.cmpi sgt, %295, %c0_i32_218 : i32
    %297 = arith.extui %296 : i1 to i32
    %c0_i32_219 = arith.constant 0 : i32
    %298 = arith.cmpi ne, %297, %c0_i32_219 : i32
    scf.if %298 {
      %c0_817 = arith.constant 0 : index
      %c256_818 = arith.constant 256 : index
      %1069 = vector.load %arg6[%c0_817, %c256_818] : memref<16x1024xf32, #tpu.memory_space<vmem>>, vector<16x128xf32>
      %1070 = arith.addf %1069, %286 : vector<16x128xf32>
      %c0_819 = arith.constant 0 : index
      %c256_820 = arith.constant 256 : index
      %1071 = vector.load %arg6[%c0_819, %c256_820] : memref<16x1024xf32, #tpu.memory_space<vmem>>, vector<16x128xf32>
      tpu.vector_store %arg6[%c0_819, %c256_820], %1070 {strides = array<i32>} : memref<16x1024xf32, #tpu.memory_space<vmem>>, vector<16x128xf32>,
    } else {
    }
    %c3_220 = arith.constant 3 : index
    %c6_221 = arith.constant 6 : index
    %299 = memref.load %arg1[%c3_220, %c6_221] : memref<8x12xi32, #tpu.memory_space<smem>>
    %c0_i32_222 = arith.constant 0 : i32
    %300 = arith.cmpi sgt, %299, %c0_i32_222 : i32
    %301 = arith.extui %300 : i1 to i32
    %c0_i32_223 = arith.constant 0 : i32
    %302 = arith.cmpi ne, %301, %c0_i32_223 : i32
    scf.if %302 {
      %c0_817 = arith.constant 0 : index
      %c384_818 = arith.constant 384 : index
      %1069 = vector.load %arg6[%c0_817, %c384_818] : memref<16x1024xf32, #tpu.memory_space<vmem>>, vector<16x128xf32>
      %1070 = arith.addf %1069, %286 : vector<16x128xf32>
      %c0_819 = arith.constant 0 : index
      %c384_820 = arith.constant 384 : index
      %1071 = vector.load %arg6[%c0_819, %c384_820] : memref<16x1024xf32, #tpu.memory_space<vmem>>, vector<16x128xf32>
      tpu.vector_store %arg6[%c0_819, %c384_820], %1070 {strides = array<i32>} : memref<16x1024xf32, #tpu.memory_space<vmem>>, vector<16x128xf32>,
    } else {
    }
    %c4_224 = arith.constant 4 : index
    %c6_225 = arith.constant 6 : index
    %303 = memref.load %arg1[%c4_224, %c6_225] : memref<8x12xi32, #tpu.memory_space<smem>>
    %c0_i32_226 = arith.constant 0 : i32
    %304 = arith.cmpi sgt, %303, %c0_i32_226 : i32
    %305 = arith.extui %304 : i1 to i32
    %c0_i32_227 = arith.constant 0 : i32
    %306 = arith.cmpi ne, %305, %c0_i32_227 : i32
    scf.if %306 {
      %c0_817 = arith.constant 0 : index
      %c512_818 = arith.constant 512 : index
      %1069 = vector.load %arg6[%c0_817, %c512_818] : memref<16x1024xf32, #tpu.memory_space<vmem>>, vector<16x128xf32>
      %1070 = arith.addf %1069, %286 : vector<16x128xf32>
      %c0_819 = arith.constant 0 : index
      %c512_820 = arith.constant 512 : index
      %1071 = vector.load %arg6[%c0_819, %c512_820] : memref<16x1024xf32, #tpu.memory_space<vmem>>, vector<16x128xf32>
      tpu.vector_store %arg6[%c0_819, %c512_820], %1070 {strides = array<i32>} : memref<16x1024xf32, #tpu.memory_space<vmem>>, vector<16x128xf32>,
    } else {
    }
    %c5_228 = arith.constant 5 : index
    %c6_229 = arith.constant 6 : index
    %307 = memref.load %arg1[%c5_228, %c6_229] : memref<8x12xi32, #tpu.memory_space<smem>>
    %c0_i32_230 = arith.constant 0 : i32
    %308 = arith.cmpi sgt, %307, %c0_i32_230 : i32
    %309 = arith.extui %308 : i1 to i32
    %c0_i32_231 = arith.constant 0 : i32
    %310 = arith.cmpi ne, %309, %c0_i32_231 : i32
    scf.if %310 {
      %c0_817 = arith.constant 0 : index
      %c640_818 = arith.constant 640 : index
      %1069 = vector.load %arg6[%c0_817, %c640_818] : memref<16x1024xf32, #tpu.memory_space<vmem>>, vector<16x128xf32>
      %1070 = arith.addf %1069, %286 : vector<16x128xf32>
      %c0_819 = arith.constant 0 : index
      %c640_820 = arith.constant 640 : index
      %1071 = vector.load %arg6[%c0_819, %c640_820] : memref<16x1024xf32, #tpu.memory_space<vmem>>, vector<16x128xf32>
      tpu.vector_store %arg6[%c0_819, %c640_820], %1070 {strides = array<i32>} : memref<16x1024xf32, #tpu.memory_space<vmem>>, vector<16x128xf32>,
    } else {
    }
    %c6_232 = arith.constant 6 : index
    %c6_233 = arith.constant 6 : index
    %311 = memref.load %arg1[%c6_232, %c6_233] : memref<8x12xi32, #tpu.memory_space<smem>>
    %c0_i32_234 = arith.constant 0 : i32
    %312 = arith.cmpi sgt, %311, %c0_i32_234 : i32
    %313 = arith.extui %312 : i1 to i32
    %c0_i32_235 = arith.constant 0 : i32
    %314 = arith.cmpi ne, %313, %c0_i32_235 : i32
    scf.if %314 {
      %c0_817 = arith.constant 0 : index
      %c768_818 = arith.constant 768 : index
      %1069 = vector.load %arg6[%c0_817, %c768_818] : memref<16x1024xf32, #tpu.memory_space<vmem>>, vector<16x128xf32>
      %1070 = arith.addf %1069, %286 : vector<16x128xf32>
      %c0_819 = arith.constant 0 : index
      %c768_820 = arith.constant 768 : index
      %1071 = vector.load %arg6[%c0_819, %c768_820] : memref<16x1024xf32, #tpu.memory_space<vmem>>, vector<16x128xf32>
      tpu.vector_store %arg6[%c0_819, %c768_820], %1070 {strides = array<i32>} : memref<16x1024xf32, #tpu.memory_space<vmem>>, vector<16x128xf32>,
    } else {
    }
    %c7_236 = arith.constant 7 : index
    %c6_237 = arith.constant 6 : index
    %315 = memref.load %arg1[%c7_236, %c6_237] : memref<8x12xi32, #tpu.memory_space<smem>>
    %c0_i32_238 = arith.constant 0 : i32
    %316 = arith.cmpi sgt, %315, %c0_i32_238 : i32
    %317 = arith.extui %316 : i1 to i32
    %c0_i32_239 = arith.constant 0 : i32
    %318 = arith.cmpi ne, %317, %c0_i32_239 : i32
    scf.if %318 {
      %c0_817 = arith.constant 0 : index
      %c896_818 = arith.constant 896 : index
      %1069 = vector.load %arg6[%c0_817, %c896_818] : memref<16x1024xf32, #tpu.memory_space<vmem>>, vector<16x128xf32>
      %1070 = arith.addf %1069, %286 : vector<16x128xf32>
      %c0_819 = arith.constant 0 : index
      %c896_820 = arith.constant 896 : index
      %1071 = vector.load %arg6[%c0_819, %c896_820] : memref<16x1024xf32, #tpu.memory_space<vmem>>, vector<16x128xf32>
      tpu.vector_store %arg6[%c0_819, %c896_820], %1070 {strides = array<i32>} : memref<16x1024xf32, #tpu.memory_space<vmem>>, vector<16x128xf32>,
    } else {
    }
    %319 = vector.extract_strided_slice %37 {offsets = [0, 896], sizes = [16, 128], strides = [1, 1]} : vector<16x1536xf32> to vector<16x128xf32>
    %320 = vector.extract_strided_slice %42 {offsets = [0, 896], sizes = [16, 128], strides = [1, 1]} : vector<16x1536xf32> to vector<16x128xf32>
    %321 = arith.subf %319, %320 : vector<16x128xf32>
    %c0_240 = arith.constant 0 : index
    %c7_241 = arith.constant 7 : index
    %322 = memref.load %arg1[%c0_240, %c7_241] : memref<8x12xi32, #tpu.memory_space<smem>>
    %c0_i32_242 = arith.constant 0 : i32
    %323 = arith.cmpi sgt, %322, %c0_i32_242 : i32
    %324 = arith.extui %323 : i1 to i32
    %c0_i32_243 = arith.constant 0 : i32
    %325 = arith.cmpi ne, %324, %c0_i32_243 : i32
    scf.if %325 {
      %c0_817 = arith.constant 0 : index
      %c0_818 = arith.constant 0 : index
      %1069 = vector.load %arg6[%c0_817, %c0_818] : memref<16x1024xf32, #tpu.memory_space<vmem>>, vector<16x128xf32>
      %1070 = arith.addf %1069, %321 : vector<16x128xf32>
      %c0_819 = arith.constant 0 : index
      %c0_820 = arith.constant 0 : index
      %1071 = vector.load %arg6[%c0_819, %c0_820] : memref<16x1024xf32, #tpu.memory_space<vmem>>, vector<16x128xf32>
      tpu.vector_store %arg6[%c0_819, %c0_820], %1070 {strides = array<i32>} : memref<16x1024xf32, #tpu.memory_space<vmem>>, vector<16x128xf32>,
    } else {
    }
    %c1_244 = arith.constant 1 : index
    %c7_245 = arith.constant 7 : index
    %326 = memref.load %arg1[%c1_244, %c7_245] : memref<8x12xi32, #tpu.memory_space<smem>>
    %c0_i32_246 = arith.constant 0 : i32
    %327 = arith.cmpi sgt, %326, %c0_i32_246 : i32
    %328 = arith.extui %327 : i1 to i32
    %c0_i32_247 = arith.constant 0 : i32
    %329 = arith.cmpi ne, %328, %c0_i32_247 : i32
    scf.if %329 {
      %c0_817 = arith.constant 0 : index
      %c128_818 = arith.constant 128 : index
      %1069 = vector.load %arg6[%c0_817, %c128_818] : memref<16x1024xf32, #tpu.memory_space<vmem>>, vector<16x128xf32>
      %1070 = arith.addf %1069, %321 : vector<16x128xf32>
      %c0_819 = arith.constant 0 : index
      %c128_820 = arith.constant 128 : index
      %1071 = vector.load %arg6[%c0_819, %c128_820] : memref<16x1024xf32, #tpu.memory_space<vmem>>, vector<16x128xf32>
      tpu.vector_store %arg6[%c0_819, %c128_820], %1070 {strides = array<i32>} : memref<16x1024xf32, #tpu.memory_space<vmem>>, vector<16x128xf32>,
    } else {
    }
    %c2_248 = arith.constant 2 : index
    %c7_249 = arith.constant 7 : index
    %330 = memref.load %arg1[%c2_248, %c7_249] : memref<8x12xi32, #tpu.memory_space<smem>>
    %c0_i32_250 = arith.constant 0 : i32
    %331 = arith.cmpi sgt, %330, %c0_i32_250 : i32
    %332 = arith.extui %331 : i1 to i32
    %c0_i32_251 = arith.constant 0 : i32
    %333 = arith.cmpi ne, %332, %c0_i32_251 : i32
    scf.if %333 {
      %c0_817 = arith.constant 0 : index
      %c256_818 = arith.constant 256 : index
      %1069 = vector.load %arg6[%c0_817, %c256_818] : memref<16x1024xf32, #tpu.memory_space<vmem>>, vector<16x128xf32>
      %1070 = arith.addf %1069, %321 : vector<16x128xf32>
      %c0_819 = arith.constant 0 : index
      %c256_820 = arith.constant 256 : index
      %1071 = vector.load %arg6[%c0_819, %c256_820] : memref<16x1024xf32, #tpu.memory_space<vmem>>, vector<16x128xf32>
      tpu.vector_store %arg6[%c0_819, %c256_820], %1070 {strides = array<i32>} : memref<16x1024xf32, #tpu.memory_space<vmem>>, vector<16x128xf32>,
    } else {
    }
    %c3_252 = arith.constant 3 : index
    %c7_253 = arith.constant 7 : index
    %334 = memref.load %arg1[%c3_252, %c7_253] : memref<8x12xi32, #tpu.memory_space<smem>>
    %c0_i32_254 = arith.constant 0 : i32
    %335 = arith.cmpi sgt, %334, %c0_i32_254 : i32
    %336 = arith.extui %335 : i1 to i32
    %c0_i32_255 = arith.constant 0 : i32
    %337 = arith.cmpi ne, %336, %c0_i32_255 : i32
    scf.if %337 {
      %c0_817 = arith.constant 0 : index
      %c384_818 = arith.constant 384 : index
      %1069 = vector.load %arg6[%c0_817, %c384_818] : memref<16x1024xf32, #tpu.memory_space<vmem>>, vector<16x128xf32>
      %1070 = arith.addf %1069, %321 : vector<16x128xf32>
      %c0_819 = arith.constant 0 : index
      %c384_820 = arith.constant 384 : index
      %1071 = vector.load %arg6[%c0_819, %c384_820] : memref<16x1024xf32, #tpu.memory_space<vmem>>, vector<16x128xf32>
      tpu.vector_store %arg6[%c0_819, %c384_820], %1070 {strides = array<i32>} : memref<16x1024xf32, #tpu.memory_space<vmem>>, vector<16x128xf32>,
    } else {
    }
    %c4_256 = arith.constant 4 : index
    %c7_257 = arith.constant 7 : index
    %338 = memref.load %arg1[%c4_256, %c7_257] : memref<8x12xi32, #tpu.memory_space<smem>>
    %c0_i32_258 = arith.constant 0 : i32
    %339 = arith.cmpi sgt, %338, %c0_i32_258 : i32
    %340 = arith.extui %339 : i1 to i32
    %c0_i32_259 = arith.constant 0 : i32
    %341 = arith.cmpi ne, %340, %c0_i32_259 : i32
    scf.if %341 {
      %c0_817 = arith.constant 0 : index
      %c512_818 = arith.constant 512 : index
      %1069 = vector.load %arg6[%c0_817, %c512_818] : memref<16x1024xf32, #tpu.memory_space<vmem>>, vector<16x128xf32>
      %1070 = arith.addf %1069, %321 : vector<16x128xf32>
      %c0_819 = arith.constant 0 : index
      %c512_820 = arith.constant 512 : index
      %1071 = vector.load %arg6[%c0_819, %c512_820] : memref<16x1024xf32, #tpu.memory_space<vmem>>, vector<16x128xf32>
      tpu.vector_store %arg6[%c0_819, %c512_820], %1070 {strides = array<i32>} : memref<16x1024xf32, #tpu.memory_space<vmem>>, vector<16x128xf32>,
    } else {
    }
    %c5_260 = arith.constant 5 : index
    %c7_261 = arith.constant 7 : index
    %342 = memref.load %arg1[%c5_260, %c7_261] : memref<8x12xi32, #tpu.memory_space<smem>>
    %c0_i32_262 = arith.constant 0 : i32
    %343 = arith.cmpi sgt, %342, %c0_i32_262 : i32
    %344 = arith.extui %343 : i1 to i32
    %c0_i32_263 = arith.constant 0 : i32
    %345 = arith.cmpi ne, %344, %c0_i32_263 : i32
    scf.if %345 {
      %c0_817 = arith.constant 0 : index
      %c640_818 = arith.constant 640 : index
      %1069 = vector.load %arg6[%c0_817, %c640_818] : memref<16x1024xf32, #tpu.memory_space<vmem>>, vector<16x128xf32>
      %1070 = arith.addf %1069, %321 : vector<16x128xf32>
      %c0_819 = arith.constant 0 : index
      %c640_820 = arith.constant 640 : index
      %1071 = vector.load %arg6[%c0_819, %c640_820] : memref<16x1024xf32, #tpu.memory_space<vmem>>, vector<16x128xf32>
      tpu.vector_store %arg6[%c0_819, %c640_820], %1070 {strides = array<i32>} : memref<16x1024xf32, #tpu.memory_space<vmem>>, vector<16x128xf32>,
    } else {
    }
    %c6_264 = arith.constant 6 : index
    %c7_265 = arith.constant 7 : index
    %346 = memref.load %arg1[%c6_264, %c7_265] : memref<8x12xi32, #tpu.memory_space<smem>>
    %c0_i32_266 = arith.constant 0 : i32
    %347 = arith.cmpi sgt, %346, %c0_i32_266 : i32
    %348 = arith.extui %347 : i1 to i32
    %c0_i32_267 = arith.constant 0 : i32
    %349 = arith.cmpi ne, %348, %c0_i32_267 : i32
    scf.if %349 {
      %c0_817 = arith.constant 0 : index
      %c768_818 = arith.constant 768 : index
      %1069 = vector.load %arg6[%c0_817, %c768_818] : memref<16x1024xf32, #tpu.memory_space<vmem>>, vector<16x128xf32>
      %1070 = arith.addf %1069, %321 : vector<16x128xf32>
      %c0_819 = arith.constant 0 : index
      %c768_820 = arith.constant 768 : index
      %1071 = vector.load %arg6[%c0_819, %c768_820] : memref<16x1024xf32, #tpu.memory_space<vmem>>, vector<16x128xf32>
      tpu.vector_store %arg6[%c0_819, %c768_820], %1070 {strides = array<i32>} : memref<16x1024xf32, #tpu.memory_space<vmem>>, vector<16x128xf32>,
    } else {
    }
    %c7_268 = arith.constant 7 : index
    %c7_269 = arith.constant 7 : index
    %350 = memref.load %arg1[%c7_268, %c7_269] : memref<8x12xi32, #tpu.memory_space<smem>>
    %c0_i32_270 = arith.constant 0 : i32
    %351 = arith.cmpi sgt, %350, %c0_i32_270 : i32
    %352 = arith.extui %351 : i1 to i32
    %c0_i32_271 = arith.constant 0 : i32
    %353 = arith.cmpi ne, %352, %c0_i32_271 : i32
    scf.if %353 {
      %c0_817 = arith.constant 0 : index
      %c896_818 = arith.constant 896 : index
      %1069 = vector.load %arg6[%c0_817, %c896_818] : memref<16x1024xf32, #tpu.memory_space<vmem>>, vector<16x128xf32>
      %1070 = arith.addf %1069, %321 : vector<16x128xf32>
      %c0_819 = arith.constant 0 : index
      %c896_820 = arith.constant 896 : index
      %1071 = vector.load %arg6[%c0_819, %c896_820] : memref<16x1024xf32, #tpu.memory_space<vmem>>, vector<16x128xf32>
      tpu.vector_store %arg6[%c0_819, %c896_820], %1070 {strides = array<i32>} : memref<16x1024xf32, #tpu.memory_space<vmem>>, vector<16x128xf32>,
    } else {
    }
    %354 = vector.extract_strided_slice %37 {offsets = [0, 1024], sizes = [16, 128], strides = [1, 1]} : vector<16x1536xf32> to vector<16x128xf32>
    %355 = vector.extract_strided_slice %42 {offsets = [0, 1024], sizes = [16, 128], strides = [1, 1]} : vector<16x1536xf32> to vector<16x128xf32>
    %356 = arith.subf %354, %355 : vector<16x128xf32>
    %c0_272 = arith.constant 0 : index
    %c8_273 = arith.constant 8 : index
    %357 = memref.load %arg1[%c0_272, %c8_273] : memref<8x12xi32, #tpu.memory_space<smem>>
    %c0_i32_274 = arith.constant 0 : i32
    %358 = arith.cmpi sgt, %357, %c0_i32_274 : i32
    %359 = arith.extui %358 : i1 to i32
    %c0_i32_275 = arith.constant 0 : i32
    %360 = arith.cmpi ne, %359, %c0_i32_275 : i32
    scf.if %360 {
      %c0_817 = arith.constant 0 : index
      %c0_818 = arith.constant 0 : index
      %1069 = vector.load %arg6[%c0_817, %c0_818] : memref<16x1024xf32, #tpu.memory_space<vmem>>, vector<16x128xf32>
      %1070 = arith.addf %1069, %356 : vector<16x128xf32>
      %c0_819 = arith.constant 0 : index
      %c0_820 = arith.constant 0 : index
      %1071 = vector.load %arg6[%c0_819, %c0_820] : memref<16x1024xf32, #tpu.memory_space<vmem>>, vector<16x128xf32>
      tpu.vector_store %arg6[%c0_819, %c0_820], %1070 {strides = array<i32>} : memref<16x1024xf32, #tpu.memory_space<vmem>>, vector<16x128xf32>,
    } else {
    }
    %c1_276 = arith.constant 1 : index
    %c8_277 = arith.constant 8 : index
    %361 = memref.load %arg1[%c1_276, %c8_277] : memref<8x12xi32, #tpu.memory_space<smem>>
    %c0_i32_278 = arith.constant 0 : i32
    %362 = arith.cmpi sgt, %361, %c0_i32_278 : i32
    %363 = arith.extui %362 : i1 to i32
    %c0_i32_279 = arith.constant 0 : i32
    %364 = arith.cmpi ne, %363, %c0_i32_279 : i32
    scf.if %364 {
      %c0_817 = arith.constant 0 : index
      %c128_818 = arith.constant 128 : index
      %1069 = vector.load %arg6[%c0_817, %c128_818] : memref<16x1024xf32, #tpu.memory_space<vmem>>, vector<16x128xf32>
      %1070 = arith.addf %1069, %356 : vector<16x128xf32>
      %c0_819 = arith.constant 0 : index
      %c128_820 = arith.constant 128 : index
      %1071 = vector.load %arg6[%c0_819, %c128_820] : memref<16x1024xf32, #tpu.memory_space<vmem>>, vector<16x128xf32>
      tpu.vector_store %arg6[%c0_819, %c128_820], %1070 {strides = array<i32>} : memref<16x1024xf32, #tpu.memory_space<vmem>>, vector<16x128xf32>,
    } else {
    }
    %c2_280 = arith.constant 2 : index
    %c8_281 = arith.constant 8 : index
    %365 = memref.load %arg1[%c2_280, %c8_281] : memref<8x12xi32, #tpu.memory_space<smem>>
    %c0_i32_282 = arith.constant 0 : i32
    %366 = arith.cmpi sgt, %365, %c0_i32_282 : i32
    %367 = arith.extui %366 : i1 to i32
    %c0_i32_283 = arith.constant 0 : i32
    %368 = arith.cmpi ne, %367, %c0_i32_283 : i32
    scf.if %368 {
      %c0_817 = arith.constant 0 : index
      %c256_818 = arith.constant 256 : index
      %1069 = vector.load %arg6[%c0_817, %c256_818] : memref<16x1024xf32, #tpu.memory_space<vmem>>, vector<16x128xf32>
      %1070 = arith.addf %1069, %356 : vector<16x128xf32>
      %c0_819 = arith.constant 0 : index
      %c256_820 = arith.constant 256 : index
      %1071 = vector.load %arg6[%c0_819, %c256_820] : memref<16x1024xf32, #tpu.memory_space<vmem>>, vector<16x128xf32>
      tpu.vector_store %arg6[%c0_819, %c256_820], %1070 {strides = array<i32>} : memref<16x1024xf32, #tpu.memory_space<vmem>>, vector<16x128xf32>,
    } else {
    }
    %c3_284 = arith.constant 3 : index
    %c8_285 = arith.constant 8 : index
    %369 = memref.load %arg1[%c3_284, %c8_285] : memref<8x12xi32, #tpu.memory_space<smem>>
    %c0_i32_286 = arith.constant 0 : i32
    %370 = arith.cmpi sgt, %369, %c0_i32_286 : i32
    %371 = arith.extui %370 : i1 to i32
    %c0_i32_287 = arith.constant 0 : i32
    %372 = arith.cmpi ne, %371, %c0_i32_287 : i32
    scf.if %372 {
      %c0_817 = arith.constant 0 : index
      %c384_818 = arith.constant 384 : index
      %1069 = vector.load %arg6[%c0_817, %c384_818] : memref<16x1024xf32, #tpu.memory_space<vmem>>, vector<16x128xf32>
      %1070 = arith.addf %1069, %356 : vector<16x128xf32>
      %c0_819 = arith.constant 0 : index
      %c384_820 = arith.constant 384 : index
      %1071 = vector.load %arg6[%c0_819, %c384_820] : memref<16x1024xf32, #tpu.memory_space<vmem>>, vector<16x128xf32>
      tpu.vector_store %arg6[%c0_819, %c384_820], %1070 {strides = array<i32>} : memref<16x1024xf32, #tpu.memory_space<vmem>>, vector<16x128xf32>,
    } else {
    }
    %c4_288 = arith.constant 4 : index
    %c8_289 = arith.constant 8 : index
    %373 = memref.load %arg1[%c4_288, %c8_289] : memref<8x12xi32, #tpu.memory_space<smem>>
    %c0_i32_290 = arith.constant 0 : i32
    %374 = arith.cmpi sgt, %373, %c0_i32_290 : i32
    %375 = arith.extui %374 : i1 to i32
    %c0_i32_291 = arith.constant 0 : i32
    %376 = arith.cmpi ne, %375, %c0_i32_291 : i32
    scf.if %376 {
      %c0_817 = arith.constant 0 : index
      %c512_818 = arith.constant 512 : index
      %1069 = vector.load %arg6[%c0_817, %c512_818] : memref<16x1024xf32, #tpu.memory_space<vmem>>, vector<16x128xf32>
      %1070 = arith.addf %1069, %356 : vector<16x128xf32>
      %c0_819 = arith.constant 0 : index
      %c512_820 = arith.constant 512 : index
      %1071 = vector.load %arg6[%c0_819, %c512_820] : memref<16x1024xf32, #tpu.memory_space<vmem>>, vector<16x128xf32>
      tpu.vector_store %arg6[%c0_819, %c512_820], %1070 {strides = array<i32>} : memref<16x1024xf32, #tpu.memory_space<vmem>>, vector<16x128xf32>,
    } else {
    }
    %c5_292 = arith.constant 5 : index
    %c8_293 = arith.constant 8 : index
    %377 = memref.load %arg1[%c5_292, %c8_293] : memref<8x12xi32, #tpu.memory_space<smem>>
    %c0_i32_294 = arith.constant 0 : i32
    %378 = arith.cmpi sgt, %377, %c0_i32_294 : i32
    %379 = arith.extui %378 : i1 to i32
    %c0_i32_295 = arith.constant 0 : i32
    %380 = arith.cmpi ne, %379, %c0_i32_295 : i32
    scf.if %380 {
      %c0_817 = arith.constant 0 : index
      %c640_818 = arith.constant 640 : index
      %1069 = vector.load %arg6[%c0_817, %c640_818] : memref<16x1024xf32, #tpu.memory_space<vmem>>, vector<16x128xf32>
      %1070 = arith.addf %1069, %356 : vector<16x128xf32>
      %c0_819 = arith.constant 0 : index
      %c640_820 = arith.constant 640 : index
      %1071 = vector.load %arg6[%c0_819, %c640_820] : memref<16x1024xf32, #tpu.memory_space<vmem>>, vector<16x128xf32>
      tpu.vector_store %arg6[%c0_819, %c640_820], %1070 {strides = array<i32>} : memref<16x1024xf32, #tpu.memory_space<vmem>>, vector<16x128xf32>,
    } else {
    }
    %c6_296 = arith.constant 6 : index
    %c8_297 = arith.constant 8 : index
    %381 = memref.load %arg1[%c6_296, %c8_297] : memref<8x12xi32, #tpu.memory_space<smem>>
    %c0_i32_298 = arith.constant 0 : i32
    %382 = arith.cmpi sgt, %381, %c0_i32_298 : i32
    %383 = arith.extui %382 : i1 to i32
    %c0_i32_299 = arith.constant 0 : i32
    %384 = arith.cmpi ne, %383, %c0_i32_299 : i32
    scf.if %384 {
      %c0_817 = arith.constant 0 : index
      %c768_818 = arith.constant 768 : index
      %1069 = vector.load %arg6[%c0_817, %c768_818] : memref<16x1024xf32, #tpu.memory_space<vmem>>, vector<16x128xf32>
      %1070 = arith.addf %1069, %356 : vector<16x128xf32>
      %c0_819 = arith.constant 0 : index
      %c768_820 = arith.constant 768 : index
      %1071 = vector.load %arg6[%c0_819, %c768_820] : memref<16x1024xf32, #tpu.memory_space<vmem>>, vector<16x128xf32>
      tpu.vector_store %arg6[%c0_819, %c768_820], %1070 {strides = array<i32>} : memref<16x1024xf32, #tpu.memory_space<vmem>>, vector<16x128xf32>,
    } else {
    }
    %c7_300 = arith.constant 7 : index
    %c8_301 = arith.constant 8 : index
    %385 = memref.load %arg1[%c7_300, %c8_301] : memref<8x12xi32, #tpu.memory_space<smem>>
    %c0_i32_302 = arith.constant 0 : i32
    %386 = arith.cmpi sgt, %385, %c0_i32_302 : i32
    %387 = arith.extui %386 : i1 to i32
    %c0_i32_303 = arith.constant 0 : i32
    %388 = arith.cmpi ne, %387, %c0_i32_303 : i32
    scf.if %388 {
      %c0_817 = arith.constant 0 : index
      %c896_818 = arith.constant 896 : index
      %1069 = vector.load %arg6[%c0_817, %c896_818] : memref<16x1024xf32, #tpu.memory_space<vmem>>, vector<16x128xf32>
      %1070 = arith.addf %1069, %356 : vector<16x128xf32>
      %c0_819 = arith.constant 0 : index
      %c896_820 = arith.constant 896 : index
      %1071 = vector.load %arg6[%c0_819, %c896_820] : memref<16x1024xf32, #tpu.memory_space<vmem>>, vector<16x128xf32>
      tpu.vector_store %arg6[%c0_819, %c896_820], %1070 {strides = array<i32>} : memref<16x1024xf32, #tpu.memory_space<vmem>>, vector<16x128xf32>,
    } else {
    }
    %389 = vector.extract_strided_slice %37 {offsets = [0, 1152], sizes = [16, 128], strides = [1, 1]} : vector<16x1536xf32> to vector<16x128xf32>
    %390 = vector.extract_strided_slice %42 {offsets = [0, 1152], sizes = [16, 128], strides = [1, 1]} : vector<16x1536xf32> to vector<16x128xf32>
    %391 = arith.subf %389, %390 : vector<16x128xf32>
    %c0_304 = arith.constant 0 : index
    %c9 = arith.constant 9 : index
    %392 = memref.load %arg1[%c0_304, %c9] : memref<8x12xi32, #tpu.memory_space<smem>>
    %c0_i32_305 = arith.constant 0 : i32
    %393 = arith.cmpi sgt, %392, %c0_i32_305 : i32
    %394 = arith.extui %393 : i1 to i32
    %c0_i32_306 = arith.constant 0 : i32
    %395 = arith.cmpi ne, %394, %c0_i32_306 : i32
    scf.if %395 {
      %c0_817 = arith.constant 0 : index
      %c0_818 = arith.constant 0 : index
      %1069 = vector.load %arg6[%c0_817, %c0_818] : memref<16x1024xf32, #tpu.memory_space<vmem>>, vector<16x128xf32>
      %1070 = arith.addf %1069, %391 : vector<16x128xf32>
      %c0_819 = arith.constant 0 : index
      %c0_820 = arith.constant 0 : index
      %1071 = vector.load %arg6[%c0_819, %c0_820] : memref<16x1024xf32, #tpu.memory_space<vmem>>, vector<16x128xf32>
      tpu.vector_store %arg6[%c0_819, %c0_820], %1070 {strides = array<i32>} : memref<16x1024xf32, #tpu.memory_space<vmem>>, vector<16x128xf32>,
    } else {
    }
    %c1_307 = arith.constant 1 : index
    %c9_308 = arith.constant 9 : index
    %396 = memref.load %arg1[%c1_307, %c9_308] : memref<8x12xi32, #tpu.memory_space<smem>>
    %c0_i32_309 = arith.constant 0 : i32
    %397 = arith.cmpi sgt, %396, %c0_i32_309 : i32
    %398 = arith.extui %397 : i1 to i32
    %c0_i32_310 = arith.constant 0 : i32
    %399 = arith.cmpi ne, %398, %c0_i32_310 : i32
    scf.if %399 {
      %c0_817 = arith.constant 0 : index
      %c128_818 = arith.constant 128 : index
      %1069 = vector.load %arg6[%c0_817, %c128_818] : memref<16x1024xf32, #tpu.memory_space<vmem>>, vector<16x128xf32>
      %1070 = arith.addf %1069, %391 : vector<16x128xf32>
      %c0_819 = arith.constant 0 : index
      %c128_820 = arith.constant 128 : index
      %1071 = vector.load %arg6[%c0_819, %c128_820] : memref<16x1024xf32, #tpu.memory_space<vmem>>, vector<16x128xf32>
      tpu.vector_store %arg6[%c0_819, %c128_820], %1070 {strides = array<i32>} : memref<16x1024xf32, #tpu.memory_space<vmem>>, vector<16x128xf32>,
    } else {
    }
    %c2_311 = arith.constant 2 : index
    %c9_312 = arith.constant 9 : index
    %400 = memref.load %arg1[%c2_311, %c9_312] : memref<8x12xi32, #tpu.memory_space<smem>>
    %c0_i32_313 = arith.constant 0 : i32
    %401 = arith.cmpi sgt, %400, %c0_i32_313 : i32
    %402 = arith.extui %401 : i1 to i32
    %c0_i32_314 = arith.constant 0 : i32
    %403 = arith.cmpi ne, %402, %c0_i32_314 : i32
    scf.if %403 {
      %c0_817 = arith.constant 0 : index
      %c256_818 = arith.constant 256 : index
      %1069 = vector.load %arg6[%c0_817, %c256_818] : memref<16x1024xf32, #tpu.memory_space<vmem>>, vector<16x128xf32>
      %1070 = arith.addf %1069, %391 : vector<16x128xf32>
      %c0_819 = arith.constant 0 : index
      %c256_820 = arith.constant 256 : index
      %1071 = vector.load %arg6[%c0_819, %c256_820] : memref<16x1024xf32, #tpu.memory_space<vmem>>, vector<16x128xf32>
      tpu.vector_store %arg6[%c0_819, %c256_820], %1070 {strides = array<i32>} : memref<16x1024xf32, #tpu.memory_space<vmem>>, vector<16x128xf32>,
    } else {
    }
    %c3_315 = arith.constant 3 : index
    %c9_316 = arith.constant 9 : index
    %404 = memref.load %arg1[%c3_315, %c9_316] : memref<8x12xi32, #tpu.memory_space<smem>>
    %c0_i32_317 = arith.constant 0 : i32
    %405 = arith.cmpi sgt, %404, %c0_i32_317 : i32
    %406 = arith.extui %405 : i1 to i32
    %c0_i32_318 = arith.constant 0 : i32
    %407 = arith.cmpi ne, %406, %c0_i32_318 : i32
    scf.if %407 {
      %c0_817 = arith.constant 0 : index
      %c384_818 = arith.constant 384 : index
      %1069 = vector.load %arg6[%c0_817, %c384_818] : memref<16x1024xf32, #tpu.memory_space<vmem>>, vector<16x128xf32>
      %1070 = arith.addf %1069, %391 : vector<16x128xf32>
      %c0_819 = arith.constant 0 : index
      %c384_820 = arith.constant 384 : index
      %1071 = vector.load %arg6[%c0_819, %c384_820] : memref<16x1024xf32, #tpu.memory_space<vmem>>, vector<16x128xf32>
      tpu.vector_store %arg6[%c0_819, %c384_820], %1070 {strides = array<i32>} : memref<16x1024xf32, #tpu.memory_space<vmem>>, vector<16x128xf32>,
    } else {
    }
    %c4_319 = arith.constant 4 : index
    %c9_320 = arith.constant 9 : index
    %408 = memref.load %arg1[%c4_319, %c9_320] : memref<8x12xi32, #tpu.memory_space<smem>>
    %c0_i32_321 = arith.constant 0 : i32
    %409 = arith.cmpi sgt, %408, %c0_i32_321 : i32
    %410 = arith.extui %409 : i1 to i32
    %c0_i32_322 = arith.constant 0 : i32
    %411 = arith.cmpi ne, %410, %c0_i32_322 : i32
    scf.if %411 {
      %c0_817 = arith.constant 0 : index
      %c512_818 = arith.constant 512 : index
      %1069 = vector.load %arg6[%c0_817, %c512_818] : memref<16x1024xf32, #tpu.memory_space<vmem>>, vector<16x128xf32>
      %1070 = arith.addf %1069, %391 : vector<16x128xf32>
      %c0_819 = arith.constant 0 : index
      %c512_820 = arith.constant 512 : index
      %1071 = vector.load %arg6[%c0_819, %c512_820] : memref<16x1024xf32, #tpu.memory_space<vmem>>, vector<16x128xf32>
      tpu.vector_store %arg6[%c0_819, %c512_820], %1070 {strides = array<i32>} : memref<16x1024xf32, #tpu.memory_space<vmem>>, vector<16x128xf32>,
    } else {
    }
    %c5_323 = arith.constant 5 : index
    %c9_324 = arith.constant 9 : index
    %412 = memref.load %arg1[%c5_323, %c9_324] : memref<8x12xi32, #tpu.memory_space<smem>>
    %c0_i32_325 = arith.constant 0 : i32
    %413 = arith.cmpi sgt, %412, %c0_i32_325 : i32
    %414 = arith.extui %413 : i1 to i32
    %c0_i32_326 = arith.constant 0 : i32
    %415 = arith.cmpi ne, %414, %c0_i32_326 : i32
    scf.if %415 {
      %c0_817 = arith.constant 0 : index
      %c640_818 = arith.constant 640 : index
      %1069 = vector.load %arg6[%c0_817, %c640_818] : memref<16x1024xf32, #tpu.memory_space<vmem>>, vector<16x128xf32>
      %1070 = arith.addf %1069, %391 : vector<16x128xf32>
      %c0_819 = arith.constant 0 : index
      %c640_820 = arith.constant 640 : index
      %1071 = vector.load %arg6[%c0_819, %c640_820] : memref<16x1024xf32, #tpu.memory_space<vmem>>, vector<16x128xf32>
      tpu.vector_store %arg6[%c0_819, %c640_820], %1070 {strides = array<i32>} : memref<16x1024xf32, #tpu.memory_space<vmem>>, vector<16x128xf32>,
    } else {
    }
    %c6_327 = arith.constant 6 : index
    %c9_328 = arith.constant 9 : index
    %416 = memref.load %arg1[%c6_327, %c9_328] : memref<8x12xi32, #tpu.memory_space<smem>>
    %c0_i32_329 = arith.constant 0 : i32
    %417 = arith.cmpi sgt, %416, %c0_i32_329 : i32
    %418 = arith.extui %417 : i1 to i32
    %c0_i32_330 = arith.constant 0 : i32
    %419 = arith.cmpi ne, %418, %c0_i32_330 : i32
    scf.if %419 {
      %c0_817 = arith.constant 0 : index
      %c768_818 = arith.constant 768 : index
      %1069 = vector.load %arg6[%c0_817, %c768_818] : memref<16x1024xf32, #tpu.memory_space<vmem>>, vector<16x128xf32>
      %1070 = arith.addf %1069, %391 : vector<16x128xf32>
      %c0_819 = arith.constant 0 : index
      %c768_820 = arith.constant 768 : index
      %1071 = vector.load %arg6[%c0_819, %c768_820] : memref<16x1024xf32, #tpu.memory_space<vmem>>, vector<16x128xf32>
      tpu.vector_store %arg6[%c0_819, %c768_820], %1070 {strides = array<i32>} : memref<16x1024xf32, #tpu.memory_space<vmem>>, vector<16x128xf32>,
    } else {
    }
    %c7_331 = arith.constant 7 : index
    %c9_332 = arith.constant 9 : index
    %420 = memref.load %arg1[%c7_331, %c9_332] : memref<8x12xi32, #tpu.memory_space<smem>>
    %c0_i32_333 = arith.constant 0 : i32
    %421 = arith.cmpi sgt, %420, %c0_i32_333 : i32
    %422 = arith.extui %421 : i1 to i32
    %c0_i32_334 = arith.constant 0 : i32
    %423 = arith.cmpi ne, %422, %c0_i32_334 : i32
    scf.if %423 {
      %c0_817 = arith.constant 0 : index
      %c896_818 = arith.constant 896 : index
      %1069 = vector.load %arg6[%c0_817, %c896_818] : memref<16x1024xf32, #tpu.memory_space<vmem>>, vector<16x128xf32>
      %1070 = arith.addf %1069, %391 : vector<16x128xf32>
      %c0_819 = arith.constant 0 : index
      %c896_820 = arith.constant 896 : index
      %1071 = vector.load %arg6[%c0_819, %c896_820] : memref<16x1024xf32, #tpu.memory_space<vmem>>, vector<16x128xf32>
      tpu.vector_store %arg6[%c0_819, %c896_820], %1070 {strides = array<i32>} : memref<16x1024xf32, #tpu.memory_space<vmem>>, vector<16x128xf32>,
    } else {
    }
    %424 = vector.extract_strided_slice %37 {offsets = [0, 1280], sizes = [16, 128], strides = [1, 1]} : vector<16x1536xf32> to vector<16x128xf32>
    %425 = vector.extract_strided_slice %42 {offsets = [0, 1280], sizes = [16, 128], strides = [1, 1]} : vector<16x1536xf32> to vector<16x128xf32>
    %426 = arith.subf %424, %425 : vector<16x128xf32>
    %c0_335 = arith.constant 0 : index
    %c10 = arith.constant 10 : index
    %427 = memref.load %arg1[%c0_335, %c10] : memref<8x12xi32, #tpu.memory_space<smem>>
    %c0_i32_336 = arith.constant 0 : i32
    %428 = arith.cmpi sgt, %427, %c0_i32_336 : i32
    %429 = arith.extui %428 : i1 to i32
    %c0_i32_337 = arith.constant 0 : i32
    %430 = arith.cmpi ne, %429, %c0_i32_337 : i32
    scf.if %430 {
      %c0_817 = arith.constant 0 : index
      %c0_818 = arith.constant 0 : index
      %1069 = vector.load %arg6[%c0_817, %c0_818] : memref<16x1024xf32, #tpu.memory_space<vmem>>, vector<16x128xf32>
      %1070 = arith.addf %1069, %426 : vector<16x128xf32>
      %c0_819 = arith.constant 0 : index
      %c0_820 = arith.constant 0 : index
      %1071 = vector.load %arg6[%c0_819, %c0_820] : memref<16x1024xf32, #tpu.memory_space<vmem>>, vector<16x128xf32>
      tpu.vector_store %arg6[%c0_819, %c0_820], %1070 {strides = array<i32>} : memref<16x1024xf32, #tpu.memory_space<vmem>>, vector<16x128xf32>,
    } else {
    }
    %c1_338 = arith.constant 1 : index
    %c10_339 = arith.constant 10 : index
    %431 = memref.load %arg1[%c1_338, %c10_339] : memref<8x12xi32, #tpu.memory_space<smem>>
    %c0_i32_340 = arith.constant 0 : i32
    %432 = arith.cmpi sgt, %431, %c0_i32_340 : i32
    %433 = arith.extui %432 : i1 to i32
    %c0_i32_341 = arith.constant 0 : i32
    %434 = arith.cmpi ne, %433, %c0_i32_341 : i32
    scf.if %434 {
      %c0_817 = arith.constant 0 : index
      %c128_818 = arith.constant 128 : index
      %1069 = vector.load %arg6[%c0_817, %c128_818] : memref<16x1024xf32, #tpu.memory_space<vmem>>, vector<16x128xf32>
      %1070 = arith.addf %1069, %426 : vector<16x128xf32>
      %c0_819 = arith.constant 0 : index
      %c128_820 = arith.constant 128 : index
      %1071 = vector.load %arg6[%c0_819, %c128_820] : memref<16x1024xf32, #tpu.memory_space<vmem>>, vector<16x128xf32>
      tpu.vector_store %arg6[%c0_819, %c128_820], %1070 {strides = array<i32>} : memref<16x1024xf32, #tpu.memory_space<vmem>>, vector<16x128xf32>,
    } else {
    }
    %c2_342 = arith.constant 2 : index
    %c10_343 = arith.constant 10 : index
    %435 = memref.load %arg1[%c2_342, %c10_343] : memref<8x12xi32, #tpu.memory_space<smem>>
    %c0_i32_344 = arith.constant 0 : i32
    %436 = arith.cmpi sgt, %435, %c0_i32_344 : i32
    %437 = arith.extui %436 : i1 to i32
    %c0_i32_345 = arith.constant 0 : i32
    %438 = arith.cmpi ne, %437, %c0_i32_345 : i32
    scf.if %438 {
      %c0_817 = arith.constant 0 : index
      %c256_818 = arith.constant 256 : index
      %1069 = vector.load %arg6[%c0_817, %c256_818] : memref<16x1024xf32, #tpu.memory_space<vmem>>, vector<16x128xf32>
      %1070 = arith.addf %1069, %426 : vector<16x128xf32>
      %c0_819 = arith.constant 0 : index
      %c256_820 = arith.constant 256 : index
      %1071 = vector.load %arg6[%c0_819, %c256_820] : memref<16x1024xf32, #tpu.memory_space<vmem>>, vector<16x128xf32>
      tpu.vector_store %arg6[%c0_819, %c256_820], %1070 {strides = array<i32>} : memref<16x1024xf32, #tpu.memory_space<vmem>>, vector<16x128xf32>,
    } else {
    }
    %c3_346 = arith.constant 3 : index
    %c10_347 = arith.constant 10 : index
    %439 = memref.load %arg1[%c3_346, %c10_347] : memref<8x12xi32, #tpu.memory_space<smem>>
    %c0_i32_348 = arith.constant 0 : i32
    %440 = arith.cmpi sgt, %439, %c0_i32_348 : i32
    %441 = arith.extui %440 : i1 to i32
    %c0_i32_349 = arith.constant 0 : i32
    %442 = arith.cmpi ne, %441, %c0_i32_349 : i32
    scf.if %442 {
      %c0_817 = arith.constant 0 : index
      %c384_818 = arith.constant 384 : index
      %1069 = vector.load %arg6[%c0_817, %c384_818] : memref<16x1024xf32, #tpu.memory_space<vmem>>, vector<16x128xf32>
      %1070 = arith.addf %1069, %426 : vector<16x128xf32>
      %c0_819 = arith.constant 0 : index
      %c384_820 = arith.constant 384 : index
      %1071 = vector.load %arg6[%c0_819, %c384_820] : memref<16x1024xf32, #tpu.memory_space<vmem>>, vector<16x128xf32>
      tpu.vector_store %arg6[%c0_819, %c384_820], %1070 {strides = array<i32>} : memref<16x1024xf32, #tpu.memory_space<vmem>>, vector<16x128xf32>,
    } else {
    }
    %c4_350 = arith.constant 4 : index
    %c10_351 = arith.constant 10 : index
    %443 = memref.load %arg1[%c4_350, %c10_351] : memref<8x12xi32, #tpu.memory_space<smem>>
    %c0_i32_352 = arith.constant 0 : i32
    %444 = arith.cmpi sgt, %443, %c0_i32_352 : i32
    %445 = arith.extui %444 : i1 to i32
    %c0_i32_353 = arith.constant 0 : i32
    %446 = arith.cmpi ne, %445, %c0_i32_353 : i32
    scf.if %446 {
      %c0_817 = arith.constant 0 : index
      %c512_818 = arith.constant 512 : index
      %1069 = vector.load %arg6[%c0_817, %c512_818] : memref<16x1024xf32, #tpu.memory_space<vmem>>, vector<16x128xf32>
      %1070 = arith.addf %1069, %426 : vector<16x128xf32>
      %c0_819 = arith.constant 0 : index
      %c512_820 = arith.constant 512 : index
      %1071 = vector.load %arg6[%c0_819, %c512_820] : memref<16x1024xf32, #tpu.memory_space<vmem>>, vector<16x128xf32>
      tpu.vector_store %arg6[%c0_819, %c512_820], %1070 {strides = array<i32>} : memref<16x1024xf32, #tpu.memory_space<vmem>>, vector<16x128xf32>,
    } else {
    }
    %c5_354 = arith.constant 5 : index
    %c10_355 = arith.constant 10 : index
    %447 = memref.load %arg1[%c5_354, %c10_355] : memref<8x12xi32, #tpu.memory_space<smem>>
    %c0_i32_356 = arith.constant 0 : i32
    %448 = arith.cmpi sgt, %447, %c0_i32_356 : i32
    %449 = arith.extui %448 : i1 to i32
    %c0_i32_357 = arith.constant 0 : i32
    %450 = arith.cmpi ne, %449, %c0_i32_357 : i32
    scf.if %450 {
      %c0_817 = arith.constant 0 : index
      %c640_818 = arith.constant 640 : index
      %1069 = vector.load %arg6[%c0_817, %c640_818] : memref<16x1024xf32, #tpu.memory_space<vmem>>, vector<16x128xf32>
      %1070 = arith.addf %1069, %426 : vector<16x128xf32>
      %c0_819 = arith.constant 0 : index
      %c640_820 = arith.constant 640 : index
      %1071 = vector.load %arg6[%c0_819, %c640_820] : memref<16x1024xf32, #tpu.memory_space<vmem>>, vector<16x128xf32>
      tpu.vector_store %arg6[%c0_819, %c640_820], %1070 {strides = array<i32>} : memref<16x1024xf32, #tpu.memory_space<vmem>>, vector<16x128xf32>,
    } else {
    }
    %c6_358 = arith.constant 6 : index
    %c10_359 = arith.constant 10 : index
    %451 = memref.load %arg1[%c6_358, %c10_359] : memref<8x12xi32, #tpu.memory_space<smem>>
    %c0_i32_360 = arith.constant 0 : i32
    %452 = arith.cmpi sgt, %451, %c0_i32_360 : i32
    %453 = arith.extui %452 : i1 to i32
    %c0_i32_361 = arith.constant 0 : i32
    %454 = arith.cmpi ne, %453, %c0_i32_361 : i32
    scf.if %454 {
      %c0_817 = arith.constant 0 : index
      %c768_818 = arith.constant 768 : index
      %1069 = vector.load %arg6[%c0_817, %c768_818] : memref<16x1024xf32, #tpu.memory_space<vmem>>, vector<16x128xf32>
      %1070 = arith.addf %1069, %426 : vector<16x128xf32>
      %c0_819 = arith.constant 0 : index
      %c768_820 = arith.constant 768 : index
      %1071 = vector.load %arg6[%c0_819, %c768_820] : memref<16x1024xf32, #tpu.memory_space<vmem>>, vector<16x128xf32>
      tpu.vector_store %arg6[%c0_819, %c768_820], %1070 {strides = array<i32>} : memref<16x1024xf32, #tpu.memory_space<vmem>>, vector<16x128xf32>,
    } else {
    }
    %c7_362 = arith.constant 7 : index
    %c10_363 = arith.constant 10 : index
    %455 = memref.load %arg1[%c7_362, %c10_363] : memref<8x12xi32, #tpu.memory_space<smem>>
    %c0_i32_364 = arith.constant 0 : i32
    %456 = arith.cmpi sgt, %455, %c0_i32_364 : i32
    %457 = arith.extui %456 : i1 to i32
    %c0_i32_365 = arith.constant 0 : i32
    %458 = arith.cmpi ne, %457, %c0_i32_365 : i32
    scf.if %458 {
      %c0_817 = arith.constant 0 : index
      %c896_818 = arith.constant 896 : index
      %1069 = vector.load %arg6[%c0_817, %c896_818] : memref<16x1024xf32, #tpu.memory_space<vmem>>, vector<16x128xf32>
      %1070 = arith.addf %1069, %426 : vector<16x128xf32>
      %c0_819 = arith.constant 0 : index
      %c896_820 = arith.constant 896 : index
      %1071 = vector.load %arg6[%c0_819, %c896_820] : memref<16x1024xf32, #tpu.memory_space<vmem>>, vector<16x128xf32>
      tpu.vector_store %arg6[%c0_819, %c896_820], %1070 {strides = array<i32>} : memref<16x1024xf32, #tpu.memory_space<vmem>>, vector<16x128xf32>,
    } else {
    }
    %459 = vector.extract_strided_slice %37 {offsets = [0, 1408], sizes = [16, 128], strides = [1, 1]} : vector<16x1536xf32> to vector<16x128xf32>
    %460 = vector.extract_strided_slice %42 {offsets = [0, 1408], sizes = [16, 128], strides = [1, 1]} : vector<16x1536xf32> to vector<16x128xf32>
    %461 = arith.subf %459, %460 : vector<16x128xf32>
    %c0_366 = arith.constant 0 : index
    %c11 = arith.constant 11 : index
    %462 = memref.load %arg1[%c0_366, %c11] : memref<8x12xi32, #tpu.memory_space<smem>>
    %c0_i32_367 = arith.constant 0 : i32
    %463 = arith.cmpi sgt, %462, %c0_i32_367 : i32
    %464 = arith.extui %463 : i1 to i32
    %c0_i32_368 = arith.constant 0 : i32
    %465 = arith.cmpi ne, %464, %c0_i32_368 : i32
    scf.if %465 {
      %c0_817 = arith.constant 0 : index
      %c0_818 = arith.constant 0 : index
      %1069 = vector.load %arg6[%c0_817, %c0_818] : memref<16x1024xf32, #tpu.memory_space<vmem>>, vector<16x128xf32>
      %1070 = arith.addf %1069, %461 : vector<16x128xf32>
      %c0_819 = arith.constant 0 : index
      %c0_820 = arith.constant 0 : index
      %1071 = vector.load %arg6[%c0_819, %c0_820] : memref<16x1024xf32, #tpu.memory_space<vmem>>, vector<16x128xf32>
      tpu.vector_store %arg6[%c0_819, %c0_820], %1070 {strides = array<i32>} : memref<16x1024xf32, #tpu.memory_space<vmem>>, vector<16x128xf32>,
    } else {
    }
    %c1_369 = arith.constant 1 : index
    %c11_370 = arith.constant 11 : index
    %466 = memref.load %arg1[%c1_369, %c11_370] : memref<8x12xi32, #tpu.memory_space<smem>>
    %c0_i32_371 = arith.constant 0 : i32
    %467 = arith.cmpi sgt, %466, %c0_i32_371 : i32
    %468 = arith.extui %467 : i1 to i32
    %c0_i32_372 = arith.constant 0 : i32
    %469 = arith.cmpi ne, %468, %c0_i32_372 : i32
    scf.if %469 {
      %c0_817 = arith.constant 0 : index
      %c128_818 = arith.constant 128 : index
      %1069 = vector.load %arg6[%c0_817, %c128_818] : memref<16x1024xf32, #tpu.memory_space<vmem>>, vector<16x128xf32>
      %1070 = arith.addf %1069, %461 : vector<16x128xf32>
      %c0_819 = arith.constant 0 : index
      %c128_820 = arith.constant 128 : index
      %1071 = vector.load %arg6[%c0_819, %c128_820] : memref<16x1024xf32, #tpu.memory_space<vmem>>, vector<16x128xf32>
      tpu.vector_store %arg6[%c0_819, %c128_820], %1070 {strides = array<i32>} : memref<16x1024xf32, #tpu.memory_space<vmem>>, vector<16x128xf32>,
    } else {
    }
    %c2_373 = arith.constant 2 : index
    %c11_374 = arith.constant 11 : index
    %470 = memref.load %arg1[%c2_373, %c11_374] : memref<8x12xi32, #tpu.memory_space<smem>>
    %c0_i32_375 = arith.constant 0 : i32
    %471 = arith.cmpi sgt, %470, %c0_i32_375 : i32
    %472 = arith.extui %471 : i1 to i32
    %c0_i32_376 = arith.constant 0 : i32
    %473 = arith.cmpi ne, %472, %c0_i32_376 : i32
    scf.if %473 {
      %c0_817 = arith.constant 0 : index
      %c256_818 = arith.constant 256 : index
      %1069 = vector.load %arg6[%c0_817, %c256_818] : memref<16x1024xf32, #tpu.memory_space<vmem>>, vector<16x128xf32>
      %1070 = arith.addf %1069, %461 : vector<16x128xf32>
      %c0_819 = arith.constant 0 : index
      %c256_820 = arith.constant 256 : index
      %1071 = vector.load %arg6[%c0_819, %c256_820] : memref<16x1024xf32, #tpu.memory_space<vmem>>, vector<16x128xf32>
      tpu.vector_store %arg6[%c0_819, %c256_820], %1070 {strides = array<i32>} : memref<16x1024xf32, #tpu.memory_space<vmem>>, vector<16x128xf32>,
    } else {
    }
    %c3_377 = arith.constant 3 : index
    %c11_378 = arith.constant 11 : index
    %474 = memref.load %arg1[%c3_377, %c11_378] : memref<8x12xi32, #tpu.memory_space<smem>>
    %c0_i32_379 = arith.constant 0 : i32
    %475 = arith.cmpi sgt, %474, %c0_i32_379 : i32
    %476 = arith.extui %475 : i1 to i32
    %c0_i32_380 = arith.constant 0 : i32
    %477 = arith.cmpi ne, %476, %c0_i32_380 : i32
    scf.if %477 {
      %c0_817 = arith.constant 0 : index
      %c384_818 = arith.constant 384 : index
      %1069 = vector.load %arg6[%c0_817, %c384_818] : memref<16x1024xf32, #tpu.memory_space<vmem>>, vector<16x128xf32>
      %1070 = arith.addf %1069, %461 : vector<16x128xf32>
      %c0_819 = arith.constant 0 : index
      %c384_820 = arith.constant 384 : index
      %1071 = vector.load %arg6[%c0_819, %c384_820] : memref<16x1024xf32, #tpu.memory_space<vmem>>, vector<16x128xf32>
      tpu.vector_store %arg6[%c0_819, %c384_820], %1070 {strides = array<i32>} : memref<16x1024xf32, #tpu.memory_space<vmem>>, vector<16x128xf32>,
    } else {
    }
    %c4_381 = arith.constant 4 : index
    %c11_382 = arith.constant 11 : index
    %478 = memref.load %arg1[%c4_381, %c11_382] : memref<8x12xi32, #tpu.memory_space<smem>>
    %c0_i32_383 = arith.constant 0 : i32
    %479 = arith.cmpi sgt, %478, %c0_i32_383 : i32
    %480 = arith.extui %479 : i1 to i32
    %c0_i32_384 = arith.constant 0 : i32
    %481 = arith.cmpi ne, %480, %c0_i32_384 : i32
    scf.if %481 {
      %c0_817 = arith.constant 0 : index
      %c512_818 = arith.constant 512 : index
      %1069 = vector.load %arg6[%c0_817, %c512_818] : memref<16x1024xf32, #tpu.memory_space<vmem>>, vector<16x128xf32>
      %1070 = arith.addf %1069, %461 : vector<16x128xf32>
      %c0_819 = arith.constant 0 : index
      %c512_820 = arith.constant 512 : index
      %1071 = vector.load %arg6[%c0_819, %c512_820] : memref<16x1024xf32, #tpu.memory_space<vmem>>, vector<16x128xf32>
      tpu.vector_store %arg6[%c0_819, %c512_820], %1070 {strides = array<i32>} : memref<16x1024xf32, #tpu.memory_space<vmem>>, vector<16x128xf32>,
    } else {
    }
    %c5_385 = arith.constant 5 : index
    %c11_386 = arith.constant 11 : index
    %482 = memref.load %arg1[%c5_385, %c11_386] : memref<8x12xi32, #tpu.memory_space<smem>>
    %c0_i32_387 = arith.constant 0 : i32
    %483 = arith.cmpi sgt, %482, %c0_i32_387 : i32
    %484 = arith.extui %483 : i1 to i32
    %c0_i32_388 = arith.constant 0 : i32
    %485 = arith.cmpi ne, %484, %c0_i32_388 : i32
    scf.if %485 {
      %c0_817 = arith.constant 0 : index
      %c640_818 = arith.constant 640 : index
      %1069 = vector.load %arg6[%c0_817, %c640_818] : memref<16x1024xf32, #tpu.memory_space<vmem>>, vector<16x128xf32>
      %1070 = arith.addf %1069, %461 : vector<16x128xf32>
      %c0_819 = arith.constant 0 : index
      %c640_820 = arith.constant 640 : index
      %1071 = vector.load %arg6[%c0_819, %c640_820] : memref<16x1024xf32, #tpu.memory_space<vmem>>, vector<16x128xf32>
      tpu.vector_store %arg6[%c0_819, %c640_820], %1070 {strides = array<i32>} : memref<16x1024xf32, #tpu.memory_space<vmem>>, vector<16x128xf32>,
    } else {
    }
    %c6_389 = arith.constant 6 : index
    %c11_390 = arith.constant 11 : index
    %486 = memref.load %arg1[%c6_389, %c11_390] : memref<8x12xi32, #tpu.memory_space<smem>>
    %c0_i32_391 = arith.constant 0 : i32
    %487 = arith.cmpi sgt, %486, %c0_i32_391 : i32
    %488 = arith.extui %487 : i1 to i32
    %c0_i32_392 = arith.constant 0 : i32
    %489 = arith.cmpi ne, %488, %c0_i32_392 : i32
    scf.if %489 {
      %c0_817 = arith.constant 0 : index
      %c768_818 = arith.constant 768 : index
      %1069 = vector.load %arg6[%c0_817, %c768_818] : memref<16x1024xf32, #tpu.memory_space<vmem>>, vector<16x128xf32>
      %1070 = arith.addf %1069, %461 : vector<16x128xf32>
      %c0_819 = arith.constant 0 : index
      %c768_820 = arith.constant 768 : index
      %1071 = vector.load %arg6[%c0_819, %c768_820] : memref<16x1024xf32, #tpu.memory_space<vmem>>, vector<16x128xf32>
      tpu.vector_store %arg6[%c0_819, %c768_820], %1070 {strides = array<i32>} : memref<16x1024xf32, #tpu.memory_space<vmem>>, vector<16x128xf32>,
    } else {
    }
    %c7_393 = arith.constant 7 : index
    %c11_394 = arith.constant 11 : index
    %490 = memref.load %arg1[%c7_393, %c11_394] : memref<8x12xi32, #tpu.memory_space<smem>>
    %c0_i32_395 = arith.constant 0 : i32
    %491 = arith.cmpi sgt, %490, %c0_i32_395 : i32
    %492 = arith.extui %491 : i1 to i32
    %c0_i32_396 = arith.constant 0 : i32
    %493 = arith.cmpi ne, %492, %c0_i32_396 : i32
    scf.if %493 {
      %c0_817 = arith.constant 0 : index
      %c896_818 = arith.constant 896 : index
      %1069 = vector.load %arg6[%c0_817, %c896_818] : memref<16x1024xf32, #tpu.memory_space<vmem>>, vector<16x128xf32>
      %1070 = arith.addf %1069, %461 : vector<16x128xf32>
      %c0_819 = arith.constant 0 : index
      %c896_820 = arith.constant 896 : index
      %1071 = vector.load %arg6[%c0_819, %c896_820] : memref<16x1024xf32, #tpu.memory_space<vmem>>, vector<16x128xf32>
      tpu.vector_store %arg6[%c0_819, %c896_820], %1070 {strides = array<i32>} : memref<16x1024xf32, #tpu.memory_space<vmem>>, vector<16x128xf32>,
    } else {
    }
    %c88 = arith.constant 88 : index
    %c0_397 = arith.constant 0 : index
    %494 = vector.load %arg4[%c88, %c0_397] : memref<224x128xf32, #tpu.memory_space<vmem>>, vector<20x16xf32>
    %c0_398 = arith.constant 0 : index
    %c0_399 = arith.constant 0 : index
    %495 = vector.load %arg6[%c0_398, %c0_399] : memref<16x1024xf32, #tpu.memory_space<vmem>>, vector<16x1024xf32>
    %cst_400 = arith.constant dense<0.000000e+00> : vector<20x1024xf32>
    %496 = tpu.matmul %494, %495, %cst_400 {dimension_numbers = #tpu.dot_dimension_numbers<[1], [0], [0], [1], [0, 0, 1, 1], [], []>} : vector<20x16xf32>, vector<16x1024xf32>, vector<20x1024xf32> -> vector<20x1024xf32>
    %c136 = arith.constant 136 : index
    %c0_401 = arith.constant 0 : index
    %497 = vector.load %arg4[%c136, %c0_401] : memref<224x128xf32, #tpu.memory_space<vmem>>, vector<20x1xf32>
    %498 = vector.broadcast %497 : vector<20x1xf32> to vector<20x1024xf32>
    %499 = arith.addf %496, %498 : vector<20x1024xf32>
    %c0_402 = arith.constant 0 : index
    %c0_403 = arith.constant 0 : index
    %500 = vector.load %arg7[%c0_402, %c0_403] : memref<20x1024xf32, #tpu.memory_space<vmem>>, vector<20x1024xf32>
    tpu.vector_store %arg7[%c0_402, %c0_403], %499 {strides = array<i32>} : memref<20x1024xf32, #tpu.memory_space<vmem>>, vector<20x1024xf32>,
    %c112 = arith.constant 112 : index
    %c0_404 = arith.constant 0 : index
    %501 = vector.load %arg4[%c112, %c0_404] : memref<224x128xf32, #tpu.memory_space<vmem>>, vector<20x16xf32>
    %c0_405 = arith.constant 0 : index
    %c0_406 = arith.constant 0 : index
    %502 = vector.load %arg6[%c0_405, %c0_406] : memref<16x1024xf32, #tpu.memory_space<vmem>>, vector<16x1024xf32>
    %cst_407 = arith.constant dense<0.000000e+00> : vector<20x1024xf32>
    %503 = tpu.matmul %501, %502, %cst_407 {dimension_numbers = #tpu.dot_dimension_numbers<[1], [0], [0], [1], [0, 0, 1, 1], [], []>} : vector<20x16xf32>, vector<16x1024xf32>, vector<20x1024xf32> -> vector<20x1024xf32>
    %c0_408 = arith.constant 0 : index
    %c0_409 = arith.constant 0 : index
    %504 = vector.load %arg8[%c0_408, %c0_409] : memref<20x1024xf32, #tpu.memory_space<vmem>>, vector<20x1024xf32>
    tpu.vector_store %arg8[%c0_408, %c0_409], %503 {strides = array<i32>} : memref<20x1024xf32, #tpu.memory_space<vmem>>, vector<20x1024xf32>,
    %c160 = arith.constant 160 : index
    %c0_410 = arith.constant 0 : index
    %505 = vector.load %arg4[%c160, %c0_410] : memref<224x128xf32, #tpu.memory_space<vmem>>, vector<20x20xf32>
    %c208 = arith.constant 208 : index
    %c0_411 = arith.constant 0 : index
    %506 = vector.load %arg4[%c208, %c0_411] : memref<224x128xf32, #tpu.memory_space<vmem>>, vector<1x20xf32>
    %c184 = arith.constant 184 : index
    %c0_412 = arith.constant 0 : index
    %507 = vector.load %arg4[%c184, %c0_412] : memref<224x128xf32, #tpu.memory_space<vmem>>, vector<20x1xf32>
    %508 = vector.shape_cast %507 : vector<20x1xf32> to vector<20x1xf32>
    %509 = vector.broadcast %508 : vector<20x1xf32> to vector<20x896xf32>
    %c0_413 = arith.constant 0 : index
    %c0_414 = arith.constant 0 : index
    %510 = vector.load %arg7[%c0_413, %c0_414] : memref<20x1024xf32, #tpu.memory_space<vmem>>, vector<20x128xf32>
    %c0_415 = arith.constant 0 : index
    %c128_416 = arith.constant 128 : index
    %511 = vector.load %arg8[%c0_415, %c128_416] : memref<20x1024xf32, #tpu.memory_space<vmem>>, vector<20x128xf32>
    %512 = arith.addf %510, %511 : vector<20x128xf32>
    %cst_417 = arith.constant 0.000000e+00 : f32
    %513 = vector.broadcast %cst_417 : f32 to vector<20x128xf32>
    %514 = arith.maximumf %512, %513 : vector<20x128xf32>
    %c0_418 = arith.constant 0 : index
    %c0_419 = arith.constant 0 : index
    %515 = vector.load %arg3[%c0_418, %c0_419] : memref<20x7168xf32, #tpu.memory_space<vmem>>, vector<20x128xf32>
    %516 = arith.mulf %514, %515 : vector<20x128xf32>
    %c0_420 = arith.constant 0 : index
    %c0_421 = arith.constant 0 : index
    %517 = vector.load %arg9[%c0_420, %c0_421] : memref<20x896xf32, #tpu.memory_space<vmem>>, vector<20x128xf32>
    tpu.vector_store %arg9[%c0_420, %c0_421], %516 {strides = array<i32>} : memref<20x896xf32, #tpu.memory_space<vmem>>, vector<20x128xf32>,
    %c0_422 = arith.constant 0 : index
    %c256_423 = arith.constant 256 : index
    %518 = vector.load %arg8[%c0_422, %c256_423] : memref<20x1024xf32, #tpu.memory_space<vmem>>, vector<20x128xf32>
    %519 = arith.addf %510, %518 : vector<20x128xf32>
    %cst_424 = arith.constant 0.000000e+00 : f32
    %520 = vector.broadcast %cst_424 : f32 to vector<20x128xf32>
    %521 = arith.maximumf %519, %520 : vector<20x128xf32>
    %c0_425 = arith.constant 0 : index
    %c128_426 = arith.constant 128 : index
    %522 = vector.load %arg3[%c0_425, %c128_426] : memref<20x7168xf32, #tpu.memory_space<vmem>>, vector<20x128xf32>
    %523 = arith.mulf %521, %522 : vector<20x128xf32>
    %c0_427 = arith.constant 0 : index
    %c128_428 = arith.constant 128 : index
    %524 = vector.load %arg9[%c0_427, %c128_428] : memref<20x896xf32, #tpu.memory_space<vmem>>, vector<20x128xf32>
    tpu.vector_store %arg9[%c0_427, %c128_428], %523 {strides = array<i32>} : memref<20x896xf32, #tpu.memory_space<vmem>>, vector<20x128xf32>,
    %c0_429 = arith.constant 0 : index
    %c384_430 = arith.constant 384 : index
    %525 = vector.load %arg8[%c0_429, %c384_430] : memref<20x1024xf32, #tpu.memory_space<vmem>>, vector<20x128xf32>
    %526 = arith.addf %510, %525 : vector<20x128xf32>
    %cst_431 = arith.constant 0.000000e+00 : f32
    %527 = vector.broadcast %cst_431 : f32 to vector<20x128xf32>
    %528 = arith.maximumf %526, %527 : vector<20x128xf32>
    %c0_432 = arith.constant 0 : index
    %c256_433 = arith.constant 256 : index
    %529 = vector.load %arg3[%c0_432, %c256_433] : memref<20x7168xf32, #tpu.memory_space<vmem>>, vector<20x128xf32>
    %530 = arith.mulf %528, %529 : vector<20x128xf32>
    %c0_434 = arith.constant 0 : index
    %c256_435 = arith.constant 256 : index
    %531 = vector.load %arg9[%c0_434, %c256_435] : memref<20x896xf32, #tpu.memory_space<vmem>>, vector<20x128xf32>
    tpu.vector_store %arg9[%c0_434, %c256_435], %530 {strides = array<i32>} : memref<20x896xf32, #tpu.memory_space<vmem>>, vector<20x128xf32>,
    %c0_436 = arith.constant 0 : index
    %c512_437 = arith.constant 512 : index
    %532 = vector.load %arg8[%c0_436, %c512_437] : memref<20x1024xf32, #tpu.memory_space<vmem>>, vector<20x128xf32>
    %533 = arith.addf %510, %532 : vector<20x128xf32>
    %cst_438 = arith.constant 0.000000e+00 : f32
    %534 = vector.broadcast %cst_438 : f32 to vector<20x128xf32>
    %535 = arith.maximumf %533, %534 : vector<20x128xf32>
    %c0_439 = arith.constant 0 : index
    %c384_440 = arith.constant 384 : index
    %536 = vector.load %arg3[%c0_439, %c384_440] : memref<20x7168xf32, #tpu.memory_space<vmem>>, vector<20x128xf32>
    %537 = arith.mulf %535, %536 : vector<20x128xf32>
    %c0_441 = arith.constant 0 : index
    %c384_442 = arith.constant 384 : index
    %538 = vector.load %arg9[%c0_441, %c384_442] : memref<20x896xf32, #tpu.memory_space<vmem>>, vector<20x128xf32>
    tpu.vector_store %arg9[%c0_441, %c384_442], %537 {strides = array<i32>} : memref<20x896xf32, #tpu.memory_space<vmem>>, vector<20x128xf32>,
    %c0_443 = arith.constant 0 : index
    %c640_444 = arith.constant 640 : index
    %539 = vector.load %arg8[%c0_443, %c640_444] : memref<20x1024xf32, #tpu.memory_space<vmem>>, vector<20x128xf32>
    %540 = arith.addf %510, %539 : vector<20x128xf32>
    %cst_445 = arith.constant 0.000000e+00 : f32
    %541 = vector.broadcast %cst_445 : f32 to vector<20x128xf32>
    %542 = arith.maximumf %540, %541 : vector<20x128xf32>
    %c0_446 = arith.constant 0 : index
    %c512_447 = arith.constant 512 : index
    %543 = vector.load %arg3[%c0_446, %c512_447] : memref<20x7168xf32, #tpu.memory_space<vmem>>, vector<20x128xf32>
    %544 = arith.mulf %542, %543 : vector<20x128xf32>
    %c0_448 = arith.constant 0 : index
    %c512_449 = arith.constant 512 : index
    %545 = vector.load %arg9[%c0_448, %c512_449] : memref<20x896xf32, #tpu.memory_space<vmem>>, vector<20x128xf32>
    tpu.vector_store %arg9[%c0_448, %c512_449], %544 {strides = array<i32>} : memref<20x896xf32, #tpu.memory_space<vmem>>, vector<20x128xf32>,
    %c0_450 = arith.constant 0 : index
    %c768_451 = arith.constant 768 : index
    %546 = vector.load %arg8[%c0_450, %c768_451] : memref<20x1024xf32, #tpu.memory_space<vmem>>, vector<20x128xf32>
    %547 = arith.addf %510, %546 : vector<20x128xf32>
    %cst_452 = arith.constant 0.000000e+00 : f32
    %548 = vector.broadcast %cst_452 : f32 to vector<20x128xf32>
    %549 = arith.maximumf %547, %548 : vector<20x128xf32>
    %c0_453 = arith.constant 0 : index
    %c640_454 = arith.constant 640 : index
    %550 = vector.load %arg3[%c0_453, %c640_454] : memref<20x7168xf32, #tpu.memory_space<vmem>>, vector<20x128xf32>
    %551 = arith.mulf %549, %550 : vector<20x128xf32>
    %c0_455 = arith.constant 0 : index
    %c640_456 = arith.constant 640 : index
    %552 = vector.load %arg9[%c0_455, %c640_456] : memref<20x896xf32, #tpu.memory_space<vmem>>, vector<20x128xf32>
    tpu.vector_store %arg9[%c0_455, %c640_456], %551 {strides = array<i32>} : memref<20x896xf32, #tpu.memory_space<vmem>>, vector<20x128xf32>,
    %c0_457 = arith.constant 0 : index
    %c896_458 = arith.constant 896 : index
    %553 = vector.load %arg8[%c0_457, %c896_458] : memref<20x1024xf32, #tpu.memory_space<vmem>>, vector<20x128xf32>
    %554 = arith.addf %510, %553 : vector<20x128xf32>
    %cst_459 = arith.constant 0.000000e+00 : f32
    %555 = vector.broadcast %cst_459 : f32 to vector<20x128xf32>
    %556 = arith.maximumf %554, %555 : vector<20x128xf32>
    %c0_460 = arith.constant 0 : index
    %c768_461 = arith.constant 768 : index
    %557 = vector.load %arg3[%c0_460, %c768_461] : memref<20x7168xf32, #tpu.memory_space<vmem>>, vector<20x128xf32>
    %558 = arith.mulf %556, %557 : vector<20x128xf32>
    %c0_462 = arith.constant 0 : index
    %c768_463 = arith.constant 768 : index
    %559 = vector.load %arg9[%c0_462, %c768_463] : memref<20x896xf32, #tpu.memory_space<vmem>>, vector<20x128xf32>
    tpu.vector_store %arg9[%c0_462, %c768_463], %558 {strides = array<i32>} : memref<20x896xf32, #tpu.memory_space<vmem>>, vector<20x128xf32>,
    %c0_464 = arith.constant 0 : index
    %c0_465 = arith.constant 0 : index
    %560 = vector.load %arg9[%c0_464, %c0_465] : memref<20x896xf32, #tpu.memory_space<vmem>>, vector<20x896xf32>
    %cst_466 = arith.constant dense<0.000000e+00> : vector<20x896xf32>
    %561 = tpu.matmul %505, %560, %cst_466 {dimension_numbers = #tpu.dot_dimension_numbers<[1], [0], [0], [1], [0, 0, 1, 1], [], []>} : vector<20x20xf32>, vector<20x896xf32>, vector<20x896xf32> -> vector<20x896xf32>
    %562 = arith.addf %561, %509 : vector<20x896xf32>
    %cst_467 = arith.constant 0.000000e+00 : f32
    %563 = vector.broadcast %cst_467 : f32 to vector<20x896xf32>
    %564 = arith.maximumf %562, %563 : vector<20x896xf32>
    %565 = vector.extract_strided_slice %564 {offsets = [0, 0], sizes = [20, 128], strides = [1, 1]} : vector<20x896xf32> to vector<20x128xf32>
    %566 = vector.extract_strided_slice %564 {offsets = [0, 128], sizes = [20, 128], strides = [1, 1]} : vector<20x896xf32> to vector<20x128xf32>
    %567 = arith.addf %565, %566 : vector<20x128xf32>
    %568 = vector.extract_strided_slice %564 {offsets = [0, 256], sizes = [20, 128], strides = [1, 1]} : vector<20x896xf32> to vector<20x128xf32>
    %569 = arith.addf %567, %568 : vector<20x128xf32>
    %570 = vector.extract_strided_slice %564 {offsets = [0, 384], sizes = [20, 128], strides = [1, 1]} : vector<20x896xf32> to vector<20x128xf32>
    %571 = arith.addf %569, %570 : vector<20x128xf32>
    %572 = vector.extract_strided_slice %564 {offsets = [0, 512], sizes = [20, 128], strides = [1, 1]} : vector<20x896xf32> to vector<20x128xf32>
    %573 = arith.addf %571, %572 : vector<20x128xf32>
    %574 = vector.extract_strided_slice %564 {offsets = [0, 640], sizes = [20, 128], strides = [1, 1]} : vector<20x896xf32> to vector<20x128xf32>
    %575 = arith.addf %573, %574 : vector<20x128xf32>
    %576 = vector.extract_strided_slice %564 {offsets = [0, 768], sizes = [20, 128], strides = [1, 1]} : vector<20x896xf32> to vector<20x128xf32>
    %577 = arith.addf %575, %576 : vector<20x128xf32>
    %cst_468 = arith.constant dense<0.000000e+00> : vector<1x128xf32>
    %578 = tpu.matmul %506, %577, %cst_468 {dimension_numbers = #tpu.dot_dimension_numbers<[1], [0], [0], [1], [0, 0, 1, 1], [], []>} : vector<1x20xf32>, vector<20x128xf32>, vector<1x128xf32> -> vector<1x128xf32>
    %c0_469 = arith.constant 0 : index
    %c128_470 = arith.constant 128 : index
    %579 = vector.load %arg7[%c0_469, %c128_470] : memref<20x1024xf32, #tpu.memory_space<vmem>>, vector<20x128xf32>
    %c0_471 = arith.constant 0 : index
    %c0_472 = arith.constant 0 : index
    %580 = vector.load %arg8[%c0_471, %c0_472] : memref<20x1024xf32, #tpu.memory_space<vmem>>, vector<20x128xf32>
    %581 = arith.addf %579, %580 : vector<20x128xf32>
    %cst_473 = arith.constant 0.000000e+00 : f32
    %582 = vector.broadcast %cst_473 : f32 to vector<20x128xf32>
    %583 = arith.maximumf %581, %582 : vector<20x128xf32>
    %c0_474 = arith.constant 0 : index
    %c896_475 = arith.constant 896 : index
    %584 = vector.load %arg3[%c0_474, %c896_475] : memref<20x7168xf32, #tpu.memory_space<vmem>>, vector<20x128xf32>
    %585 = arith.mulf %583, %584 : vector<20x128xf32>
    %c0_476 = arith.constant 0 : index
    %c0_477 = arith.constant 0 : index
    %586 = vector.load %arg9[%c0_476, %c0_477] : memref<20x896xf32, #tpu.memory_space<vmem>>, vector<20x128xf32>
    tpu.vector_store %arg9[%c0_476, %c0_477], %585 {strides = array<i32>} : memref<20x896xf32, #tpu.memory_space<vmem>>, vector<20x128xf32>,
    %c0_478 = arith.constant 0 : index
    %c256_479 = arith.constant 256 : index
    %587 = vector.load %arg8[%c0_478, %c256_479] : memref<20x1024xf32, #tpu.memory_space<vmem>>, vector<20x128xf32>
    %588 = arith.addf %579, %587 : vector<20x128xf32>
    %cst_480 = arith.constant 0.000000e+00 : f32
    %589 = vector.broadcast %cst_480 : f32 to vector<20x128xf32>
    %590 = arith.maximumf %588, %589 : vector<20x128xf32>
    %c0_481 = arith.constant 0 : index
    %c1024 = arith.constant 1024 : index
    %591 = vector.load %arg3[%c0_481, %c1024] : memref<20x7168xf32, #tpu.memory_space<vmem>>, vector<20x128xf32>
    %592 = arith.mulf %590, %591 : vector<20x128xf32>
    %c0_482 = arith.constant 0 : index
    %c128_483 = arith.constant 128 : index
    %593 = vector.load %arg9[%c0_482, %c128_483] : memref<20x896xf32, #tpu.memory_space<vmem>>, vector<20x128xf32>
    tpu.vector_store %arg9[%c0_482, %c128_483], %592 {strides = array<i32>} : memref<20x896xf32, #tpu.memory_space<vmem>>, vector<20x128xf32>,
    %c0_484 = arith.constant 0 : index
    %c384_485 = arith.constant 384 : index
    %594 = vector.load %arg8[%c0_484, %c384_485] : memref<20x1024xf32, #tpu.memory_space<vmem>>, vector<20x128xf32>
    %595 = arith.addf %579, %594 : vector<20x128xf32>
    %cst_486 = arith.constant 0.000000e+00 : f32
    %596 = vector.broadcast %cst_486 : f32 to vector<20x128xf32>
    %597 = arith.maximumf %595, %596 : vector<20x128xf32>
    %c0_487 = arith.constant 0 : index
    %c1152 = arith.constant 1152 : index
    %598 = vector.load %arg3[%c0_487, %c1152] : memref<20x7168xf32, #tpu.memory_space<vmem>>, vector<20x128xf32>
    %599 = arith.mulf %597, %598 : vector<20x128xf32>
    %c0_488 = arith.constant 0 : index
    %c256_489 = arith.constant 256 : index
    %600 = vector.load %arg9[%c0_488, %c256_489] : memref<20x896xf32, #tpu.memory_space<vmem>>, vector<20x128xf32>
    tpu.vector_store %arg9[%c0_488, %c256_489], %599 {strides = array<i32>} : memref<20x896xf32, #tpu.memory_space<vmem>>, vector<20x128xf32>,
    %c0_490 = arith.constant 0 : index
    %c512_491 = arith.constant 512 : index
    %601 = vector.load %arg8[%c0_490, %c512_491] : memref<20x1024xf32, #tpu.memory_space<vmem>>, vector<20x128xf32>
    %602 = arith.addf %579, %601 : vector<20x128xf32>
    %cst_492 = arith.constant 0.000000e+00 : f32
    %603 = vector.broadcast %cst_492 : f32 to vector<20x128xf32>
    %604 = arith.maximumf %602, %603 : vector<20x128xf32>
    %c0_493 = arith.constant 0 : index
    %c1280 = arith.constant 1280 : index
    %605 = vector.load %arg3[%c0_493, %c1280] : memref<20x7168xf32, #tpu.memory_space<vmem>>, vector<20x128xf32>
    %606 = arith.mulf %604, %605 : vector<20x128xf32>
    %c0_494 = arith.constant 0 : index
    %c384_495 = arith.constant 384 : index
    %607 = vector.load %arg9[%c0_494, %c384_495] : memref<20x896xf32, #tpu.memory_space<vmem>>, vector<20x128xf32>
    tpu.vector_store %arg9[%c0_494, %c384_495], %606 {strides = array<i32>} : memref<20x896xf32, #tpu.memory_space<vmem>>, vector<20x128xf32>,
    %c0_496 = arith.constant 0 : index
    %c640_497 = arith.constant 640 : index
    %608 = vector.load %arg8[%c0_496, %c640_497] : memref<20x1024xf32, #tpu.memory_space<vmem>>, vector<20x128xf32>
    %609 = arith.addf %579, %608 : vector<20x128xf32>
    %cst_498 = arith.constant 0.000000e+00 : f32
    %610 = vector.broadcast %cst_498 : f32 to vector<20x128xf32>
    %611 = arith.maximumf %609, %610 : vector<20x128xf32>
    %c0_499 = arith.constant 0 : index
    %c1408 = arith.constant 1408 : index
    %612 = vector.load %arg3[%c0_499, %c1408] : memref<20x7168xf32, #tpu.memory_space<vmem>>, vector<20x128xf32>
    %613 = arith.mulf %611, %612 : vector<20x128xf32>
    %c0_500 = arith.constant 0 : index
    %c512_501 = arith.constant 512 : index
    %614 = vector.load %arg9[%c0_500, %c512_501] : memref<20x896xf32, #tpu.memory_space<vmem>>, vector<20x128xf32>
    tpu.vector_store %arg9[%c0_500, %c512_501], %613 {strides = array<i32>} : memref<20x896xf32, #tpu.memory_space<vmem>>, vector<20x128xf32>,
    %c0_502 = arith.constant 0 : index
    %c768_503 = arith.constant 768 : index
    %615 = vector.load %arg8[%c0_502, %c768_503] : memref<20x1024xf32, #tpu.memory_space<vmem>>, vector<20x128xf32>
    %616 = arith.addf %579, %615 : vector<20x128xf32>
    %cst_504 = arith.constant 0.000000e+00 : f32
    %617 = vector.broadcast %cst_504 : f32 to vector<20x128xf32>
    %618 = arith.maximumf %616, %617 : vector<20x128xf32>
    %c0_505 = arith.constant 0 : index
    %c1536 = arith.constant 1536 : index
    %619 = vector.load %arg3[%c0_505, %c1536] : memref<20x7168xf32, #tpu.memory_space<vmem>>, vector<20x128xf32>
    %620 = arith.mulf %618, %619 : vector<20x128xf32>
    %c0_506 = arith.constant 0 : index
    %c640_507 = arith.constant 640 : index
    %621 = vector.load %arg9[%c0_506, %c640_507] : memref<20x896xf32, #tpu.memory_space<vmem>>, vector<20x128xf32>
    tpu.vector_store %arg9[%c0_506, %c640_507], %620 {strides = array<i32>} : memref<20x896xf32, #tpu.memory_space<vmem>>, vector<20x128xf32>,
    %c0_508 = arith.constant 0 : index
    %c896_509 = arith.constant 896 : index
    %622 = vector.load %arg8[%c0_508, %c896_509] : memref<20x1024xf32, #tpu.memory_space<vmem>>, vector<20x128xf32>
    %623 = arith.addf %579, %622 : vector<20x128xf32>
    %cst_510 = arith.constant 0.000000e+00 : f32
    %624 = vector.broadcast %cst_510 : f32 to vector<20x128xf32>
    %625 = arith.maximumf %623, %624 : vector<20x128xf32>
    %c0_511 = arith.constant 0 : index
    %c1664 = arith.constant 1664 : index
    %626 = vector.load %arg3[%c0_511, %c1664] : memref<20x7168xf32, #tpu.memory_space<vmem>>, vector<20x128xf32>
    %627 = arith.mulf %625, %626 : vector<20x128xf32>
    %c0_512 = arith.constant 0 : index
    %c768_513 = arith.constant 768 : index
    %628 = vector.load %arg9[%c0_512, %c768_513] : memref<20x896xf32, #tpu.memory_space<vmem>>, vector<20x128xf32>
    tpu.vector_store %arg9[%c0_512, %c768_513], %627 {strides = array<i32>} : memref<20x896xf32, #tpu.memory_space<vmem>>, vector<20x128xf32>,
    %c0_514 = arith.constant 0 : index
    %c0_515 = arith.constant 0 : index
    %629 = vector.load %arg9[%c0_514, %c0_515] : memref<20x896xf32, #tpu.memory_space<vmem>>, vector<20x896xf32>
    %cst_516 = arith.constant dense<0.000000e+00> : vector<20x896xf32>
    %630 = tpu.matmul %505, %629, %cst_516 {dimension_numbers = #tpu.dot_dimension_numbers<[1], [0], [0], [1], [0, 0, 1, 1], [], []>} : vector<20x20xf32>, vector<20x896xf32>, vector<20x896xf32> -> vector<20x896xf32>
    %631 = arith.addf %630, %509 : vector<20x896xf32>
    %cst_517 = arith.constant 0.000000e+00 : f32
    %632 = vector.broadcast %cst_517 : f32 to vector<20x896xf32>
    %633 = arith.maximumf %631, %632 : vector<20x896xf32>
    %634 = vector.extract_strided_slice %633 {offsets = [0, 0], sizes = [20, 128], strides = [1, 1]} : vector<20x896xf32> to vector<20x128xf32>
    %635 = vector.extract_strided_slice %633 {offsets = [0, 128], sizes = [20, 128], strides = [1, 1]} : vector<20x896xf32> to vector<20x128xf32>
    %636 = arith.addf %634, %635 : vector<20x128xf32>
    %637 = vector.extract_strided_slice %633 {offsets = [0, 256], sizes = [20, 128], strides = [1, 1]} : vector<20x896xf32> to vector<20x128xf32>
    %638 = arith.addf %636, %637 : vector<20x128xf32>
    %639 = vector.extract_strided_slice %633 {offsets = [0, 384], sizes = [20, 128], strides = [1, 1]} : vector<20x896xf32> to vector<20x128xf32>
    %640 = arith.addf %638, %639 : vector<20x128xf32>
    %641 = vector.extract_strided_slice %633 {offsets = [0, 512], sizes = [20, 128], strides = [1, 1]} : vector<20x896xf32> to vector<20x128xf32>
    %642 = arith.addf %640, %641 : vector<20x128xf32>
    %643 = vector.extract_strided_slice %633 {offsets = [0, 640], sizes = [20, 128], strides = [1, 1]} : vector<20x896xf32> to vector<20x128xf32>
    %644 = arith.addf %642, %643 : vector<20x128xf32>
    %645 = vector.extract_strided_slice %633 {offsets = [0, 768], sizes = [20, 128], strides = [1, 1]} : vector<20x896xf32> to vector<20x128xf32>
    %646 = arith.addf %644, %645 : vector<20x128xf32>
    %cst_518 = arith.constant dense<0.000000e+00> : vector<1x128xf32>
    %647 = tpu.matmul %506, %646, %cst_518 {dimension_numbers = #tpu.dot_dimension_numbers<[1], [0], [0], [1], [0, 0, 1, 1], [], []>} : vector<1x20xf32>, vector<20x128xf32>, vector<1x128xf32> -> vector<1x128xf32>
    %c0_519 = arith.constant 0 : index
    %c256_520 = arith.constant 256 : index
    %648 = vector.load %arg7[%c0_519, %c256_520] : memref<20x1024xf32, #tpu.memory_space<vmem>>, vector<20x128xf32>
    %c0_521 = arith.constant 0 : index
    %c0_522 = arith.constant 0 : index
    %649 = vector.load %arg8[%c0_521, %c0_522] : memref<20x1024xf32, #tpu.memory_space<vmem>>, vector<20x128xf32>
    %650 = arith.addf %648, %649 : vector<20x128xf32>
    %cst_523 = arith.constant 0.000000e+00 : f32
    %651 = vector.broadcast %cst_523 : f32 to vector<20x128xf32>
    %652 = arith.maximumf %650, %651 : vector<20x128xf32>
    %c0_524 = arith.constant 0 : index
    %c1792 = arith.constant 1792 : index
    %653 = vector.load %arg3[%c0_524, %c1792] : memref<20x7168xf32, #tpu.memory_space<vmem>>, vector<20x128xf32>
    %654 = arith.mulf %652, %653 : vector<20x128xf32>
    %c0_525 = arith.constant 0 : index
    %c0_526 = arith.constant 0 : index
    %655 = vector.load %arg9[%c0_525, %c0_526] : memref<20x896xf32, #tpu.memory_space<vmem>>, vector<20x128xf32>
    tpu.vector_store %arg9[%c0_525, %c0_526], %654 {strides = array<i32>} : memref<20x896xf32, #tpu.memory_space<vmem>>, vector<20x128xf32>,
    %c0_527 = arith.constant 0 : index
    %c128_528 = arith.constant 128 : index
    %656 = vector.load %arg8[%c0_527, %c128_528] : memref<20x1024xf32, #tpu.memory_space<vmem>>, vector<20x128xf32>
    %657 = arith.addf %648, %656 : vector<20x128xf32>
    %cst_529 = arith.constant 0.000000e+00 : f32
    %658 = vector.broadcast %cst_529 : f32 to vector<20x128xf32>
    %659 = arith.maximumf %657, %658 : vector<20x128xf32>
    %c0_530 = arith.constant 0 : index
    %c1920 = arith.constant 1920 : index
    %660 = vector.load %arg3[%c0_530, %c1920] : memref<20x7168xf32, #tpu.memory_space<vmem>>, vector<20x128xf32>
    %661 = arith.mulf %659, %660 : vector<20x128xf32>
    %c0_531 = arith.constant 0 : index
    %c128_532 = arith.constant 128 : index
    %662 = vector.load %arg9[%c0_531, %c128_532] : memref<20x896xf32, #tpu.memory_space<vmem>>, vector<20x128xf32>
    tpu.vector_store %arg9[%c0_531, %c128_532], %661 {strides = array<i32>} : memref<20x896xf32, #tpu.memory_space<vmem>>, vector<20x128xf32>,
    %c0_533 = arith.constant 0 : index
    %c384_534 = arith.constant 384 : index
    %663 = vector.load %arg8[%c0_533, %c384_534] : memref<20x1024xf32, #tpu.memory_space<vmem>>, vector<20x128xf32>
    %664 = arith.addf %648, %663 : vector<20x128xf32>
    %cst_535 = arith.constant 0.000000e+00 : f32
    %665 = vector.broadcast %cst_535 : f32 to vector<20x128xf32>
    %666 = arith.maximumf %664, %665 : vector<20x128xf32>
    %c0_536 = arith.constant 0 : index
    %c2048 = arith.constant 2048 : index
    %667 = vector.load %arg3[%c0_536, %c2048] : memref<20x7168xf32, #tpu.memory_space<vmem>>, vector<20x128xf32>
    %668 = arith.mulf %666, %667 : vector<20x128xf32>
    %c0_537 = arith.constant 0 : index
    %c256_538 = arith.constant 256 : index
    %669 = vector.load %arg9[%c0_537, %c256_538] : memref<20x896xf32, #tpu.memory_space<vmem>>, vector<20x128xf32>
    tpu.vector_store %arg9[%c0_537, %c256_538], %668 {strides = array<i32>} : memref<20x896xf32, #tpu.memory_space<vmem>>, vector<20x128xf32>,
    %c0_539 = arith.constant 0 : index
    %c512_540 = arith.constant 512 : index
    %670 = vector.load %arg8[%c0_539, %c512_540] : memref<20x1024xf32, #tpu.memory_space<vmem>>, vector<20x128xf32>
    %671 = arith.addf %648, %670 : vector<20x128xf32>
    %cst_541 = arith.constant 0.000000e+00 : f32
    %672 = vector.broadcast %cst_541 : f32 to vector<20x128xf32>
    %673 = arith.maximumf %671, %672 : vector<20x128xf32>
    %c0_542 = arith.constant 0 : index
    %c2176 = arith.constant 2176 : index
    %674 = vector.load %arg3[%c0_542, %c2176] : memref<20x7168xf32, #tpu.memory_space<vmem>>, vector<20x128xf32>
    %675 = arith.mulf %673, %674 : vector<20x128xf32>
    %c0_543 = arith.constant 0 : index
    %c384_544 = arith.constant 384 : index
    %676 = vector.load %arg9[%c0_543, %c384_544] : memref<20x896xf32, #tpu.memory_space<vmem>>, vector<20x128xf32>
    tpu.vector_store %arg9[%c0_543, %c384_544], %675 {strides = array<i32>} : memref<20x896xf32, #tpu.memory_space<vmem>>, vector<20x128xf32>,
    %c0_545 = arith.constant 0 : index
    %c640_546 = arith.constant 640 : index
    %677 = vector.load %arg8[%c0_545, %c640_546] : memref<20x1024xf32, #tpu.memory_space<vmem>>, vector<20x128xf32>
    %678 = arith.addf %648, %677 : vector<20x128xf32>
    %cst_547 = arith.constant 0.000000e+00 : f32
    %679 = vector.broadcast %cst_547 : f32 to vector<20x128xf32>
    %680 = arith.maximumf %678, %679 : vector<20x128xf32>
    %c0_548 = arith.constant 0 : index
    %c2304 = arith.constant 2304 : index
    %681 = vector.load %arg3[%c0_548, %c2304] : memref<20x7168xf32, #tpu.memory_space<vmem>>, vector<20x128xf32>
    %682 = arith.mulf %680, %681 : vector<20x128xf32>
    %c0_549 = arith.constant 0 : index
    %c512_550 = arith.constant 512 : index
    %683 = vector.load %arg9[%c0_549, %c512_550] : memref<20x896xf32, #tpu.memory_space<vmem>>, vector<20x128xf32>
    tpu.vector_store %arg9[%c0_549, %c512_550], %682 {strides = array<i32>} : memref<20x896xf32, #tpu.memory_space<vmem>>, vector<20x128xf32>,
    %c0_551 = arith.constant 0 : index
    %c768_552 = arith.constant 768 : index
    %684 = vector.load %arg8[%c0_551, %c768_552] : memref<20x1024xf32, #tpu.memory_space<vmem>>, vector<20x128xf32>
    %685 = arith.addf %648, %684 : vector<20x128xf32>
    %cst_553 = arith.constant 0.000000e+00 : f32
    %686 = vector.broadcast %cst_553 : f32 to vector<20x128xf32>
    %687 = arith.maximumf %685, %686 : vector<20x128xf32>
    %c0_554 = arith.constant 0 : index
    %c2432 = arith.constant 2432 : index
    %688 = vector.load %arg3[%c0_554, %c2432] : memref<20x7168xf32, #tpu.memory_space<vmem>>, vector<20x128xf32>
    %689 = arith.mulf %687, %688 : vector<20x128xf32>
    %c0_555 = arith.constant 0 : index
    %c640_556 = arith.constant 640 : index
    %690 = vector.load %arg9[%c0_555, %c640_556] : memref<20x896xf32, #tpu.memory_space<vmem>>, vector<20x128xf32>
    tpu.vector_store %arg9[%c0_555, %c640_556], %689 {strides = array<i32>} : memref<20x896xf32, #tpu.memory_space<vmem>>, vector<20x128xf32>,
    %c0_557 = arith.constant 0 : index
    %c896_558 = arith.constant 896 : index
    %691 = vector.load %arg8[%c0_557, %c896_558] : memref<20x1024xf32, #tpu.memory_space<vmem>>, vector<20x128xf32>
    %692 = arith.addf %648, %691 : vector<20x128xf32>
    %cst_559 = arith.constant 0.000000e+00 : f32
    %693 = vector.broadcast %cst_559 : f32 to vector<20x128xf32>
    %694 = arith.maximumf %692, %693 : vector<20x128xf32>
    %c0_560 = arith.constant 0 : index
    %c2560 = arith.constant 2560 : index
    %695 = vector.load %arg3[%c0_560, %c2560] : memref<20x7168xf32, #tpu.memory_space<vmem>>, vector<20x128xf32>
    %696 = arith.mulf %694, %695 : vector<20x128xf32>
    %c0_561 = arith.constant 0 : index
    %c768_562 = arith.constant 768 : index
    %697 = vector.load %arg9[%c0_561, %c768_562] : memref<20x896xf32, #tpu.memory_space<vmem>>, vector<20x128xf32>
    tpu.vector_store %arg9[%c0_561, %c768_562], %696 {strides = array<i32>} : memref<20x896xf32, #tpu.memory_space<vmem>>, vector<20x128xf32>,
    %c0_563 = arith.constant 0 : index
    %c0_564 = arith.constant 0 : index
    %698 = vector.load %arg9[%c0_563, %c0_564] : memref<20x896xf32, #tpu.memory_space<vmem>>, vector<20x896xf32>
    %cst_565 = arith.constant dense<0.000000e+00> : vector<20x896xf32>
    %699 = tpu.matmul %505, %698, %cst_565 {dimension_numbers = #tpu.dot_dimension_numbers<[1], [0], [0], [1], [0, 0, 1, 1], [], []>} : vector<20x20xf32>, vector<20x896xf32>, vector<20x896xf32> -> vector<20x896xf32>
    %700 = arith.addf %699, %509 : vector<20x896xf32>
    %cst_566 = arith.constant 0.000000e+00 : f32
    %701 = vector.broadcast %cst_566 : f32 to vector<20x896xf32>
    %702 = arith.maximumf %700, %701 : vector<20x896xf32>
    %703 = vector.extract_strided_slice %702 {offsets = [0, 0], sizes = [20, 128], strides = [1, 1]} : vector<20x896xf32> to vector<20x128xf32>
    %704 = vector.extract_strided_slice %702 {offsets = [0, 128], sizes = [20, 128], strides = [1, 1]} : vector<20x896xf32> to vector<20x128xf32>
    %705 = arith.addf %703, %704 : vector<20x128xf32>
    %706 = vector.extract_strided_slice %702 {offsets = [0, 256], sizes = [20, 128], strides = [1, 1]} : vector<20x896xf32> to vector<20x128xf32>
    %707 = arith.addf %705, %706 : vector<20x128xf32>
    %708 = vector.extract_strided_slice %702 {offsets = [0, 384], sizes = [20, 128], strides = [1, 1]} : vector<20x896xf32> to vector<20x128xf32>
    %709 = arith.addf %707, %708 : vector<20x128xf32>
    %710 = vector.extract_strided_slice %702 {offsets = [0, 512], sizes = [20, 128], strides = [1, 1]} : vector<20x896xf32> to vector<20x128xf32>
    %711 = arith.addf %709, %710 : vector<20x128xf32>
    %712 = vector.extract_strided_slice %702 {offsets = [0, 640], sizes = [20, 128], strides = [1, 1]} : vector<20x896xf32> to vector<20x128xf32>
    %713 = arith.addf %711, %712 : vector<20x128xf32>
    %714 = vector.extract_strided_slice %702 {offsets = [0, 768], sizes = [20, 128], strides = [1, 1]} : vector<20x896xf32> to vector<20x128xf32>
    %715 = arith.addf %713, %714 : vector<20x128xf32>
    %cst_567 = arith.constant dense<0.000000e+00> : vector<1x128xf32>
    %716 = tpu.matmul %506, %715, %cst_567 {dimension_numbers = #tpu.dot_dimension_numbers<[1], [0], [0], [1], [0, 0, 1, 1], [], []>} : vector<1x20xf32>, vector<20x128xf32>, vector<1x128xf32> -> vector<1x128xf32>
    %c0_568 = arith.constant 0 : index
    %c384_569 = arith.constant 384 : index
    %717 = vector.load %arg7[%c0_568, %c384_569] : memref<20x1024xf32, #tpu.memory_space<vmem>>, vector<20x128xf32>
    %c0_570 = arith.constant 0 : index
    %c0_571 = arith.constant 0 : index
    %718 = vector.load %arg8[%c0_570, %c0_571] : memref<20x1024xf32, #tpu.memory_space<vmem>>, vector<20x128xf32>
    %719 = arith.addf %717, %718 : vector<20x128xf32>
    %cst_572 = arith.constant 0.000000e+00 : f32
    %720 = vector.broadcast %cst_572 : f32 to vector<20x128xf32>
    %721 = arith.maximumf %719, %720 : vector<20x128xf32>
    %c0_573 = arith.constant 0 : index
    %c2688 = arith.constant 2688 : index
    %722 = vector.load %arg3[%c0_573, %c2688] : memref<20x7168xf32, #tpu.memory_space<vmem>>, vector<20x128xf32>
    %723 = arith.mulf %721, %722 : vector<20x128xf32>
    %c0_574 = arith.constant 0 : index
    %c0_575 = arith.constant 0 : index
    %724 = vector.load %arg9[%c0_574, %c0_575] : memref<20x896xf32, #tpu.memory_space<vmem>>, vector<20x128xf32>
    tpu.vector_store %arg9[%c0_574, %c0_575], %723 {strides = array<i32>} : memref<20x896xf32, #tpu.memory_space<vmem>>, vector<20x128xf32>,
    %c0_576 = arith.constant 0 : index
    %c128_577 = arith.constant 128 : index
    %725 = vector.load %arg8[%c0_576, %c128_577] : memref<20x1024xf32, #tpu.memory_space<vmem>>, vector<20x128xf32>
    %726 = arith.addf %717, %725 : vector<20x128xf32>
    %cst_578 = arith.constant 0.000000e+00 : f32
    %727 = vector.broadcast %cst_578 : f32 to vector<20x128xf32>
    %728 = arith.maximumf %726, %727 : vector<20x128xf32>
    %c0_579 = arith.constant 0 : index
    %c2816 = arith.constant 2816 : index
    %729 = vector.load %arg3[%c0_579, %c2816] : memref<20x7168xf32, #tpu.memory_space<vmem>>, vector<20x128xf32>
    %730 = arith.mulf %728, %729 : vector<20x128xf32>
    %c0_580 = arith.constant 0 : index
    %c128_581 = arith.constant 128 : index
    %731 = vector.load %arg9[%c0_580, %c128_581] : memref<20x896xf32, #tpu.memory_space<vmem>>, vector<20x128xf32>
    tpu.vector_store %arg9[%c0_580, %c128_581], %730 {strides = array<i32>} : memref<20x896xf32, #tpu.memory_space<vmem>>, vector<20x128xf32>,
    %c0_582 = arith.constant 0 : index
    %c256_583 = arith.constant 256 : index
    %732 = vector.load %arg8[%c0_582, %c256_583] : memref<20x1024xf32, #tpu.memory_space<vmem>>, vector<20x128xf32>
    %733 = arith.addf %717, %732 : vector<20x128xf32>
    %cst_584 = arith.constant 0.000000e+00 : f32
    %734 = vector.broadcast %cst_584 : f32 to vector<20x128xf32>
    %735 = arith.maximumf %733, %734 : vector<20x128xf32>
    %c0_585 = arith.constant 0 : index
    %c2944 = arith.constant 2944 : index
    %736 = vector.load %arg3[%c0_585, %c2944] : memref<20x7168xf32, #tpu.memory_space<vmem>>, vector<20x128xf32>
    %737 = arith.mulf %735, %736 : vector<20x128xf32>
    %c0_586 = arith.constant 0 : index
    %c256_587 = arith.constant 256 : index
    %738 = vector.load %arg9[%c0_586, %c256_587] : memref<20x896xf32, #tpu.memory_space<vmem>>, vector<20x128xf32>
    tpu.vector_store %arg9[%c0_586, %c256_587], %737 {strides = array<i32>} : memref<20x896xf32, #tpu.memory_space<vmem>>, vector<20x128xf32>,
    %c0_588 = arith.constant 0 : index
    %c512_589 = arith.constant 512 : index
    %739 = vector.load %arg8[%c0_588, %c512_589] : memref<20x1024xf32, #tpu.memory_space<vmem>>, vector<20x128xf32>
    %740 = arith.addf %717, %739 : vector<20x128xf32>
    %cst_590 = arith.constant 0.000000e+00 : f32
    %741 = vector.broadcast %cst_590 : f32 to vector<20x128xf32>
    %742 = arith.maximumf %740, %741 : vector<20x128xf32>
    %c0_591 = arith.constant 0 : index
    %c3072 = arith.constant 3072 : index
    %743 = vector.load %arg3[%c0_591, %c3072] : memref<20x7168xf32, #tpu.memory_space<vmem>>, vector<20x128xf32>
    %744 = arith.mulf %742, %743 : vector<20x128xf32>
    %c0_592 = arith.constant 0 : index
    %c384_593 = arith.constant 384 : index
    %745 = vector.load %arg9[%c0_592, %c384_593] : memref<20x896xf32, #tpu.memory_space<vmem>>, vector<20x128xf32>
    tpu.vector_store %arg9[%c0_592, %c384_593], %744 {strides = array<i32>} : memref<20x896xf32, #tpu.memory_space<vmem>>, vector<20x128xf32>,
    %c0_594 = arith.constant 0 : index
    %c640_595 = arith.constant 640 : index
    %746 = vector.load %arg8[%c0_594, %c640_595] : memref<20x1024xf32, #tpu.memory_space<vmem>>, vector<20x128xf32>
    %747 = arith.addf %717, %746 : vector<20x128xf32>
    %cst_596 = arith.constant 0.000000e+00 : f32
    %748 = vector.broadcast %cst_596 : f32 to vector<20x128xf32>
    %749 = arith.maximumf %747, %748 : vector<20x128xf32>
    %c0_597 = arith.constant 0 : index
    %c3200 = arith.constant 3200 : index
    %750 = vector.load %arg3[%c0_597, %c3200] : memref<20x7168xf32, #tpu.memory_space<vmem>>, vector<20x128xf32>
    %751 = arith.mulf %749, %750 : vector<20x128xf32>
    %c0_598 = arith.constant 0 : index
    %c512_599 = arith.constant 512 : index
    %752 = vector.load %arg9[%c0_598, %c512_599] : memref<20x896xf32, #tpu.memory_space<vmem>>, vector<20x128xf32>
    tpu.vector_store %arg9[%c0_598, %c512_599], %751 {strides = array<i32>} : memref<20x896xf32, #tpu.memory_space<vmem>>, vector<20x128xf32>,
    %c0_600 = arith.constant 0 : index
    %c768_601 = arith.constant 768 : index
    %753 = vector.load %arg8[%c0_600, %c768_601] : memref<20x1024xf32, #tpu.memory_space<vmem>>, vector<20x128xf32>
    %754 = arith.addf %717, %753 : vector<20x128xf32>
    %cst_602 = arith.constant 0.000000e+00 : f32
    %755 = vector.broadcast %cst_602 : f32 to vector<20x128xf32>
    %756 = arith.maximumf %754, %755 : vector<20x128xf32>
    %c0_603 = arith.constant 0 : index
    %c3328 = arith.constant 3328 : index
    %757 = vector.load %arg3[%c0_603, %c3328] : memref<20x7168xf32, #tpu.memory_space<vmem>>, vector<20x128xf32>
    %758 = arith.mulf %756, %757 : vector<20x128xf32>
    %c0_604 = arith.constant 0 : index
    %c640_605 = arith.constant 640 : index
    %759 = vector.load %arg9[%c0_604, %c640_605] : memref<20x896xf32, #tpu.memory_space<vmem>>, vector<20x128xf32>
    tpu.vector_store %arg9[%c0_604, %c640_605], %758 {strides = array<i32>} : memref<20x896xf32, #tpu.memory_space<vmem>>, vector<20x128xf32>,
    %c0_606 = arith.constant 0 : index
    %c896_607 = arith.constant 896 : index
    %760 = vector.load %arg8[%c0_606, %c896_607] : memref<20x1024xf32, #tpu.memory_space<vmem>>, vector<20x128xf32>
    %761 = arith.addf %717, %760 : vector<20x128xf32>
    %cst_608 = arith.constant 0.000000e+00 : f32
    %762 = vector.broadcast %cst_608 : f32 to vector<20x128xf32>
    %763 = arith.maximumf %761, %762 : vector<20x128xf32>
    %c0_609 = arith.constant 0 : index
    %c3456 = arith.constant 3456 : index
    %764 = vector.load %arg3[%c0_609, %c3456] : memref<20x7168xf32, #tpu.memory_space<vmem>>, vector<20x128xf32>
    %765 = arith.mulf %763, %764 : vector<20x128xf32>
    %c0_610 = arith.constant 0 : index
    %c768_611 = arith.constant 768 : index
    %766 = vector.load %arg9[%c0_610, %c768_611] : memref<20x896xf32, #tpu.memory_space<vmem>>, vector<20x128xf32>
    tpu.vector_store %arg9[%c0_610, %c768_611], %765 {strides = array<i32>} : memref<20x896xf32, #tpu.memory_space<vmem>>, vector<20x128xf32>,
    %c0_612 = arith.constant 0 : index
    %c0_613 = arith.constant 0 : index
    %767 = vector.load %arg9[%c0_612, %c0_613] : memref<20x896xf32, #tpu.memory_space<vmem>>, vector<20x896xf32>
    %cst_614 = arith.constant dense<0.000000e+00> : vector<20x896xf32>
    %768 = tpu.matmul %505, %767, %cst_614 {dimension_numbers = #tpu.dot_dimension_numbers<[1], [0], [0], [1], [0, 0, 1, 1], [], []>} : vector<20x20xf32>, vector<20x896xf32>, vector<20x896xf32> -> vector<20x896xf32>
    %769 = arith.addf %768, %509 : vector<20x896xf32>
    %cst_615 = arith.constant 0.000000e+00 : f32
    %770 = vector.broadcast %cst_615 : f32 to vector<20x896xf32>
    %771 = arith.maximumf %769, %770 : vector<20x896xf32>
    %772 = vector.extract_strided_slice %771 {offsets = [0, 0], sizes = [20, 128], strides = [1, 1]} : vector<20x896xf32> to vector<20x128xf32>
    %773 = vector.extract_strided_slice %771 {offsets = [0, 128], sizes = [20, 128], strides = [1, 1]} : vector<20x896xf32> to vector<20x128xf32>
    %774 = arith.addf %772, %773 : vector<20x128xf32>
    %775 = vector.extract_strided_slice %771 {offsets = [0, 256], sizes = [20, 128], strides = [1, 1]} : vector<20x896xf32> to vector<20x128xf32>
    %776 = arith.addf %774, %775 : vector<20x128xf32>
    %777 = vector.extract_strided_slice %771 {offsets = [0, 384], sizes = [20, 128], strides = [1, 1]} : vector<20x896xf32> to vector<20x128xf32>
    %778 = arith.addf %776, %777 : vector<20x128xf32>
    %779 = vector.extract_strided_slice %771 {offsets = [0, 512], sizes = [20, 128], strides = [1, 1]} : vector<20x896xf32> to vector<20x128xf32>
    %780 = arith.addf %778, %779 : vector<20x128xf32>
    %781 = vector.extract_strided_slice %771 {offsets = [0, 640], sizes = [20, 128], strides = [1, 1]} : vector<20x896xf32> to vector<20x128xf32>
    %782 = arith.addf %780, %781 : vector<20x128xf32>
    %783 = vector.extract_strided_slice %771 {offsets = [0, 768], sizes = [20, 128], strides = [1, 1]} : vector<20x896xf32> to vector<20x128xf32>
    %784 = arith.addf %782, %783 : vector<20x128xf32>
    %cst_616 = arith.constant dense<0.000000e+00> : vector<1x128xf32>
    %785 = tpu.matmul %506, %784, %cst_616 {dimension_numbers = #tpu.dot_dimension_numbers<[1], [0], [0], [1], [0, 0, 1, 1], [], []>} : vector<1x20xf32>, vector<20x128xf32>, vector<1x128xf32> -> vector<1x128xf32>
    %c0_617 = arith.constant 0 : index
    %c512_618 = arith.constant 512 : index
    %786 = vector.load %arg7[%c0_617, %c512_618] : memref<20x1024xf32, #tpu.memory_space<vmem>>, vector<20x128xf32>
    %c0_619 = arith.constant 0 : index
    %c0_620 = arith.constant 0 : index
    %787 = vector.load %arg8[%c0_619, %c0_620] : memref<20x1024xf32, #tpu.memory_space<vmem>>, vector<20x128xf32>
    %788 = arith.addf %786, %787 : vector<20x128xf32>
    %cst_621 = arith.constant 0.000000e+00 : f32
    %789 = vector.broadcast %cst_621 : f32 to vector<20x128xf32>
    %790 = arith.maximumf %788, %789 : vector<20x128xf32>
    %c0_622 = arith.constant 0 : index
    %c3584 = arith.constant 3584 : index
    %791 = vector.load %arg3[%c0_622, %c3584] : memref<20x7168xf32, #tpu.memory_space<vmem>>, vector<20x128xf32>
    %792 = arith.mulf %790, %791 : vector<20x128xf32>
    %c0_623 = arith.constant 0 : index
    %c0_624 = arith.constant 0 : index
    %793 = vector.load %arg9[%c0_623, %c0_624] : memref<20x896xf32, #tpu.memory_space<vmem>>, vector<20x128xf32>
    tpu.vector_store %arg9[%c0_623, %c0_624], %792 {strides = array<i32>} : memref<20x896xf32, #tpu.memory_space<vmem>>, vector<20x128xf32>,
    %c0_625 = arith.constant 0 : index
    %c128_626 = arith.constant 128 : index
    %794 = vector.load %arg8[%c0_625, %c128_626] : memref<20x1024xf32, #tpu.memory_space<vmem>>, vector<20x128xf32>
    %795 = arith.addf %786, %794 : vector<20x128xf32>
    %cst_627 = arith.constant 0.000000e+00 : f32
    %796 = vector.broadcast %cst_627 : f32 to vector<20x128xf32>
    %797 = arith.maximumf %795, %796 : vector<20x128xf32>
    %c0_628 = arith.constant 0 : index
    %c3712 = arith.constant 3712 : index
    %798 = vector.load %arg3[%c0_628, %c3712] : memref<20x7168xf32, #tpu.memory_space<vmem>>, vector<20x128xf32>
    %799 = arith.mulf %797, %798 : vector<20x128xf32>
    %c0_629 = arith.constant 0 : index
    %c128_630 = arith.constant 128 : index
    %800 = vector.load %arg9[%c0_629, %c128_630] : memref<20x896xf32, #tpu.memory_space<vmem>>, vector<20x128xf32>
    tpu.vector_store %arg9[%c0_629, %c128_630], %799 {strides = array<i32>} : memref<20x896xf32, #tpu.memory_space<vmem>>, vector<20x128xf32>,
    %c0_631 = arith.constant 0 : index
    %c256_632 = arith.constant 256 : index
    %801 = vector.load %arg8[%c0_631, %c256_632] : memref<20x1024xf32, #tpu.memory_space<vmem>>, vector<20x128xf32>
    %802 = arith.addf %786, %801 : vector<20x128xf32>
    %cst_633 = arith.constant 0.000000e+00 : f32
    %803 = vector.broadcast %cst_633 : f32 to vector<20x128xf32>
    %804 = arith.maximumf %802, %803 : vector<20x128xf32>
    %c0_634 = arith.constant 0 : index
    %c3840 = arith.constant 3840 : index
    %805 = vector.load %arg3[%c0_634, %c3840] : memref<20x7168xf32, #tpu.memory_space<vmem>>, vector<20x128xf32>
    %806 = arith.mulf %804, %805 : vector<20x128xf32>
    %c0_635 = arith.constant 0 : index
    %c256_636 = arith.constant 256 : index
    %807 = vector.load %arg9[%c0_635, %c256_636] : memref<20x896xf32, #tpu.memory_space<vmem>>, vector<20x128xf32>
    tpu.vector_store %arg9[%c0_635, %c256_636], %806 {strides = array<i32>} : memref<20x896xf32, #tpu.memory_space<vmem>>, vector<20x128xf32>,
    %c0_637 = arith.constant 0 : index
    %c384_638 = arith.constant 384 : index
    %808 = vector.load %arg8[%c0_637, %c384_638] : memref<20x1024xf32, #tpu.memory_space<vmem>>, vector<20x128xf32>
    %809 = arith.addf %786, %808 : vector<20x128xf32>
    %cst_639 = arith.constant 0.000000e+00 : f32
    %810 = vector.broadcast %cst_639 : f32 to vector<20x128xf32>
    %811 = arith.maximumf %809, %810 : vector<20x128xf32>
    %c0_640 = arith.constant 0 : index
    %c3968 = arith.constant 3968 : index
    %812 = vector.load %arg3[%c0_640, %c3968] : memref<20x7168xf32, #tpu.memory_space<vmem>>, vector<20x128xf32>
    %813 = arith.mulf %811, %812 : vector<20x128xf32>
    %c0_641 = arith.constant 0 : index
    %c384_642 = arith.constant 384 : index
    %814 = vector.load %arg9[%c0_641, %c384_642] : memref<20x896xf32, #tpu.memory_space<vmem>>, vector<20x128xf32>
    tpu.vector_store %arg9[%c0_641, %c384_642], %813 {strides = array<i32>} : memref<20x896xf32, #tpu.memory_space<vmem>>, vector<20x128xf32>,
    %c0_643 = arith.constant 0 : index
    %c640_644 = arith.constant 640 : index
    %815 = vector.load %arg8[%c0_643, %c640_644] : memref<20x1024xf32, #tpu.memory_space<vmem>>, vector<20x128xf32>
    %816 = arith.addf %786, %815 : vector<20x128xf32>
    %cst_645 = arith.constant 0.000000e+00 : f32
    %817 = vector.broadcast %cst_645 : f32 to vector<20x128xf32>
    %818 = arith.maximumf %816, %817 : vector<20x128xf32>
    %c0_646 = arith.constant 0 : index
    %c4096 = arith.constant 4096 : index
    %819 = vector.load %arg3[%c0_646, %c4096] : memref<20x7168xf32, #tpu.memory_space<vmem>>, vector<20x128xf32>
    %820 = arith.mulf %818, %819 : vector<20x128xf32>
    %c0_647 = arith.constant 0 : index
    %c512_648 = arith.constant 512 : index
    %821 = vector.load %arg9[%c0_647, %c512_648] : memref<20x896xf32, #tpu.memory_space<vmem>>, vector<20x128xf32>
    tpu.vector_store %arg9[%c0_647, %c512_648], %820 {strides = array<i32>} : memref<20x896xf32, #tpu.memory_space<vmem>>, vector<20x128xf32>,
    %c0_649 = arith.constant 0 : index
    %c768_650 = arith.constant 768 : index
    %822 = vector.load %arg8[%c0_649, %c768_650] : memref<20x1024xf32, #tpu.memory_space<vmem>>, vector<20x128xf32>
    %823 = arith.addf %786, %822 : vector<20x128xf32>
    %cst_651 = arith.constant 0.000000e+00 : f32
    %824 = vector.broadcast %cst_651 : f32 to vector<20x128xf32>
    %825 = arith.maximumf %823, %824 : vector<20x128xf32>
    %c0_652 = arith.constant 0 : index
    %c4224 = arith.constant 4224 : index
    %826 = vector.load %arg3[%c0_652, %c4224] : memref<20x7168xf32, #tpu.memory_space<vmem>>, vector<20x128xf32>
    %827 = arith.mulf %825, %826 : vector<20x128xf32>
    %c0_653 = arith.constant 0 : index
    %c640_654 = arith.constant 640 : index
    %828 = vector.load %arg9[%c0_653, %c640_654] : memref<20x896xf32, #tpu.memory_space<vmem>>, vector<20x128xf32>
    tpu.vector_store %arg9[%c0_653, %c640_654], %827 {strides = array<i32>} : memref<20x896xf32, #tpu.memory_space<vmem>>, vector<20x128xf32>,
    %c0_655 = arith.constant 0 : index
    %c896_656 = arith.constant 896 : index
    %829 = vector.load %arg8[%c0_655, %c896_656] : memref<20x1024xf32, #tpu.memory_space<vmem>>, vector<20x128xf32>
    %830 = arith.addf %786, %829 : vector<20x128xf32>
    %cst_657 = arith.constant 0.000000e+00 : f32
    %831 = vector.broadcast %cst_657 : f32 to vector<20x128xf32>
    %832 = arith.maximumf %830, %831 : vector<20x128xf32>
    %c0_658 = arith.constant 0 : index
    %c4352 = arith.constant 4352 : index
    %833 = vector.load %arg3[%c0_658, %c4352] : memref<20x7168xf32, #tpu.memory_space<vmem>>, vector<20x128xf32>
    %834 = arith.mulf %832, %833 : vector<20x128xf32>
    %c0_659 = arith.constant 0 : index
    %c768_660 = arith.constant 768 : index
    %835 = vector.load %arg9[%c0_659, %c768_660] : memref<20x896xf32, #tpu.memory_space<vmem>>, vector<20x128xf32>
    tpu.vector_store %arg9[%c0_659, %c768_660], %834 {strides = array<i32>} : memref<20x896xf32, #tpu.memory_space<vmem>>, vector<20x128xf32>,
    %c0_661 = arith.constant 0 : index
    %c0_662 = arith.constant 0 : index
    %836 = vector.load %arg9[%c0_661, %c0_662] : memref<20x896xf32, #tpu.memory_space<vmem>>, vector<20x896xf32>
    %cst_663 = arith.constant dense<0.000000e+00> : vector<20x896xf32>
    %837 = tpu.matmul %505, %836, %cst_663 {dimension_numbers = #tpu.dot_dimension_numbers<[1], [0], [0], [1], [0, 0, 1, 1], [], []>} : vector<20x20xf32>, vector<20x896xf32>, vector<20x896xf32> -> vector<20x896xf32>
    %838 = arith.addf %837, %509 : vector<20x896xf32>
    %cst_664 = arith.constant 0.000000e+00 : f32
    %839 = vector.broadcast %cst_664 : f32 to vector<20x896xf32>
    %840 = arith.maximumf %838, %839 : vector<20x896xf32>
    %841 = vector.extract_strided_slice %840 {offsets = [0, 0], sizes = [20, 128], strides = [1, 1]} : vector<20x896xf32> to vector<20x128xf32>
    %842 = vector.extract_strided_slice %840 {offsets = [0, 128], sizes = [20, 128], strides = [1, 1]} : vector<20x896xf32> to vector<20x128xf32>
    %843 = arith.addf %841, %842 : vector<20x128xf32>
    %844 = vector.extract_strided_slice %840 {offsets = [0, 256], sizes = [20, 128], strides = [1, 1]} : vector<20x896xf32> to vector<20x128xf32>
    %845 = arith.addf %843, %844 : vector<20x128xf32>
    %846 = vector.extract_strided_slice %840 {offsets = [0, 384], sizes = [20, 128], strides = [1, 1]} : vector<20x896xf32> to vector<20x128xf32>
    %847 = arith.addf %845, %846 : vector<20x128xf32>
    %848 = vector.extract_strided_slice %840 {offsets = [0, 512], sizes = [20, 128], strides = [1, 1]} : vector<20x896xf32> to vector<20x128xf32>
    %849 = arith.addf %847, %848 : vector<20x128xf32>
    %850 = vector.extract_strided_slice %840 {offsets = [0, 640], sizes = [20, 128], strides = [1, 1]} : vector<20x896xf32> to vector<20x128xf32>
    %851 = arith.addf %849, %850 : vector<20x128xf32>
    %852 = vector.extract_strided_slice %840 {offsets = [0, 768], sizes = [20, 128], strides = [1, 1]} : vector<20x896xf32> to vector<20x128xf32>
    %853 = arith.addf %851, %852 : vector<20x128xf32>
    %cst_665 = arith.constant dense<0.000000e+00> : vector<1x128xf32>
    %854 = tpu.matmul %506, %853, %cst_665 {dimension_numbers = #tpu.dot_dimension_numbers<[1], [0], [0], [1], [0, 0, 1, 1], [], []>} : vector<1x20xf32>, vector<20x128xf32>, vector<1x128xf32> -> vector<1x128xf32>
    %c0_666 = arith.constant 0 : index
    %c640_667 = arith.constant 640 : index
    %855 = vector.load %arg7[%c0_666, %c640_667] : memref<20x1024xf32, #tpu.memory_space<vmem>>, vector<20x128xf32>
    %c0_668 = arith.constant 0 : index
    %c0_669 = arith.constant 0 : index
    %856 = vector.load %arg8[%c0_668, %c0_669] : memref<20x1024xf32, #tpu.memory_space<vmem>>, vector<20x128xf32>
    %857 = arith.addf %855, %856 : vector<20x128xf32>
    %cst_670 = arith.constant 0.000000e+00 : f32
    %858 = vector.broadcast %cst_670 : f32 to vector<20x128xf32>
    %859 = arith.maximumf %857, %858 : vector<20x128xf32>
    %c0_671 = arith.constant 0 : index
    %c4480 = arith.constant 4480 : index
    %860 = vector.load %arg3[%c0_671, %c4480] : memref<20x7168xf32, #tpu.memory_space<vmem>>, vector<20x128xf32>
    %861 = arith.mulf %859, %860 : vector<20x128xf32>
    %c0_672 = arith.constant 0 : index
    %c0_673 = arith.constant 0 : index
    %862 = vector.load %arg9[%c0_672, %c0_673] : memref<20x896xf32, #tpu.memory_space<vmem>>, vector<20x128xf32>
    tpu.vector_store %arg9[%c0_672, %c0_673], %861 {strides = array<i32>} : memref<20x896xf32, #tpu.memory_space<vmem>>, vector<20x128xf32>,
    %c0_674 = arith.constant 0 : index
    %c128_675 = arith.constant 128 : index
    %863 = vector.load %arg8[%c0_674, %c128_675] : memref<20x1024xf32, #tpu.memory_space<vmem>>, vector<20x128xf32>
    %864 = arith.addf %855, %863 : vector<20x128xf32>
    %cst_676 = arith.constant 0.000000e+00 : f32
    %865 = vector.broadcast %cst_676 : f32 to vector<20x128xf32>
    %866 = arith.maximumf %864, %865 : vector<20x128xf32>
    %c0_677 = arith.constant 0 : index
    %c4608 = arith.constant 4608 : index
    %867 = vector.load %arg3[%c0_677, %c4608] : memref<20x7168xf32, #tpu.memory_space<vmem>>, vector<20x128xf32>
    %868 = arith.mulf %866, %867 : vector<20x128xf32>
    %c0_678 = arith.constant 0 : index
    %c128_679 = arith.constant 128 : index
    %869 = vector.load %arg9[%c0_678, %c128_679] : memref<20x896xf32, #tpu.memory_space<vmem>>, vector<20x128xf32>
    tpu.vector_store %arg9[%c0_678, %c128_679], %868 {strides = array<i32>} : memref<20x896xf32, #tpu.memory_space<vmem>>, vector<20x128xf32>,
    %c0_680 = arith.constant 0 : index
    %c256_681 = arith.constant 256 : index
    %870 = vector.load %arg8[%c0_680, %c256_681] : memref<20x1024xf32, #tpu.memory_space<vmem>>, vector<20x128xf32>
    %871 = arith.addf %855, %870 : vector<20x128xf32>
    %cst_682 = arith.constant 0.000000e+00 : f32
    %872 = vector.broadcast %cst_682 : f32 to vector<20x128xf32>
    %873 = arith.maximumf %871, %872 : vector<20x128xf32>
    %c0_683 = arith.constant 0 : index
    %c4736 = arith.constant 4736 : index
    %874 = vector.load %arg3[%c0_683, %c4736] : memref<20x7168xf32, #tpu.memory_space<vmem>>, vector<20x128xf32>
    %875 = arith.mulf %873, %874 : vector<20x128xf32>
    %c0_684 = arith.constant 0 : index
    %c256_685 = arith.constant 256 : index
    %876 = vector.load %arg9[%c0_684, %c256_685] : memref<20x896xf32, #tpu.memory_space<vmem>>, vector<20x128xf32>
    tpu.vector_store %arg9[%c0_684, %c256_685], %875 {strides = array<i32>} : memref<20x896xf32, #tpu.memory_space<vmem>>, vector<20x128xf32>,
    %c0_686 = arith.constant 0 : index
    %c384_687 = arith.constant 384 : index
    %877 = vector.load %arg8[%c0_686, %c384_687] : memref<20x1024xf32, #tpu.memory_space<vmem>>, vector<20x128xf32>
    %878 = arith.addf %855, %877 : vector<20x128xf32>
    %cst_688 = arith.constant 0.000000e+00 : f32
    %879 = vector.broadcast %cst_688 : f32 to vector<20x128xf32>
    %880 = arith.maximumf %878, %879 : vector<20x128xf32>
    %c0_689 = arith.constant 0 : index
    %c4864 = arith.constant 4864 : index
    %881 = vector.load %arg3[%c0_689, %c4864] : memref<20x7168xf32, #tpu.memory_space<vmem>>, vector<20x128xf32>
    %882 = arith.mulf %880, %881 : vector<20x128xf32>
    %c0_690 = arith.constant 0 : index
    %c384_691 = arith.constant 384 : index
    %883 = vector.load %arg9[%c0_690, %c384_691] : memref<20x896xf32, #tpu.memory_space<vmem>>, vector<20x128xf32>
    tpu.vector_store %arg9[%c0_690, %c384_691], %882 {strides = array<i32>} : memref<20x896xf32, #tpu.memory_space<vmem>>, vector<20x128xf32>,
    %c0_692 = arith.constant 0 : index
    %c512_693 = arith.constant 512 : index
    %884 = vector.load %arg8[%c0_692, %c512_693] : memref<20x1024xf32, #tpu.memory_space<vmem>>, vector<20x128xf32>
    %885 = arith.addf %855, %884 : vector<20x128xf32>
    %cst_694 = arith.constant 0.000000e+00 : f32
    %886 = vector.broadcast %cst_694 : f32 to vector<20x128xf32>
    %887 = arith.maximumf %885, %886 : vector<20x128xf32>
    %c0_695 = arith.constant 0 : index
    %c4992 = arith.constant 4992 : index
    %888 = vector.load %arg3[%c0_695, %c4992] : memref<20x7168xf32, #tpu.memory_space<vmem>>, vector<20x128xf32>
    %889 = arith.mulf %887, %888 : vector<20x128xf32>
    %c0_696 = arith.constant 0 : index
    %c512_697 = arith.constant 512 : index
    %890 = vector.load %arg9[%c0_696, %c512_697] : memref<20x896xf32, #tpu.memory_space<vmem>>, vector<20x128xf32>
    tpu.vector_store %arg9[%c0_696, %c512_697], %889 {strides = array<i32>} : memref<20x896xf32, #tpu.memory_space<vmem>>, vector<20x128xf32>,
    %c0_698 = arith.constant 0 : index
    %c768_699 = arith.constant 768 : index
    %891 = vector.load %arg8[%c0_698, %c768_699] : memref<20x1024xf32, #tpu.memory_space<vmem>>, vector<20x128xf32>
    %892 = arith.addf %855, %891 : vector<20x128xf32>
    %cst_700 = arith.constant 0.000000e+00 : f32
    %893 = vector.broadcast %cst_700 : f32 to vector<20x128xf32>
    %894 = arith.maximumf %892, %893 : vector<20x128xf32>
    %c0_701 = arith.constant 0 : index
    %c5120 = arith.constant 5120 : index
    %895 = vector.load %arg3[%c0_701, %c5120] : memref<20x7168xf32, #tpu.memory_space<vmem>>, vector<20x128xf32>
    %896 = arith.mulf %894, %895 : vector<20x128xf32>
    %c0_702 = arith.constant 0 : index
    %c640_703 = arith.constant 640 : index
    %897 = vector.load %arg9[%c0_702, %c640_703] : memref<20x896xf32, #tpu.memory_space<vmem>>, vector<20x128xf32>
    tpu.vector_store %arg9[%c0_702, %c640_703], %896 {strides = array<i32>} : memref<20x896xf32, #tpu.memory_space<vmem>>, vector<20x128xf32>,
    %c0_704 = arith.constant 0 : index
    %c896_705 = arith.constant 896 : index
    %898 = vector.load %arg8[%c0_704, %c896_705] : memref<20x1024xf32, #tpu.memory_space<vmem>>, vector<20x128xf32>
    %899 = arith.addf %855, %898 : vector<20x128xf32>
    %cst_706 = arith.constant 0.000000e+00 : f32
    %900 = vector.broadcast %cst_706 : f32 to vector<20x128xf32>
    %901 = arith.maximumf %899, %900 : vector<20x128xf32>
    %c0_707 = arith.constant 0 : index
    %c5248 = arith.constant 5248 : index
    %902 = vector.load %arg3[%c0_707, %c5248] : memref<20x7168xf32, #tpu.memory_space<vmem>>, vector<20x128xf32>
    %903 = arith.mulf %901, %902 : vector<20x128xf32>
    %c0_708 = arith.constant 0 : index
    %c768_709 = arith.constant 768 : index
    %904 = vector.load %arg9[%c0_708, %c768_709] : memref<20x896xf32, #tpu.memory_space<vmem>>, vector<20x128xf32>
    tpu.vector_store %arg9[%c0_708, %c768_709], %903 {strides = array<i32>} : memref<20x896xf32, #tpu.memory_space<vmem>>, vector<20x128xf32>,
    %c0_710 = arith.constant 0 : index
    %c0_711 = arith.constant 0 : index
    %905 = vector.load %arg9[%c0_710, %c0_711] : memref<20x896xf32, #tpu.memory_space<vmem>>, vector<20x896xf32>
    %cst_712 = arith.constant dense<0.000000e+00> : vector<20x896xf32>
    %906 = tpu.matmul %505, %905, %cst_712 {dimension_numbers = #tpu.dot_dimension_numbers<[1], [0], [0], [1], [0, 0, 1, 1], [], []>} : vector<20x20xf32>, vector<20x896xf32>, vector<20x896xf32> -> vector<20x896xf32>
    %907 = arith.addf %906, %509 : vector<20x896xf32>
    %cst_713 = arith.constant 0.000000e+00 : f32
    %908 = vector.broadcast %cst_713 : f32 to vector<20x896xf32>
    %909 = arith.maximumf %907, %908 : vector<20x896xf32>
    %910 = vector.extract_strided_slice %909 {offsets = [0, 0], sizes = [20, 128], strides = [1, 1]} : vector<20x896xf32> to vector<20x128xf32>
    %911 = vector.extract_strided_slice %909 {offsets = [0, 128], sizes = [20, 128], strides = [1, 1]} : vector<20x896xf32> to vector<20x128xf32>
    %912 = arith.addf %910, %911 : vector<20x128xf32>
    %913 = vector.extract_strided_slice %909 {offsets = [0, 256], sizes = [20, 128], strides = [1, 1]} : vector<20x896xf32> to vector<20x128xf32>
    %914 = arith.addf %912, %913 : vector<20x128xf32>
    %915 = vector.extract_strided_slice %909 {offsets = [0, 384], sizes = [20, 128], strides = [1, 1]} : vector<20x896xf32> to vector<20x128xf32>
    %916 = arith.addf %914, %915 : vector<20x128xf32>
    %917 = vector.extract_strided_slice %909 {offsets = [0, 512], sizes = [20, 128], strides = [1, 1]} : vector<20x896xf32> to vector<20x128xf32>
    %918 = arith.addf %916, %917 : vector<20x128xf32>
    %919 = vector.extract_strided_slice %909 {offsets = [0, 640], sizes = [20, 128], strides = [1, 1]} : vector<20x896xf32> to vector<20x128xf32>
    %920 = arith.addf %918, %919 : vector<20x128xf32>
    %921 = vector.extract_strided_slice %909 {offsets = [0, 768], sizes = [20, 128], strides = [1, 1]} : vector<20x896xf32> to vector<20x128xf32>
    %922 = arith.addf %920, %921 : vector<20x128xf32>
    %cst_714 = arith.constant dense<0.000000e+00> : vector<1x128xf32>
    %923 = tpu.matmul %506, %922, %cst_714 {dimension_numbers = #tpu.dot_dimension_numbers<[1], [0], [0], [1], [0, 0, 1, 1], [], []>} : vector<1x20xf32>, vector<20x128xf32>, vector<1x128xf32> -> vector<1x128xf32>
    %c0_715 = arith.constant 0 : index
    %c768_716 = arith.constant 768 : index
    %924 = vector.load %arg7[%c0_715, %c768_716] : memref<20x1024xf32, #tpu.memory_space<vmem>>, vector<20x128xf32>
    %c0_717 = arith.constant 0 : index
    %c0_718 = arith.constant 0 : index
    %925 = vector.load %arg8[%c0_717, %c0_718] : memref<20x1024xf32, #tpu.memory_space<vmem>>, vector<20x128xf32>
    %926 = arith.addf %924, %925 : vector<20x128xf32>
    %cst_719 = arith.constant 0.000000e+00 : f32
    %927 = vector.broadcast %cst_719 : f32 to vector<20x128xf32>
    %928 = arith.maximumf %926, %927 : vector<20x128xf32>
    %c0_720 = arith.constant 0 : index
    %c5376 = arith.constant 5376 : index
    %929 = vector.load %arg3[%c0_720, %c5376] : memref<20x7168xf32, #tpu.memory_space<vmem>>, vector<20x128xf32>
    %930 = arith.mulf %928, %929 : vector<20x128xf32>
    %c0_721 = arith.constant 0 : index
    %c0_722 = arith.constant 0 : index
    %931 = vector.load %arg9[%c0_721, %c0_722] : memref<20x896xf32, #tpu.memory_space<vmem>>, vector<20x128xf32>
    tpu.vector_store %arg9[%c0_721, %c0_722], %930 {strides = array<i32>} : memref<20x896xf32, #tpu.memory_space<vmem>>, vector<20x128xf32>,
    %c0_723 = arith.constant 0 : index
    %c128_724 = arith.constant 128 : index
    %932 = vector.load %arg8[%c0_723, %c128_724] : memref<20x1024xf32, #tpu.memory_space<vmem>>, vector<20x128xf32>
    %933 = arith.addf %924, %932 : vector<20x128xf32>
    %cst_725 = arith.constant 0.000000e+00 : f32
    %934 = vector.broadcast %cst_725 : f32 to vector<20x128xf32>
    %935 = arith.maximumf %933, %934 : vector<20x128xf32>
    %c0_726 = arith.constant 0 : index
    %c5504 = arith.constant 5504 : index
    %936 = vector.load %arg3[%c0_726, %c5504] : memref<20x7168xf32, #tpu.memory_space<vmem>>, vector<20x128xf32>
    %937 = arith.mulf %935, %936 : vector<20x128xf32>
    %c0_727 = arith.constant 0 : index
    %c128_728 = arith.constant 128 : index
    %938 = vector.load %arg9[%c0_727, %c128_728] : memref<20x896xf32, #tpu.memory_space<vmem>>, vector<20x128xf32>
    tpu.vector_store %arg9[%c0_727, %c128_728], %937 {strides = array<i32>} : memref<20x896xf32, #tpu.memory_space<vmem>>, vector<20x128xf32>,
    %c0_729 = arith.constant 0 : index
    %c256_730 = arith.constant 256 : index
    %939 = vector.load %arg8[%c0_729, %c256_730] : memref<20x1024xf32, #tpu.memory_space<vmem>>, vector<20x128xf32>
    %940 = arith.addf %924, %939 : vector<20x128xf32>
    %cst_731 = arith.constant 0.000000e+00 : f32
    %941 = vector.broadcast %cst_731 : f32 to vector<20x128xf32>
    %942 = arith.maximumf %940, %941 : vector<20x128xf32>
    %c0_732 = arith.constant 0 : index
    %c5632 = arith.constant 5632 : index
    %943 = vector.load %arg3[%c0_732, %c5632] : memref<20x7168xf32, #tpu.memory_space<vmem>>, vector<20x128xf32>
    %944 = arith.mulf %942, %943 : vector<20x128xf32>
    %c0_733 = arith.constant 0 : index
    %c256_734 = arith.constant 256 : index
    %945 = vector.load %arg9[%c0_733, %c256_734] : memref<20x896xf32, #tpu.memory_space<vmem>>, vector<20x128xf32>
    tpu.vector_store %arg9[%c0_733, %c256_734], %944 {strides = array<i32>} : memref<20x896xf32, #tpu.memory_space<vmem>>, vector<20x128xf32>,
    %c0_735 = arith.constant 0 : index
    %c384_736 = arith.constant 384 : index
    %946 = vector.load %arg8[%c0_735, %c384_736] : memref<20x1024xf32, #tpu.memory_space<vmem>>, vector<20x128xf32>
    %947 = arith.addf %924, %946 : vector<20x128xf32>
    %cst_737 = arith.constant 0.000000e+00 : f32
    %948 = vector.broadcast %cst_737 : f32 to vector<20x128xf32>
    %949 = arith.maximumf %947, %948 : vector<20x128xf32>
    %c0_738 = arith.constant 0 : index
    %c5760 = arith.constant 5760 : index
    %950 = vector.load %arg3[%c0_738, %c5760] : memref<20x7168xf32, #tpu.memory_space<vmem>>, vector<20x128xf32>
    %951 = arith.mulf %949, %950 : vector<20x128xf32>
    %c0_739 = arith.constant 0 : index
    %c384_740 = arith.constant 384 : index
    %952 = vector.load %arg9[%c0_739, %c384_740] : memref<20x896xf32, #tpu.memory_space<vmem>>, vector<20x128xf32>
    tpu.vector_store %arg9[%c0_739, %c384_740], %951 {strides = array<i32>} : memref<20x896xf32, #tpu.memory_space<vmem>>, vector<20x128xf32>,
    %c0_741 = arith.constant 0 : index
    %c512_742 = arith.constant 512 : index
    %953 = vector.load %arg8[%c0_741, %c512_742] : memref<20x1024xf32, #tpu.memory_space<vmem>>, vector<20x128xf32>
    %954 = arith.addf %924, %953 : vector<20x128xf32>
    %cst_743 = arith.constant 0.000000e+00 : f32
    %955 = vector.broadcast %cst_743 : f32 to vector<20x128xf32>
    %956 = arith.maximumf %954, %955 : vector<20x128xf32>
    %c0_744 = arith.constant 0 : index
    %c5888 = arith.constant 5888 : index
    %957 = vector.load %arg3[%c0_744, %c5888] : memref<20x7168xf32, #tpu.memory_space<vmem>>, vector<20x128xf32>
    %958 = arith.mulf %956, %957 : vector<20x128xf32>
    %c0_745 = arith.constant 0 : index
    %c512_746 = arith.constant 512 : index
    %959 = vector.load %arg9[%c0_745, %c512_746] : memref<20x896xf32, #tpu.memory_space<vmem>>, vector<20x128xf32>
    tpu.vector_store %arg9[%c0_745, %c512_746], %958 {strides = array<i32>} : memref<20x896xf32, #tpu.memory_space<vmem>>, vector<20x128xf32>,
    %c0_747 = arith.constant 0 : index
    %c640_748 = arith.constant 640 : index
    %960 = vector.load %arg8[%c0_747, %c640_748] : memref<20x1024xf32, #tpu.memory_space<vmem>>, vector<20x128xf32>
    %961 = arith.addf %924, %960 : vector<20x128xf32>
    %cst_749 = arith.constant 0.000000e+00 : f32
    %962 = vector.broadcast %cst_749 : f32 to vector<20x128xf32>
    %963 = arith.maximumf %961, %962 : vector<20x128xf32>
    %c0_750 = arith.constant 0 : index
    %c6016 = arith.constant 6016 : index
    %964 = vector.load %arg3[%c0_750, %c6016] : memref<20x7168xf32, #tpu.memory_space<vmem>>, vector<20x128xf32>
    %965 = arith.mulf %963, %964 : vector<20x128xf32>
    %c0_751 = arith.constant 0 : index
    %c640_752 = arith.constant 640 : index
    %966 = vector.load %arg9[%c0_751, %c640_752] : memref<20x896xf32, #tpu.memory_space<vmem>>, vector<20x128xf32>
    tpu.vector_store %arg9[%c0_751, %c640_752], %965 {strides = array<i32>} : memref<20x896xf32, #tpu.memory_space<vmem>>, vector<20x128xf32>,
    %c0_753 = arith.constant 0 : index
    %c896_754 = arith.constant 896 : index
    %967 = vector.load %arg8[%c0_753, %c896_754] : memref<20x1024xf32, #tpu.memory_space<vmem>>, vector<20x128xf32>
    %968 = arith.addf %924, %967 : vector<20x128xf32>
    %cst_755 = arith.constant 0.000000e+00 : f32
    %969 = vector.broadcast %cst_755 : f32 to vector<20x128xf32>
    %970 = arith.maximumf %968, %969 : vector<20x128xf32>
    %c0_756 = arith.constant 0 : index
    %c6144 = arith.constant 6144 : index
    %971 = vector.load %arg3[%c0_756, %c6144] : memref<20x7168xf32, #tpu.memory_space<vmem>>, vector<20x128xf32>
    %972 = arith.mulf %970, %971 : vector<20x128xf32>
    %c0_757 = arith.constant 0 : index
    %c768_758 = arith.constant 768 : index
    %973 = vector.load %arg9[%c0_757, %c768_758] : memref<20x896xf32, #tpu.memory_space<vmem>>, vector<20x128xf32>
    tpu.vector_store %arg9[%c0_757, %c768_758], %972 {strides = array<i32>} : memref<20x896xf32, #tpu.memory_space<vmem>>, vector<20x128xf32>,
    %c0_759 = arith.constant 0 : index
    %c0_760 = arith.constant 0 : index
    %974 = vector.load %arg9[%c0_759, %c0_760] : memref<20x896xf32, #tpu.memory_space<vmem>>, vector<20x896xf32>
    %cst_761 = arith.constant dense<0.000000e+00> : vector<20x896xf32>
    %975 = tpu.matmul %505, %974, %cst_761 {dimension_numbers = #tpu.dot_dimension_numbers<[1], [0], [0], [1], [0, 0, 1, 1], [], []>} : vector<20x20xf32>, vector<20x896xf32>, vector<20x896xf32> -> vector<20x896xf32>
    %976 = arith.addf %975, %509 : vector<20x896xf32>
    %cst_762 = arith.constant 0.000000e+00 : f32
    %977 = vector.broadcast %cst_762 : f32 to vector<20x896xf32>
    %978 = arith.maximumf %976, %977 : vector<20x896xf32>
    %979 = vector.extract_strided_slice %978 {offsets = [0, 0], sizes = [20, 128], strides = [1, 1]} : vector<20x896xf32> to vector<20x128xf32>
    %980 = vector.extract_strided_slice %978 {offsets = [0, 128], sizes = [20, 128], strides = [1, 1]} : vector<20x896xf32> to vector<20x128xf32>
    %981 = arith.addf %979, %980 : vector<20x128xf32>
    %982 = vector.extract_strided_slice %978 {offsets = [0, 256], sizes = [20, 128], strides = [1, 1]} : vector<20x896xf32> to vector<20x128xf32>
    %983 = arith.addf %981, %982 : vector<20x128xf32>
    %984 = vector.extract_strided_slice %978 {offsets = [0, 384], sizes = [20, 128], strides = [1, 1]} : vector<20x896xf32> to vector<20x128xf32>
    %985 = arith.addf %983, %984 : vector<20x128xf32>
    %986 = vector.extract_strided_slice %978 {offsets = [0, 512], sizes = [20, 128], strides = [1, 1]} : vector<20x896xf32> to vector<20x128xf32>
    %987 = arith.addf %985, %986 : vector<20x128xf32>
    %988 = vector.extract_strided_slice %978 {offsets = [0, 640], sizes = [20, 128], strides = [1, 1]} : vector<20x896xf32> to vector<20x128xf32>
    %989 = arith.addf %987, %988 : vector<20x128xf32>
    %990 = vector.extract_strided_slice %978 {offsets = [0, 768], sizes = [20, 128], strides = [1, 1]} : vector<20x896xf32> to vector<20x128xf32>
    %991 = arith.addf %989, %990 : vector<20x128xf32>
    %cst_763 = arith.constant dense<0.000000e+00> : vector<1x128xf32>
    %992 = tpu.matmul %506, %991, %cst_763 {dimension_numbers = #tpu.dot_dimension_numbers<[1], [0], [0], [1], [0, 0, 1, 1], [], []>} : vector<1x20xf32>, vector<20x128xf32>, vector<1x128xf32> -> vector<1x128xf32>
    %c0_764 = arith.constant 0 : index
    %c896_765 = arith.constant 896 : index
    %993 = vector.load %arg7[%c0_764, %c896_765] : memref<20x1024xf32, #tpu.memory_space<vmem>>, vector<20x128xf32>
    %c0_766 = arith.constant 0 : index
    %c0_767 = arith.constant 0 : index
    %994 = vector.load %arg8[%c0_766, %c0_767] : memref<20x1024xf32, #tpu.memory_space<vmem>>, vector<20x128xf32>
    %995 = arith.addf %993, %994 : vector<20x128xf32>
    %cst_768 = arith.constant 0.000000e+00 : f32
    %996 = vector.broadcast %cst_768 : f32 to vector<20x128xf32>
    %997 = arith.maximumf %995, %996 : vector<20x128xf32>
    %c0_769 = arith.constant 0 : index
    %c6272 = arith.constant 6272 : index
    %998 = vector.load %arg3[%c0_769, %c6272] : memref<20x7168xf32, #tpu.memory_space<vmem>>, vector<20x128xf32>
    %999 = arith.mulf %997, %998 : vector<20x128xf32>
    %c0_770 = arith.constant 0 : index
    %c0_771 = arith.constant 0 : index
    %1000 = vector.load %arg9[%c0_770, %c0_771] : memref<20x896xf32, #tpu.memory_space<vmem>>, vector<20x128xf32>
    tpu.vector_store %arg9[%c0_770, %c0_771], %999 {strides = array<i32>} : memref<20x896xf32, #tpu.memory_space<vmem>>, vector<20x128xf32>,
    %c0_772 = arith.constant 0 : index
    %c128_773 = arith.constant 128 : index
    %1001 = vector.load %arg8[%c0_772, %c128_773] : memref<20x1024xf32, #tpu.memory_space<vmem>>, vector<20x128xf32>
    %1002 = arith.addf %993, %1001 : vector<20x128xf32>
    %cst_774 = arith.constant 0.000000e+00 : f32
    %1003 = vector.broadcast %cst_774 : f32 to vector<20x128xf32>
    %1004 = arith.maximumf %1002, %1003 : vector<20x128xf32>
    %c0_775 = arith.constant 0 : index
    %c6400 = arith.constant 6400 : index
    %1005 = vector.load %arg3[%c0_775, %c6400] : memref<20x7168xf32, #tpu.memory_space<vmem>>, vector<20x128xf32>
    %1006 = arith.mulf %1004, %1005 : vector<20x128xf32>
    %c0_776 = arith.constant 0 : index
    %c128_777 = arith.constant 128 : index
    %1007 = vector.load %arg9[%c0_776, %c128_777] : memref<20x896xf32, #tpu.memory_space<vmem>>, vector<20x128xf32>
    tpu.vector_store %arg9[%c0_776, %c128_777], %1006 {strides = array<i32>} : memref<20x896xf32, #tpu.memory_space<vmem>>, vector<20x128xf32>,
    %c0_778 = arith.constant 0 : index
    %c256_779 = arith.constant 256 : index
    %1008 = vector.load %arg8[%c0_778, %c256_779] : memref<20x1024xf32, #tpu.memory_space<vmem>>, vector<20x128xf32>
    %1009 = arith.addf %993, %1008 : vector<20x128xf32>
    %cst_780 = arith.constant 0.000000e+00 : f32
    %1010 = vector.broadcast %cst_780 : f32 to vector<20x128xf32>
    %1011 = arith.maximumf %1009, %1010 : vector<20x128xf32>
    %c0_781 = arith.constant 0 : index
    %c6528 = arith.constant 6528 : index
    %1012 = vector.load %arg3[%c0_781, %c6528] : memref<20x7168xf32, #tpu.memory_space<vmem>>, vector<20x128xf32>
    %1013 = arith.mulf %1011, %1012 : vector<20x128xf32>
    %c0_782 = arith.constant 0 : index
    %c256_783 = arith.constant 256 : index
    %1014 = vector.load %arg9[%c0_782, %c256_783] : memref<20x896xf32, #tpu.memory_space<vmem>>, vector<20x128xf32>
    tpu.vector_store %arg9[%c0_782, %c256_783], %1013 {strides = array<i32>} : memref<20x896xf32, #tpu.memory_space<vmem>>, vector<20x128xf32>,
    %c0_784 = arith.constant 0 : index
    %c384_785 = arith.constant 384 : index
    %1015 = vector.load %arg8[%c0_784, %c384_785] : memref<20x1024xf32, #tpu.memory_space<vmem>>, vector<20x128xf32>
    %1016 = arith.addf %993, %1015 : vector<20x128xf32>
    %cst_786 = arith.constant 0.000000e+00 : f32
    %1017 = vector.broadcast %cst_786 : f32 to vector<20x128xf32>
    %1018 = arith.maximumf %1016, %1017 : vector<20x128xf32>
    %c0_787 = arith.constant 0 : index
    %c6656 = arith.constant 6656 : index
    %1019 = vector.load %arg3[%c0_787, %c6656] : memref<20x7168xf32, #tpu.memory_space<vmem>>, vector<20x128xf32>
    %1020 = arith.mulf %1018, %1019 : vector<20x128xf32>
    %c0_788 = arith.constant 0 : index
    %c384_789 = arith.constant 384 : index
    %1021 = vector.load %arg9[%c0_788, %c384_789] : memref<20x896xf32, #tpu.memory_space<vmem>>, vector<20x128xf32>
    tpu.vector_store %arg9[%c0_788, %c384_789], %1020 {strides = array<i32>} : memref<20x896xf32, #tpu.memory_space<vmem>>, vector<20x128xf32>,
    %c0_790 = arith.constant 0 : index
    %c512_791 = arith.constant 512 : index
    %1022 = vector.load %arg8[%c0_790, %c512_791] : memref<20x1024xf32, #tpu.memory_space<vmem>>, vector<20x128xf32>
    %1023 = arith.addf %993, %1022 : vector<20x128xf32>
    %cst_792 = arith.constant 0.000000e+00 : f32
    %1024 = vector.broadcast %cst_792 : f32 to vector<20x128xf32>
    %1025 = arith.maximumf %1023, %1024 : vector<20x128xf32>
    %c0_793 = arith.constant 0 : index
    %c6784 = arith.constant 6784 : index
    %1026 = vector.load %arg3[%c0_793, %c6784] : memref<20x7168xf32, #tpu.memory_space<vmem>>, vector<20x128xf32>
    %1027 = arith.mulf %1025, %1026 : vector<20x128xf32>
    %c0_794 = arith.constant 0 : index
    %c512_795 = arith.constant 512 : index
    %1028 = vector.load %arg9[%c0_794, %c512_795] : memref<20x896xf32, #tpu.memory_space<vmem>>, vector<20x128xf32>
    tpu.vector_store %arg9[%c0_794, %c512_795], %1027 {strides = array<i32>} : memref<20x896xf32, #tpu.memory_space<vmem>>, vector<20x128xf32>,
    %c0_796 = arith.constant 0 : index
    %c640_797 = arith.constant 640 : index
    %1029 = vector.load %arg8[%c0_796, %c640_797] : memref<20x1024xf32, #tpu.memory_space<vmem>>, vector<20x128xf32>
    %1030 = arith.addf %993, %1029 : vector<20x128xf32>
    %cst_798 = arith.constant 0.000000e+00 : f32
    %1031 = vector.broadcast %cst_798 : f32 to vector<20x128xf32>
    %1032 = arith.maximumf %1030, %1031 : vector<20x128xf32>
    %c0_799 = arith.constant 0 : index
    %c6912 = arith.constant 6912 : index
    %1033 = vector.load %arg3[%c0_799, %c6912] : memref<20x7168xf32, #tpu.memory_space<vmem>>, vector<20x128xf32>
    %1034 = arith.mulf %1032, %1033 : vector<20x128xf32>
    %c0_800 = arith.constant 0 : index
    %c640_801 = arith.constant 640 : index
    %1035 = vector.load %arg9[%c0_800, %c640_801] : memref<20x896xf32, #tpu.memory_space<vmem>>, vector<20x128xf32>
    tpu.vector_store %arg9[%c0_800, %c640_801], %1034 {strides = array<i32>} : memref<20x896xf32, #tpu.memory_space<vmem>>, vector<20x128xf32>,
    %c0_802 = arith.constant 0 : index
    %c768_803 = arith.constant 768 : index
    %1036 = vector.load %arg8[%c0_802, %c768_803] : memref<20x1024xf32, #tpu.memory_space<vmem>>, vector<20x128xf32>
    %1037 = arith.addf %993, %1036 : vector<20x128xf32>
    %cst_804 = arith.constant 0.000000e+00 : f32
    %1038 = vector.broadcast %cst_804 : f32 to vector<20x128xf32>
    %1039 = arith.maximumf %1037, %1038 : vector<20x128xf32>
    %c0_805 = arith.constant 0 : index
    %c7040 = arith.constant 7040 : index
    %1040 = vector.load %arg3[%c0_805, %c7040] : memref<20x7168xf32, #tpu.memory_space<vmem>>, vector<20x128xf32>
    %1041 = arith.mulf %1039, %1040 : vector<20x128xf32>
    %c0_806 = arith.constant 0 : index
    %c768_807 = arith.constant 768 : index
    %1042 = vector.load %arg9[%c0_806, %c768_807] : memref<20x896xf32, #tpu.memory_space<vmem>>, vector<20x128xf32>
    tpu.vector_store %arg9[%c0_806, %c768_807], %1041 {strides = array<i32>} : memref<20x896xf32, #tpu.memory_space<vmem>>, vector<20x128xf32>,
    %c0_808 = arith.constant 0 : index
    %c0_809 = arith.constant 0 : index
    %1043 = vector.load %arg9[%c0_808, %c0_809] : memref<20x896xf32, #tpu.memory_space<vmem>>, vector<20x896xf32>
    %cst_810 = arith.constant dense<0.000000e+00> : vector<20x896xf32>
    %1044 = tpu.matmul %505, %1043, %cst_810 {dimension_numbers = #tpu.dot_dimension_numbers<[1], [0], [0], [1], [0, 0, 1, 1], [], []>} : vector<20x20xf32>, vector<20x896xf32>, vector<20x896xf32> -> vector<20x896xf32>
    %1045 = arith.addf %1044, %509 : vector<20x896xf32>
    %cst_811 = arith.constant 0.000000e+00 : f32
    %1046 = vector.broadcast %cst_811 : f32 to vector<20x896xf32>
    %1047 = arith.maximumf %1045, %1046 : vector<20x896xf32>
    %1048 = vector.extract_strided_slice %1047 {offsets = [0, 0], sizes = [20, 128], strides = [1, 1]} : vector<20x896xf32> to vector<20x128xf32>
    %1049 = vector.extract_strided_slice %1047 {offsets = [0, 128], sizes = [20, 128], strides = [1, 1]} : vector<20x896xf32> to vector<20x128xf32>
    %1050 = arith.addf %1048, %1049 : vector<20x128xf32>
    %1051 = vector.extract_strided_slice %1047 {offsets = [0, 256], sizes = [20, 128], strides = [1, 1]} : vector<20x896xf32> to vector<20x128xf32>
    %1052 = arith.addf %1050, %1051 : vector<20x128xf32>
    %1053 = vector.extract_strided_slice %1047 {offsets = [0, 384], sizes = [20, 128], strides = [1, 1]} : vector<20x896xf32> to vector<20x128xf32>
    %1054 = arith.addf %1052, %1053 : vector<20x128xf32>
    %1055 = vector.extract_strided_slice %1047 {offsets = [0, 512], sizes = [20, 128], strides = [1, 1]} : vector<20x896xf32> to vector<20x128xf32>
    %1056 = arith.addf %1054, %1055 : vector<20x128xf32>
    %1057 = vector.extract_strided_slice %1047 {offsets = [0, 640], sizes = [20, 128], strides = [1, 1]} : vector<20x896xf32> to vector<20x128xf32>
    %1058 = arith.addf %1056, %1057 : vector<20x128xf32>
    %1059 = vector.extract_strided_slice %1047 {offsets = [0, 768], sizes = [20, 128], strides = [1, 1]} : vector<20x896xf32> to vector<20x128xf32>
    %1060 = arith.addf %1058, %1059 : vector<20x128xf32>
    %cst_812 = arith.constant dense<0.000000e+00> : vector<1x128xf32>
    %1061 = tpu.matmul %506, %1060, %cst_812 {dimension_numbers = #tpu.dot_dimension_numbers<[1], [0], [0], [1], [0, 0, 1, 1], [], []>} : vector<1x20xf32>, vector<20x128xf32>, vector<1x128xf32> -> vector<1x128xf32>
    %1062 = tpu.concatenate %578, %647, %716, %785, %854, %923, %992, %1061 in 1 : vector<1x128xf32>, vector<1x128xf32>, vector<1x128xf32>, vector<1x128xf32>, vector<1x128xf32>, vector<1x128xf32>, vector<1x128xf32>, vector<1x128xf32> -> vector<1x1024xf32>
    %c216 = arith.constant 216 : index
    %c0_813 = arith.constant 0 : index
    %1063 = vector.load %arg4[%c216, %c0_813] : memref<224x128xf32, #tpu.memory_space<vmem>>, vector<1x1xf32>
    %1064 = vector.broadcast %1063 : vector<1x1xf32> to vector<1x1024xf32>
    %1065 = arith.addf %1062, %1064 : vector<1x1024xf32>
    %c0_814 = arith.constant 0 : index
    %c0_815 = arith.constant 0 : index
    %c0_816 = arith.constant 0 : index
    %1066 = vector.load %arg5[%c0_814, %c0_815, %c0_816] : memref<1x1x1024xf32, #tpu.memory_space<vmem>>, vector<1x1x1024xf32>
    %1067 = vector.shape_cast %1066 : vector<1x1x1024xf32> to vector<1x1024xf32>
    %1068 = vector.shape_cast %1065 : vector<1x1024xf32> to vector<1x1x1024xf32>
    tpu.vector_store %arg5[%c0_814, %c0_815, %c0_816], %1068 {strides = array<i32>} : memref<1x1x1024xf32, #tpu.memory_space<vmem>>, vector<1x1x1024xf32>,
    return
  }
  func.func @transform_0(%arg0: i32, %arg1: memref<8x12xi32, #tpu.memory_space<smem>>) -> (i32, i32, i32) {
    %c0_i32 = arith.constant 0 : i32
    %c0_i32_0 = arith.constant 0 : i32
    %c0_i32_1 = arith.constant 0 : i32
    return %arg0, %c0_i32, %c0_i32_0 : i32, i32, i32
  }
  func.func @transform_1(%arg0: i32, %arg1: memref<8x12xi32, #tpu.memory_space<smem>>) -> (i32, i32) {
    %c0_i32 = arith.constant 0 : i32
    %c0_i32_0 = arith.constant 0 : i32
    %c0_i32_1 = arith.constant 0 : i32
    return %c0_i32, %c0_i32_0 : i32, i32
  }
  func.func @transform_2(%arg0: i32, %arg1: memref<8x12xi32, #tpu.memory_space<smem>>) -> (i32, i32) {
    %c0_i32 = arith.constant 0 : i32
    %c0_i32_0 = arith.constant 0 : i32
    %c0_i32_1 = arith.constant 0 : i32
    return %c0_i32, %c0_i32_0 : i32, i32
  }
  func.func @transform_3(%arg0: i32, %arg1: memref<8x12xi32, #tpu.memory_space<smem>>) -> (i32, i32, i32) {
    %c0_i32 = arith.constant 0 : i32
    %c0_i32_0 = arith.constant 0 : i32
    %c0_i32_1 = arith.constant 0 : i32
    return %arg0, %c0_i32, %c0_i32_0 : i32, i32, i32
  }
}

</mosaic_0001>

<llo_original>
// kernel: tpu_custom_call.1
$region0: #{tpu_custom_call.1}
  #allocation0 [shape = 'u32[]', space=smem, size = 0x4, offset = 0x4, fixed_abs, tag = 'smem constant byte address 0x4 - core index']
  #allocation1 [shape = 'u32[72,128]{1,0:T(1,128)}', space=vmem, size = 0x9000, scoped, tag = 'internal scratch']
  #allocation2 [shape = 'f32[16,1024]{1,0:T(8,128)}', space=vmem, size = 0x10000, scoped, tag = 'scratch operand']
  #allocation3 [shape = 'f32[20,1024]{1,0:T(8,128)}', space=vmem, size = 0x18000, scoped, tag = 'scratch operand']
  #allocation4 [shape = 'f32[20,1024]{1,0:T(8,128)}', space=vmem, size = 0x18000, scoped, tag = 'scratch operand']
  #allocation5 [shape = 'f32[20,896]{1,0:T(8,128)}', space=vmem, size = 0x15000, scoped, tag = 'scratch operand']
  #allocation6 [shape = 's32[1]{0}', space=sflag, size = 0x4, scoped, tag = 'scoped memory for tpu_custom_call.1']
  #allocation7 [shape = 'u8[4096]{0}', space=smem, size = 0x1000, scoped, tag = 'prefetched SMEM operand 0']
  %s0 = inlined_call_operand.hbm [shape: s32[8,12], index: 0, kind: input, shape index: {}]
  %s1 = inlined_call_operand.hbm [shape: f32[1,2,1536], index: 1, kind: input, shape index: {}]
  %s2 = inlined_call_operand.hbm [shape: f32[20,7168], index: 2, kind: input, shape index: {}]
  %s3 = inlined_call_operand.hbm [shape: f32[224,128], index: 3, kind: input, shape index: {}]
  %s4 = inlined_call_operand.hbm [shape: f32[1,1,1024], index: 4, kind: output, shape index: {}]
  %s5 = sld [smem:[#allocation0]]
  $region418: #{tpu_custom_call.1} parent=0
    _
  %s7 = ssub.s32 1, %s5
  %s8 = scalar_select 0, %s7, %s5
  %s10 = sshll.u32 %s0, 4
  %s11 = int_to_ptr.hbm [resolvable:$true] %s10
  %13 = dma.hbm_to_smem %s11, 128, [#allocation7], [#allocation6]
  %15 = dma.done [#allocation6], 128
  %16 = sfence
  $region1: #{tpu_custom_call.1} parent=0
    #allocation8 [shape = 'u8[12288]{0}', space=vmem, size = 0x3000, scoped, tag = 'input window, operand 1, single buffered']
    #allocation9 [shape = 's32[1]{0}', space=sflag, size = 0x4, scoped, tag = 'scoped memory for tpu_custom_call.1']
    #allocation10 [shape = 's32[1]{0}', space=sflag, size = 0x4, scoped, tag = 'scoped memory for tpu_custom_call.1']
    #allocation11 [shape = 'u8[688128]{0}', space=vmem, size = 0xa8000, scoped, tag = 'input window, operand 2, single buffered']
    #allocation12 [shape = 's32[1]{0}', space=sflag, size = 0x4, scoped, tag = 'scoped memory for tpu_custom_call.1']
    #allocation13 [shape = 'u8[114688]{0}', space=vmem, size = 0x1c000, scoped, tag = 'input window, operand 3, single buffered']
    #allocation14 [shape = 'u8[4096]{0}', space=vmem, size = 0x1000, scoped, tag = 'output window, operand 0, single buffered']
    %17 = vsyncpa [#allocation9], 0
    %18 = vsyncpa [#allocation12], 0
    %19 = vsyncpa [#allocation10], 0
    // Predicated region
    $region2: #{tpu_custom_call.1} parent=1 // pred_check
      _
    $region3: #{tpu_custom_call.1} parent=1 // pred_check_branch
      %21 = sbr.rel (0) target = $region5
    $region4: #{tpu_custom_call.1} parent=1 // pred_region
      %23 = vsyncadd [#allocation9], 0
      %s25 = sshll.u32 %s1, 4
      %s26 = int_to_ptr.hbm [resolvable:$true] %s25
      %s27 = sshll.u32 [#allocation8], 4
      %s28 = int_to_ptr.vmem [resolvable:$true] %s27
      %30 = dma.hbm_to_vmem [thread:$0]  %s26, 384, %s28, [#allocation9]
    $region5: #{tpu_custom_call.1} parent=1 // pred_fallthru
      _
    // Predicated region
    $region6: #{tpu_custom_call.1} parent=1 // pred_check
      _
    $region7: #{tpu_custom_call.1} parent=1 // pred_check_branch
      %32 = sbr.rel (0) target = $region9
    $region8: #{tpu_custom_call.1} parent=1 // pred_region
      %34 = vsyncadd [#allocation12], 0
      %s35 = sshll.u32 %s2, 4
      %s36 = int_to_ptr.hbm [resolvable:$true] %s35
      %s37 = sshll.u32 [#allocation11], 4
      %s38 = int_to_ptr.vmem [resolvable:$true] %s37
      %43 = dma.hbm_to_vmem [thread:$0]  %s36, 21504, %s38, [#allocation12], 7168, 7168, 448
    $region9: #{tpu_custom_call.1} parent=1 // pred_fallthru
      _
    // Predicated region
    $region10: #{tpu_custom_call.1} parent=1 // pred_check
      _
    $region11: #{tpu_custom_call.1} parent=1 // pred_check_branch
      %45 = sbr.rel (0) target = $region13
    $region12: #{tpu_custom_call.1} parent=1 // pred_region
      %47 = vsyncadd [#allocation12], 0
      %s48 = sshll.u32 %s3, 4
      %s49 = int_to_ptr.hbm [resolvable:$true] %s48
      %s50 = sshll.u32 [#allocation13], 4
      %s51 = int_to_ptr.vmem [resolvable:$true] %s50
      %56 = dma.hbm_to_vmem [thread:$0]  %s49, 3584, %s51, [#allocation12], 128, 128, 8
    $region13: #{tpu_custom_call.1} parent=1 // pred_fallthru
      _
    // Predicated region
    $region14: #{tpu_custom_call.1} parent=1 // pred_check
      _
    $region15: #{tpu_custom_call.1} parent=1 // pred_check_branch
      %58 = sbr.rel (0) target = $region17
    $region16: #{tpu_custom_call.1} parent=1 // pred_region
      %60 = dma.done [#allocation9], 384
    $region17: #{tpu_custom_call.1} parent=1 // pred_fallthru
      _
    // Predicated region
    $region18: #{tpu_custom_call.1} parent=1 // pred_check
      _
    $region19: #{tpu_custom_call.1} parent=1 // pred_check_branch
      %62 = sbr.rel (0) target = $region21
    $region20: #{tpu_custom_call.1} parent=1 // pred_region
      %64 = dma.done [#allocation12], 21504
    $region21: #{tpu_custom_call.1} parent=1 // pred_fallthru
      _
    // Predicated region
    $region22: #{tpu_custom_call.1} parent=1 // pred_check
      _
    $region23: #{tpu_custom_call.1} parent=1 // pred_check_branch
      %66 = sbr.rel (0) target = $region25
    $region24: #{tpu_custom_call.1} parent=1 // pred_region
      %68 = dma.done [#allocation12], 3584
    $region25: #{tpu_custom_call.1} parent=1 // pred_fallthru
      _
    %v69 = vld [vmem:[#allocation8] sm:$0xff]
    %v70 = vld [vmem:[#allocation8 + $0x8] sm:$0xff]
    %v71 = vld [vmem:[#allocation8 + $0x10] sm:$0xff]
    %v72 = vld [vmem:[#allocation13] sm:$0xf]
    %74 = vset.pattern.permute.xlu0 0
    %75 = vperm.xlu0 %74, %v72
    %v76 = vpop.permute.xlu0 %75
    %v81 = vperm.slane %v69, 0
    %v82 = vperm.slane %v69, 2
    %v83 = vperm.slane %v69, 4
    %v84 = vperm.slane %v69, 6
    %v85 = vperm.slane %v70, 0
    %v86 = vperm.slane %v70, 2
    %v87 = vperm.slane %v70, 4
    %v88 = vperm.slane %v70, 6
    %v89 = vperm.slane %v71, 0
    %v90 = vperm.slane %v71, 2
    %v91 = vperm.slane %v71, 4
    %v92 = vperm.slane %v71, 6
    %v105 = vperm.slane %v81, 0
    %v106 = vperm.slane %v82, 0
    %v107 = vperm.slane %v83, 0
    %v108 = vperm.slane %v84, 0
    %v109 = vperm.slane %v85, 0
    %v110 = vperm.slane %v86, 0
    %v111 = vperm.slane %v87, 0
    %v112 = vperm.slane %v88, 0
    %v113 = vperm.slane %v89, 0
    %v114 = vperm.slane %v90, 0
    %v115 = vperm.slane %v91, 0
    %v116 = vperm.slane %v92, 0
    %v117 = vmul.f32 %v76, %v105
    %v118 = vmul.f32 %v76, %v106
    %v119 = vmul.f32 %v76, %v107
    %v120 = vmul.f32 %v76, %v108
    %v121 = vmul.f32 %v76, %v109
    %v122 = vmul.f32 %v76, %v110
    %v123 = vmul.f32 %v76, %v111
    %v124 = vmul.f32 %v76, %v112
    %v125 = vmul.f32 %v76, %v113
    %v126 = vmul.f32 %v76, %v114
    %v127 = vmul.f32 %v76, %v115
    %v128 = vmul.f32 %v76, %v116
    %v129 = vld [vmem:[#allocation13 + $0x8] sm:$0xf]
    %131 = vset.pattern.permute.xlu0 0
    %132 = vperm.xlu0 %131, %v129
    %v133 = vpop.permute.xlu0 %132
    %v135 = vadd.f32 %v117, %v133
    %v136 = vadd.f32 %v118, %v133
    %v137 = vadd.f32 %v119, %v133
    %v138 = vadd.f32 %v120, %v133
    %v139 = vadd.f32 %v121, %v133
    %v140 = vadd.f32 %v122, %v133
    %v141 = vadd.f32 %v123, %v133
    %v142 = vadd.f32 %v124, %v133
    %v143 = vadd.f32 %v125, %v133
    %v144 = vadd.f32 %v126, %v133
    %v145 = vadd.f32 %v127, %v133
    %v146 = vadd.f32 %v128, %v133
    %v147 = vxor.u32 %v135, 2147483648
    %v148 = vxor.u32 %v136, 2147483648
    %v149 = vxor.u32 %v137, 2147483648
    %v150 = vxor.u32 %v138, 2147483648
    %v151 = vxor.u32 %v139, 2147483648
    %v152 = vxor.u32 %v140, 2147483648
    %v153 = vxor.u32 %v141, 2147483648
    %v154 = vxor.u32 %v142, 2147483648
    %v155 = vxor.u32 %v143, 2147483648
    %v156 = vxor.u32 %v144, 2147483648
    %v157 = vxor.u32 %v145, 2147483648
    %v158 = vxor.u32 %v146, 2147483648
    %v159 = vmul.f32 %v147, 1.442695
    %v160 = vpow.pop %v159
    %v161 = vmul.f32 %v148, 1.442695
    %v162 = vpow.pop %v161
    %v163 = vmul.f32 %v149, 1.442695
    %v164 = vpow.pop %v163
    %v165 = vmul.f32 %v150, 1.442695
    %v166 = vpow.pop %v165
    %v167 = vmul.f32 %v151, 1.442695
    %v168 = vpow.pop %v167
    %v169 = vmul.f32 %v152, 1.442695
    %v170 = vpow.pop %v169
    %v171 = vmul.f32 %v153, 1.442695
    %v172 = vpow.pop %v171
    %v173 = vmul.f32 %v154, 1.442695
    %v174 = vpow.pop %v173
    %v175 = vmul.f32 %v155, 1.442695
    %v176 = vpow.pop %v175
    %v177 = vmul.f32 %v156, 1.442695
    %v178 = vpow.pop %v177
    %v179 = vmul.f32 %v157, 1.442695
    %v180 = vpow.pop %v179
    %v181 = vmul.f32 %v158, 1.442695
    %v182 = vpow.pop %v181
    %v183 = vadd.f32 %v160, 1.0
    %v184 = vadd.f32 %v162, 1.0
    %v185 = vadd.f32 %v164, 1.0
    %v186 = vadd.f32 %v166, 1.0
    %v187 = vadd.f32 %v168, 1.0
    %v188 = vadd.f32 %v170, 1.0
    %v189 = vadd.f32 %v172, 1.0
    %v190 = vadd.f32 %v174, 1.0
    %v191 = vadd.f32 %v176, 1.0
    %v192 = vadd.f32 %v178, 1.0
    %v193 = vadd.f32 %v180, 1.0
    %v194 = vadd.f32 %v182, 1.0
    %v195 = vrcp.pop %v183
    %v196 = vmul.f32 %v183, %v195
    %v197 = vsub.f32 1.0, %v196
    %v198 = vmul.f32 %v195, %v197
    %v199 = vadd.f32 %v195, %v198
    %vm200 = vweird.f32 %v183
    %vm201 = vweird.f32 %v195
    %vm202 = vmor %vm200, %vm201
    %v203 = vsel %vm202, %v195, %v199
    %v204 = vand.u32 2147483647, %v183
    %vm205 = vcmp.eq.f32.partialorder %v204, 8.507059e+37
    %v206 = vand.u32 %v183, 2147483648
    %v207 = vor.u32 1.1754944e-38, %v206
    %v208 = vsel %vm205, %v207, %v203
    %v209 = vmul.f32 1.0, %v208
    %v210 = vrcp.pop %v184
    %v211 = vmul.f32 %v184, %v210
    %v212 = vsub.f32 1.0, %v211
    %v213 = vmul.f32 %v210, %v212
    %v214 = vadd.f32 %v210, %v213
    %vm215 = vweird.f32 %v184
    %vm216 = vweird.f32 %v210
    %vm217 = vmor %vm215, %vm216
    %v218 = vsel %vm217, %v210, %v214
    %v219 = vand.u32 2147483647, %v184
    %vm220 = vcmp.eq.f32.partialorder %v219, 8.507059e+37
    %v221 = vand.u32 %v184, 2147483648
    %v222 = vor.u32 1.1754944e-38, %v221
    %v223 = vsel %vm220, %v222, %v218
    %v224 = vmul.f32 1.0, %v223
    %v225 = vrcp.pop %v185
    %v226 = vmul.f32 %v185, %v225
    %v227 = vsub.f32 1.0, %v226
    %v228 = vmul.f32 %v225, %v227
    %v229 = vadd.f32 %v225, %v228
    %vm230 = vweird.f32 %v185
    %vm231 = vweird.f32 %v225
    %vm232 = vmor %vm230, %vm231
    %v233 = vsel %vm232, %v225, %v229
    %v234 = vand.u32 2147483647, %v185
    %vm235 = vcmp.eq.f32.partialorder %v234, 8.507059e+37
    %v236 = vand.u32 %v185, 2147483648
    %v237 = vor.u32 1.1754944e-38, %v236
    %v238 = vsel %vm235, %v237, %v233
    %v239 = vmul.f32 1.0, %v238
    %v240 = vrcp.pop %v186
    %v241 = vmul.f32 %v186, %v240
    %v242 = vsub.f32 1.0, %v241
    %v243 = vmul.f32 %v240, %v242
    %v244 = vadd.f32 %v240, %v243
    %vm245 = vweird.f32 %v186
    %vm246 = vweird.f32 %v240
    %vm247 = vmor %vm245, %vm246
    %v248 = vsel %vm247, %v240, %v244
    %v249 = vand.u32 2147483647, %v186
    %vm250 = vcmp.eq.f32.partialorder %v249, 8.507059e+37
    %v251 = vand.u32 %v186, 2147483648
    %v252 = vor.u32 1.1754944e-38, %v251
    %v253 = vsel %vm250, %v252, %v248
    %v254 = vmul.f32 1.0, %v253
    %v255 = vrcp.pop %v187
    %v256 = vmul.f32 %v187, %v255
    %v257 = vsub.f32 1.0, %v256
    %v258 = vmul.f32 %v255, %v257
    %v259 = vadd.f32 %v255, %v258
    %vm260 = vweird.f32 %v187
    %vm261 = vweird.f32 %v255
    %vm262 = vmor %vm260, %vm261
    %v263 = vsel %vm262, %v255, %v259
    %v264 = vand.u32 2147483647, %v187
    %vm265 = vcmp.eq.f32.partialorder %v264, 8.507059e+37
    %v266 = vand.u32 %v187, 2147483648
    %v267 = vor.u32 1.1754944e-38, %v266
    %v268 = vsel %vm265, %v267, %v263
    %v269 = vmul.f32 1.0, %v268
    %v270 = vrcp.pop %v188
    %v271 = vmul.f32 %v188, %v270
    %v272 = vsub.f32 1.0, %v271
    %v273 = vmul.f32 %v270, %v272
    %v274 = vadd.f32 %v270, %v273
    %vm275 = vweird.f32 %v188
    %vm276 = vweird.f32 %v270
    %vm277 = vmor %vm275, %vm276
    %v278 = vsel %vm277, %v270, %v274
    %v279 = vand.u32 2147483647, %v188
    %vm280 = vcmp.eq.f32.partialorder %v279, 8.507059e+37
    %v281 = vand.u32 %v188, 2147483648
    %v282 = vor.u32 1.1754944e-38, %v281
    %v283 = vsel %vm280, %v282, %v278
    %v284 = vmul.f32 1.0, %v283
    %v285 = vrcp.pop %v189
    %v286 = vmul.f32 %v189, %v285
    %v287 = vsub.f32 1.0, %v286
    %v288 = vmul.f32 %v285, %v287
    %v289 = vadd.f32 %v285, %v288
    %vm290 = vweird.f32 %v189
    %vm291 = vweird.f32 %v285
    %vm292 = vmor %vm290, %vm291
    %v293 = vsel %vm292, %v285, %v289
    %v294 = vand.u32 2147483647, %v189
    %vm295 = vcmp.eq.f32.partialorder %v294, 8.507059e+37
    %v296 = vand.u32 %v189, 2147483648
    %v297 = vor.u32 1.1754944e-38, %v296
    %v298 = vsel %vm295, %v297, %v293
    %v299 = vmul.f32 1.0, %v298
    %v300 = vrcp.pop %v190
    %v301 = vmul.f32 %v190, %v300
    %v302 = vsub.f32 1.0, %v301
    %v303 = vmul.f32 %v300, %v302
    %v304 = vadd.f32 %v300, %v303
    %vm305 = vweird.f32 %v190
    %vm306 = vweird.f32 %v300
    %vm307 = vmor %vm305, %vm306
    %v308 = vsel %vm307, %v300, %v304
    %v309 = vand.u32 2147483647, %v190
    %vm310 = vcmp.eq.f32.partialorder %v309, 8.507059e+37
    %v311 = vand.u32 %v190, 2147483648
    %v312 = vor.u32 1.1754944e-38, %v311
    %v313 = vsel %vm310, %v312, %v308
    %v314 = vmul.f32 1.0, %v313
    %v315 = vrcp.pop %v191
    %v316 = vmul.f32 %v191, %v315
    %v317 = vsub.f32 1.0, %v316
    %v318 = vmul.f32 %v315, %v317
    %v319 = vadd.f32 %v315, %v318
    %vm320 = vweird.f32 %v191
    %vm321 = vweird.f32 %v315
    %vm322 = vmor %vm320, %vm321
    %v323 = vsel %vm322, %v315, %v319
    %v324 = vand.u32 2147483647, %v191
    %vm325 = vcmp.eq.f32.partialorder %v324, 8.507059e+37
    %v326 = vand.u32 %v191, 2147483648
    %v327 = vor.u32 1.1754944e-38, %v326
    %v328 = vsel %vm325, %v327, %v323
    %v329 = vmul.f32 1.0, %v328
    %v330 = vrcp.pop %v192
    %v331 = vmul.f32 %v192, %v330
    %v332 = vsub.f32 1.0, %v331
    %v333 = vmul.f32 %v330, %v332
    %v334 = vadd.f32 %v330, %v333
    %vm335 = vweird.f32 %v192
    %vm336 = vweird.f32 %v330
    %vm337 = vmor %vm335, %vm336
    %v338 = vsel %vm337, %v330, %v334
    %v339 = vand.u32 2147483647, %v192
    %vm340 = vcmp.eq.f32.partialorder %v339, 8.507059e+37
    %v341 = vand.u32 %v192, 2147483648
    %v342 = vor.u32 1.1754944e-38, %v341
    %v343 = vsel %vm340, %v342, %v338
    %v344 = vmul.f32 1.0, %v343
    %v345 = vrcp.pop %v193
    %v346 = vmul.f32 %v193, %v345
    %v347 = vsub.f32 1.0, %v346
    %v348 = vmul.f32 %v345, %v347
    %v349 = vadd.f32 %v345, %v348
    %vm350 = vweird.f32 %v193
    %vm351 = vweird.f32 %v345
    %vm352 = vmor %vm350, %vm351
    %v353 = vsel %vm352, %v345, %v349
    %v354 = vand.u32 2147483647, %v193
    %vm355 = vcmp.eq.f32.partialorder %v354, 8.507059e+37
    %v356 = vand.u32 %v193, 2147483648
    %v357 = vor.u32 1.1754944e-38, %v356
    %v358 = vsel %vm355, %v357, %v353
    %v359 = vmul.f32 1.0, %v358
    %v360 = vrcp.pop %v194
    %v361 = vmul.f32 %v194, %v360
    %v362 = vsub.f32 1.0, %v361
    %v363 = vmul.f32 %v360, %v362
    %v364 = vadd.f32 %v360, %v363
    %vm365 = vweird.f32 %v194
    %vm366 = vweird.f32 %v360
    %vm367 = vmor %vm365, %vm366
    %v368 = vsel %vm367, %v360, %v364
    %v369 = vand.u32 2147483647, %v194
    %vm370 = vcmp.eq.f32.partialorder %v369, 8.507059e+37
    %v371 = vand.u32 %v194, 2147483648
    %v372 = vor.u32 1.1754944e-38, %v371
    %v373 = vsel %vm370, %v372, %v368
    %v374 = vmul.f32 1.0, %v373
    %v375 = vld [vmem:[#allocation13 + $0x10] sm:$0xf]
    %v376 = vperm.slane %v69, 1
    %v377 = vperm.slane %v69, 3
    %v378 = vperm.slane %v69, 5
    %v379 = vperm.slane %v69, 7
    %v380 = vperm.slane %v70, 1
    %v381 = vperm.slane %v70, 3
    %v382 = vperm.slane %v70, 5
    %v383 = vperm.slane %v70, 7
    %v384 = vperm.slane %v71, 1
    %v385 = vperm.slane %v71, 3
    %v386 = vperm.slane %v71, 5
    %v387 = vperm.slane %v71, 7
    %v400 = vperm.slane %v376, 1
    %v401 = vperm.slane %v377, 1
    %v402 = vperm.slane %v378, 1
    %v403 = vperm.slane %v379, 1
    %v404 = vperm.slane %v380, 1
    %v405 = vperm.slane %v381, 1
    %v406 = vperm.slane %v382, 1
    %v407 = vperm.slane %v383, 1
    %v408 = vperm.slane %v384, 1
    %v409 = vperm.slane %v385, 1
    %v410 = vperm.slane %v386, 1
    %v411 = vperm.slane %v387, 1
    %413 = vset.pattern.permute.xlu0 1
    %414 = vperm.xlu0 %413, %v375
    %v415 = vpop.permute.xlu0 %414
    %v417 = vmul.f32 %v400, %v415
    %v418 = vmul.f32 %v401, %v415
    %v419 = vmul.f32 %v402, %v415
    %v420 = vmul.f32 %v403, %v415
    %v421 = vmul.f32 %v404, %v415
    %v422 = vmul.f32 %v405, %v415
    %v423 = vmul.f32 %v406, %v415
    %v424 = vmul.f32 %v407, %v415
    %v425 = vmul.f32 %v408, %v415
    %v426 = vmul.f32 %v409, %v415
    %v427 = vmul.f32 %v410, %v415
    %v428 = vmul.f32 %v411, %v415
    %v429 = vsub.f32 1.0, %v69
    %v430 = vsub.f32 1.0, %v70
    %v431 = vsub.f32 1.0, %v71
    %v435 = vperm.slane %v429, 1
    %v436 = vperm.slane %v429, 3
    %v437 = vperm.slane %v429, 5
    %v438 = vperm.slane %v429, 7
    %v439 = vperm.slane %v430, 1
    %v440 = vperm.slane %v430, 3
    %v441 = vperm.slane %v430, 5
    %v442 = vperm.slane %v430, 7
    %v443 = vperm.slane %v431, 1
    %v444 = vperm.slane %v431, 3
    %v445 = vperm.slane %v431, 5
    %v446 = vperm.slane %v431, 7
    %v459 = vperm.slane %v435, 1
    %v460 = vperm.slane %v436, 1
    %v461 = vperm.slane %v437, 1
    %v462 = vperm.slane %v438, 1
    %v463 = vperm.slane %v439, 1
    %v464 = vperm.slane %v440, 1
    %v465 = vperm.slane %v441, 1
    %v466 = vperm.slane %v442, 1
    %v467 = vperm.slane %v443, 1
    %v468 = vperm.slane %v444, 1
    %v469 = vperm.slane %v445, 1
    %v470 = vperm.slane %v446, 1
    %471 = vset.pattern.permute.xlu0 0
    %472 = vperm.xlu0 %471, %v375
    %v473 = vpop.permute.xlu0 %472
    %v475 = vmul.f32 %v459, %v473
    %v476 = vmul.f32 %v460, %v473
    %v477 = vmul.f32 %v461, %v473
    %v478 = vmul.f32 %v462, %v473
    %v479 = vmul.f32 %v463, %v473
    %v480 = vmul.f32 %v464, %v473
    %v481 = vmul.f32 %v465, %v473
    %v482 = vmul.f32 %v466, %v473
    %v483 = vmul.f32 %v467, %v473
    %v484 = vmul.f32 %v468, %v473
    %v485 = vmul.f32 %v469, %v473
    %v486 = vmul.f32 %v470, %v473
    %v487 = vadd.f32 %v417, %v475
    %v488 = vadd.f32 %v418, %v476
    %v489 = vadd.f32 %v419, %v477
    %v490 = vadd.f32 %v420, %v478
    %v491 = vadd.f32 %v421, %v479
    %v492 = vadd.f32 %v422, %v480
    %v493 = vadd.f32 %v423, %v481
    %v494 = vadd.f32 %v424, %v482
    %v495 = vadd.f32 %v425, %v483
    %v496 = vadd.f32 %v426, %v484
    %v497 = vadd.f32 %v427, %v485
    %v498 = vadd.f32 %v428, %v486
    %v499 = vld [vmem:[#allocation13 + $0x18] sm:$0xff]
    %v500 = vld [vmem:[#allocation13 + $0x20] sm:$0xff]
    %v501 = vld [vmem:[#allocation13 + $0x38] sm:$0xff]
    %v502 = vld [vmem:[#allocation13 + $0x40] sm:$0xff]
    %504 = vset.pattern.permute.xlu0 0
    %505 = vperm.xlu0 %504, %v501
    %v506 = vpop.permute.xlu0 %505
    %509 = vset.pattern.permute.xlu0 0
    %510 = vperm.xlu0 %509, %v502
    %v511 = vpop.permute.xlu0 %510
    %vm513 = vcmask 31744
    %v515 = vsel %vm513, %v499, 0
    %v518 = vsel %vm513, %v500, 0
    %vm520 = vcmask 1043456
    %v522 = vsel %vm520, %v209, 0
    %v525 = vsel %vm520, %v224, 0
    %v528 = vsel %vm520, %v239, 0
    %v531 = vsel %vm520, %v254, 0
    %v534 = vsel %vm520, %v269, 0
    %v537 = vsel %vm520, %v284, 0
    %v540 = vsel %vm520, %v299, 0
    %v543 = vsel %vm520, %v314, 0
    %v546 = vsel %vm520, %v329, 0
    %v549 = vsel %vm520, %v344, 0
    %v552 = vsel %vm520, %v359, 0
    %v555 = vsel %vm520, %v374, 0
    %557 = vmatpush.msra.mxu0 0.0
    %558 = vmatpush.msra.mxu0 0.0
    %559 = vmatpush.msra.mxu0 0.0
    %560 = vmatpush.msra.mxu0 0.0
    %561 = vmatpush.msra.mxu0 0.0
    %562 = vmatpush.msra.mxu0 0.0
    %563 = vmatpush.msra.mxu0 0.0
    %564 = vmatpush.msra.mxu0 0.0
    %565 = vmatpush.msra.mxu0 0.0
    %566 = vmatpush.msra.mxu0 0.0
    %567 = vmatpush.msra.mxu0 0.0
    %568 = vmatpush.msra.mxu0 0.0
    %569 = vmatpush.msra.mxu0 0.0
    %570 = vmatpush.msra.mxu0 0.0
    %571 = vmatpush.msra.mxu0 0.0
    %572 = vmatpush.msra.mxu0 %v522
    %573 = vmatmul.f32.gmra.mxu0 %v515
    %v574 = vpop.f32.mrf.mxu0
    %v575 = vadd.f32 %v506, %v574
    %576 = vmatmul.f32.gmra.mxu0 %v518
    %v577 = vpop.f32.mrf.mxu0
    %v578 = vadd.f32 %v511, %v577
    %579 = vdwg.mxu0
    %580 = vmatpush.msra.mxu0 0.0
    %581 = vmatpush.msra.mxu0 0.0
    %582 = vmatpush.msra.mxu0 0.0
    %583 = vmatpush.msra.mxu0 0.0
    %584 = vmatpush.msra.mxu0 0.0
    %585 = vmatpush.msra.mxu0 0.0
    %586 = vmatpush.msra.mxu0 0.0
    %587 = vmatpush.msra.mxu0 0.0
    %588 = vmatpush.msra.mxu0 0.0
    %589 = vmatpush.msra.mxu0 0.0
    %590 = vmatpush.msra.mxu0 0.0
    %591 = vmatpush.msra.mxu0 0.0
    %592 = vmatpush.msra.mxu0 0.0
    %593 = vmatpush.msra.mxu0 0.0
    %594 = vmatpush.msra.mxu0 0.0
    %595 = vmatpush.msra.mxu0 %v525
    %596 = vmatmul.f32.gmra.mxu0 %v515
    %v597 = vpop.f32.mrf.mxu0
    %v598 = vadd.f32 %v506, %v597
    %599 = vmatmul.f32.gmra.mxu0 %v518
    %v600 = vpop.f32.mrf.mxu0
    %v601 = vadd.f32 %v511, %v600
    %602 = vdwg.mxu0
    %603 = vmatpush.msra.mxu0 0.0
    %604 = vmatpush.msra.mxu0 0.0
    %605 = vmatpush.msra.mxu0 0.0
    %606 = vmatpush.msra.mxu0 0.0
    %607 = vmatpush.msra.mxu0 0.0
    %608 = vmatpush.msra.mxu0 0.0
    %609 = vmatpush.msra.mxu0 0.0
    %610 = vmatpush.msra.mxu0 0.0
    %611 = vmatpush.msra.mxu0 0.0
    %612 = vmatpush.msra.mxu0 0.0
    %613 = vmatpush.msra.mxu0 0.0
    %614 = vmatpush.msra.mxu0 0.0
    %615 = vmatpush.msra.mxu0 0.0
    %616 = vmatpush.msra.mxu0 0.0
    %617 = vmatpush.msra.mxu0 0.0
    %618 = vmatpush.msra.mxu0 %v528
    %619 = vmatmul.f32.gmra.mxu0 %v515
    %v620 = vpop.f32.mrf.mxu0
    %v621 = vadd.f32 %v506, %v620
    %622 = vmatmul.f32.gmra.mxu0 %v518
    %v623 = vpop.f32.mrf.mxu0
    %v624 = vadd.f32 %v511, %v623
    %625 = vdwg.mxu0
    %626 = vmatpush.msra.mxu0 0.0
    %627 = vmatpush.msra.mxu0 0.0
    %628 = vmatpush.msra.mxu0 0.0
    %629 = vmatpush.msra.mxu0 0.0
    %630 = vmatpush.msra.mxu0 0.0
    %631 = vmatpush.msra.mxu0 0.0
    %632 = vmatpush.msra.mxu0 0.0
    %633 = vmatpush.msra.mxu0 0.0
    %634 = vmatpush.msra.mxu0 0.0
    %635 = vmatpush.msra.mxu0 0.0
    %636 = vmatpush.msra.mxu0 0.0
    %637 = vmatpush.msra.mxu0 0.0
    %638 = vmatpush.msra.mxu0 0.0
    %639 = vmatpush.msra.mxu0 0.0
    %640 = vmatpush.msra.mxu0 0.0
    %641 = vmatpush.msra.mxu0 %v531
    %642 = vmatmul.f32.gmra.mxu0 %v515
    %v643 = vpop.f32.mrf.mxu0
    %v644 = vadd.f32 %v506, %v643
    %645 = vmatmul.f32.gmra.mxu0 %v518
    %v646 = vpop.f32.mrf.mxu0
    %v647 = vadd.f32 %v511, %v646
    %648 = vdwg.mxu0
    %649 = vmatpush.msra.mxu0 0.0
    %650 = vmatpush.msra.mxu0 0.0
    %651 = vmatpush.msra.mxu0 0.0
    %652 = vmatpush.msra.mxu0 0.0
    %653 = vmatpush.msra.mxu0 0.0
    %654 = vmatpush.msra.mxu0 0.0
    %655 = vmatpush.msra.mxu0 0.0
    %656 = vmatpush.msra.mxu0 0.0
    %657 = vmatpush.msra.mxu0 0.0
    %658 = vmatpush.msra.mxu0 0.0
    %659 = vmatpush.msra.mxu0 0.0
    %660 = vmatpush.msra.mxu0 0.0
    %661 = vmatpush.msra.mxu0 0.0
    %662 = vmatpush.msra.mxu0 0.0
    %663 = vmatpush.msra.mxu0 0.0
    %664 = vmatpush.msra.mxu0 %v534
    %665 = vmatmul.f32.gmra.mxu0 %v515
    %v666 = vpop.f32.mrf.mxu0
    %v667 = vadd.f32 %v506, %v666
    %668 = vmatmul.f32.gmra.mxu0 %v518
    %v669 = vpop.f32.mrf.mxu0
    %v670 = vadd.f32 %v511, %v669
    %671 = vdwg.mxu0
    %672 = vmatpush.msra.mxu0 0.0
    %673 = vmatpush.msra.mxu0 0.0
    %674 = vmatpush.msra.mxu0 0.0
    %675 = vmatpush.msra.mxu0 0.0
    %676 = vmatpush.msra.mxu0 0.0
    %677 = vmatpush.msra.mxu0 0.0
    %678 = vmatpush.msra.mxu0 0.0
    %679 = vmatpush.msra.mxu0 0.0
    %680 = vmatpush.msra.mxu0 0.0
    %681 = vmatpush.msra.mxu0 0.0
    %682 = vmatpush.msra.mxu0 0.0
    %683 = vmatpush.msra.mxu0 0.0
    %684 = vmatpush.msra.mxu0 0.0
    %685 = vmatpush.msra.mxu0 0.0
    %686 = vmatpush.msra.mxu0 0.0
    %687 = vmatpush.msra.mxu0 %v537
    %688 = vmatmul.f32.gmra.mxu0 %v515
    %v689 = vpop.f32.mrf.mxu0
    %v690 = vadd.f32 %v506, %v689
    %691 = vmatmul.f32.gmra.mxu0 %v518
    %v692 = vpop.f32.mrf.mxu0
    %v693 = vadd.f32 %v511, %v692
    %694 = vdwg.mxu0
    %695 = vmatpush.msra.mxu0 0.0
    %696 = vmatpush.msra.mxu0 0.0
    %697 = vmatpush.msra.mxu0 0.0
    %698 = vmatpush.msra.mxu0 0.0
    %699 = vmatpush.msra.mxu0 0.0
    %700 = vmatpush.msra.mxu0 0.0
    %701 = vmatpush.msra.mxu0 0.0
    %702 = vmatpush.msra.mxu0 0.0
    %703 = vmatpush.msra.mxu0 0.0
    %704 = vmatpush.msra.mxu0 0.0
    %705 = vmatpush.msra.mxu0 0.0
    %706 = vmatpush.msra.mxu0 0.0
    %707 = vmatpush.msra.mxu0 0.0
    %708 = vmatpush.msra.mxu0 0.0
    %709 = vmatpush.msra.mxu0 0.0
    %710 = vmatpush.msra.mxu0 %v540
    %711 = vmatmul.f32.gmra.mxu0 %v515
    %v712 = vpop.f32.mrf.mxu0
    %v713 = vadd.f32 %v506, %v712
    %714 = vmatmul.f32.gmra.mxu0 %v518
    %v715 = vpop.f32.mrf.mxu0
    %v716 = vadd.f32 %v511, %v715
    %717 = vdwg.mxu0
    %718 = vmatpush.msra.mxu0 0.0
    %719 = vmatpush.msra.mxu0 0.0
    %720 = vmatpush.msra.mxu0 0.0
    %721 = vmatpush.msra.mxu0 0.0
    %722 = vmatpush.msra.mxu0 0.0
    %723 = vmatpush.msra.mxu0 0.0
    %724 = vmatpush.msra.mxu0 0.0
    %725 = vmatpush.msra.mxu0 0.0
    %726 = vmatpush.msra.mxu0 0.0
    %727 = vmatpush.msra.mxu0 0.0
    %728 = vmatpush.msra.mxu0 0.0
    %729 = vmatpush.msra.mxu0 0.0
    %730 = vmatpush.msra.mxu0 0.0
    %731 = vmatpush.msra.mxu0 0.0
    %732 = vmatpush.msra.mxu0 0.0
    %733 = vmatpush.msra.mxu0 %v543
    %734 = vmatmul.f32.gmra.mxu0 %v515
    %v735 = vpop.f32.mrf.mxu0
    %v736 = vadd.f32 %v506, %v735
    %737 = vmatmul.f32.gmra.mxu0 %v518
    %v738 = vpop.f32.mrf.mxu0
    %v739 = vadd.f32 %v511, %v738
    %740 = vdwg.mxu0
    %741 = vmatpush.msra.mxu0 0.0
    %742 = vmatpush.msra.mxu0 0.0
    %743 = vmatpush.msra.mxu0 0.0
    %744 = vmatpush.msra.mxu0 0.0
    %745 = vmatpush.msra.mxu0 0.0
    %746 = vmatpush.msra.mxu0 0.0
    %747 = vmatpush.msra.mxu0 0.0
    %748 = vmatpush.msra.mxu0 0.0
    %749 = vmatpush.msra.mxu0 0.0
    %750 = vmatpush.msra.mxu0 0.0
    %751 = vmatpush.msra.mxu0 0.0
    %752 = vmatpush.msra.mxu0 0.0
    %753 = vmatpush.msra.mxu0 0.0
    %754 = vmatpush.msra.mxu0 0.0
    %755 = vmatpush.msra.mxu0 0.0
    %756 = vmatpush.msra.mxu0 %v546
    %757 = vmatmul.f32.gmra.mxu0 %v515
    %v758 = vpop.f32.mrf.mxu0
    %v759 = vadd.f32 %v506, %v758
    %760 = vmatmul.f32.gmra.mxu0 %v518
    %v761 = vpop.f32.mrf.mxu0
    %v762 = vadd.f32 %v511, %v761
    %763 = vdwg.mxu0
    %764 = vmatpush.msra.mxu0 0.0
    %765 = vmatpush.msra.mxu0 0.0
    %766 = vmatpush.msra.mxu0 0.0
    %767 = vmatpush.msra.mxu0 0.0
    %768 = vmatpush.msra.mxu0 0.0
    %769 = vmatpush.msra.mxu0 0.0
    %770 = vmatpush.msra.mxu0 0.0
    %771 = vmatpush.msra.mxu0 0.0
    %772 = vmatpush.msra.mxu0 0.0
    %773 = vmatpush.msra.mxu0 0.0
    %774 = vmatpush.msra.mxu0 0.0
    %775 = vmatpush.msra.mxu0 0.0
    %776 = vmatpush.msra.mxu0 0.0
    %777 = vmatpush.msra.mxu0 0.0
    %778 = vmatpush.msra.mxu0 0.0
    %779 = vmatpush.msra.mxu0 %v549
    %780 = vmatmul.f32.gmra.mxu0 %v515
    %v781 = vpop.f32.mrf.mxu0
    %v782 = vadd.f32 %v506, %v781
    %783 = vmatmul.f32.gmra.mxu0 %v518
    %v784 = vpop.f32.mrf.mxu0
    %v785 = vadd.f32 %v511, %v784
    %786 = vdwg.mxu0
    %787 = vmatpush.msra.mxu0 0.0
    %788 = vmatpush.msra.mxu0 0.0
    %789 = vmatpush.msra.mxu0 0.0
    %790 = vmatpush.msra.mxu0 0.0
    %791 = vmatpush.msra.mxu0 0.0
    %792 = vmatpush.msra.mxu0 0.0
    %793 = vmatpush.msra.mxu0 0.0
    %794 = vmatpush.msra.mxu0 0.0
    %795 = vmatpush.msra.mxu0 0.0
    %796 = vmatpush.msra.mxu0 0.0
    %797 = vmatpush.msra.mxu0 0.0
    %798 = vmatpush.msra.mxu0 0.0
    %799 = vmatpush.msra.mxu0 0.0
    %800 = vmatpush.msra.mxu0 0.0
    %801 = vmatpush.msra.mxu0 0.0
    %802 = vmatpush.msra.mxu0 %v552
    %803 = vmatmul.f32.gmra.mxu0 %v515
    %v804 = vpop.f32.mrf.mxu0
    %v805 = vadd.f32 %v506, %v804
    %806 = vmatmul.f32.gmra.mxu0 %v518
    %v807 = vpop.f32.mrf.mxu0
    %v808 = vadd.f32 %v511, %v807
    %809 = vdwg.mxu0
    %810 = vmatpush.msra.mxu0 0.0
    %811 = vmatpush.msra.mxu0 0.0
    %812 = vmatpush.msra.mxu0 0.0
    %813 = vmatpush.msra.mxu0 0.0
    %814 = vmatpush.msra.mxu0 0.0
    %815 = vmatpush.msra.mxu0 0.0
    %816 = vmatpush.msra.mxu0 0.0
    %817 = vmatpush.msra.mxu0 0.0
    %818 = vmatpush.msra.mxu0 0.0
    %819 = vmatpush.msra.mxu0 0.0
    %820 = vmatpush.msra.mxu0 0.0
    %821 = vmatpush.msra.mxu0 0.0
    %822 = vmatpush.msra.mxu0 0.0
    %823 = vmatpush.msra.mxu0 0.0
    %824 = vmatpush.msra.mxu0 0.0
    %825 = vmatpush.msra.mxu0 %v555
    %826 = vmatmul.f32.gmra.mxu0 %v515
    %v827 = vpop.f32.mrf.mxu0
    %v828 = vadd.f32 %v506, %v827
    %829 = vmatmul.f32.gmra.mxu0 %v518
    %v830 = vpop.f32.mrf.mxu0
    %v831 = vadd.f32 %v511, %v830
    %832 = vdwg.mxu0
    %v833 = vld [vmem:[#allocation13 + $0x28] sm:$0xff]
    %v834 = vld [vmem:[#allocation13 + $0x30] sm:$0xff]
    %v836 = vsel %vm513, %v833, 0
    %v839 = vsel %vm513, %v834, 0
    %v842 = vsel %vm520, %v487, 0
    %v845 = vsel %vm520, %v488, 0
    %v848 = vsel %vm520, %v489, 0
    %v851 = vsel %vm520, %v490, 0
    %v854 = vsel %vm520, %v491, 0
    %v857 = vsel %vm520, %v492, 0
    %v860 = vsel %vm520, %v493, 0
    %v863 = vsel %vm520, %v494, 0
    %v866 = vsel %vm520, %v495, 0
    %v869 = vsel %vm520, %v496, 0
    %v872 = vsel %vm520, %v497, 0
    %v875 = vsel %vm520, %v498, 0
    %877 = vmatpush.msra.mxu0 0.0
    %878 = vmatpush.msra.mxu0 0.0
    %879 = vmatpush.msra.mxu0 0.0
    %880 = vmatpush.msra.mxu0 0.0
    %881 = vmatpush.msra.mxu0 0.0
    %882 = vmatpush.msra.mxu0 0.0
    %883 = vmatpush.msra.mxu0 0.0
    %884 = vmatpush.msra.mxu0 0.0
    %885 = vmatpush.msra.mxu0 0.0
    %886 = vmatpush.msra.mxu0 0.0
    %887 = vmatpush.msra.mxu0 0.0
    %888 = vmatpush.msra.mxu0 0.0
    %889 = vmatpush.msra.mxu0 0.0
    %890 = vmatpush.msra.mxu0 0.0
    %891 = vmatpush.msra.mxu0 0.0
    %892 = vmatpush.msra.mxu0 %v842
    %893 = vmatmul.f32.gmra.mxu0 %v836
    %v894 = vpop.f32.mrf.mxu0
    %v895 = vadd.f32 0.0, %v894
    %896 = vmatmul.f32.gmra.mxu0 %v839
    %v897 = vpop.f32.mrf.mxu0
    %v898 = vadd.f32 0.0, %v897
    %899 = vdwg.mxu0
    %900 = vmatpush.msra.mxu0 0.0
    %901 = vmatpush.msra.mxu0 0.0
    %902 = vmatpush.msra.mxu0 0.0
    %903 = vmatpush.msra.mxu0 0.0
    %904 = vmatpush.msra.mxu0 0.0
    %905 = vmatpush.msra.mxu0 0.0
    %906 = vmatpush.msra.mxu0 0.0
    %907 = vmatpush.msra.mxu0 0.0
    %908 = vmatpush.msra.mxu0 0.0
    %909 = vmatpush.msra.mxu0 0.0
    %910 = vmatpush.msra.mxu0 0.0
    %911 = vmatpush.msra.mxu0 0.0
    %912 = vmatpush.msra.mxu0 0.0
    %913 = vmatpush.msra.mxu0 0.0
    %914 = vmatpush.msra.mxu0 0.0
    %915 = vmatpush.msra.mxu0 %v845
    %916 = vmatmul.f32.gmra.mxu0 %v836
    %v917 = vpop.f32.mrf.mxu0
    %v918 = vadd.f32 0.0, %v917
    %919 = vmatmul.f32.gmra.mxu0 %v839
    %v920 = vpop.f32.mrf.mxu0
    %v921 = vadd.f32 0.0, %v920
    %922 = vdwg.mxu0
    %923 = vmatpush.msra.mxu0 0.0
    %924 = vmatpush.msra.mxu0 0.0
    %925 = vmatpush.msra.mxu0 0.0
    %926 = vmatpush.msra.mxu0 0.0
    %927 = vmatpush.msra.mxu0 0.0
    %928 = vmatpush.msra.mxu0 0.0
    %929 = vmatpush.msra.mxu0 0.0
    %930 = vmatpush.msra.mxu0 0.0
    %931 = vmatpush.msra.mxu0 0.0
    %932 = vmatpush.msra.mxu0 0.0
    %933 = vmatpush.msra.mxu0 0.0
    %934 = vmatpush.msra.mxu0 0.0
    %935 = vmatpush.msra.mxu0 0.0
    %936 = vmatpush.msra.mxu0 0.0
    %937 = vmatpush.msra.mxu0 0.0
    %938 = vmatpush.msra.mxu0 %v848
    %939 = vmatmul.f32.gmra.mxu0 %v836
    %v940 = vpop.f32.mrf.mxu0
    %v941 = vadd.f32 0.0, %v940
    %942 = vmatmul.f32.gmra.mxu0 %v839
    %v943 = vpop.f32.mrf.mxu0
    %v944 = vadd.f32 0.0, %v943
    %945 = vdwg.mxu0
    %946 = vmatpush.msra.mxu0 0.0
    %947 = vmatpush.msra.mxu0 0.0
    %948 = vmatpush.msra.mxu0 0.0
    %949 = vmatpush.msra.mxu0 0.0
    %950 = vmatpush.msra.mxu0 0.0
    %951 = vmatpush.msra.mxu0 0.0
    %952 = vmatpush.msra.mxu0 0.0
    %953 = vmatpush.msra.mxu0 0.0
    %954 = vmatpush.msra.mxu0 0.0
    %955 = vmatpush.msra.mxu0 0.0
    %956 = vmatpush.msra.mxu0 0.0
    %957 = vmatpush.msra.mxu0 0.0
    %958 = vmatpush.msra.mxu0 0.0
    %959 = vmatpush.msra.mxu0 0.0
    %960 = vmatpush.msra.mxu0 0.0
    %961 = vmatpush.msra.mxu0 %v851
    %962 = vmatmul.f32.gmra.mxu0 %v836
    %v963 = vpop.f32.mrf.mxu0
    %v964 = vadd.f32 0.0, %v963
    %965 = vmatmul.f32.gmra.mxu0 %v839
    %v966 = vpop.f32.mrf.mxu0
    %v967 = vadd.f32 0.0, %v966
    %968 = vdwg.mxu0
    %969 = vmatpush.msra.mxu0 0.0
    %970 = vmatpush.msra.mxu0 0.0
    %971 = vmatpush.msra.mxu0 0.0
    %972 = vmatpush.msra.mxu0 0.0
    %973 = vmatpush.msra.mxu0 0.0
    %974 = vmatpush.msra.mxu0 0.0
    %975 = vmatpush.msra.mxu0 0.0
    %976 = vmatpush.msra.mxu0 0.0
    %977 = vmatpush.msra.mxu0 0.0
    %978 = vmatpush.msra.mxu0 0.0
    %979 = vmatpush.msra.mxu0 0.0
    %980 = vmatpush.msra.mxu0 0.0
    %981 = vmatpush.msra.mxu0 0.0
    %982 = vmatpush.msra.mxu0 0.0
    %983 = vmatpush.msra.mxu0 0.0
    %984 = vmatpush.msra.mxu0 %v854
    %985 = vmatmul.f32.gmra.mxu0 %v836
    %v986 = vpop.f32.mrf.mxu0
    %v987 = vadd.f32 0.0, %v986
    %988 = vmatmul.f32.gmra.mxu0 %v839
    %v989 = vpop.f32.mrf.mxu0
    %v990 = vadd.f32 0.0, %v989
    %991 = vdwg.mxu0
    %992 = vmatpush.msra.mxu0 0.0
    %993 = vmatpush.msra.mxu0 0.0
    %994 = vmatpush.msra.mxu0 0.0
    %995 = vmatpush.msra.mxu0 0.0
    %996 = vmatpush.msra.mxu0 0.0
    %997 = vmatpush.msra.mxu0 0.0
    %998 = vmatpush.msra.mxu0 0.0
    %999 = vmatpush.msra.mxu0 0.0
    %1000 = vmatpush.msra.mxu0 0.0
    %1001 = vmatpush.msra.mxu0 0.0
    %1002 = vmatpush.msra.mxu0 0.0
    %1003 = vmatpush.msra.mxu0 0.0
    %1004 = vmatpush.msra.mxu0 0.0
    %1005 = vmatpush.msra.mxu0 0.0
    %1006 = vmatpush.msra.mxu0 0.0
    %1007 = vmatpush.msra.mxu0 %v857
    %1008 = vmatmul.f32.gmra.mxu0 %v836
    %v1009 = vpop.f32.mrf.mxu0
    %v1010 = vadd.f32 0.0, %v1009
    %1011 = vmatmul.f32.gmra.mxu0 %v839
    %v1012 = vpop.f32.mrf.mxu0
    %v1013 = vadd.f32 0.0, %v1012
    %1014 = vdwg.mxu0
    %1015 = vmatpush.msra.mxu0 0.0
    %1016 = vmatpush.msra.mxu0 0.0
    %1017 = vmatpush.msra.mxu0 0.0
    %1018 = vmatpush.msra.mxu0 0.0
    %1019 = vmatpush.msra.mxu0 0.0
    %1020 = vmatpush.msra.mxu0 0.0
    %1021 = vmatpush.msra.mxu0 0.0
    %1022 = vmatpush.msra.mxu0 0.0
    %1023 = vmatpush.msra.mxu0 0.0
    %1024 = vmatpush.msra.mxu0 0.0
    %1025 = vmatpush.msra.mxu0 0.0
    %1026 = vmatpush.msra.mxu0 0.0
    %1027 = vmatpush.msra.mxu0 0.0
    %1028 = vmatpush.msra.mxu0 0.0
    %1029 = vmatpush.msra.mxu0 0.0
    %1030 = vmatpush.msra.mxu0 %v860
    %1031 = vmatmul.f32.gmra.mxu0 %v836
    %v1032 = vpop.f32.mrf.mxu0
    %v1033 = vadd.f32 0.0, %v1032
    %1034 = vmatmul.f32.gmra.mxu0 %v839
    %v1035 = vpop.f32.mrf.mxu0
    %v1036 = vadd.f32 0.0, %v1035
    %1037 = vdwg.mxu0
    %1038 = vmatpush.msra.mxu0 0.0
    %1039 = vmatpush.msra.mxu0 0.0
    %1040 = vmatpush.msra.mxu0 0.0
    %1041 = vmatpush.msra.mxu0 0.0
    %1042 = vmatpush.msra.mxu0 0.0
    %1043 = vmatpush.msra.mxu0 0.0
    %1044 = vmatpush.msra.mxu0 0.0
    %1045 = vmatpush.msra.mxu0 0.0
    %1046 = vmatpush.msra.mxu0 0.0
    %1047 = vmatpush.msra.mxu0 0.0
    %1048 = vmatpush.msra.mxu0 0.0
    %1049 = vmatpush.msra.mxu0 0.0
    %1050 = vmatpush.msra.mxu0 0.0
    %1051 = vmatpush.msra.mxu0 0.0
    %1052 = vmatpush.msra.mxu0 0.0
    %1053 = vmatpush.msra.mxu0 %v863
    %1054 = vmatmul.f32.gmra.mxu0 %v836
    %v1055 = vpop.f32.mrf.mxu0
    %v1056 = vadd.f32 0.0, %v1055
    %1057 = vmatmul.f32.gmra.mxu0 %v839
    %v1058 = vpop.f32.mrf.mxu0
    %v1059 = vadd.f32 0.0, %v1058
    %1060 = vdwg.mxu0
    %1061 = vmatpush.msra.mxu0 0.0
    %1062 = vmatpush.msra.mxu0 0.0
    %1063 = vmatpush.msra.mxu0 0.0
    %1064 = vmatpush.msra.mxu0 0.0
    %1065 = vmatpush.msra.mxu0 0.0
    %1066 = vmatpush.msra.mxu0 0.0
    %1067 = vmatpush.msra.mxu0 0.0
    %1068 = vmatpush.msra.mxu0 0.0
    %1069 = vmatpush.msra.mxu0 0.0
    %1070 = vmatpush.msra.mxu0 0.0
    %1071 = vmatpush.msra.mxu0 0.0
    %1072 = vmatpush.msra.mxu0 0.0
    %1073 = vmatpush.msra.mxu0 0.0
    %1074 = vmatpush.msra.mxu0 0.0
    %1075 = vmatpush.msra.mxu0 0.0
    %1076 = vmatpush.msra.mxu0 %v866
    %1077 = vmatmul.f32.gmra.mxu0 %v836
    %v1078 = vpop.f32.mrf.mxu0
    %v1079 = vadd.f32 0.0, %v1078
    %1080 = vmatmul.f32.gmra.mxu0 %v839
    %v1081 = vpop.f32.mrf.mxu0
    %v1082 = vadd.f32 0.0, %v1081
    %1083 = vdwg.mxu0
    %1084 = vmatpush.msra.mxu0 0.0
    %1085 = vmatpush.msra.mxu0 0.0
    %1086 = vmatpush.msra.mxu0 0.0
    %1087 = vmatpush.msra.mxu0 0.0
    %1088 = vmatpush.msra.mxu0 0.0
    %1089 = vmatpush.msra.mxu0 0.0
    %1090 = vmatpush.msra.mxu0 0.0
    %1091 = vmatpush.msra.mxu0 0.0
    %1092 = vmatpush.msra.mxu0 0.0
    %1093 = vmatpush.msra.mxu0 0.0
    %1094 = vmatpush.msra.mxu0 0.0
    %1095 = vmatpush.msra.mxu0 0.0
    %1096 = vmatpush.msra.mxu0 0.0
    %1097 = vmatpush.msra.mxu0 0.0
    %1098 = vmatpush.msra.mxu0 0.0
    %1099 = vmatpush.msra.mxu0 %v869
    %1100 = vmatmul.f32.gmra.mxu0 %v836
    %v1101 = vpop.f32.mrf.mxu0
    %v1102 = vadd.f32 0.0, %v1101
    %1103 = vmatmul.f32.gmra.mxu0 %v839
    %v1104 = vpop.f32.mrf.mxu0
    %v1105 = vadd.f32 0.0, %v1104
    %1106 = vdwg.mxu0
    %1107 = vmatpush.msra.mxu0 0.0
    %1108 = vmatpush.msra.mxu0 0.0
    %1109 = vmatpush.msra.mxu0 0.0
    %1110 = vmatpush.msra.mxu0 0.0
    %1111 = vmatpush.msra.mxu0 0.0
    %1112 = vmatpush.msra.mxu0 0.0
    %1113 = vmatpush.msra.mxu0 0.0
    %1114 = vmatpush.msra.mxu0 0.0
    %1115 = vmatpush.msra.mxu0 0.0
    %1116 = vmatpush.msra.mxu0 0.0
    %1117 = vmatpush.msra.mxu0 0.0
    %1118 = vmatpush.msra.mxu0 0.0
    %1119 = vmatpush.msra.mxu0 0.0
    %1120 = vmatpush.msra.mxu0 0.0
    %1121 = vmatpush.msra.mxu0 0.0
    %1122 = vmatpush.msra.mxu0 %v872
    %1123 = vmatmul.f32.gmra.mxu0 %v836
    %v1124 = vpop.f32.mrf.mxu0
    %v1125 = vadd.f32 0.0, %v1124
    %1126 = vmatmul.f32.gmra.mxu0 %v839
    %v1127 = vpop.f32.mrf.mxu0
    %v1128 = vadd.f32 0.0, %v1127
    %1129 = vdwg.mxu0
    %1130 = vmatpush.msra.mxu0 0.0
    %1131 = vmatpush.msra.mxu0 0.0
    %1132 = vmatpush.msra.mxu0 0.0
    %1133 = vmatpush.msra.mxu0 0.0
    %1134 = vmatpush.msra.mxu0 0.0
    %1135 = vmatpush.msra.mxu0 0.0
    %1136 = vmatpush.msra.mxu0 0.0
    %1137 = vmatpush.msra.mxu0 0.0
    %1138 = vmatpush.msra.mxu0 0.0
    %1139 = vmatpush.msra.mxu0 0.0
    %1140 = vmatpush.msra.mxu0 0.0
    %1141 = vmatpush.msra.mxu0 0.0
    %1142 = vmatpush.msra.mxu0 0.0
    %1143 = vmatpush.msra.mxu0 0.0
    %1144 = vmatpush.msra.mxu0 0.0
    %1145 = vmatpush.msra.mxu0 %v875
    %1146 = vmatmul.f32.gmra.mxu0 %v836
    %v1147 = vpop.f32.mrf.mxu0
    %v1148 = vadd.f32 0.0, %v1147
    %1149 = vmatmul.f32.gmra.mxu0 %v839
    %v1150 = vpop.f32.mrf.mxu0
    %v1151 = vadd.f32 0.0, %v1150
    %1152 = vdwg.mxu0
    %v1153 = vadd.f32 %v895, %v575
    %v1154 = vadd.f32 %v918, %v598
    %v1155 = vadd.f32 %v941, %v621
    %v1156 = vadd.f32 %v964, %v644
    %v1157 = vadd.f32 %v987, %v667
    %v1158 = vadd.f32 %v1010, %v690
    %v1159 = vadd.f32 %v1033, %v713
    %v1160 = vadd.f32 %v1056, %v736
    %v1161 = vadd.f32 %v1079, %v759
    %v1162 = vadd.f32 %v1102, %v782
    %v1163 = vadd.f32 %v1125, %v805
    %v1164 = vadd.f32 %v1148, %v828
    %v1165 = vadd.f32 %v898, %v578
    %v1166 = vadd.f32 %v921, %v601
    %v1167 = vadd.f32 %v944, %v624
    %v1168 = vadd.f32 %v967, %v647
    %v1169 = vadd.f32 %v990, %v670
    %v1170 = vadd.f32 %v1013, %v693
    %v1171 = vadd.f32 %v1036, %v716
    %v1172 = vadd.f32 %v1059, %v739
    %v1173 = vadd.f32 %v1082, %v762
    %v1174 = vadd.f32 %v1105, %v785
    %v1175 = vadd.f32 %v1128, %v808
    %v1176 = vadd.f32 %v1151, %v831
    %v1177 = vmax.f32 %v1153, 0.0
    %v1178 = vmax.f32 %v1154, 0.0
    %v1179 = vmax.f32 %v1155, 0.0
    %v1180 = vmax.f32 %v1156, 0.0
    %v1181 = vmax.f32 %v1157, 0.0
    %v1182 = vmax.f32 %v1158, 0.0
    %v1183 = vmax.f32 %v1159, 0.0
    %v1184 = vmax.f32 %v1160, 0.0
    %v1185 = vmax.f32 %v1161, 0.0
    %v1186 = vmax.f32 %v1162, 0.0
    %v1187 = vmax.f32 %v1163, 0.0
    %v1188 = vmax.f32 %v1164, 0.0
    %v1189 = vmax.f32 %v1165, 0.0
    %v1190 = vmax.f32 %v1166, 0.0
    %v1191 = vmax.f32 %v1167, 0.0
    %v1192 = vmax.f32 %v1168, 0.0
    %v1193 = vmax.f32 %v1169, 0.0
    %v1194 = vmax.f32 %v1170, 0.0
    %v1195 = vmax.f32 %v1171, 0.0
    %v1196 = vmax.f32 %v1172, 0.0
    %v1197 = vmax.f32 %v1173, 0.0
    %v1198 = vmax.f32 %v1174, 0.0
    %v1199 = vmax.f32 %v1175, 0.0
    %v1200 = vmax.f32 %v1176, 0.0
    %v1201 = vld [vmem:[#allocation13 + $0x48] sm:$0xff]
    %v1202 = vld [vmem:[#allocation13 + $0x50] sm:$0xff]
    %1204 = vset.pattern.permute.xlu0 0
    %1205 = vperm.xlu0 %1204, %v1201
    %v1206 = vpop.permute.xlu0 %1205
    %1209 = vset.pattern.permute.xlu0 0
    %1210 = vperm.xlu0 %1209, %v1202
    %v1211 = vpop.permute.xlu0 %1210
    %v1213 = vadd.f32 %v895, %v1206
    %v1214 = vadd.f32 %v918, %v1206
    %v1215 = vadd.f32 %v941, %v1206
    %v1216 = vadd.f32 %v964, %v1206
    %v1217 = vadd.f32 %v987, %v1206
    %v1218 = vadd.f32 %v1010, %v1206
    %v1219 = vadd.f32 %v1033, %v1206
    %v1220 = vadd.f32 %v1056, %v1206
    %v1221 = vadd.f32 %v1079, %v1206
    %v1222 = vadd.f32 %v1102, %v1206
    %v1223 = vadd.f32 %v1125, %v1206
    %v1224 = vadd.f32 %v1148, %v1206
    %v1225 = vadd.f32 %v898, %v1211
    %v1226 = vadd.f32 %v921, %v1211
    %v1227 = vadd.f32 %v944, %v1211
    %v1228 = vadd.f32 %v967, %v1211
    %v1229 = vadd.f32 %v990, %v1211
    %v1230 = vadd.f32 %v1013, %v1211
    %v1231 = vadd.f32 %v1036, %v1211
    %v1232 = vadd.f32 %v1059, %v1211
    %v1233 = vadd.f32 %v1082, %v1211
    %v1234 = vadd.f32 %v1105, %v1211
    %v1235 = vadd.f32 %v1128, %v1211
    %v1236 = vadd.f32 %v1151, %v1211
    %v1237 = vmax.f32 %v1213, 0.0
    %v1238 = vmax.f32 %v1214, 0.0
    %v1239 = vmax.f32 %v1215, 0.0
    %v1240 = vmax.f32 %v1216, 0.0
    %v1241 = vmax.f32 %v1217, 0.0
    %v1242 = vmax.f32 %v1218, 0.0
    %v1243 = vmax.f32 %v1219, 0.0
    %v1244 = vmax.f32 %v1220, 0.0
    %v1245 = vmax.f32 %v1221, 0.0
    %v1246 = vmax.f32 %v1222, 0.0
    %v1247 = vmax.f32 %v1223, 0.0
    %v1248 = vmax.f32 %v1224, 0.0
    %v1249 = vmax.f32 %v1225, 0.0
    %v1250 = vmax.f32 %v1226, 0.0
    %v1251 = vmax.f32 %v1227, 0.0
    %v1252 = vmax.f32 %v1228, 0.0
    %v1253 = vmax.f32 %v1229, 0.0
    %v1254 = vmax.f32 %v1230, 0.0
    %v1255 = vmax.f32 %v1231, 0.0
    %v1256 = vmax.f32 %v1232, 0.0
    %v1257 = vmax.f32 %v1233, 0.0
    %v1258 = vmax.f32 %v1234, 0.0
    %v1259 = vmax.f32 %v1235, 0.0
    %v1260 = vmax.f32 %v1236, 0.0
    %v1261 = vadd.f32 %v1237, %v1238
    %v1262 = vadd.f32 %v1249, %v1250
    %v1263 = vadd.f32 %v1261, %v1239
    %v1264 = vadd.f32 %v1262, %v1251
    %v1265 = vadd.f32 %v1263, %v1240
    %v1266 = vadd.f32 %v1264, %v1252
    %v1267 = vadd.f32 %v1265, %v1241
    %v1268 = vadd.f32 %v1266, %v1253
    %v1269 = vadd.f32 %v1267, %v1242
    %v1270 = vadd.f32 %v1268, %v1254
    %v1271 = vadd.f32 %v1269, %v1243
    %v1272 = vadd.f32 %v1270, %v1255
    %v1273 = vadd.f32 %v1271, %v1244
    %v1274 = vadd.f32 %v1272, %v1256
    %v1275 = vadd.f32 %v1273, %v1245
    %v1276 = vadd.f32 %v1274, %v1257
    %v1277 = vadd.f32 %v1275, %v1246
    %v1278 = vadd.f32 %v1276, %v1258
    %v1279 = vadd.f32 %v1277, %v1247
    %v1280 = vadd.f32 %v1278, %v1259
    %v1281 = vadd.f32 %v1279, %v1248
    %v1282 = vadd.f32 %v1280, %v1260
    %1283 = vst [vmem:[#allocation2] sm:$0xff] %v1281
    %1284 = vst [vmem:[#allocation2 + $0x40] sm:$0xff] %v1282
    %1285 = vst [vmem:[#allocation2 + $0x8] sm:$0xff] %v1281
    %1286 = vst [vmem:[#allocation2 + $0x48] sm:$0xff] %v1282
    %1287 = vst [vmem:[#allocation2 + $0x10] sm:$0xff] %v1281
    %1288 = vst [vmem:[#allocation2 + $0x50] sm:$0xff] %v1282
    %1289 = vst [vmem:[#allocation2 + $0x18] sm:$0xff] %v1281
    %1290 = vst [vmem:[#allocation2 + $0x58] sm:$0xff] %v1282
    %1291 = vst [vmem:[#allocation2 + $0x20] sm:$0xff] %v1281
    %1292 = vst [vmem:[#allocation2 + $0x60] sm:$0xff] %v1282
    %1293 = vst [vmem:[#allocation2 + $0x28] sm:$0xff] %v1281
    %1294 = vst [vmem:[#allocation2 + $0x68] sm:$0xff] %v1282
    %1295 = vst [vmem:[#allocation2 + $0x30] sm:$0xff] %v1281
    %1296 = vst [vmem:[#allocation2 + $0x70] sm:$0xff] %v1282
    %1297 = vst [vmem:[#allocation2 + $0x38] sm:$0xff] %v1281
    %1298 = vst [vmem:[#allocation2 + $0x78] sm:$0xff] %v1282
    %v1299 = vsub.f32 %v1177, %v1237
    %v1300 = vsub.f32 %v1189, %v1249
    %s1301 = sld [smem:[#allocation7]]
    %p1302 = scmp.gt.s32.totalorder %s1301, 0
    // Predicated region
    $region26: #{tpu_custom_call.1} parent=1 // pred_check
      %p1303 = pneg %p1302
    $region27: #{tpu_custom_call.1} parent=1 // pred_check_branch
      %1305 = sbr.rel (%p1303) target = $region29
    $region28: #{tpu_custom_call.1} parent=1 // pred_region
      %v1306 = vld [vmem:[#allocation2] sm:$0xff]
      %v1307 = vld [vmem:[#allocation2 + $0x40] sm:$0xff]
      %v1308 = vadd.f32 %v1306, %v1299
      %v1309 = vadd.f32 %v1307, %v1300
      %1310 = vst [vmem:[#allocation2] sm:$0xff] %v1308
      %1311 = vst [vmem:[#allocation2 + $0x40] sm:$0xff] %v1309
    $region29: #{tpu_custom_call.1} parent=1 // pred_fallthru
      _
    %s1312 = sld [smem:[#allocation7 + $0x80]]
    %p1313 = scmp.gt.s32.totalorder %s1312, 0
    // Predicated region
    $region30: #{tpu_custom_call.1} parent=1 // pred_check
      %p1314 = pneg %p1313
    $region31: #{tpu_custom_call.1} parent=1 // pred_check_branch
      %1316 = sbr.rel (%p1314) target = $region33
    $region32: #{tpu_custom_call.1} parent=1 // pred_region
      %v1317 = vld [vmem:[#allocation2 + $0x8] sm:$0xff]
      %v1318 = vld [vmem:[#allocation2 + $0x48] sm:$0xff]
      %v1319 = vadd.f32 %v1317, %v1299
      %v1320 = vadd.f32 %v1318, %v1300
      %1321 = vst [vmem:[#allocation2 + $0x8] sm:$0xff] %v1319
      %1322 = vst [vmem:[#allocation2 + $0x48] sm:$0xff] %v1320
    $region33: #{tpu_custom_call.1} parent=1 // pred_fallthru
      _
    %s1323 = sld [smem:[#allocation7 + $0x100]]
    %p1324 = scmp.gt.s32.totalorder %s1323, 0
    // Predicated region
    $region34: #{tpu_custom_call.1} parent=1 // pred_check
      %p1325 = pneg %p1324
    $region35: #{tpu_custom_call.1} parent=1 // pred_check_branch
      %1327 = sbr.rel (%p1325) target = $region37
    $region36: #{tpu_custom_call.1} parent=1 // pred_region
      %v1328 = vld [vmem:[#allocation2 + $0x10] sm:$0xff]
      %v1329 = vld [vmem:[#allocation2 + $0x50] sm:$0xff]
      %v1330 = vadd.f32 %v1328, %v1299
      %v1331 = vadd.f32 %v1329, %v1300
      %1332 = vst [vmem:[#allocation2 + $0x10] sm:$0xff] %v1330
      %1333 = vst [vmem:[#allocation2 + $0x50] sm:$0xff] %v1331
    $region37: #{tpu_custom_call.1} parent=1 // pred_fallthru
      _
    %s1334 = sld [smem:[#allocation7 + $0x180]]
    %p1335 = scmp.gt.s32.totalorder %s1334, 0
    // Predicated region
    $region38: #{tpu_custom_call.1} parent=1 // pred_check
      %p1336 = pneg %p1335
    $region39: #{tpu_custom_call.1} parent=1 // pred_check_branch
      %1338 = sbr.rel (%p1336) target = $region41
    $region40: #{tpu_custom_call.1} parent=1 // pred_region
      %v1339 = vld [vmem:[#allocation2 + $0x18] sm:$0xff]
      %v1340 = vld [vmem:[#allocation2 + $0x58] sm:$0xff]
      %v1341 = vadd.f32 %v1339, %v1299
      %v1342 = vadd.f32 %v1340, %v1300
      %1343 = vst [vmem:[#allocation2 + $0x18] sm:$0xff] %v1341
      %1344 = vst [vmem:[#allocation2 + $0x58] sm:$0xff] %v1342
    $region41: #{tpu_custom_call.1} parent=1 // pred_fallthru
      _
    %s1345 = sld [smem:[#allocation7 + $0x200]]
    %p1346 = scmp.gt.s32.totalorder %s1345, 0
    // Predicated region
    $region42: #{tpu_custom_call.1} parent=1 // pred_check
      %p1347 = pneg %p1346
    $region43: #{tpu_custom_call.1} parent=1 // pred_check_branch
      %1349 = sbr.rel (%p1347) target = $region45
    $region44: #{tpu_custom_call.1} parent=1 // pred_region
      %v1350 = vld [vmem:[#allocation2 + $0x20] sm:$0xff]
      %v1351 = vld [vmem:[#allocation2 + $0x60] sm:$0xff]
      %v1352 = vadd.f32 %v1350, %v1299
      %v1353 = vadd.f32 %v1351, %v1300
      %1354 = vst [vmem:[#allocation2 + $0x20] sm:$0xff] %v1352
      %1355 = vst [vmem:[#allocation2 + $0x60] sm:$0xff] %v1353
    $region45: #{tpu_custom_call.1} parent=1 // pred_fallthru
      _
    %s1356 = sld [smem:[#allocation7 + $0x280]]
    %p1357 = scmp.gt.s32.totalorder %s1356, 0
    // Predicated region
    $region46: #{tpu_custom_call.1} parent=1 // pred_check
      %p1358 = pneg %p1357
    $region47: #{tpu_custom_call.1} parent=1 // pred_check_branch
      %1360 = sbr.rel (%p1358) target = $region49
    $region48: #{tpu_custom_call.1} parent=1 // pred_region
      %v1361 = vld [vmem:[#allocation2 + $0x28] sm:$0xff]
      %v1362 = vld [vmem:[#allocation2 + $0x68] sm:$0xff]
      %v1363 = vadd.f32 %v1361, %v1299
      %v1364 = vadd.f32 %v1362, %v1300
      %1365 = vst [vmem:[#allocation2 + $0x28] sm:$0xff] %v1363
      %1366 = vst [vmem:[#allocation2 + $0x68] sm:$0xff] %v1364
    $region49: #{tpu_custom_call.1} parent=1 // pred_fallthru
      _
    %s1367 = sld [smem:[#allocation7 + $0x300]]
    %p1368 = scmp.gt.s32.totalorder %s1367, 0
    // Predicated region
    $region50: #{tpu_custom_call.1} parent=1 // pred_check
      %p1369 = pneg %p1368
    $region51: #{tpu_custom_call.1} parent=1 // pred_check_branch
      %1371 = sbr.rel (%p1369) target = $region53
    $region52: #{tpu_custom_call.1} parent=1 // pred_region
      %v1372 = vld [vmem:[#allocation2 + $0x30] sm:$0xff]
      %v1373 = vld [vmem:[#allocation2 + $0x70] sm:$0xff]
      %v1374 = vadd.f32 %v1372, %v1299
      %v1375 = vadd.f32 %v1373, %v1300
      %1376 = vst [vmem:[#allocation2 + $0x30] sm:$0xff] %v1374
      %1377 = vst [vmem:[#allocation2 + $0x70] sm:$0xff] %v1375
    $region53: #{tpu_custom_call.1} parent=1 // pred_fallthru
      _
    %s1378 = sld [smem:[#allocation7 + $0x380]]
    %p1379 = scmp.gt.s32.totalorder %s1378, 0
    // Predicated region
    $region54: #{tpu_custom_call.1} parent=1 // pred_check
      %p1380 = pneg %p1379
    $region55: #{tpu_custom_call.1} parent=1 // pred_check_branch
      %1382 = sbr.rel (%p1380) target = $region57
    $region56: #{tpu_custom_call.1} parent=1 // pred_region
      %v1383 = vld [vmem:[#allocation2 + $0x38] sm:$0xff]
      %v1384 = vld [vmem:[#allocation2 + $0x78] sm:$0xff]
      %v1385 = vadd.f32 %v1383, %v1299
      %v1386 = vadd.f32 %v1384, %v1300
      %1387 = vst [vmem:[#allocation2 + $0x38] sm:$0xff] %v1385
      %1388 = vst [vmem:[#allocation2 + $0x78] sm:$0xff] %v1386
    $region57: #{tpu_custom_call.1} parent=1 // pred_fallthru
      _
    %v1389 = vsub.f32 %v1178, %v1238
    %v1390 = vsub.f32 %v1190, %v1250
    %s1391 = sld [smem:[#allocation7 + $0x1]]
    %p1392 = scmp.gt.s32.totalorder %s1391, 0
    // Predicated region
    $region58: #{tpu_custom_call.1} parent=1 // pred_check
      %p1393 = pneg %p1392
    $region59: #{tpu_custom_call.1} parent=1 // pred_check_branch
      %1395 = sbr.rel (%p1393) target = $region61
    $region60: #{tpu_custom_call.1} parent=1 // pred_region
      %v1396 = vld [vmem:[#allocation2] sm:$0xff]
      %v1397 = vld [vmem:[#allocation2 + $0x40] sm:$0xff]
      %v1398 = vadd.f32 %v1396, %v1389
      %v1399 = vadd.f32 %v1397, %v1390
      %1400 = vst [vmem:[#allocation2] sm:$0xff] %v1398
      %1401 = vst [vmem:[#allocation2 + $0x40] sm:$0xff] %v1399
    $region61: #{tpu_custom_call.1} parent=1 // pred_fallthru
      _
    %s1402 = sld [smem:[#allocation7 + $0x81]]
    %p1403 = scmp.gt.s32.totalorder %s1402, 0
    // Predicated region
    $region62: #{tpu_custom_call.1} parent=1 // pred_check
      %p1404 = pneg %p1403
    $region63: #{tpu_custom_call.1} parent=1 // pred_check_branch
      %1406 = sbr.rel (%p1404) target = $region65
    $region64: #{tpu_custom_call.1} parent=1 // pred_region
      %v1407 = vld [vmem:[#allocation2 + $0x8] sm:$0xff]
      %v1408 = vld [vmem:[#allocation2 + $0x48] sm:$0xff]
      %v1409 = vadd.f32 %v1407, %v1389
      %v1410 = vadd.f32 %v1408, %v1390
      %1411 = vst [vmem:[#allocation2 + $0x8] sm:$0xff] %v1409
      %1412 = vst [vmem:[#allocation2 + $0x48] sm:$0xff] %v1410
    $region65: #{tpu_custom_call.1} parent=1 // pred_fallthru
      _
    %s1413 = sld [smem:[#allocation7 + $0x101]]
    %p1414 = scmp.gt.s32.totalorder %s1413, 0
    // Predicated region
    $region66: #{tpu_custom_call.1} parent=1 // pred_check
      %p1415 = pneg %p1414
    $region67: #{tpu_custom_call.1} parent=1 // pred_check_branch
      %1417 = sbr.rel (%p1415) target = $region69
    $region68: #{tpu_custom_call.1} parent=1 // pred_region
      %v1418 = vld [vmem:[#allocation2 + $0x10] sm:$0xff]
      %v1419 = vld [vmem:[#allocation2 + $0x50] sm:$0xff]
      %v1420 = vadd.f32 %v1418, %v1389
      %v1421 = vadd.f32 %v1419, %v1390
      %1422 = vst [vmem:[#allocation2 + $0x10] sm:$0xff] %v1420
      %1423 = vst [vmem:[#allocation2 + $0x50] sm:$0xff] %v1421
    $region69: #{tpu_custom_call.1} parent=1 // pred_fallthru
      _
    %s1424 = sld [smem:[#allocation7 + $0x181]]
    %p1425 = scmp.gt.s32.totalorder %s1424, 0
    // Predicated region
    $region70: #{tpu_custom_call.1} parent=1 // pred_check
      %p1426 = pneg %p1425
    $region71: #{tpu_custom_call.1} parent=1 // pred_check_branch
      %1428 = sbr.rel (%p1426) target = $region73
    $region72: #{tpu_custom_call.1} parent=1 // pred_region
      %v1429 = vld [vmem:[#allocation2 + $0x18] sm:$0xff]
      %v1430 = vld [vmem:[#allocation2 + $0x58] sm:$0xff]
      %v1431 = vadd.f32 %v1429, %v1389
      %v1432 = vadd.f32 %v1430, %v1390
      %1433 = vst [vmem:[#allocation2 + $0x18] sm:$0xff] %v1431
      %1434 = vst [vmem:[#allocation2 + $0x58] sm:$0xff] %v1432
    $region73: #{tpu_custom_call.1} parent=1 // pred_fallthru
      _
    %s1435 = sld [smem:[#allocation7 + $0x201]]
    %p1436 = scmp.gt.s32.totalorder %s1435, 0
    // Predicated region
    $region74: #{tpu_custom_call.1} parent=1 // pred_check
      %p1437 = pneg %p1436
    $region75: #{tpu_custom_call.1} parent=1 // pred_check_branch
      %1439 = sbr.rel (%p1437) target = $region77
    $region76: #{tpu_custom_call.1} parent=1 // pred_region
      %v1440 = vld [vmem:[#allocation2 + $0x20] sm:$0xff]
      %v1441 = vld [vmem:[#allocation2 + $0x60] sm:$0xff]
      %v1442 = vadd.f32 %v1440, %v1389
      %v1443 = vadd.f32 %v1441, %v1390
      %1444 = vst [vmem:[#allocation2 + $0x20] sm:$0xff] %v1442
      %1445 = vst [vmem:[#allocation2 + $0x60] sm:$0xff] %v1443
    $region77: #{tpu_custom_call.1} parent=1 // pred_fallthru
      _
    %s1446 = sld [smem:[#allocation7 + $0x281]]
    %p1447 = scmp.gt.s32.totalorder %s1446, 0
    // Predicated region
    $region78: #{tpu_custom_call.1} parent=1 // pred_check
      %p1448 = pneg %p1447
    $region79: #{tpu_custom_call.1} parent=1 // pred_check_branch
      %1450 = sbr.rel (%p1448) target = $region81
    $region80: #{tpu_custom_call.1} parent=1 // pred_region
      %v1451 = vld [vmem:[#allocation2 + $0x28] sm:$0xff]
      %v1452 = vld [vmem:[#allocation2 + $0x68] sm:$0xff]
      %v1453 = vadd.f32 %v1451, %v1389
      %v1454 = vadd.f32 %v1452, %v1390
      %1455 = vst [vmem:[#allocation2 + $0x28] sm:$0xff] %v1453
      %1456 = vst [vmem:[#allocation2 + $0x68] sm:$0xff] %v1454
    $region81: #{tpu_custom_call.1} parent=1 // pred_fallthru
      _
    %s1457 = sld [smem:[#allocation7 + $0x301]]
    %p1458 = scmp.gt.s32.totalorder %s1457, 0
    // Predicated region
    $region82: #{tpu_custom_call.1} parent=1 // pred_check
      %p1459 = pneg %p1458
    $region83: #{tpu_custom_call.1} parent=1 // pred_check_branch
      %1461 = sbr.rel (%p1459) target = $region85
    $region84: #{tpu_custom_call.1} parent=1 // pred_region
      %v1462 = vld [vmem:[#allocation2 + $0x30] sm:$0xff]
      %v1463 = vld [vmem:[#allocation2 + $0x70] sm:$0xff]
      %v1464 = vadd.f32 %v1462, %v1389
      %v1465 = vadd.f32 %v1463, %v1390
      %1466 = vst [vmem:[#allocation2 + $0x30] sm:$0xff] %v1464
      %1467 = vst [vmem:[#allocation2 + $0x70] sm:$0xff] %v1465
    $region85: #{tpu_custom_call.1} parent=1 // pred_fallthru
      _
    %s1468 = sld [smem:[#allocation7 + $0x381]]
    %p1469 = scmp.gt.s32.totalorder %s1468, 0
    // Predicated region
    $region86: #{tpu_custom_call.1} parent=1 // pred_check
      %p1470 = pneg %p1469
    $region87: #{tpu_custom_call.1} parent=1 // pred_check_branch
      %1472 = sbr.rel (%p1470) target = $region89
    $region88: #{tpu_custom_call.1} parent=1 // pred_region
      %v1473 = vld [vmem:[#allocation2 + $0x38] sm:$0xff]
      %v1474 = vld [vmem:[#allocation2 + $0x78] sm:$0xff]
      %v1475 = vadd.f32 %v1473, %v1389
      %v1476 = vadd.f32 %v1474, %v1390
      %1477 = vst [vmem:[#allocation2 + $0x38] sm:$0xff] %v1475
      %1478 = vst [vmem:[#allocation2 + $0x78] sm:$0xff] %v1476
    $region89: #{tpu_custom_call.1} parent=1 // pred_fallthru
      _
    %v1479 = vsub.f32 %v1179, %v1239
    %v1480 = vsub.f32 %v1191, %v1251
    %s1481 = sld [smem:[#allocation7 + $0x2]]
    %p1482 = scmp.gt.s32.totalorder %s1481, 0
    // Predicated region
    $region90: #{tpu_custom_call.1} parent=1 // pred_check
      %p1483 = pneg %p1482
    $region91: #{tpu_custom_call.1} parent=1 // pred_check_branch
      %1485 = sbr.rel (%p1483) target = $region93
    $region92: #{tpu_custom_call.1} parent=1 // pred_region
      %v1486 = vld [vmem:[#allocation2] sm:$0xff]
      %v1487 = vld [vmem:[#allocation2 + $0x40] sm:$0xff]
      %v1488 = vadd.f32 %v1486, %v1479
      %v1489 = vadd.f32 %v1487, %v1480
      %1490 = vst [vmem:[#allocation2] sm:$0xff] %v1488
      %1491 = vst [vmem:[#allocation2 + $0x40] sm:$0xff] %v1489
    $region93: #{tpu_custom_call.1} parent=1 // pred_fallthru
      _
    %s1492 = sld [smem:[#allocation7 + $0x82]]
    %p1493 = scmp.gt.s32.totalorder %s1492, 0
    // Predicated region
    $region94: #{tpu_custom_call.1} parent=1 // pred_check
      %p1494 = pneg %p1493
    $region95: #{tpu_custom_call.1} parent=1 // pred_check_branch
      %1496 = sbr.rel (%p1494) target = $region97
    $region96: #{tpu_custom_call.1} parent=1 // pred_region
      %v1497 = vld [vmem:[#allocation2 + $0x8] sm:$0xff]
      %v1498 = vld [vmem:[#allocation2 + $0x48] sm:$0xff]
      %v1499 = vadd.f32 %v1497, %v1479
      %v1500 = vadd.f32 %v1498, %v1480
      %1501 = vst [vmem:[#allocation2 + $0x8] sm:$0xff] %v1499
      %1502 = vst [vmem:[#allocation2 + $0x48] sm:$0xff] %v1500
    $region97: #{tpu_custom_call.1} parent=1 // pred_fallthru
      _
    %s1503 = sld [smem:[#allocation7 + $0x102]]
    %p1504 = scmp.gt.s32.totalorder %s1503, 0
    // Predicated region
    $region98: #{tpu_custom_call.1} parent=1 // pred_check
      %p1505 = pneg %p1504
    $region99: #{tpu_custom_call.1} parent=1 // pred_check_branch
      %1507 = sbr.rel (%p1505) target = $region101
    $region100: #{tpu_custom_call.1} parent=1 // pred_region
      %v1508 = vld [vmem:[#allocation2 + $0x10] sm:$0xff]
      %v1509 = vld [vmem:[#allocation2 + $0x50] sm:$0xff]
      %v1510 = vadd.f32 %v1508, %v1479
      %v1511 = vadd.f32 %v1509, %v1480
      %1512 = vst [vmem:[#allocation2 + $0x10] sm:$0xff] %v1510
      %1513 = vst [vmem:[#allocation2 + $0x50] sm:$0xff] %v1511
    $region101: #{tpu_custom_call.1} parent=1 // pred_fallthru
      _
    %s1514 = sld [smem:[#allocation7 + $0x182]]
    %p1515 = scmp.gt.s32.totalorder %s1514, 0
    // Predicated region
    $region102: #{tpu_custom_call.1} parent=1 // pred_check
      %p1516 = pneg %p1515
    $region103: #{tpu_custom_call.1} parent=1 // pred_check_branch
      %1518 = sbr.rel (%p1516) target = $region105
    $region104: #{tpu_custom_call.1} parent=1 // pred_region
      %v1519 = vld [vmem:[#allocation2 + $0x18] sm:$0xff]
      %v1520 = vld [vmem:[#allocation2 + $0x58] sm:$0xff]
      %v1521 = vadd.f32 %v1519, %v1479
      %v1522 = vadd.f32 %v1520, %v1480
      %1523 = vst [vmem:[#allocation2 + $0x18] sm:$0xff] %v1521
      %1524 = vst [vmem:[#allocation2 + $0x58] sm:$0xff] %v1522
    $region105: #{tpu_custom_call.1} parent=1 // pred_fallthru
      _
    %s1525 = sld [smem:[#allocation7 + $0x202]]
    %p1526 = scmp.gt.s32.totalorder %s1525, 0
    // Predicated region
    $region106: #{tpu_custom_call.1} parent=1 // pred_check
      %p1527 = pneg %p1526
    $region107: #{tpu_custom_call.1} parent=1 // pred_check_branch
      %1529 = sbr.rel (%p1527) target = $region109
    $region108: #{tpu_custom_call.1} parent=1 // pred_region
      %v1530 = vld [vmem:[#allocation2 + $0x20] sm:$0xff]
      %v1531 = vld [vmem:[#allocation2 + $0x60] sm:$0xff]
      %v1532 = vadd.f32 %v1530, %v1479
      %v1533 = vadd.f32 %v1531, %v1480
      %1534 = vst [vmem:[#allocation2 + $0x20] sm:$0xff] %v1532
      %1535 = vst [vmem:[#allocation2 + $0x60] sm:$0xff] %v1533
    $region109: #{tpu_custom_call.1} parent=1 // pred_fallthru
      _
    %s1536 = sld [smem:[#allocation7 + $0x282]]
    %p1537 = scmp.gt.s32.totalorder %s1536, 0
    // Predicated region
    $region110: #{tpu_custom_call.1} parent=1 // pred_check
      %p1538 = pneg %p1537
    $region111: #{tpu_custom_call.1} parent=1 // pred_check_branch
      %1540 = sbr.rel (%p1538) target = $region113
    $region112: #{tpu_custom_call.1} parent=1 // pred_region
      %v1541 = vld [vmem:[#allocation2 + $0x28] sm:$0xff]
      %v1542 = vld [vmem:[#allocation2 + $0x68] sm:$0xff]
      %v1543 = vadd.f32 %v1541, %v1479
      %v1544 = vadd.f32 %v1542, %v1480
      %1545 = vst [vmem:[#allocation2 + $0x28] sm:$0xff] %v1543
      %1546 = vst [vmem:[#allocation2 + $0x68] sm:$0xff] %v1544
    $region113: #{tpu_custom_call.1} parent=1 // pred_fallthru
      _
    %s1547 = sld [smem:[#allocation7 + $0x302]]
    %p1548 = scmp.gt.s32.totalorder %s1547, 0
    // Predicated region
    $region114: #{tpu_custom_call.1} parent=1 // pred_check
      %p1549 = pneg %p1548
    $region115: #{tpu_custom_call.1} parent=1 // pred_check_branch
      %1551 = sbr.rel (%p1549) target = $region117
    $region116: #{tpu_custom_call.1} parent=1 // pred_region
      %v1552 = vld [vmem:[#allocation2 + $0x30] sm:$0xff]
      %v1553 = vld [vmem:[#allocation2 + $0x70] sm:$0xff]
      %v1554 = vadd.f32 %v1552, %v1479
      %v1555 = vadd.f32 %v1553, %v1480
      %1556 = vst [vmem:[#allocation2 + $0x30] sm:$0xff] %v1554
      %1557 = vst [vmem:[#allocation2 + $0x70] sm:$0xff] %v1555
    $region117: #{tpu_custom_call.1} parent=1 // pred_fallthru
      _
    %s1558 = sld [smem:[#allocation7 + $0x382]]
    %p1559 = scmp.gt.s32.totalorder %s1558, 0
    // Predicated region
    $region118: #{tpu_custom_call.1} parent=1 // pred_check
      %p1560 = pneg %p1559
    $region119: #{tpu_custom_call.1} parent=1 // pred_check_branch
      %1562 = sbr.rel (%p1560) target = $region121
    $region120: #{tpu_custom_call.1} parent=1 // pred_region
      %v1563 = vld [vmem:[#allocation2 + $0x38] sm:$0xff]
      %v1564 = vld [vmem:[#allocation2 + $0x78] sm:$0xff]
      %v1565 = vadd.f32 %v1563, %v1479
      %v1566 = vadd.f32 %v1564, %v1480
      %1567 = vst [vmem:[#allocation2 + $0x38] sm:$0xff] %v1565
      %1568 = vst [vmem:[#allocation2 + $0x78] sm:$0xff] %v1566
    $region121: #{tpu_custom_call.1} parent=1 // pred_fallthru
      _
    %v1569 = vsub.f32 %v1180, %v1240
    %v1570 = vsub.f32 %v1192, %v1252
    %s1571 = sld [smem:[#allocation7 + $0x3]]
    %p1572 = scmp.gt.s32.totalorder %s1571, 0
    // Predicated region
    $region122: #{tpu_custom_call.1} parent=1 // pred_check
      %p1573 = pneg %p1572
    $region123: #{tpu_custom_call.1} parent=1 // pred_check_branch
      %1575 = sbr.rel (%p1573) target = $region125
    $region124: #{tpu_custom_call.1} parent=1 // pred_region
      %v1576 = vld [vmem:[#allocation2] sm:$0xff]
      %v1577 = vld [vmem:[#allocation2 + $0x40] sm:$0xff]
      %v1578 = vadd.f32 %v1576, %v1569
      %v1579 = vadd.f32 %v1577, %v1570
      %1580 = vst [vmem:[#allocation2] sm:$0xff] %v1578
      %1581 = vst [vmem:[#allocation2 + $0x40] sm:$0xff] %v1579
    $region125: #{tpu_custom_call.1} parent=1 // pred_fallthru
      _
    %s1582 = sld [smem:[#allocation7 + $0x83]]
    %p1583 = scmp.gt.s32.totalorder %s1582, 0
    // Predicated region
    $region126: #{tpu_custom_call.1} parent=1 // pred_check
      %p1584 = pneg %p1583
    $region127: #{tpu_custom_call.1} parent=1 // pred_check_branch
      %1586 = sbr.rel (%p1584) target = $region129
    $region128: #{tpu_custom_call.1} parent=1 // pred_region
      %v1587 = vld [vmem:[#allocation2 + $0x8] sm:$0xff]
      %v1588 = vld [vmem:[#allocation2 + $0x48] sm:$0xff]
      %v1589 = vadd.f32 %v1587, %v1569
      %v1590 = vadd.f32 %v1588, %v1570
      %1591 = vst [vmem:[#allocation2 + $0x8] sm:$0xff] %v1589
      %1592 = vst [vmem:[#allocation2 + $0x48] sm:$0xff] %v1590
    $region129: #{tpu_custom_call.1} parent=1 // pred_fallthru
      _
    %s1593 = sld [smem:[#allocation7 + $0x103]]
    %p1594 = scmp.gt.s32.totalorder %s1593, 0
    // Predicated region
    $region130: #{tpu_custom_call.1} parent=1 // pred_check
      %p1595 = pneg %p1594
    $region131: #{tpu_custom_call.1} parent=1 // pred_check_branch
      %1597 = sbr.rel (%p1595) target = $region133
    $region132: #{tpu_custom_call.1} parent=1 // pred_region
      %v1598 = vld [vmem:[#allocation2 + $0x10] sm:$0xff]
      %v1599 = vld [vmem:[#allocation2 + $0x50] sm:$0xff]
      %v1600 = vadd.f32 %v1598, %v1569
      %v1601 = vadd.f32 %v1599, %v1570
      %1602 = vst [vmem:[#allocation2 + $0x10] sm:$0xff] %v1600
      %1603 = vst [vmem:[#allocation2 + $0x50] sm:$0xff] %v1601
    $region133: #{tpu_custom_call.1} parent=1 // pred_fallthru
      _
    %s1604 = sld [smem:[#allocation7 + $0x183]]
    %p1605 = scmp.gt.s32.totalorder %s1604, 0
    // Predicated region
    $region134: #{tpu_custom_call.1} parent=1 // pred_check
      %p1606 = pneg %p1605
    $region135: #{tpu_custom_call.1} parent=1 // pred_check_branch
      %1608 = sbr.rel (%p1606) target = $region137
    $region136: #{tpu_custom_call.1} parent=1 // pred_region
      %v1609 = vld [vmem:[#allocation2 + $0x18] sm:$0xff]
      %v1610 = vld [vmem:[#allocation2 + $0x58] sm:$0xff]
      %v1611 = vadd.f32 %v1609, %v1569
      %v1612 = vadd.f32 %v1610, %v1570
      %1613 = vst [vmem:[#allocation2 + $0x18] sm:$0xff] %v1611
      %1614 = vst [vmem:[#allocation2 + $0x58] sm:$0xff] %v1612
    $region137: #{tpu_custom_call.1} parent=1 // pred_fallthru
      _
    %s1615 = sld [smem:[#allocation7 + $0x203]]
    %p1616 = scmp.gt.s32.totalorder %s1615, 0
    // Predicated region
    $region138: #{tpu_custom_call.1} parent=1 // pred_check
      %p1617 = pneg %p1616
    $region139: #{tpu_custom_call.1} parent=1 // pred_check_branch
      %1619 = sbr.rel (%p1617) target = $region141
    $region140: #{tpu_custom_call.1} parent=1 // pred_region
      %v1620 = vld [vmem:[#allocation2 + $0x20] sm:$0xff]
      %v1621 = vld [vmem:[#allocation2 + $0x60] sm:$0xff]
      %v1622 = vadd.f32 %v1620, %v1569
      %v1623 = vadd.f32 %v1621, %v1570
      %1624 = vst [vmem:[#allocation2 + $0x20] sm:$0xff] %v1622
      %1625 = vst [vmem:[#allocation2 + $0x60] sm:$0xff] %v1623
    $region141: #{tpu_custom_call.1} parent=1 // pred_fallthru
      _
    %s1626 = sld [smem:[#allocation7 + $0x283]]
    %p1627 = scmp.gt.s32.totalorder %s1626, 0
    // Predicated region
    $region142: #{tpu_custom_call.1} parent=1 // pred_check
      %p1628 = pneg %p1627
    $region143: #{tpu_custom_call.1} parent=1 // pred_check_branch
      %1630 = sbr.rel (%p1628) target = $region145
    $region144: #{tpu_custom_call.1} parent=1 // pred_region
      %v1631 = vld [vmem:[#allocation2 + $0x28] sm:$0xff]
      %v1632 = vld [vmem:[#allocation2 + $0x68] sm:$0xff]
      %v1633 = vadd.f32 %v1631, %v1569
      %v1634 = vadd.f32 %v1632, %v1570
      %1635 = vst [vmem:[#allocation2 + $0x28] sm:$0xff] %v1633
      %1636 = vst [vmem:[#allocation2 + $0x68] sm:$0xff] %v1634
    $region145: #{tpu_custom_call.1} parent=1 // pred_fallthru
      _
    %s1637 = sld [smem:[#allocation7 + $0x303]]
    %p1638 = scmp.gt.s32.totalorder %s1637, 0
    // Predicated region
    $region146: #{tpu_custom_call.1} parent=1 // pred_check
      %p1639 = pneg %p1638
    $region147: #{tpu_custom_call.1} parent=1 // pred_check_branch
      %1641 = sbr.rel (%p1639) target = $region149
    $region148: #{tpu_custom_call.1} parent=1 // pred_region
      %v1642 = vld [vmem:[#allocation2 + $0x30] sm:$0xff]
      %v1643 = vld [vmem:[#allocation2 + $0x70] sm:$0xff]
      %v1644 = vadd.f32 %v1642, %v1569
      %v1645 = vadd.f32 %v1643, %v1570
      %1646 = vst [vmem:[#allocation2 + $0x30] sm:$0xff] %v1644
      %1647 = vst [vmem:[#allocation2 + $0x70] sm:$0xff] %v1645
    $region149: #{tpu_custom_call.1} parent=1 // pred_fallthru
      _
    %s1648 = sld [smem:[#allocation7 + $0x383]]
    %p1649 = scmp.gt.s32.totalorder %s1648, 0
    // Predicated region
    $region150: #{tpu_custom_call.1} parent=1 // pred_check
      %p1650 = pneg %p1649
    $region151: #{tpu_custom_call.1} parent=1 // pred_check_branch
      %1652 = sbr.rel (%p1650) target = $region153
    $region152: #{tpu_custom_call.1} parent=1 // pred_region
      %v1653 = vld [vmem:[#allocation2 + $0x38] sm:$0xff]
      %v1654 = vld [vmem:[#allocation2 + $0x78] sm:$0xff]
      %v1655 = vadd.f32 %v1653, %v1569
      %v1656 = vadd.f32 %v1654, %v1570
      %1657 = vst [vmem:[#allocation2 + $0x38] sm:$0xff] %v1655
      %1658 = vst [vmem:[#allocation2 + $0x78] sm:$0xff] %v1656
    $region153: #{tpu_custom_call.1} parent=1 // pred_fallthru
      _
    %v1659 = vsub.f32 %v1181, %v1241
    %v1660 = vsub.f32 %v1193, %v1253
    %s1661 = sld [smem:[#allocation7 + $0x4]]
    %p1662 = scmp.gt.s32.totalorder %s1661, 0
    // Predicated region
    $region154: #{tpu_custom_call.1} parent=1 // pred_check
      %p1663 = pneg %p1662
    $region155: #{tpu_custom_call.1} parent=1 // pred_check_branch
      %1665 = sbr.rel (%p1663) target = $region157
    $region156: #{tpu_custom_call.1} parent=1 // pred_region
      %v1666 = vld [vmem:[#allocation2] sm:$0xff]
      %v1667 = vld [vmem:[#allocation2 + $0x40] sm:$0xff]
      %v1668 = vadd.f32 %v1666, %v1659
      %v1669 = vadd.f32 %v1667, %v1660
      %1670 = vst [vmem:[#allocation2] sm:$0xff] %v1668
      %1671 = vst [vmem:[#allocation2 + $0x40] sm:$0xff] %v1669
    $region157: #{tpu_custom_call.1} parent=1 // pred_fallthru
      _
    %s1672 = sld [smem:[#allocation7 + $0x84]]
    %p1673 = scmp.gt.s32.totalorder %s1672, 0
    // Predicated region
    $region158: #{tpu_custom_call.1} parent=1 // pred_check
      %p1674 = pneg %p1673
    $region159: #{tpu_custom_call.1} parent=1 // pred_check_branch
      %1676 = sbr.rel (%p1674) target = $region161
    $region160: #{tpu_custom_call.1} parent=1 // pred_region
      %v1677 = vld [vmem:[#allocation2 + $0x8] sm:$0xff]
      %v1678 = vld [vmem:[#allocation2 + $0x48] sm:$0xff]
      %v1679 = vadd.f32 %v1677, %v1659
      %v1680 = vadd.f32 %v1678, %v1660
      %1681 = vst [vmem:[#allocation2 + $0x8] sm:$0xff] %v1679
      %1682 = vst [vmem:[#allocation2 + $0x48] sm:$0xff] %v1680
    $region161: #{tpu_custom_call.1} parent=1 // pred_fallthru
      _
    %s1683 = sld [smem:[#allocation7 + $0x104]]
    %p1684 = scmp.gt.s32.totalorder %s1683, 0
    // Predicated region
    $region162: #{tpu_custom_call.1} parent=1 // pred_check
      %p1685 = pneg %p1684
    $region163: #{tpu_custom_call.1} parent=1 // pred_check_branch
      %1687 = sbr.rel (%p1685) target = $region165
    $region164: #{tpu_custom_call.1} parent=1 // pred_region
      %v1688 = vld [vmem:[#allocation2 + $0x10] sm:$0xff]
      %v1689 = vld [vmem:[#allocation2 + $0x50] sm:$0xff]
      %v1690 = vadd.f32 %v1688, %v1659
      %v1691 = vadd.f32 %v1689, %v1660
      %1692 = vst [vmem:[#allocation2 + $0x10] sm:$0xff] %v1690
      %1693 = vst [vmem:[#allocation2 + $0x50] sm:$0xff] %v1691
    $region165: #{tpu_custom_call.1} parent=1 // pred_fallthru
      _
    %s1694 = sld [smem:[#allocation7 + $0x184]]
    %p1695 = scmp.gt.s32.totalorder %s1694, 0
    // Predicated region
    $region166: #{tpu_custom_call.1} parent=1 // pred_check
      %p1696 = pneg %p1695
    $region167: #{tpu_custom_call.1} parent=1 // pred_check_branch
      %1698 = sbr.rel (%p1696) target = $region169
    $region168: #{tpu_custom_call.1} parent=1 // pred_region
      %v1699 = vld [vmem:[#allocation2 + $0x18] sm:$0xff]
      %v1700 = vld [vmem:[#allocation2 + $0x58] sm:$0xff]
      %v1701 = vadd.f32 %v1699, %v1659
      %v1702 = vadd.f32 %v1700, %v1660
      %1703 = vst [vmem:[#allocation2 + $0x18] sm:$0xff] %v1701
      %1704 = vst [vmem:[#allocation2 + $0x58] sm:$0xff] %v1702
    $region169: #{tpu_custom_call.1} parent=1 // pred_fallthru
      _
    %s1705 = sld [smem:[#allocation7 + $0x204]]
    %p1706 = scmp.gt.s32.totalorder %s1705, 0
    // Predicated region
    $region170: #{tpu_custom_call.1} parent=1 // pred_check
      %p1707 = pneg %p1706
    $region171: #{tpu_custom_call.1} parent=1 // pred_check_branch
      %1709 = sbr.rel (%p1707) target = $region173
    $region172: #{tpu_custom_call.1} parent=1 // pred_region
      %v1710 = vld [vmem:[#allocation2 + $0x20] sm:$0xff]
      %v1711 = vld [vmem:[#allocation2 + $0x60] sm:$0xff]
      %v1712 = vadd.f32 %v1710, %v1659
      %v1713 = vadd.f32 %v1711, %v1660
      %1714 = vst [vmem:[#allocation2 + $0x20] sm:$0xff] %v1712
      %1715 = vst [vmem:[#allocation2 + $0x60] sm:$0xff] %v1713
    $region173: #{tpu_custom_call.1} parent=1 // pred_fallthru
      _
    %s1716 = sld [smem:[#allocation7 + $0x284]]
    %p1717 = scmp.gt.s32.totalorder %s1716, 0
    // Predicated region
    $region174: #{tpu_custom_call.1} parent=1 // pred_check
      %p1718 = pneg %p1717
    $region175: #{tpu_custom_call.1} parent=1 // pred_check_branch
      %1720 = sbr.rel (%p1718) target = $region177
    $region176: #{tpu_custom_call.1} parent=1 // pred_region
      %v1721 = vld [vmem:[#allocation2 + $0x28] sm:$0xff]
      %v1722 = vld [vmem:[#allocation2 + $0x68] sm:$0xff]
      %v1723 = vadd.f32 %v1721, %v1659
      %v1724 = vadd.f32 %v1722, %v1660
      %1725 = vst [vmem:[#allocation2 + $0x28] sm:$0xff] %v1723
      %1726 = vst [vmem:[#allocation2 + $0x68] sm:$0xff] %v1724
    $region177: #{tpu_custom_call.1} parent=1 // pred_fallthru
      _
    %s1727 = sld [smem:[#allocation7 + $0x304]]
    %p1728 = scmp.gt.s32.totalorder %s1727, 0
    // Predicated region
    $region178: #{tpu_custom_call.1} parent=1 // pred_check
      %p1729 = pneg %p1728
    $region179: #{tpu_custom_call.1} parent=1 // pred_check_branch
      %1731 = sbr.rel (%p1729) target = $region181
    $region180: #{tpu_custom_call.1} parent=1 // pred_region
      %v1732 = vld [vmem:[#allocation2 + $0x30] sm:$0xff]
      %v1733 = vld [vmem:[#allocation2 + $0x70] sm:$0xff]
      %v1734 = vadd.f32 %v1732, %v1659
      %v1735 = vadd.f32 %v1733, %v1660
      %1736 = vst [vmem:[#allocation2 + $0x30] sm:$0xff] %v1734
      %1737 = vst [vmem:[#allocation2 + $0x70] sm:$0xff] %v1735
    $region181: #{tpu_custom_call.1} parent=1 // pred_fallthru
      _
    %s1738 = sld [smem:[#allocation7 + $0x384]]
    %p1739 = scmp.gt.s32.totalorder %s1738, 0
    // Predicated region
    $region182: #{tpu_custom_call.1} parent=1 // pred_check
      %p1740 = pneg %p1739
    $region183: #{tpu_custom_call.1} parent=1 // pred_check_branch
      %1742 = sbr.rel (%p1740) target = $region185
    $region184: #{tpu_custom_call.1} parent=1 // pred_region
      %v1743 = vld [vmem:[#allocation2 + $0x38] sm:$0xff]
      %v1744 = vld [vmem:[#allocation2 + $0x78] sm:$0xff]
      %v1745 = vadd.f32 %v1743, %v1659
      %v1746 = vadd.f32 %v1744, %v1660
      %1747 = vst [vmem:[#allocation2 + $0x38] sm:$0xff] %v1745
      %1748 = vst [vmem:[#allocation2 + $0x78] sm:$0xff] %v1746
    $region185: #{tpu_custom_call.1} parent=1 // pred_fallthru
      _
    %v1749 = vsub.f32 %v1182, %v1242
    %v1750 = vsub.f32 %v1194, %v1254
    %s1751 = sld [smem:[#allocation7 + $0x5]]
    %p1752 = scmp.gt.s32.totalorder %s1751, 0
    // Predicated region
    $region186: #{tpu_custom_call.1} parent=1 // pred_check
      %p1753 = pneg %p1752
    $region187: #{tpu_custom_call.1} parent=1 // pred_check_branch
      %1755 = sbr.rel (%p1753) target = $region189
    $region188: #{tpu_custom_call.1} parent=1 // pred_region
      %v1756 = vld [vmem:[#allocation2] sm:$0xff]
      %v1757 = vld [vmem:[#allocation2 + $0x40] sm:$0xff]
      %v1758 = vadd.f32 %v1756, %v1749
      %v1759 = vadd.f32 %v1757, %v1750
      %1760 = vst [vmem:[#allocation2] sm:$0xff] %v1758
      %1761 = vst [vmem:[#allocation2 + $0x40] sm:$0xff] %v1759
    $region189: #{tpu_custom_call.1} parent=1 // pred_fallthru
      _
    %s1762 = sld [smem:[#allocation7 + $0x85]]
    %p1763 = scmp.gt.s32.totalorder %s1762, 0
    // Predicated region
    $region190: #{tpu_custom_call.1} parent=1 // pred_check
      %p1764 = pneg %p1763
    $region191: #{tpu_custom_call.1} parent=1 // pred_check_branch
      %1766 = sbr.rel (%p1764) target = $region193
    $region192: #{tpu_custom_call.1} parent=1 // pred_region
      %v1767 = vld [vmem:[#allocation2 + $0x8] sm:$0xff]
      %v1768 = vld [vmem:[#allocation2 + $0x48] sm:$0xff]
      %v1769 = vadd.f32 %v1767, %v1749
      %v1770 = vadd.f32 %v1768, %v1750
      %1771 = vst [vmem:[#allocation2 + $0x8] sm:$0xff] %v1769
      %1772 = vst [vmem:[#allocation2 + $0x48] sm:$0xff] %v1770
    $region193: #{tpu_custom_call.1} parent=1 // pred_fallthru
      _
    %s1773 = sld [smem:[#allocation7 + $0x105]]
    %p1774 = scmp.gt.s32.totalorder %s1773, 0
    // Predicated region
    $region194: #{tpu_custom_call.1} parent=1 // pred_check
      %p1775 = pneg %p1774
    $region195: #{tpu_custom_call.1} parent=1 // pred_check_branch
      %1777 = sbr.rel (%p1775) target = $region197
    $region196: #{tpu_custom_call.1} parent=1 // pred_region
      %v1778 = vld [vmem:[#allocation2 + $0x10] sm:$0xff]
      %v1779 = vld [vmem:[#allocation2 + $0x50] sm:$0xff]
      %v1780 = vadd.f32 %v1778, %v1749
      %v1781 = vadd.f32 %v1779, %v1750
      %1782 = vst [vmem:[#allocation2 + $0x10] sm:$0xff] %v1780
      %1783 = vst [vmem:[#allocation2 + $0x50] sm:$0xff] %v1781
    $region197: #{tpu_custom_call.1} parent=1 // pred_fallthru
      _
    %s1784 = sld [smem:[#allocation7 + $0x185]]
    %p1785 = scmp.gt.s32.totalorder %s1784, 0
    // Predicated region
    $region198: #{tpu_custom_call.1} parent=1 // pred_check
      %p1786 = pneg %p1785
    $region199: #{tpu_custom_call.1} parent=1 // pred_check_branch
      %1788 = sbr.rel (%p1786) target = $region201
    $region200: #{tpu_custom_call.1} parent=1 // pred_region
      %v1789 = vld [vmem:[#allocation2 + $0x18] sm:$0xff]
      %v1790 = vld [vmem:[#allocation2 + $0x58] sm:$0xff]
      %v1791 = vadd.f32 %v1789, %v1749
      %v1792 = vadd.f32 %v1790, %v1750
      %1793 = vst [vmem:[#allocation2 + $0x18] sm:$0xff] %v1791
      %1794 = vst [vmem:[#allocation2 + $0x58] sm:$0xff] %v1792
    $region201: #{tpu_custom_call.1} parent=1 // pred_fallthru
      _
    %s1795 = sld [smem:[#allocation7 + $0x205]]
    %p1796 = scmp.gt.s32.totalorder %s1795, 0
    // Predicated region
    $region202: #{tpu_custom_call.1} parent=1 // pred_check
      %p1797 = pneg %p1796
    $region203: #{tpu_custom_call.1} parent=1 // pred_check_branch
      %1799 = sbr.rel (%p1797) target = $region205
    $region204: #{tpu_custom_call.1} parent=1 // pred_region
      %v1800 = vld [vmem:[#allocation2 + $0x20] sm:$0xff]
      %v1801 = vld [vmem:[#allocation2 + $0x60] sm:$0xff]
      %v1802 = vadd.f32 %v1800, %v1749
      %v1803 = vadd.f32 %v1801, %v1750
      %1804 = vst [vmem:[#allocation2 + $0x20] sm:$0xff] %v1802
      %1805 = vst [vmem:[#allocation2 + $0x60] sm:$0xff] %v1803
    $region205: #{tpu_custom_call.1} parent=1 // pred_fallthru
      _
    %s1806 = sld [smem:[#allocation7 + $0x285]]
    %p1807 = scmp.gt.s32.totalorder %s1806, 0
    // Predicated region
    $region206: #{tpu_custom_call.1} parent=1 // pred_check
      %p1808 = pneg %p1807
    $region207: #{tpu_custom_call.1} parent=1 // pred_check_branch
      %1810 = sbr.rel (%p1808) target = $region209
    $region208: #{tpu_custom_call.1} parent=1 // pred_region
      %v1811 = vld [vmem:[#allocation2 + $0x28] sm:$0xff]
      %v1812 = vld [vmem:[#allocation2 + $0x68] sm:$0xff]
      %v1813 = vadd.f32 %v1811, %v1749
      %v1814 = vadd.f32 %v1812, %v1750
      %1815 = vst [vmem:[#allocation2 + $0x28] sm:$0xff] %v1813
      %1816 = vst [vmem:[#allocation2 + $0x68] sm:$0xff] %v1814
    $region209: #{tpu_custom_call.1} parent=1 // pred_fallthru
      _
    %s1817 = sld [smem:[#allocation7 + $0x305]]
    %p1818 = scmp.gt.s32.totalorder %s1817, 0
    // Predicated region
    $region210: #{tpu_custom_call.1} parent=1 // pred_check
      %p1819 = pneg %p1818
    $region211: #{tpu_custom_call.1} parent=1 // pred_check_branch
      %1821 = sbr.rel (%p1819) target = $region213
    $region212: #{tpu_custom_call.1} parent=1 // pred_region
      %v1822 = vld [vmem:[#allocation2 + $0x30] sm:$0xff]
      %v1823 = vld [vmem:[#allocation2 + $0x70] sm:$0xff]
      %v1824 = vadd.f32 %v1822, %v1749
      %v1825 = vadd.f32 %v1823, %v1750
      %1826 = vst [vmem:[#allocation2 + $0x30] sm:$0xff] %v1824
      %1827 = vst [vmem:[#allocation2 + $0x70] sm:$0xff] %v1825
    $region213: #{tpu_custom_call.1} parent=1 // pred_fallthru
      _
    %s1828 = sld [smem:[#allocation7 + $0x385]]
    %p1829 = scmp.gt.s32.totalorder %s1828, 0
    // Predicated region
    $region214: #{tpu_custom_call.1} parent=1 // pred_check
      %p1830 = pneg %p1829
    $region215: #{tpu_custom_call.1} parent=1 // pred_check_branch
      %1832 = sbr.rel (%p1830) target = $region217
    $region216: #{tpu_custom_call.1} parent=1 // pred_region
      %v1833 = vld [vmem:[#allocation2 + $0x38] sm:$0xff]
      %v1834 = vld [vmem:[#allocation2 + $0x78] sm:$0xff]
      %v1835 = vadd.f32 %v1833, %v1749
      %v1836 = vadd.f32 %v1834, %v1750
      %1837 = vst [vmem:[#allocation2 + $0x38] sm:$0xff] %v1835
      %1838 = vst [vmem:[#allocation2 + $0x78] sm:$0xff] %v1836
    $region217: #{tpu_custom_call.1} parent=1 // pred_fallthru
      _
    %v1839 = vsub.f32 %v1183, %v1243
    %v1840 = vsub.f32 %v1195, %v1255
    %s1841 = sld [smem:[#allocation7 + $0x6]]
    %p1842 = scmp.gt.s32.totalorder %s1841, 0
    // Predicated region
    $region218: #{tpu_custom_call.1} parent=1 // pred_check
      %p1843 = pneg %p1842
    $region219: #{tpu_custom_call.1} parent=1 // pred_check_branch
      %1845 = sbr.rel (%p1843) target = $region221
    $region220: #{tpu_custom_call.1} parent=1 // pred_region
      %v1846 = vld [vmem:[#allocation2] sm:$0xff]
      %v1847 = vld [vmem:[#allocation2 + $0x40] sm:$0xff]
      %v1848 = vadd.f32 %v1846, %v1839
      %v1849 = vadd.f32 %v1847, %v1840
      %1850 = vst [vmem:[#allocation2] sm:$0xff] %v1848
      %1851 = vst [vmem:[#allocation2 + $0x40] sm:$0xff] %v1849
    $region221: #{tpu_custom_call.1} parent=1 // pred_fallthru
      _
    %s1852 = sld [smem:[#allocation7 + $0x86]]
    %p1853 = scmp.gt.s32.totalorder %s1852, 0
    // Predicated region
    $region222: #{tpu_custom_call.1} parent=1 // pred_check
      %p1854 = pneg %p1853
    $region223: #{tpu_custom_call.1} parent=1 // pred_check_branch
      %1856 = sbr.rel (%p1854) target = $region225
    $region224: #{tpu_custom_call.1} parent=1 // pred_region
      %v1857 = vld [vmem:[#allocation2 + $0x8] sm:$0xff]
      %v1858 = vld [vmem:[#allocation2 + $0x48] sm:$0xff]
      %v1859 = vadd.f32 %v1857, %v1839
      %v1860 = vadd.f32 %v1858, %v1840
      %1861 = vst [vmem:[#allocation2 + $0x8] sm:$0xff] %v1859
      %1862 = vst [vmem:[#allocation2 + $0x48] sm:$0xff] %v1860
    $region225: #{tpu_custom_call.1} parent=1 // pred_fallthru
      _
    %s1863 = sld [smem:[#allocation7 + $0x106]]
    %p1864 = scmp.gt.s32.totalorder %s1863, 0
    // Predicated region
    $region226: #{tpu_custom_call.1} parent=1 // pred_check
      %p1865 = pneg %p1864
    $region227: #{tpu_custom_call.1} parent=1 // pred_check_branch
      %1867 = sbr.rel (%p1865) target = $region229
    $region228: #{tpu_custom_call.1} parent=1 // pred_region
      %v1868 = vld [vmem:[#allocation2 + $0x10] sm:$0xff]
      %v1869 = vld [vmem:[#allocation2 + $0x50] sm:$0xff]
      %v1870 = vadd.f32 %v1868, %v1839
      %v1871 = vadd.f32 %v1869, %v1840
      %1872 = vst [vmem:[#allocation2 + $0x10] sm:$0xff] %v1870
      %1873 = vst [vmem:[#allocation2 + $0x50] sm:$0xff] %v1871
    $region229: #{tpu_custom_call.1} parent=1 // pred_fallthru
      _
    %s1874 = sld [smem:[#allocation7 + $0x186]]
    %p1875 = scmp.gt.s32.totalorder %s1874, 0
    // Predicated region
    $region230: #{tpu_custom_call.1} parent=1 // pred_check
      %p1876 = pneg %p1875
    $region231: #{tpu_custom_call.1} parent=1 // pred_check_branch
      %1878 = sbr.rel (%p1876) target = $region233
    $region232: #{tpu_custom_call.1} parent=1 // pred_region
      %v1879 = vld [vmem:[#allocation2 + $0x18] sm:$0xff]
      %v1880 = vld [vmem:[#allocation2 + $0x58] sm:$0xff]
      %v1881 = vadd.f32 %v1879, %v1839
      %v1882 = vadd.f32 %v1880, %v1840
      %1883 = vst [vmem:[#allocation2 + $0x18] sm:$0xff] %v1881
      %1884 = vst [vmem:[#allocation2 + $0x58] sm:$0xff] %v1882
    $region233: #{tpu_custom_call.1} parent=1 // pred_fallthru
      _
    %s1885 = sld [smem:[#allocation7 + $0x206]]
    %p1886 = scmp.gt.s32.totalorder %s1885, 0
    // Predicated region
    $region234: #{tpu_custom_call.1} parent=1 // pred_check
      %p1887 = pneg %p1886
    $region235: #{tpu_custom_call.1} parent=1 // pred_check_branch
      %1889 = sbr.rel (%p1887) target = $region237
    $region236: #{tpu_custom_call.1} parent=1 // pred_region
      %v1890 = vld [vmem:[#allocation2 + $0x20] sm:$0xff]
      %v1891 = vld [vmem:[#allocation2 + $0x60] sm:$0xff]
      %v1892 = vadd.f32 %v1890, %v1839
      %v1893 = vadd.f32 %v1891, %v1840
      %1894 = vst [vmem:[#allocation2 + $0x20] sm:$0xff] %v1892
      %1895 = vst [vmem:[#allocation2 + $0x60] sm:$0xff] %v1893
    $region237: #{tpu_custom_call.1} parent=1 // pred_fallthru
      _
    %s1896 = sld [smem:[#allocation7 + $0x286]]
    %p1897 = scmp.gt.s32.totalorder %s1896, 0
    // Predicated region
    $region238: #{tpu_custom_call.1} parent=1 // pred_check
      %p1898 = pneg %p1897
    $region239: #{tpu_custom_call.1} parent=1 // pred_check_branch
      %1900 = sbr.rel (%p1898) target = $region241
    $region240: #{tpu_custom_call.1} parent=1 // pred_region
      %v1901 = vld [vmem:[#allocation2 + $0x28] sm:$0xff]
      %v1902 = vld [vmem:[#allocation2 + $0x68] sm:$0xff]
      %v1903 = vadd.f32 %v1901, %v1839
      %v1904 = vadd.f32 %v1902, %v1840
      %1905 = vst [vmem:[#allocation2 + $0x28] sm:$0xff] %v1903
      %1906 = vst [vmem:[#allocation2 + $0x68] sm:$0xff] %v1904
    $region241: #{tpu_custom_call.1} parent=1 // pred_fallthru
      _
    %s1907 = sld [smem:[#allocation7 + $0x306]]
    %p1908 = scmp.gt.s32.totalorder %s1907, 0
    // Predicated region
    $region242: #{tpu_custom_call.1} parent=1 // pred_check
      %p1909 = pneg %p1908
    $region243: #{tpu_custom_call.1} parent=1 // pred_check_branch
      %1911 = sbr.rel (%p1909) target = $region245
    $region244: #{tpu_custom_call.1} parent=1 // pred_region
      %v1912 = vld [vmem:[#allocation2 + $0x30] sm:$0xff]
      %v1913 = vld [vmem:[#allocation2 + $0x70] sm:$0xff]
      %v1914 = vadd.f32 %v1912, %v1839
      %v1915 = vadd.f32 %v1913, %v1840
      %1916 = vst [vmem:[#allocation2 + $0x30] sm:$0xff] %v1914
      %1917 = vst [vmem:[#allocation2 + $0x70] sm:$0xff] %v1915
    $region245: #{tpu_custom_call.1} parent=1 // pred_fallthru
      _
    %s1918 = sld [smem:[#allocation7 + $0x386]]
    %p1919 = scmp.gt.s32.totalorder %s1918, 0
    // Predicated region
    $region246: #{tpu_custom_call.1} parent=1 // pred_check
      %p1920 = pneg %p1919
    $region247: #{tpu_custom_call.1} parent=1 // pred_check_branch
      %1922 = sbr.rel (%p1920) target = $region249
    $region248: #{tpu_custom_call.1} parent=1 // pred_region
      %v1923 = vld [vmem:[#allocation2 + $0x38] sm:$0xff]
      %v1924 = vld [vmem:[#allocation2 + $0x78] sm:$0xff]
      %v1925 = vadd.f32 %v1923, %v1839
      %v1926 = vadd.f32 %v1924, %v1840
      %1927 = vst [vmem:[#allocation2 + $0x38] sm:$0xff] %v1925
      %1928 = vst [vmem:[#allocation2 + $0x78] sm:$0xff] %v1926
    $region249: #{tpu_custom_call.1} parent=1 // pred_fallthru
      _
    %v1929 = vsub.f32 %v1184, %v1244
    %v1930 = vsub.f32 %v1196, %v1256
    %s1931 = sld [smem:[#allocation7 + $0x7]]
    %p1932 = scmp.gt.s32.totalorder %s1931, 0
    // Predicated region
    $region250: #{tpu_custom_call.1} parent=1 // pred_check
      %p1933 = pneg %p1932
    $region251: #{tpu_custom_call.1} parent=1 // pred_check_branch
      %1935 = sbr.rel (%p1933) target = $region253
    $region252: #{tpu_custom_call.1} parent=1 // pred_region
      %v1936 = vld [vmem:[#allocation2] sm:$0xff]
      %v1937 = vld [vmem:[#allocation2 + $0x40] sm:$0xff]
      %v1938 = vadd.f32 %v1936, %v1929
      %v1939 = vadd.f32 %v1937, %v1930
      %1940 = vst [vmem:[#allocation2] sm:$0xff] %v1938
      %1941 = vst [vmem:[#allocation2 + $0x40] sm:$0xff] %v1939
    $region253: #{tpu_custom_call.1} parent=1 // pred_fallthru
      _
    %s1942 = sld [smem:[#allocation7 + $0x87]]
    %p1943 = scmp.gt.s32.totalorder %s1942, 0
    // Predicated region
    $region254: #{tpu_custom_call.1} parent=1 // pred_check
      %p1944 = pneg %p1943
    $region255: #{tpu_custom_call.1} parent=1 // pred_check_branch
      %1946 = sbr.rel (%p1944) target = $region257
    $region256: #{tpu_custom_call.1} parent=1 // pred_region
      %v1947 = vld [vmem:[#allocation2 + $0x8] sm:$0xff]
      %v1948 = vld [vmem:[#allocation2 + $0x48] sm:$0xff]
      %v1949 = vadd.f32 %v1947, %v1929
      %v1950 = vadd.f32 %v1948, %v1930
      %1951 = vst [vmem:[#allocation2 + $0x8] sm:$0xff] %v1949
      %1952 = vst [vmem:[#allocation2 + $0x48] sm:$0xff] %v1950
    $region257: #{tpu_custom_call.1} parent=1 // pred_fallthru
      _
    %s1953 = sld [smem:[#allocation7 + $0x107]]
    %p1954 = scmp.gt.s32.totalorder %s1953, 0
    // Predicated region
    $region258: #{tpu_custom_call.1} parent=1 // pred_check
      %p1955 = pneg %p1954
    $region259: #{tpu_custom_call.1} parent=1 // pred_check_branch
      %1957 = sbr.rel (%p1955) target = $region261
    $region260: #{tpu_custom_call.1} parent=1 // pred_region
      %v1958 = vld [vmem:[#allocation2 + $0x10] sm:$0xff]
      %v1959 = vld [vmem:[#allocation2 + $0x50] sm:$0xff]
      %v1960 = vadd.f32 %v1958, %v1929
      %v1961 = vadd.f32 %v1959, %v1930
      %1962 = vst [vmem:[#allocation2 + $0x10] sm:$0xff] %v1960
      %1963 = vst [vmem:[#allocation2 + $0x50] sm:$0xff] %v1961
    $region261: #{tpu_custom_call.1} parent=1 // pred_fallthru
      _
    %s1964 = sld [smem:[#allocation7 + $0x187]]
    %p1965 = scmp.gt.s32.totalorder %s1964, 0
    // Predicated region
    $region262: #{tpu_custom_call.1} parent=1 // pred_check
      %p1966 = pneg %p1965
    $region263: #{tpu_custom_call.1} parent=1 // pred_check_branch
      %1968 = sbr.rel (%p1966) target = $region265
    $region264: #{tpu_custom_call.1} parent=1 // pred_region
      %v1969 = vld [vmem:[#allocation2 + $0x18] sm:$0xff]
      %v1970 = vld [vmem:[#allocation2 + $0x58] sm:$0xff]
      %v1971 = vadd.f32 %v1969, %v1929
      %v1972 = vadd.f32 %v1970, %v1930
      %1973 = vst [vmem:[#allocation2 + $0x18] sm:$0xff] %v1971
      %1974 = vst [vmem:[#allocation2 + $0x58] sm:$0xff] %v1972
    $region265: #{tpu_custom_call.1} parent=1 // pred_fallthru
      _
    %s1975 = sld [smem:[#allocation7 + $0x207]]
    %p1976 = scmp.gt.s32.totalorder %s1975, 0
    // Predicated region
    $region266: #{tpu_custom_call.1} parent=1 // pred_check
      %p1977 = pneg %p1976
    $region267: #{tpu_custom_call.1} parent=1 // pred_check_branch
      %1979 = sbr.rel (%p1977) target = $region269
    $region268: #{tpu_custom_call.1} parent=1 // pred_region
      %v1980 = vld [vmem:[#allocation2 + $0x20] sm:$0xff]
      %v1981 = vld [vmem:[#allocation2 + $0x60] sm:$0xff]
      %v1982 = vadd.f32 %v1980, %v1929
      %v1983 = vadd.f32 %v1981, %v1930
      %1984 = vst [vmem:[#allocation2 + $0x20] sm:$0xff] %v1982
      %1985 = vst [vmem:[#allocation2 + $0x60] sm:$0xff] %v1983
    $region269: #{tpu_custom_call.1} parent=1 // pred_fallthru
      _
    %s1986 = sld [smem:[#allocation7 + $0x287]]
    %p1987 = scmp.gt.s32.totalorder %s1986, 0
    // Predicated region
    $region270: #{tpu_custom_call.1} parent=1 // pred_check
      %p1988 = pneg %p1987
    $region271: #{tpu_custom_call.1} parent=1 // pred_check_branch
      %1990 = sbr.rel (%p1988) target = $region273
    $region272: #{tpu_custom_call.1} parent=1 // pred_region
      %v1991 = vld [vmem:[#allocation2 + $0x28] sm:$0xff]
      %v1992 = vld [vmem:[#allocation2 + $0x68] sm:$0xff]
      %v1993 = vadd.f32 %v1991, %v1929
      %v1994 = vadd.f32 %v1992, %v1930
      %1995 = vst [vmem:[#allocation2 + $0x28] sm:$0xff] %v1993
      %1996 = vst [vmem:[#allocation2 + $0x68] sm:$0xff] %v1994
    $region273: #{tpu_custom_call.1} parent=1 // pred_fallthru
      _
    %s1997 = sld [smem:[#allocation7 + $0x307]]
    %p1998 = scmp.gt.s32.totalorder %s1997, 0
    // Predicated region
    $region274: #{tpu_custom_call.1} parent=1 // pred_check
      %p1999 = pneg %p1998
    $region275: #{tpu_custom_call.1} parent=1 // pred_check_branch
      %2001 = sbr.rel (%p1999) target = $region277
    $region276: #{tpu_custom_call.1} parent=1 // pred_region
      %v2002 = vld [vmem:[#allocation2 + $0x30] sm:$0xff]
      %v2003 = vld [vmem:[#allocation2 + $0x70] sm:$0xff]
      %v2004 = vadd.f32 %v2002, %v1929
      %v2005 = vadd.f32 %v2003, %v1930
      %2006 = vst [vmem:[#allocation2 + $0x30] sm:$0xff] %v2004
      %2007 = vst [vmem:[#allocation2 + $0x70] sm:$0xff] %v2005
    $region277: #{tpu_custom_call.1} parent=1 // pred_fallthru
      _
    %s2008 = sld [smem:[#allocation7 + $0x387]]
    %p2009 = scmp.gt.s32.totalorder %s2008, 0
    // Predicated region
    $region278: #{tpu_custom_call.1} parent=1 // pred_check
      %p2010 = pneg %p2009
    $region279: #{tpu_custom_call.1} parent=1 // pred_check_branch
      %2012 = sbr.rel (%p2010) target = $region281
    $region280: #{tpu_custom_call.1} parent=1 // pred_region
      %v2013 = vld [vmem:[#allocation2 + $0x38] sm:$0xff]
      %v2014 = vld [vmem:[#allocation2 + $0x78] sm:$0xff]
      %v2015 = vadd.f32 %v2013, %v1929
      %v2016 = vadd.f32 %v2014, %v1930
      %2017 = vst [vmem:[#allocation2 + $0x38] sm:$0xff] %v2015
      %2018 = vst [vmem:[#allocation2 + $0x78] sm:$0xff] %v2016
    $region281: #{tpu_custom_call.1} parent=1 // pred_fallthru
      _
    %v2019 = vsub.f32 %v1185, %v1245
    %v2020 = vsub.f32 %v1197, %v1257
    %s2021 = sld [smem:[#allocation7 + $0x8]]
    %p2022 = scmp.gt.s32.totalorder %s2021, 0
    // Predicated region
    $region282: #{tpu_custom_call.1} parent=1 // pred_check
      %p2023 = pneg %p2022
    $region283: #{tpu_custom_call.1} parent=1 // pred_check_branch
      %2025 = sbr.rel (%p2023) target = $region285
    $region284: #{tpu_custom_call.1} parent=1 // pred_region
      %v2026 = vld [vmem:[#allocation2] sm:$0xff]
      %v2027 = vld [vmem:[#allocation2 + $0x40] sm:$0xff]
      %v2028 = vadd.f32 %v2026, %v2019
      %v2029 = vadd.f32 %v2027, %v2020
      %2030 = vst [vmem:[#allocation2] sm:$0xff] %v2028
      %2031 = vst [vmem:[#allocation2 + $0x40] sm:$0xff] %v2029
    $region285: #{tpu_custom_call.1} parent=1 // pred_fallthru
      _
    %s2032 = sld [smem:[#allocation7 + $0x88]]
    %p2033 = scmp.gt.s32.totalorder %s2032, 0
    // Predicated region
    $region286: #{tpu_custom_call.1} parent=1 // pred_check
      %p2034 = pneg %p2033
    $region287: #{tpu_custom_call.1} parent=1 // pred_check_branch
      %2036 = sbr.rel (%p2034) target = $region289
    $region288: #{tpu_custom_call.1} parent=1 // pred_region
      %v2037 = vld [vmem:[#allocation2 + $0x8] sm:$0xff]
      %v2038 = vld [vmem:[#allocation2 + $0x48] sm:$0xff]
      %v2039 = vadd.f32 %v2037, %v2019
      %v2040 = vadd.f32 %v2038, %v2020
      %2041 = vst [vmem:[#allocation2 + $0x8] sm:$0xff] %v2039
      %2042 = vst [vmem:[#allocation2 + $0x48] sm:$0xff] %v2040
    $region289: #{tpu_custom_call.1} parent=1 // pred_fallthru
      _
    %s2043 = sld [smem:[#allocation7 + $0x108]]
    %p2044 = scmp.gt.s32.totalorder %s2043, 0
    // Predicated region
    $region290: #{tpu_custom_call.1} parent=1 // pred_check
      %p2045 = pneg %p2044
    $region291: #{tpu_custom_call.1} parent=1 // pred_check_branch
      %2047 = sbr.rel (%p2045) target = $region293
    $region292: #{tpu_custom_call.1} parent=1 // pred_region
      %v2048 = vld [vmem:[#allocation2 + $0x10] sm:$0xff]
      %v2049 = vld [vmem:[#allocation2 + $0x50] sm:$0xff]
      %v2050 = vadd.f32 %v2048, %v2019
      %v2051 = vadd.f32 %v2049, %v2020
      %2052 = vst [vmem:[#allocation2 + $0x10] sm:$0xff] %v2050
      %2053 = vst [vmem:[#allocation2 + $0x50] sm:$0xff] %v2051
    $region293: #{tpu_custom_call.1} parent=1 // pred_fallthru
      _
    %s2054 = sld [smem:[#allocation7 + $0x188]]
    %p2055 = scmp.gt.s32.totalorder %s2054, 0
    // Predicated region
    $region294: #{tpu_custom_call.1} parent=1 // pred_check
      %p2056 = pneg %p2055
    $region295: #{tpu_custom_call.1} parent=1 // pred_check_branch
      %2058 = sbr.rel (%p2056) target = $region297
    $region296: #{tpu_custom_call.1} parent=1 // pred_region
      %v2059 = vld [vmem:[#allocation2 + $0x18] sm:$0xff]
      %v2060 = vld [vmem:[#allocation2 + $0x58] sm:$0xff]
      %v2061 = vadd.f32 %v2059, %v2019
      %v2062 = vadd.f32 %v2060, %v2020
      %2063 = vst [vmem:[#allocation2 + $0x18] sm:$0xff] %v2061
      %2064 = vst [vmem:[#allocation2 + $0x58] sm:$0xff] %v2062
    $region297: #{tpu_custom_call.1} parent=1 // pred_fallthru
      _
    %s2065 = sld [smem:[#allocation7 + $0x208]]
    %p2066 = scmp.gt.s32.totalorder %s2065, 0
    // Predicated region
    $region298: #{tpu_custom_call.1} parent=1 // pred_check
      %p2067 = pneg %p2066
    $region299: #{tpu_custom_call.1} parent=1 // pred_check_branch
      %2069 = sbr.rel (%p2067) target = $region301
    $region300: #{tpu_custom_call.1} parent=1 // pred_region
      %v2070 = vld [vmem:[#allocation2 + $0x20] sm:$0xff]
      %v2071 = vld [vmem:[#allocation2 + $0x60] sm:$0xff]
      %v2072 = vadd.f32 %v2070, %v2019
      %v2073 = vadd.f32 %v2071, %v2020
      %2074 = vst [vmem:[#allocation2 + $0x20] sm:$0xff] %v2072
      %2075 = vst [vmem:[#allocation2 + $0x60] sm:$0xff] %v2073
    $region301: #{tpu_custom_call.1} parent=1 // pred_fallthru
      _
    %s2076 = sld [smem:[#allocation7 + $0x288]]
    %p2077 = scmp.gt.s32.totalorder %s2076, 0
    // Predicated region
    $region302: #{tpu_custom_call.1} parent=1 // pred_check
      %p2078 = pneg %p2077
    $region303: #{tpu_custom_call.1} parent=1 // pred_check_branch
      %2080 = sbr.rel (%p2078) target = $region305
    $region304: #{tpu_custom_call.1} parent=1 // pred_region
      %v2081 = vld [vmem:[#allocation2 + $0x28] sm:$0xff]
      %v2082 = vld [vmem:[#allocation2 + $0x68] sm:$0xff]
      %v2083 = vadd.f32 %v2081, %v2019
      %v2084 = vadd.f32 %v2082, %v2020
      %2085 = vst [vmem:[#allocation2 + $0x28] sm:$0xff] %v2083
      %2086 = vst [vmem:[#allocation2 + $0x68] sm:$0xff] %v2084
    $region305: #{tpu_custom_call.1} parent=1 // pred_fallthru
      _
    %s2087 = sld [smem:[#allocation7 + $0x308]]
    %p2088 = scmp.gt.s32.totalorder %s2087, 0
    // Predicated region
    $region306: #{tpu_custom_call.1} parent=1 // pred_check
      %p2089 = pneg %p2088
    $region307: #{tpu_custom_call.1} parent=1 // pred_check_branch
      %2091 = sbr.rel (%p2089) target = $region309
    $region308: #{tpu_custom_call.1} parent=1 // pred_region
      %v2092 = vld [vmem:[#allocation2 + $0x30] sm:$0xff]
      %v2093 = vld [vmem:[#allocation2 + $0x70] sm:$0xff]
      %v2094 = vadd.f32 %v2092, %v2019
      %v2095 = vadd.f32 %v2093, %v2020
      %2096 = vst [vmem:[#allocation2 + $0x30] sm:$0xff] %v2094
      %2097 = vst [vmem:[#allocation2 + $0x70] sm:$0xff] %v2095
    $region309: #{tpu_custom_call.1} parent=1 // pred_fallthru
      _
    %s2098 = sld [smem:[#allocation7 + $0x388]]
    %p2099 = scmp.gt.s32.totalorder %s2098, 0
    // Predicated region
    $region310: #{tpu_custom_call.1} parent=1 // pred_check
      %p2100 = pneg %p2099
    $region311: #{tpu_custom_call.1} parent=1 // pred_check_branch
      %2102 = sbr.rel (%p2100) target = $region313
    $region312: #{tpu_custom_call.1} parent=1 // pred_region
      %v2103 = vld [vmem:[#allocation2 + $0x38] sm:$0xff]
      %v2104 = vld [vmem:[#allocation2 + $0x78] sm:$0xff]
      %v2105 = vadd.f32 %v2103, %v2019
      %v2106 = vadd.f32 %v2104, %v2020
      %2107 = vst [vmem:[#allocation2 + $0x38] sm:$0xff] %v2105
      %2108 = vst [vmem:[#allocation2 + $0x78] sm:$0xff] %v2106
    $region313: #{tpu_custom_call.1} parent=1 // pred_fallthru
      _
    %v2109 = vsub.f32 %v1186, %v1246
    %v2110 = vsub.f32 %v1198, %v1258
    %s2111 = sld [smem:[#allocation7 + $0x9]]
    %p2112 = scmp.gt.s32.totalorder %s2111, 0
    // Predicated region
    $region314: #{tpu_custom_call.1} parent=1 // pred_check
      %p2113 = pneg %p2112
    $region315: #{tpu_custom_call.1} parent=1 // pred_check_branch
      %2115 = sbr.rel (%p2113) target = $region317
    $region316: #{tpu_custom_call.1} parent=1 // pred_region
      %v2116 = vld [vmem:[#allocation2] sm:$0xff]
      %v2117 = vld [vmem:[#allocation2 + $0x40] sm:$0xff]
      %v2118 = vadd.f32 %v2116, %v2109
      %v2119 = vadd.f32 %v2117, %v2110
      %2120 = vst [vmem:[#allocation2] sm:$0xff] %v2118
      %2121 = vst [vmem:[#allocation2 + $0x40] sm:$0xff] %v2119
    $region317: #{tpu_custom_call.1} parent=1 // pred_fallthru
      _
    %s2122 = sld [smem:[#allocation7 + $0x89]]
    %p2123 = scmp.gt.s32.totalorder %s2122, 0
    // Predicated region
    $region318: #{tpu_custom_call.1} parent=1 // pred_check
      %p2124 = pneg %p2123
    $region319: #{tpu_custom_call.1} parent=1 // pred_check_branch
      %2126 = sbr.rel (%p2124) target = $region321
    $region320: #{tpu_custom_call.1} parent=1 // pred_region
      %v2127 = vld [vmem:[#allocation2 + $0x8] sm:$0xff]
      %v2128 = vld [vmem:[#allocation2 + $0x48] sm:$0xff]
      %v2129 = vadd.f32 %v2127, %v2109
      %v2130 = vadd.f32 %v2128, %v2110
      %2131 = vst [vmem:[#allocation2 + $0x8] sm:$0xff] %v2129
      %2132 = vst [vmem:[#allocation2 + $0x48] sm:$0xff] %v2130
    $region321: #{tpu_custom_call.1} parent=1 // pred_fallthru
      _
    %s2133 = sld [smem:[#allocation7 + $0x109]]
    %p2134 = scmp.gt.s32.totalorder %s2133, 0
    // Predicated region
    $region322: #{tpu_custom_call.1} parent=1 // pred_check
      %p2135 = pneg %p2134
    $region323: #{tpu_custom_call.1} parent=1 // pred_check_branch
      %2137 = sbr.rel (%p2135) target = $region325
    $region324: #{tpu_custom_call.1} parent=1 // pred_region
      %v2138 = vld [vmem:[#allocation2 + $0x10] sm:$0xff]
      %v2139 = vld [vmem:[#allocation2 + $0x50] sm:$0xff]
      %v2140 = vadd.f32 %v2138, %v2109
      %v2141 = vadd.f32 %v2139, %v2110
      %2142 = vst [vmem:[#allocation2 + $0x10] sm:$0xff] %v2140
      %2143 = vst [vmem:[#allocation2 + $0x50] sm:$0xff] %v2141
    $region325: #{tpu_custom_call.1} parent=1 // pred_fallthru
      _
    %s2144 = sld [smem:[#allocation7 + $0x189]]
    %p2145 = scmp.gt.s32.totalorder %s2144, 0
    // Predicated region
    $region326: #{tpu_custom_call.1} parent=1 // pred_check
      %p2146 = pneg %p2145
    $region327: #{tpu_custom_call.1} parent=1 // pred_check_branch
      %2148 = sbr.rel (%p2146) target = $region329
    $region328: #{tpu_custom_call.1} parent=1 // pred_region
      %v2149 = vld [vmem:[#allocation2 + $0x18] sm:$0xff]
      %v2150 = vld [vmem:[#allocation2 + $0x58] sm:$0xff]
      %v2151 = vadd.f32 %v2149, %v2109
      %v2152 = vadd.f32 %v2150, %v2110
      %2153 = vst [vmem:[#allocation2 + $0x18] sm:$0xff] %v2151
      %2154 = vst [vmem:[#allocation2 + $0x58] sm:$0xff] %v2152
    $region329: #{tpu_custom_call.1} parent=1 // pred_fallthru
      _
    %s2155 = sld [smem:[#allocation7 + $0x209]]
    %p2156 = scmp.gt.s32.totalorder %s2155, 0
    // Predicated region
    $region330: #{tpu_custom_call.1} parent=1 // pred_check
      %p2157 = pneg %p2156
    $region331: #{tpu_custom_call.1} parent=1 // pred_check_branch
      %2159 = sbr.rel (%p2157) target = $region333
    $region332: #{tpu_custom_call.1} parent=1 // pred_region
      %v2160 = vld [vmem:[#allocation2 + $0x20] sm:$0xff]
      %v2161 = vld [vmem:[#allocation2 + $0x60] sm:$0xff]
      %v2162 = vadd.f32 %v2160, %v2109
      %v2163 = vadd.f32 %v2161, %v2110
      %2164 = vst [vmem:[#allocation2 + $0x20] sm:$0xff] %v2162
      %2165 = vst [vmem:[#allocation2 + $0x60] sm:$0xff] %v2163
    $region333: #{tpu_custom_call.1} parent=1 // pred_fallthru
      _
    %s2166 = sld [smem:[#allocation7 + $0x289]]
    %p2167 = scmp.gt.s32.totalorder %s2166, 0
    // Predicated region
    $region334: #{tpu_custom_call.1} parent=1 // pred_check
      %p2168 = pneg %p2167
    $region335: #{tpu_custom_call.1} parent=1 // pred_check_branch
      %2170 = sbr.rel (%p2168) target = $region337
    $region336: #{tpu_custom_call.1} parent=1 // pred_region
      %v2171 = vld [vmem:[#allocation2 + $0x28] sm:$0xff]
      %v2172 = vld [vmem:[#allocation2 + $0x68] sm:$0xff]
      %v2173 = vadd.f32 %v2171, %v2109
      %v2174 = vadd.f32 %v2172, %v2110
      %2175 = vst [vmem:[#allocation2 + $0x28] sm:$0xff] %v2173
      %2176 = vst [vmem:[#allocation2 + $0x68] sm:$0xff] %v2174
    $region337: #{tpu_custom_call.1} parent=1 // pred_fallthru
      _
    %s2177 = sld [smem:[#allocation7 + $0x309]]
    %p2178 = scmp.gt.s32.totalorder %s2177, 0
    // Predicated region
    $region338: #{tpu_custom_call.1} parent=1 // pred_check
      %p2179 = pneg %p2178
    $region339: #{tpu_custom_call.1} parent=1 // pred_check_branch
      %2181 = sbr.rel (%p2179) target = $region341
    $region340: #{tpu_custom_call.1} parent=1 // pred_region
      %v2182 = vld [vmem:[#allocation2 + $0x30] sm:$0xff]
      %v2183 = vld [vmem:[#allocation2 + $0x70] sm:$0xff]
      %v2184 = vadd.f32 %v2182, %v2109
      %v2185 = vadd.f32 %v2183, %v2110
      %2186 = vst [vmem:[#allocation2 + $0x30] sm:$0xff] %v2184
      %2187 = vst [vmem:[#allocation2 + $0x70] sm:$0xff] %v2185
    $region341: #{tpu_custom_call.1} parent=1 // pred_fallthru
      _
    %s2188 = sld [smem:[#allocation7 + $0x389]]
    %p2189 = scmp.gt.s32.totalorder %s2188, 0
    // Predicated region
    $region342: #{tpu_custom_call.1} parent=1 // pred_check
      %p2190 = pneg %p2189
    $region343: #{tpu_custom_call.1} parent=1 // pred_check_branch
      %2192 = sbr.rel (%p2190) target = $region345
    $region344: #{tpu_custom_call.1} parent=1 // pred_region
      %v2193 = vld [vmem:[#allocation2 + $0x38] sm:$0xff]
      %v2194 = vld [vmem:[#allocation2 + $0x78] sm:$0xff]
      %v2195 = vadd.f32 %v2193, %v2109
      %v2196 = vadd.f32 %v2194, %v2110
      %2197 = vst [vmem:[#allocation2 + $0x38] sm:$0xff] %v2195
      %2198 = vst [vmem:[#allocation2 + $0x78] sm:$0xff] %v2196
    $region345: #{tpu_custom_call.1} parent=1 // pred_fallthru
      _
    %v2199 = vsub.f32 %v1187, %v1247
    %v2200 = vsub.f32 %v1199, %v1259
    %s2201 = sld [smem:[#allocation7 + $0xa]]
    %p2202 = scmp.gt.s32.totalorder %s2201, 0
    // Predicated region
    $region346: #{tpu_custom_call.1} parent=1 // pred_check
      %p2203 = pneg %p2202
    $region347: #{tpu_custom_call.1} parent=1 // pred_check_branch
      %2205 = sbr.rel (%p2203) target = $region349
    $region348: #{tpu_custom_call.1} parent=1 // pred_region
      %v2206 = vld [vmem:[#allocation2] sm:$0xff]
      %v2207 = vld [vmem:[#allocation2 + $0x40] sm:$0xff]
      %v2208 = vadd.f32 %v2206, %v2199
      %v2209 = vadd.f32 %v2207, %v2200
      %2210 = vst [vmem:[#allocation2] sm:$0xff] %v2208
      %2211 = vst [vmem:[#allocation2 + $0x40] sm:$0xff] %v2209
    $region349: #{tpu_custom_call.1} parent=1 // pred_fallthru
      _
    %s2212 = sld [smem:[#allocation7 + $0x8a]]
    %p2213 = scmp.gt.s32.totalorder %s2212, 0
    // Predicated region
    $region350: #{tpu_custom_call.1} parent=1 // pred_check
      %p2214 = pneg %p2213
    $region351: #{tpu_custom_call.1} parent=1 // pred_check_branch
      %2216 = sbr.rel (%p2214) target = $region353
    $region352: #{tpu_custom_call.1} parent=1 // pred_region
      %v2217 = vld [vmem:[#allocation2 + $0x8] sm:$0xff]
      %v2218 = vld [vmem:[#allocation2 + $0x48] sm:$0xff]
      %v2219 = vadd.f32 %v2217, %v2199
      %v2220 = vadd.f32 %v2218, %v2200
      %2221 = vst [vmem:[#allocation2 + $0x8] sm:$0xff] %v2219
      %2222 = vst [vmem:[#allocation2 + $0x48] sm:$0xff] %v2220
    $region353: #{tpu_custom_call.1} parent=1 // pred_fallthru
      _
    %s2223 = sld [smem:[#allocation7 + $0x10a]]
    %p2224 = scmp.gt.s32.totalorder %s2223, 0
    // Predicated region
    $region354: #{tpu_custom_call.1} parent=1 // pred_check
      %p2225 = pneg %p2224
    $region355: #{tpu_custom_call.1} parent=1 // pred_check_branch
      %2227 = sbr.rel (%p2225) target = $region357
    $region356: #{tpu_custom_call.1} parent=1 // pred_region
      %v2228 = vld [vmem:[#allocation2 + $0x10] sm:$0xff]
      %v2229 = vld [vmem:[#allocation2 + $0x50] sm:$0xff]
      %v2230 = vadd.f32 %v2228, %v2199
      %v2231 = vadd.f32 %v2229, %v2200
      %2232 = vst [vmem:[#allocation2 + $0x10] sm:$0xff] %v2230
      %2233 = vst [vmem:[#allocation2 + $0x50] sm:$0xff] %v2231
    $region357: #{tpu_custom_call.1} parent=1 // pred_fallthru
      _
    %s2234 = sld [smem:[#allocation7 + $0x18a]]
    %p2235 = scmp.gt.s32.totalorder %s2234, 0
    // Predicated region
    $region358: #{tpu_custom_call.1} parent=1 // pred_check
      %p2236 = pneg %p2235
    $region359: #{tpu_custom_call.1} parent=1 // pred_check_branch
      %2238 = sbr.rel (%p2236) target = $region361
    $region360: #{tpu_custom_call.1} parent=1 // pred_region
      %v2239 = vld [vmem:[#allocation2 + $0x18] sm:$0xff]
      %v2240 = vld [vmem:[#allocation2 + $0x58] sm:$0xff]
      %v2241 = vadd.f32 %v2239, %v2199
      %v2242 = vadd.f32 %v2240, %v2200
      %2243 = vst [vmem:[#allocation2 + $0x18] sm:$0xff] %v2241
      %2244 = vst [vmem:[#allocation2 + $0x58] sm:$0xff] %v2242
    $region361: #{tpu_custom_call.1} parent=1 // pred_fallthru
      _
    %s2245 = sld [smem:[#allocation7 + $0x20a]]
    %p2246 = scmp.gt.s32.totalorder %s2245, 0
    // Predicated region
    $region362: #{tpu_custom_call.1} parent=1 // pred_check
      %p2247 = pneg %p2246
    $region363: #{tpu_custom_call.1} parent=1 // pred_check_branch
      %2249 = sbr.rel (%p2247) target = $region365
    $region364: #{tpu_custom_call.1} parent=1 // pred_region
      %v2250 = vld [vmem:[#allocation2 + $0x20] sm:$0xff]
      %v2251 = vld [vmem:[#allocation2 + $0x60] sm:$0xff]
      %v2252 = vadd.f32 %v2250, %v2199
      %v2253 = vadd.f32 %v2251, %v2200
      %2254 = vst [vmem:[#allocation2 + $0x20] sm:$0xff] %v2252
      %2255 = vst [vmem:[#allocation2 + $0x60] sm:$0xff] %v2253
    $region365: #{tpu_custom_call.1} parent=1 // pred_fallthru
      _
    %s2256 = sld [smem:[#allocation7 + $0x28a]]
    %p2257 = scmp.gt.s32.totalorder %s2256, 0
    // Predicated region
    $region366: #{tpu_custom_call.1} parent=1 // pred_check
      %p2258 = pneg %p2257
    $region367: #{tpu_custom_call.1} parent=1 // pred_check_branch
      %2260 = sbr.rel (%p2258) target = $region369
    $region368: #{tpu_custom_call.1} parent=1 // pred_region
      %v2261 = vld [vmem:[#allocation2 + $0x28] sm:$0xff]
      %v2262 = vld [vmem:[#allocation2 + $0x68] sm:$0xff]
      %v2263 = vadd.f32 %v2261, %v2199
      %v2264 = vadd.f32 %v2262, %v2200
      %2265 = vst [vmem:[#allocation2 + $0x28] sm:$0xff] %v2263
      %2266 = vst [vmem:[#allocation2 + $0x68] sm:$0xff] %v2264
    $region369: #{tpu_custom_call.1} parent=1 // pred_fallthru
      _
    %s2267 = sld [smem:[#allocation7 + $0x30a]]
    %p2268 = scmp.gt.s32.totalorder %s2267, 0
    // Predicated region
    $region370: #{tpu_custom_call.1} parent=1 // pred_check
      %p2269 = pneg %p2268
    $region371: #{tpu_custom_call.1} parent=1 // pred_check_branch
      %2271 = sbr.rel (%p2269) target = $region373
    $region372: #{tpu_custom_call.1} parent=1 // pred_region
      %v2272 = vld [vmem:[#allocation2 + $0x30] sm:$0xff]
      %v2273 = vld [vmem:[#allocation2 + $0x70] sm:$0xff]
      %v2274 = vadd.f32 %v2272, %v2199
      %v2275 = vadd.f32 %v2273, %v2200
      %2276 = vst [vmem:[#allocation2 + $0x30] sm:$0xff] %v2274
      %2277 = vst [vmem:[#allocation2 + $0x70] sm:$0xff] %v2275
    $region373: #{tpu_custom_call.1} parent=1 // pred_fallthru
      _
    %s2278 = sld [smem:[#allocation7 + $0x38a]]
    %p2279 = scmp.gt.s32.totalorder %s2278, 0
    // Predicated region
    $region374: #{tpu_custom_call.1} parent=1 // pred_check
      %p2280 = pneg %p2279
    $region375: #{tpu_custom_call.1} parent=1 // pred_check_branch
      %2282 = sbr.rel (%p2280) target = $region377
    $region376: #{tpu_custom_call.1} parent=1 // pred_region
      %v2283 = vld [vmem:[#allocation2 + $0x38] sm:$0xff]
      %v2284 = vld [vmem:[#allocation2 + $0x78] sm:$0xff]
      %v2285 = vadd.f32 %v2283, %v2199
      %v2286 = vadd.f32 %v2284, %v2200
      %2287 = vst [vmem:[#allocation2 + $0x38] sm:$0xff] %v2285
      %2288 = vst [vmem:[#allocation2 + $0x78] sm:$0xff] %v2286
    $region377: #{tpu_custom_call.1} parent=1 // pred_fallthru
      _
    %v2289 = vsub.f32 %v1188, %v1248
    %v2290 = vsub.f32 %v1200, %v1260
    %s2291 = sld [smem:[#allocation7 + $0xb]]
    %p2292 = scmp.gt.s32.totalorder %s2291, 0
    // Predicated region
    $region378: #{tpu_custom_call.1} parent=1 // pred_check
      %p2293 = pneg %p2292
    $region379: #{tpu_custom_call.1} parent=1 // pred_check_branch
      %2295 = sbr.rel (%p2293) target = $region381
    $region380: #{tpu_custom_call.1} parent=1 // pred_region
      %v2296 = vld [vmem:[#allocation2] sm:$0xff]
      %v2297 = vld [vmem:[#allocation2 + $0x40] sm:$0xff]
      %v2298 = vadd.f32 %v2296, %v2289
      %v2299 = vadd.f32 %v2297, %v2290
      %2300 = vst [vmem:[#allocation2] sm:$0xff] %v2298
      %2301 = vst [vmem:[#allocation2 + $0x40] sm:$0xff] %v2299
    $region381: #{tpu_custom_call.1} parent=1 // pred_fallthru
      _
    %s2302 = sld [smem:[#allocation7 + $0x8b]]
    %p2303 = scmp.gt.s32.totalorder %s2302, 0
    // Predicated region
    $region382: #{tpu_custom_call.1} parent=1 // pred_check
      %p2304 = pneg %p2303
    $region383: #{tpu_custom_call.1} parent=1 // pred_check_branch
      %2306 = sbr.rel (%p2304) target = $region385
    $region384: #{tpu_custom_call.1} parent=1 // pred_region
      %v2307 = vld [vmem:[#allocation2 + $0x8] sm:$0xff]
      %v2308 = vld [vmem:[#allocation2 + $0x48] sm:$0xff]
      %v2309 = vadd.f32 %v2307, %v2289
      %v2310 = vadd.f32 %v2308, %v2290
      %2311 = vst [vmem:[#allocation2 + $0x8] sm:$0xff] %v2309
      %2312 = vst [vmem:[#allocation2 + $0x48] sm:$0xff] %v2310
    $region385: #{tpu_custom_call.1} parent=1 // pred_fallthru
      _
    %s2313 = sld [smem:[#allocation7 + $0x10b]]
    %p2314 = scmp.gt.s32.totalorder %s2313, 0
    // Predicated region
    $region386: #{tpu_custom_call.1} parent=1 // pred_check
      %p2315 = pneg %p2314
    $region387: #{tpu_custom_call.1} parent=1 // pred_check_branch
      %2317 = sbr.rel (%p2315) target = $region389
    $region388: #{tpu_custom_call.1} parent=1 // pred_region
      %v2318 = vld [vmem:[#allocation2 + $0x10] sm:$0xff]
      %v2319 = vld [vmem:[#allocation2 + $0x50] sm:$0xff]
      %v2320 = vadd.f32 %v2318, %v2289
      %v2321 = vadd.f32 %v2319, %v2290
      %2322 = vst [vmem:[#allocation2 + $0x10] sm:$0xff] %v2320
      %2323 = vst [vmem:[#allocation2 + $0x50] sm:$0xff] %v2321
    $region389: #{tpu_custom_call.1} parent=1 // pred_fallthru
      _
    %s2324 = sld [smem:[#allocation7 + $0x18b]]
    %p2325 = scmp.gt.s32.totalorder %s2324, 0
    // Predicated region
    $region390: #{tpu_custom_call.1} parent=1 // pred_check
      %p2326 = pneg %p2325
    $region391: #{tpu_custom_call.1} parent=1 // pred_check_branch
      %2328 = sbr.rel (%p2326) target = $region393
    $region392: #{tpu_custom_call.1} parent=1 // pred_region
      %v2329 = vld [vmem:[#allocation2 + $0x18] sm:$0xff]
      %v2330 = vld [vmem:[#allocation2 + $0x58] sm:$0xff]
      %v2331 = vadd.f32 %v2329, %v2289
      %v2332 = vadd.f32 %v2330, %v2290
      %2333 = vst [vmem:[#allocation2 + $0x18] sm:$0xff] %v2331
      %2334 = vst [vmem:[#allocation2 + $0x58] sm:$0xff] %v2332
    $region393: #{tpu_custom_call.1} parent=1 // pred_fallthru
      _
    %s2335 = sld [smem:[#allocation7 + $0x20b]]
    %p2336 = scmp.gt.s32.totalorder %s2335, 0
    // Predicated region
    $region394: #{tpu_custom_call.1} parent=1 // pred_check
      %p2337 = pneg %p2336
    $region395: #{tpu_custom_call.1} parent=1 // pred_check_branch
      %2339 = sbr.rel (%p2337) target = $region397
    $region396: #{tpu_custom_call.1} parent=1 // pred_region
      %v2340 = vld [vmem:[#allocation2 + $0x20] sm:$0xff]
      %v2341 = vld [vmem:[#allocation2 + $0x60] sm:$0xff]
      %v2342 = vadd.f32 %v2340, %v2289
      %v2343 = vadd.f32 %v2341, %v2290
      %2344 = vst [vmem:[#allocation2 + $0x20] sm:$0xff] %v2342
      %2345 = vst [vmem:[#allocation2 + $0x60] sm:$0xff] %v2343
    $region397: #{tpu_custom_call.1} parent=1 // pred_fallthru
      _
    %s2346 = sld [smem:[#allocation7 + $0x28b]]
    %p2347 = scmp.gt.s32.totalorder %s2346, 0
    // Predicated region
    $region398: #{tpu_custom_call.1} parent=1 // pred_check
      %p2348 = pneg %p2347
    $region399: #{tpu_custom_call.1} parent=1 // pred_check_branch
      %2350 = sbr.rel (%p2348) target = $region401
    $region400: #{tpu_custom_call.1} parent=1 // pred_region
      %v2351 = vld [vmem:[#allocation2 + $0x28] sm:$0xff]
      %v2352 = vld [vmem:[#allocation2 + $0x68] sm:$0xff]
      %v2353 = vadd.f32 %v2351, %v2289
      %v2354 = vadd.f32 %v2352, %v2290
      %2355 = vst [vmem:[#allocation2 + $0x28] sm:$0xff] %v2353
      %2356 = vst [vmem:[#allocation2 + $0x68] sm:$0xff] %v2354
    $region401: #{tpu_custom_call.1} parent=1 // pred_fallthru
      _
    %s2357 = sld [smem:[#allocation7 + $0x30b]]
    %p2358 = scmp.gt.s32.totalorder %s2357, 0
    // Predicated region
    $region402: #{tpu_custom_call.1} parent=1 // pred_check
      %p2359 = pneg %p2358
    $region403: #{tpu_custom_call.1} parent=1 // pred_check_branch
      %2361 = sbr.rel (%p2359) target = $region405
    $region404: #{tpu_custom_call.1} parent=1 // pred_region
      %v2362 = vld [vmem:[#allocation2 + $0x30] sm:$0xff]
      %v2363 = vld [vmem:[#allocation2 + $0x70] sm:$0xff]
      %v2364 = vadd.f32 %v2362, %v2289
      %v2365 = vadd.f32 %v2363, %v2290
      %2366 = vst [vmem:[#allocation2 + $0x30] sm:$0xff] %v2364
      %2367 = vst [vmem:[#allocation2 + $0x70] sm:$0xff] %v2365
    $region405: #{tpu_custom_call.1} parent=1 // pred_fallthru
      _
    %s2368 = sld [smem:[#allocation7 + $0x38b]]
    %p2369 = scmp.gt.s32.totalorder %s2368, 0
    // Predicated region
    $region406: #{tpu_custom_call.1} parent=1 // pred_check
      %p2370 = pneg %p2369
    $region407: #{tpu_custom_call.1} parent=1 // pred_check_branch
      %2372 = sbr.rel (%p2370) target = $region409
    $region408: #{tpu_custom_call.1} parent=1 // pred_region
      %v2373 = vld [vmem:[#allocation2 + $0x38] sm:$0xff]
      %v2374 = vld [vmem:[#allocation2 + $0x78] sm:$0xff]
      %v2375 = vadd.f32 %v2373, %v2289
      %v2376 = vadd.f32 %v2374, %v2290
      %2377 = vst [vmem:[#allocation2 + $0x38] sm:$0xff] %v2375
      %2378 = vst [vmem:[#allocation2 + $0x78] sm:$0xff] %v2376
    $region409: #{tpu_custom_call.1} parent=1 // pred_fallthru
      _
    %v2379 = vld [vmem:[#allocation13 + $0x58] sm:$0xff]
    %v2380 = vld [vmem:[#allocation13 + $0x60] sm:$0xff]
    %v2381 = vld [vmem:[#allocation13 + $0x68] sm:$0xf]
    %v2382 = vld [vmem:[#allocation2] sm:$0xff]
    %v2383 = vld [vmem:[#allocation2 + $0x8] sm:$0xff]
    %v2384 = vld [vmem:[#allocation2 + $0x10] sm:$0xff]
    %v2385 = vld [vmem:[#allocation2 + $0x18] sm:$0xff]
    %v2386 = vld [vmem:[#allocation2 + $0x20] sm:$0xff]
    %v2387 = vld [vmem:[#allocation2 + $0x28] sm:$0xff]
    %v2388 = vld [vmem:[#allocation2 + $0x30] sm:$0xff]
    %v2389 = vld [vmem:[#allocation2 + $0x38] sm:$0xff]
    %v2390 = vld [vmem:[#allocation2 + $0x40] sm:$0xff]
    %v2391 = vld [vmem:[#allocation2 + $0x48] sm:$0xff]
    %v2392 = vld [vmem:[#allocation2 + $0x50] sm:$0xff]
    %v2393 = vld [vmem:[#allocation2 + $0x58] sm:$0xff]
    %v2394 = vld [vmem:[#allocation2 + $0x60] sm:$0xff]
    %v2395 = vld [vmem:[#allocation2 + $0x68] sm:$0xff]
    %v2396 = vld [vmem:[#allocation2 + $0x70] sm:$0xff]
    %v2397 = vld [vmem:[#allocation2 + $0x78] sm:$0xff]
    %v2398 = vld [vmem:[#allocation13 + $0x88] sm:$0xff]
    %v2399 = vld [vmem:[#allocation13 + $0x90] sm:$0xff]
    %v2400 = vld [vmem:[#allocation13 + $0x98] sm:$0xf]
    %2402 = vset.pattern.permute.xlu0 0
    %2403 = vperm.xlu0 %2402, %v2398
    %v2404 = vpop.permute.xlu0 %2403
    %2407 = vset.pattern.permute.xlu0 0
    %2408 = vperm.xlu0 %2407, %v2399
    %v2409 = vpop.permute.xlu0 %2408
    %2412 = vset.pattern.permute.xlu0 0
    %2413 = vperm.xlu0 %2412, %v2400
    %v2414 = vpop.permute.xlu0 %2413
    %vm2416 = vcmask 130048
    %v2418 = vsel %vm2416, %v2379, 0
    %v2421 = vsel %vm2416, %v2380, 0
    %v2424 = vsel %vm2416, %v2381, 0
    %2426 = vmatpush.msra.mxu0 0.0
    %2427 = vmatpush.msra.mxu0 0.0
    %2428 = vmatpush.msra.mxu0 0.0
    %2429 = vmatpush.msra.mxu0 0.0
    %2430 = vmatpush.msra.mxu0 0.0
    %2431 = vmatpush.msra.mxu0 0.0
    %2432 = vmatpush.msra.mxu0 0.0
    %2433 = vmatpush.msra.mxu0 0.0
    %2434 = vmatpush.msra.mxu0 0.0
    %2435 = vmatpush.msra.mxu0 0.0
    %2436 = vmatpush.msra.mxu0 0.0
    %2437 = vmatpush.msra.mxu0 0.0
    %2438 = vmatpush.msra.mxu0 0.0
    %2439 = vmatpush.msra.mxu0 0.0
    %2440 = vmatpush.msra.mxu0 %v2390
    %2441 = vmatpush.msra.mxu0 %v2382
    %2442 = vmatmul.f32.gmra.mxu0 %v2418
    %v2443 = vpop.f32.mrf.mxu0
    %v2444 = vadd.f32 %v2404, %v2443
    %2445 = vmatmul.f32.gmra.mxu0 %v2421
    %v2446 = vpop.f32.mrf.mxu0
    %v2447 = vadd.f32 %v2409, %v2446
    %2448 = vmatmul.f32.gmra.mxu0 %v2424
    %v2449 = vpop.f32.mrf.mxu0
    %v2450 = vadd.f32 %v2414, %v2449
    %2451 = vdwg.mxu0
    %2452 = vmatpush.msra.mxu0 0.0
    %2453 = vmatpush.msra.mxu0 0.0
    %2454 = vmatpush.msra.mxu0 0.0
    %2455 = vmatpush.msra.mxu0 0.0
    %2456 = vmatpush.msra.mxu0 0.0
    %2457 = vmatpush.msra.mxu0 0.0
    %2458 = vmatpush.msra.mxu0 0.0
    %2459 = vmatpush.msra.mxu0 0.0
    %2460 = vmatpush.msra.mxu0 0.0
    %2461 = vmatpush.msra.mxu0 0.0
    %2462 = vmatpush.msra.mxu0 0.0
    %2463 = vmatpush.msra.mxu0 0.0
    %2464 = vmatpush.msra.mxu0 0.0
    %2465 = vmatpush.msra.mxu0 0.0
    %2466 = vmatpush.msra.mxu0 %v2391
    %2467 = vmatpush.msra.mxu0 %v2383
    %2468 = vmatmul.f32.gmra.mxu0 %v2418
    %v2469 = vpop.f32.mrf.mxu0
    %v2470 = vadd.f32 %v2404, %v2469
    %2471 = vmatmul.f32.gmra.mxu0 %v2421
    %v2472 = vpop.f32.mrf.mxu0
    %v2473 = vadd.f32 %v2409, %v2472
    %2474 = vmatmul.f32.gmra.mxu0 %v2424
    %v2475 = vpop.f32.mrf.mxu0
    %v2476 = vadd.f32 %v2414, %v2475
    %2477 = vdwg.mxu0
    %2478 = vmatpush.msra.mxu0 0.0
    %2479 = vmatpush.msra.mxu0 0.0
    %2480 = vmatpush.msra.mxu0 0.0
    %2481 = vmatpush.msra.mxu0 0.0
    %2482 = vmatpush.msra.mxu0 0.0
    %2483 = vmatpush.msra.mxu0 0.0
    %2484 = vmatpush.msra.mxu0 0.0
    %2485 = vmatpush.msra.mxu0 0.0
    %2486 = vmatpush.msra.mxu0 0.0
    %2487 = vmatpush.msra.mxu0 0.0
    %2488 = vmatpush.msra.mxu0 0.0
    %2489 = vmatpush.msra.mxu0 0.0
    %2490 = vmatpush.msra.mxu0 0.0
    %2491 = vmatpush.msra.mxu0 0.0
    %2492 = vmatpush.msra.mxu0 %v2392
    %2493 = vmatpush.msra.mxu0 %v2384
    %2494 = vmatmul.f32.gmra.mxu0 %v2418
    %v2495 = vpop.f32.mrf.mxu0
    %v2496 = vadd.f32 %v2404, %v2495
    %2497 = vmatmul.f32.gmra.mxu0 %v2421
    %v2498 = vpop.f32.mrf.mxu0
    %v2499 = vadd.f32 %v2409, %v2498
    %2500 = vmatmul.f32.gmra.mxu0 %v2424
    %v2501 = vpop.f32.mrf.mxu0
    %v2502 = vadd.f32 %v2414, %v2501
    %2503 = vdwg.mxu0
    %2504 = vmatpush.msra.mxu0 0.0
    %2505 = vmatpush.msra.mxu0 0.0
    %2506 = vmatpush.msra.mxu0 0.0
    %2507 = vmatpush.msra.mxu0 0.0
    %2508 = vmatpush.msra.mxu0 0.0
    %2509 = vmatpush.msra.mxu0 0.0
    %2510 = vmatpush.msra.mxu0 0.0
    %2511 = vmatpush.msra.mxu0 0.0
    %2512 = vmatpush.msra.mxu0 0.0
    %2513 = vmatpush.msra.mxu0 0.0
    %2514 = vmatpush.msra.mxu0 0.0
    %2515 = vmatpush.msra.mxu0 0.0
    %2516 = vmatpush.msra.mxu0 0.0
    %2517 = vmatpush.msra.mxu0 0.0
    %2518 = vmatpush.msra.mxu0 %v2393
    %2519 = vmatpush.msra.mxu0 %v2385
    %2520 = vmatmul.f32.gmra.mxu0 %v2418
    %v2521 = vpop.f32.mrf.mxu0
    %v2522 = vadd.f32 %v2404, %v2521
    %2523 = vmatmul.f32.gmra.mxu0 %v2421
    %v2524 = vpop.f32.mrf.mxu0
    %v2525 = vadd.f32 %v2409, %v2524
    %2526 = vmatmul.f32.gmra.mxu0 %v2424
    %v2527 = vpop.f32.mrf.mxu0
    %v2528 = vadd.f32 %v2414, %v2527
    %2529 = vdwg.mxu0
    %2530 = vmatpush.msra.mxu0 0.0
    %2531 = vmatpush.msra.mxu0 0.0
    %2532 = vmatpush.msra.mxu0 0.0
    %2533 = vmatpush.msra.mxu0 0.0
    %2534 = vmatpush.msra.mxu0 0.0
    %2535 = vmatpush.msra.mxu0 0.0
    %2536 = vmatpush.msra.mxu0 0.0
    %2537 = vmatpush.msra.mxu0 0.0
    %2538 = vmatpush.msra.mxu0 0.0
    %2539 = vmatpush.msra.mxu0 0.0
    %2540 = vmatpush.msra.mxu0 0.0
    %2541 = vmatpush.msra.mxu0 0.0
    %2542 = vmatpush.msra.mxu0 0.0
    %2543 = vmatpush.msra.mxu0 0.0
    %2544 = vmatpush.msra.mxu0 %v2394
    %2545 = vmatpush.msra.mxu0 %v2386
    %2546 = vmatmul.f32.gmra.mxu0 %v2418
    %v2547 = vpop.f32.mrf.mxu0
    %v2548 = vadd.f32 %v2404, %v2547
    %2549 = vmatmul.f32.gmra.mxu0 %v2421
    %v2550 = vpop.f32.mrf.mxu0
    %v2551 = vadd.f32 %v2409, %v2550
    %2552 = vmatmul.f32.gmra.mxu0 %v2424
    %v2553 = vpop.f32.mrf.mxu0
    %v2554 = vadd.f32 %v2414, %v2553
    %2555 = vdwg.mxu0
    %2556 = vmatpush.msra.mxu0 0.0
    %2557 = vmatpush.msra.mxu0 0.0
    %2558 = vmatpush.msra.mxu0 0.0
    %2559 = vmatpush.msra.mxu0 0.0
    %2560 = vmatpush.msra.mxu0 0.0
    %2561 = vmatpush.msra.mxu0 0.0
    %2562 = vmatpush.msra.mxu0 0.0
    %2563 = vmatpush.msra.mxu0 0.0
    %2564 = vmatpush.msra.mxu0 0.0
    %2565 = vmatpush.msra.mxu0 0.0
    %2566 = vmatpush.msra.mxu0 0.0
    %2567 = vmatpush.msra.mxu0 0.0
    %2568 = vmatpush.msra.mxu0 0.0
    %2569 = vmatpush.msra.mxu0 0.0
    %2570 = vmatpush.msra.mxu0 %v2395
    %2571 = vmatpush.msra.mxu0 %v2387
    %2572 = vmatmul.f32.gmra.mxu0 %v2418
    %v2573 = vpop.f32.mrf.mxu0
    %v2574 = vadd.f32 %v2404, %v2573
    %2575 = vmatmul.f32.gmra.mxu0 %v2421
    %v2576 = vpop.f32.mrf.mxu0
    %v2577 = vadd.f32 %v2409, %v2576
    %2578 = vmatmul.f32.gmra.mxu0 %v2424
    %v2579 = vpop.f32.mrf.mxu0
    %v2580 = vadd.f32 %v2414, %v2579
    %2581 = vdwg.mxu0
    %2582 = vmatpush.msra.mxu0 0.0
    %2583 = vmatpush.msra.mxu0 0.0
    %2584 = vmatpush.msra.mxu0 0.0
    %2585 = vmatpush.msra.mxu0 0.0
    %2586 = vmatpush.msra.mxu0 0.0
    %2587 = vmatpush.msra.mxu0 0.0
    %2588 = vmatpush.msra.mxu0 0.0
    %2589 = vmatpush.msra.mxu0 0.0
    %2590 = vmatpush.msra.mxu0 0.0
    %2591 = vmatpush.msra.mxu0 0.0
    %2592 = vmatpush.msra.mxu0 0.0
    %2593 = vmatpush.msra.mxu0 0.0
    %2594 = vmatpush.msra.mxu0 0.0
    %2595 = vmatpush.msra.mxu0 0.0
    %2596 = vmatpush.msra.mxu0 %v2396
    %2597 = vmatpush.msra.mxu0 %v2388
    %2598 = vmatmul.f32.gmra.mxu0 %v2418
    %v2599 = vpop.f32.mrf.mxu0
    %v2600 = vadd.f32 %v2404, %v2599
    %2601 = vmatmul.f32.gmra.mxu0 %v2421
    %v2602 = vpop.f32.mrf.mxu0
    %v2603 = vadd.f32 %v2409, %v2602
    %2604 = vmatmul.f32.gmra.mxu0 %v2424
    %v2605 = vpop.f32.mrf.mxu0
    %v2606 = vadd.f32 %v2414, %v2605
    %2607 = vdwg.mxu0
    %2608 = vmatpush.msra.mxu0 0.0
    %2609 = vmatpush.msra.mxu0 0.0
    %2610 = vmatpush.msra.mxu0 0.0
    %2611 = vmatpush.msra.mxu0 0.0
    %2612 = vmatpush.msra.mxu0 0.0
    %2613 = vmatpush.msra.mxu0 0.0
    %2614 = vmatpush.msra.mxu0 0.0
    %2615 = vmatpush.msra.mxu0 0.0
    %2616 = vmatpush.msra.mxu0 0.0
    %2617 = vmatpush.msra.mxu0 0.0
    %2618 = vmatpush.msra.mxu0 0.0
    %2619 = vmatpush.msra.mxu0 0.0
    %2620 = vmatpush.msra.mxu0 0.0
    %2621 = vmatpush.msra.mxu0 0.0
    %2622 = vmatpush.msra.mxu0 %v2397
    %2623 = vmatpush.msra.mxu0 %v2389
    %2624 = vmatmul.f32.gmra.mxu0 %v2418
    %v2625 = vpop.f32.mrf.mxu0
    %v2626 = vadd.f32 %v2404, %v2625
    %2627 = vmatmul.f32.gmra.mxu0 %v2421
    %v2628 = vpop.f32.mrf.mxu0
    %v2629 = vadd.f32 %v2409, %v2628
    %2630 = vmatmul.f32.gmra.mxu0 %v2424
    %v2631 = vpop.f32.mrf.mxu0
    %v2632 = vadd.f32 %v2414, %v2631
    %2633 = vdwg.mxu0
    %2634 = vst [vmem:[#allocation3] sm:$0xff] %v2444
    %2635 = vst [vmem:[#allocation3 + $0x8] sm:$0xff] %v2470
    %2636 = vst [vmem:[#allocation3 + $0x10] sm:$0xff] %v2496
    %2637 = vst [vmem:[#allocation3 + $0x18] sm:$0xff] %v2522
    %2638 = vst [vmem:[#allocation3 + $0x20] sm:$0xff] %v2548
    %2639 = vst [vmem:[#allocation3 + $0x28] sm:$0xff] %v2574
    %2640 = vst [vmem:[#allocation3 + $0x30] sm:$0xff] %v2600
    %2641 = vst [vmem:[#allocation3 + $0x38] sm:$0xff] %v2626
    %2642 = vst [vmem:[#allocation3 + $0x40] sm:$0xff] %v2447
    %2643 = vst [vmem:[#allocation3 + $0x48] sm:$0xff] %v2473
    %2644 = vst [vmem:[#allocation3 + $0x50] sm:$0xff] %v2499
    %2645 = vst [vmem:[#allocation3 + $0x58] sm:$0xff] %v2525
    %2646 = vst [vmem:[#allocation3 + $0x60] sm:$0xff] %v2551
    %2647 = vst [vmem:[#allocation3 + $0x68] sm:$0xff] %v2577
    %2648 = vst [vmem:[#allocation3 + $0x70] sm:$0xff] %v2603
    %2649 = vst [vmem:[#allocation3 + $0x78] sm:$0xff] %v2629
    %2650 = vst [vmem:[#allocation3 + $0x80] sm:$0xf] %v2450
    %2651 = vst [vmem:[#allocation3 + $0x88] sm:$0xf] %v2476
    %2652 = vst [vmem:[#allocation3 + $0x90] sm:$0xf] %v2502
    %2653 = vst [vmem:[#allocation3 + $0x98] sm:$0xf] %v2528
    %2654 = vst [vmem:[#allocation3 + $0xa0] sm:$0xf] %v2554
    %2655 = vst [vmem:[#allocation3 + $0xa8] sm:$0xf] %v2580
    %2656 = vst [vmem:[#allocation3 + $0xb0] sm:$0xf] %v2606
    %2657 = vst [vmem:[#allocation3 + $0xb8] sm:$0xf] %v2632
    %v2658 = vld [vmem:[#allocation13 + $0x70] sm:$0xff]
    %v2659 = vld [vmem:[#allocation13 + $0x78] sm:$0xff]
    %v2660 = vld [vmem:[#allocation13 + $0x80] sm:$0xf]
    %v2661 = vld [vmem:[#allocation2] sm:$0xff]
    %v2662 = vld [vmem:[#allocation2 + $0x8] sm:$0xff]
    %v2663 = vld [vmem:[#allocation2 + $0x10] sm:$0xff]
    %v2664 = vld [vmem:[#allocation2 + $0x18] sm:$0xff]
    %v2665 = vld [vmem:[#allocation2 + $0x20] sm:$0xff]
    %v2666 = vld [vmem:[#allocation2 + $0x28] sm:$0xff]
    %v2667 = vld [vmem:[#allocation2 + $0x30] sm:$0xff]
    %v2668 = vld [vmem:[#allocation2 + $0x38] sm:$0xff]
    %v2669 = vld [vmem:[#allocation2 + $0x40] sm:$0xff]
    %v2670 = vld [vmem:[#allocation2 + $0x48] sm:$0xff]
    %v2671 = vld [vmem:[#allocation2 + $0x50] sm:$0xff]
    %v2672 = vld [vmem:[#allocation2 + $0x58] sm:$0xff]
    %v2673 = vld [vmem:[#allocation2 + $0x60] sm:$0xff]
    %v2674 = vld [vmem:[#allocation2 + $0x68] sm:$0xff]
    %v2675 = vld [vmem:[#allocation2 + $0x70] sm:$0xff]
    %v2676 = vld [vmem:[#allocation2 + $0x78] sm:$0xff]
    %v2678 = vsel %vm2416, %v2658, 0
    %v2681 = vsel %vm2416, %v2659, 0
    %v2684 = vsel %vm2416, %v2660, 0
    %2686 = vmatpush.msra.mxu0 0.0
    %2687 = vmatpush.msra.mxu0 0.0
    %2688 = vmatpush.msra.mxu0 0.0
    %2689 = vmatpush.msra.mxu0 0.0
    %2690 = vmatpush.msra.mxu0 0.0
    %2691 = vmatpush.msra.mxu0 0.0
    %2692 = vmatpush.msra.mxu0 0.0
    %2693 = vmatpush.msra.mxu0 0.0
    %2694 = vmatpush.msra.mxu0 0.0
    %2695 = vmatpush.msra.mxu0 0.0
    %2696 = vmatpush.msra.mxu0 0.0
    %2697 = vmatpush.msra.mxu0 0.0
    %2698 = vmatpush.msra.mxu0 0.0
    %2699 = vmatpush.msra.mxu0 0.0
    %2700 = vmatpush.msra.mxu0 %v2669
    %2701 = vmatpush.msra.mxu0 %v2661
    %2702 = vmatmul.f32.gmra.mxu0 %v2678
    %v2703 = vpop.f32.mrf.mxu0
    %v2704 = vadd.f32 0.0, %v2703
    %2705 = vmatmul.f32.gmra.mxu0 %v2681
    %v2706 = vpop.f32.mrf.mxu0
    %v2707 = vadd.f32 0.0, %v2706
    %2708 = vmatmul.f32.gmra.mxu0 %v2684
    %v2709 = vpop.f32.mrf.mxu0
    %v2710 = vadd.f32 0.0, %v2709
    %2711 = vdwg.mxu0
    %2712 = vmatpush.msra.mxu0 0.0
    %2713 = vmatpush.msra.mxu0 0.0
    %2714 = vmatpush.msra.mxu0 0.0
    %2715 = vmatpush.msra.mxu0 0.0
    %2716 = vmatpush.msra.mxu0 0.0
    %2717 = vmatpush.msra.mxu0 0.0
    %2718 = vmatpush.msra.mxu0 0.0
    %2719 = vmatpush.msra.mxu0 0.0
    %2720 = vmatpush.msra.mxu0 0.0
    %2721 = vmatpush.msra.mxu0 0.0
    %2722 = vmatpush.msra.mxu0 0.0
    %2723 = vmatpush.msra.mxu0 0.0
    %2724 = vmatpush.msra.mxu0 0.0
    %2725 = vmatpush.msra.mxu0 0.0
    %2726 = vmatpush.msra.mxu0 %v2670
    %2727 = vmatpush.msra.mxu0 %v2662
    %2728 = vmatmul.f32.gmra.mxu0 %v2678
    %v2729 = vpop.f32.mrf.mxu0
    %v2730 = vadd.f32 0.0, %v2729
    %2731 = vmatmul.f32.gmra.mxu0 %v2681
    %v2732 = vpop.f32.mrf.mxu0
    %v2733 = vadd.f32 0.0, %v2732
    %2734 = vmatmul.f32.gmra.mxu0 %v2684
    %v2735 = vpop.f32.mrf.mxu0
    %v2736 = vadd.f32 0.0, %v2735
    %2737 = vdwg.mxu0
    %2738 = vmatpush.msra.mxu0 0.0
    %2739 = vmatpush.msra.mxu0 0.0
    %2740 = vmatpush.msra.mxu0 0.0
    %2741 = vmatpush.msra.mxu0 0.0
    %2742 = vmatpush.msra.mxu0 0.0
    %2743 = vmatpush.msra.mxu0 0.0
    %2744 = vmatpush.msra.mxu0 0.0
    %2745 = vmatpush.msra.mxu0 0.0
    %2746 = vmatpush.msra.mxu0 0.0
    %2747 = vmatpush.msra.mxu0 0.0
    %2748 = vmatpush.msra.mxu0 0.0
    %2749 = vmatpush.msra.mxu0 0.0
    %2750 = vmatpush.msra.mxu0 0.0
    %2751 = vmatpush.msra.mxu0 0.0
    %2752 = vmatpush.msra.mxu0 %v2671
    %2753 = vmatpush.msra.mxu0 %v2663
    %2754 = vmatmul.f32.gmra.mxu0 %v2678
    %v2755 = vpop.f32.mrf.mxu0
    %v2756 = vadd.f32 0.0, %v2755
    %2757 = vmatmul.f32.gmra.mxu0 %v2681
    %v2758 = vpop.f32.mrf.mxu0
    %v2759 = vadd.f32 0.0, %v2758
    %2760 = vmatmul.f32.gmra.mxu0 %v2684
    %v2761 = vpop.f32.mrf.mxu0
    %v2762 = vadd.f32 0.0, %v2761
    %2763 = vdwg.mxu0
    %2764 = vmatpush.msra.mxu0 0.0
    %2765 = vmatpush.msra.mxu0 0.0
    %2766 = vmatpush.msra.mxu0 0.0
    %2767 = vmatpush.msra.mxu0 0.0
    %2768 = vmatpush.msra.mxu0 0.0
    %2769 = vmatpush.msra.mxu0 0.0
    %2770 = vmatpush.msra.mxu0 0.0
    %2771 = vmatpush.msra.mxu0 0.0
    %2772 = vmatpush.msra.mxu0 0.0
    %2773 = vmatpush.msra.mxu0 0.0
    %2774 = vmatpush.msra.mxu0 0.0
    %2775 = vmatpush.msra.mxu0 0.0
    %2776 = vmatpush.msra.mxu0 0.0
    %2777 = vmatpush.msra.mxu0 0.0
    %2778 = vmatpush.msra.mxu0 %v2672
    %2779 = vmatpush.msra.mxu0 %v2664
    %2780 = vmatmul.f32.gmra.mxu0 %v2678
    %v2781 = vpop.f32.mrf.mxu0
    %v2782 = vadd.f32 0.0, %v2781
    %2783 = vmatmul.f32.gmra.mxu0 %v2681
    %v2784 = vpop.f32.mrf.mxu0
    %v2785 = vadd.f32 0.0, %v2784
    %2786 = vmatmul.f32.gmra.mxu0 %v2684
    %v2787 = vpop.f32.mrf.mxu0
    %v2788 = vadd.f32 0.0, %v2787
    %2789 = vdwg.mxu0
    %2790 = vmatpush.msra.mxu0 0.0
    %2791 = vmatpush.msra.mxu0 0.0
    %2792 = vmatpush.msra.mxu0 0.0
    %2793 = vmatpush.msra.mxu0 0.0
    %2794 = vmatpush.msra.mxu0 0.0
    %2795 = vmatpush.msra.mxu0 0.0
    %2796 = vmatpush.msra.mxu0 0.0
    %2797 = vmatpush.msra.mxu0 0.0
    %2798 = vmatpush.msra.mxu0 0.0
    %2799 = vmatpush.msra.mxu0 0.0
    %2800 = vmatpush.msra.mxu0 0.0
    %2801 = vmatpush.msra.mxu0 0.0
    %2802 = vmatpush.msra.mxu0 0.0
    %2803 = vmatpush.msra.mxu0 0.0
    %2804 = vmatpush.msra.mxu0 %v2673
    %2805 = vmatpush.msra.mxu0 %v2665
    %2806 = vmatmul.f32.gmra.mxu0 %v2678
    %v2807 = vpop.f32.mrf.mxu0
    %v2808 = vadd.f32 0.0, %v2807
    %2809 = vmatmul.f32.gmra.mxu0 %v2681
    %v2810 = vpop.f32.mrf.mxu0
    %v2811 = vadd.f32 0.0, %v2810
    %2812 = vmatmul.f32.gmra.mxu0 %v2684
    %v2813 = vpop.f32.mrf.mxu0
    %v2814 = vadd.f32 0.0, %v2813
    %2815 = vdwg.mxu0
    %2816 = vmatpush.msra.mxu0 0.0
    %2817 = vmatpush.msra.mxu0 0.0
    %2818 = vmatpush.msra.mxu0 0.0
    %2819 = vmatpush.msra.mxu0 0.0
    %2820 = vmatpush.msra.mxu0 0.0
    %2821 = vmatpush.msra.mxu0 0.0
    %2822 = vmatpush.msra.mxu0 0.0
    %2823 = vmatpush.msra.mxu0 0.0
    %2824 = vmatpush.msra.mxu0 0.0
    %2825 = vmatpush.msra.mxu0 0.0
    %2826 = vmatpush.msra.mxu0 0.0
    %2827 = vmatpush.msra.mxu0 0.0
    %2828 = vmatpush.msra.mxu0 0.0
    %2829 = vmatpush.msra.mxu0 0.0
    %2830 = vmatpush.msra.mxu0 %v2674
    %2831 = vmatpush.msra.mxu0 %v2666
    %2832 = vmatmul.f32.gmra.mxu0 %v2678
    %v2833 = vpop.f32.mrf.mxu0
    %v2834 = vadd.f32 0.0, %v2833
    %2835 = vmatmul.f32.gmra.mxu0 %v2681
    %v2836 = vpop.f32.mrf.mxu0
    %v2837 = vadd.f32 0.0, %v2836
    %2838 = vmatmul.f32.gmra.mxu0 %v2684
    %v2839 = vpop.f32.mrf.mxu0
    %v2840 = vadd.f32 0.0, %v2839
    %2841 = vdwg.mxu0
    %2842 = vmatpush.msra.mxu0 0.0
    %2843 = vmatpush.msra.mxu0 0.0
    %2844 = vmatpush.msra.mxu0 0.0
    %2845 = vmatpush.msra.mxu0 0.0
    %2846 = vmatpush.msra.mxu0 0.0
    %2847 = vmatpush.msra.mxu0 0.0
    %2848 = vmatpush.msra.mxu0 0.0
    %2849 = vmatpush.msra.mxu0 0.0
    %2850 = vmatpush.msra.mxu0 0.0
    %2851 = vmatpush.msra.mxu0 0.0
    %2852 = vmatpush.msra.mxu0 0.0
    %2853 = vmatpush.msra.mxu0 0.0
    %2854 = vmatpush.msra.mxu0 0.0
    %2855 = vmatpush.msra.mxu0 0.0
    %2856 = vmatpush.msra.mxu0 %v2675
    %2857 = vmatpush.msra.mxu0 %v2667
    %2858 = vmatmul.f32.gmra.mxu0 %v2678
    %v2859 = vpop.f32.mrf.mxu0
    %v2860 = vadd.f32 0.0, %v2859
    %2861 = vmatmul.f32.gmra.mxu0 %v2681
    %v2862 = vpop.f32.mrf.mxu0
    %v2863 = vadd.f32 0.0, %v2862
    %2864 = vmatmul.f32.gmra.mxu0 %v2684
    %v2865 = vpop.f32.mrf.mxu0
    %v2866 = vadd.f32 0.0, %v2865
    %2867 = vdwg.mxu0
    %2868 = vmatpush.msra.mxu0 0.0
    %2869 = vmatpush.msra.mxu0 0.0
    %2870 = vmatpush.msra.mxu0 0.0
    %2871 = vmatpush.msra.mxu0 0.0
    %2872 = vmatpush.msra.mxu0 0.0
    %2873 = vmatpush.msra.mxu0 0.0
    %2874 = vmatpush.msra.mxu0 0.0
    %2875 = vmatpush.msra.mxu0 0.0
    %2876 = vmatpush.msra.mxu0 0.0
    %2877 = vmatpush.msra.mxu0 0.0
    %2878 = vmatpush.msra.mxu0 0.0
    %2879 = vmatpush.msra.mxu0 0.0
    %2880 = vmatpush.msra.mxu0 0.0
    %2881 = vmatpush.msra.mxu0 0.0
    %2882 = vmatpush.msra.mxu0 %v2676
    %2883 = vmatpush.msra.mxu0 %v2668
    %2884 = vmatmul.f32.gmra.mxu0 %v2678
    %v2885 = vpop.f32.mrf.mxu0
    %v2886 = vadd.f32 0.0, %v2885
    %2887 = vmatmul.f32.gmra.mxu0 %v2681
    %v2888 = vpop.f32.mrf.mxu0
    %v2889 = vadd.f32 0.0, %v2888
    %2890 = vmatmul.f32.gmra.mxu0 %v2684
    %v2891 = vpop.f32.mrf.mxu0
    %v2892 = vadd.f32 0.0, %v2891
    %2893 = vdwg.mxu0
    %2894 = vst [vmem:[#allocation4] sm:$0xff] %v2704
    %2895 = vst [vmem:[#allocation4 + $0x8] sm:$0xff] %v2730
    %2896 = vst [vmem:[#allocation4 + $0x10] sm:$0xff] %v2756
    %2897 = vst [vmem:[#allocation4 + $0x18] sm:$0xff] %v2782
    %2898 = vst [vmem:[#allocation4 + $0x20] sm:$0xff] %v2808
    %2899 = vst [vmem:[#allocation4 + $0x28] sm:$0xff] %v2834
    %2900 = vst [vmem:[#allocation4 + $0x30] sm:$0xff] %v2860
    %2901 = vst [vmem:[#allocation4 + $0x38] sm:$0xff] %v2886
    %2902 = vst [vmem:[#allocation4 + $0x40] sm:$0xff] %v2707
    %2903 = vst [vmem:[#allocation4 + $0x48] sm:$0xff] %v2733
    %2904 = vst [vmem:[#allocation4 + $0x50] sm:$0xff] %v2759
    %2905 = vst [vmem:[#allocation4 + $0x58] sm:$0xff] %v2785
    %2906 = vst [vmem:[#allocation4 + $0x60] sm:$0xff] %v2811
    %2907 = vst [vmem:[#allocation4 + $0x68] sm:$0xff] %v2837
    %2908 = vst [vmem:[#allocation4 + $0x70] sm:$0xff] %v2863
    %2909 = vst [vmem:[#allocation4 + $0x78] sm:$0xff] %v2889
    %2910 = vst [vmem:[#allocation4 + $0x80] sm:$0xf] %v2710
    %2911 = vst [vmem:[#allocation4 + $0x88] sm:$0xf] %v2736
    %2912 = vst [vmem:[#allocation4 + $0x90] sm:$0xf] %v2762
    %2913 = vst [vmem:[#allocation4 + $0x98] sm:$0xf] %v2788
    %2914 = vst [vmem:[#allocation4 + $0xa0] sm:$0xf] %v2814
    %2915 = vst [vmem:[#allocation4 + $0xa8] sm:$0xf] %v2840
    %2916 = vst [vmem:[#allocation4 + $0xb0] sm:$0xf] %v2866
    %2917 = vst [vmem:[#allocation4 + $0xb8] sm:$0xf] %v2892
    %v2918 = vld [vmem:[#allocation13 + $0xa0] sm:$0xff]
    %v2919 = vld [vmem:[#allocation13 + $0xa8] sm:$0xff]
    %v2920 = vld [vmem:[#allocation13 + $0xb0] sm:$0xf]
    %v2921 = vld [vmem:[#allocation13 + $0xd0] sm:$0x1]
    %v2922 = vld [vmem:[#allocation13 + $0xb8] sm:$0xff]
    %v2923 = vld [vmem:[#allocation13 + $0xc0] sm:$0xff]
    %v2924 = vld [vmem:[#allocation13 + $0xc8] sm:$0xf]
    %2926 = vset.pattern.permute.xlu0 0
    %2927 = vperm.xlu0 %2926, %v2922
    %v2928 = vpop.permute.xlu0 %2927
    %2931 = vset.pattern.permute.xlu0 0
    %2932 = vperm.xlu0 %2931, %v2923
    %v2933 = vpop.permute.xlu0 %2932
    %2936 = vset.pattern.permute.xlu0 0
    %2937 = vperm.xlu0 %2936, %v2924
    %v2938 = vpop.permute.xlu0 %2937
    %v2940 = vld [vmem:[#allocation3] sm:$0xff]
    %v2941 = vld [vmem:[#allocation3 + $0x40] sm:$0xff]
    %v2942 = vld [vmem:[#allocation3 + $0x80] sm:$0xf]
    %v2943 = vld [vmem:[#allocation4 + $0x8] sm:$0xff]
    %v2944 = vld [vmem:[#allocation4 + $0x48] sm:$0xff]
    %v2945 = vld [vmem:[#allocation4 + $0x88] sm:$0xf]
    %v2946 = vadd.f32 %v2940, %v2943
    %v2947 = vadd.f32 %v2941, %v2944
    %v2948 = vadd.f32 %v2942, %v2945
    %v2949 = vmax.f32 %v2946, 0.0
    %v2950 = vmax.f32 %v2947, 0.0
    %v2951 = vmax.f32 %v2948, 0.0
    %v2952 = vld [vmem:[#allocation11] sm:$0xff]
    %v2953 = vld [vmem:[#allocation11 + $0x1c0] sm:$0xff]
    %v2954 = vld [vmem:[#allocation11 + $0x380] sm:$0xf]
    %v2955 = vmul.f32 %v2949, %v2952
    %v2956 = vmul.f32 %v2950, %v2953
    %v2957 = vmul.f32 %v2951, %v2954
    %2958 = vst [vmem:[#allocation5] sm:$0xff] %v2955
    %2959 = vst [vmem:[#allocation5 + $0x38] sm:$0xff] %v2956
    %2960 = vst [vmem:[#allocation5 + $0x70] sm:$0xf] %v2957
    %v2961 = vld [vmem:[#allocation4 + $0x10] sm:$0xff]
    %v2962 = vld [vmem:[#allocation4 + $0x50] sm:$0xff]
    %v2963 = vld [vmem:[#allocation4 + $0x90] sm:$0xf]
    %v2964 = vadd.f32 %v2940, %v2961
    %v2965 = vadd.f32 %v2941, %v2962
    %v2966 = vadd.f32 %v2942, %v2963
    %v2967 = vmax.f32 %v2964, 0.0
    %v2968 = vmax.f32 %v2965, 0.0
    %v2969 = vmax.f32 %v2966, 0.0
    %v2970 = vld [vmem:[#allocation11 + $0x8] sm:$0xff]
    %v2971 = vld [vmem:[#allocation11 + $0x1c8] sm:$0xff]
    %v2972 = vld [vmem:[#allocation11 + $0x388] sm:$0xf]
    %v2973 = vmul.f32 %v2967, %v2970
    %v2974 = vmul.f32 %v2968, %v2971
    %v2975 = vmul.f32 %v2969, %v2972
    %2976 = vst [vmem:[#allocation5 + $0x8] sm:$0xff] %v2973
    %2977 = vst [vmem:[#allocation5 + $0x40] sm:$0xff] %v2974
    %2978 = vst [vmem:[#allocation5 + $0x78] sm:$0xf] %v2975
    %v2979 = vld [vmem:[#allocation4 + $0x18] sm:$0xff]
    %v2980 = vld [vmem:[#allocation4 + $0x58] sm:$0xff]
    %v2981 = vld [vmem:[#allocation4 + $0x98] sm:$0xf]
    %v2982 = vadd.f32 %v2940, %v2979
    %v2983 = vadd.f32 %v2941, %v2980
    %v2984 = vadd.f32 %v2942, %v2981
    %v2985 = vmax.f32 %v2982, 0.0
    %v2986 = vmax.f32 %v2983, 0.0
    %v2987 = vmax.f32 %v2984, 0.0
    %v2988 = vld [vmem:[#allocation11 + $0x10] sm:$0xff]
    %v2989 = vld [vmem:[#allocation11 + $0x1d0] sm:$0xff]
    %v2990 = vld [vmem:[#allocation11 + $0x390] sm:$0xf]
    %v2991 = vmul.f32 %v2985, %v2988
    %v2992 = vmul.f32 %v2986, %v2989
    %v2993 = vmul.f32 %v2987, %v2990
    %2994 = vst [vmem:[#allocation5 + $0x10] sm:$0xff] %v2991
    %2995 = vst [vmem:[#allocation5 + $0x48] sm:$0xff] %v2992
    %2996 = vst [vmem:[#allocation5 + $0x80] sm:$0xf] %v2993
    %v2997 = vld [vmem:[#allocation4 + $0x20] sm:$0xff]
    %v2998 = vld [vmem:[#allocation4 + $0x60] sm:$0xff]
    %v2999 = vld [vmem:[#allocation4 + $0xa0] sm:$0xf]
    %v3000 = vadd.f32 %v2940, %v2997
    %v3001 = vadd.f32 %v2941, %v2998
    %v3002 = vadd.f32 %v2942, %v2999
    %v3003 = vmax.f32 %v3000, 0.0
    %v3004 = vmax.f32 %v3001, 0.0
    %v3005 = vmax.f32 %v3002, 0.0
    %v3006 = vld [vmem:[#allocation11 + $0x18] sm:$0xff]
    %v3007 = vld [vmem:[#allocation11 + $0x1d8] sm:$0xff]
    %v3008 = vld [vmem:[#allocation11 + $0x398] sm:$0xf]
    %v3009 = vmul.f32 %v3003, %v3006
    %v3010 = vmul.f32 %v3004, %v3007
    %v3011 = vmul.f32 %v3005, %v3008
    %3012 = vst [vmem:[#allocation5 + $0x18] sm:$0xff] %v3009
    %3013 = vst [vmem:[#allocation5 + $0x50] sm:$0xff] %v3010
    %3014 = vst [vmem:[#allocation5 + $0x88] sm:$0xf] %v3011
    %v3015 = vld [vmem:[#allocation4 + $0x28] sm:$0xff]
    %v3016 = vld [vmem:[#allocation4 + $0x68] sm:$0xff]
    %v3017 = vld [vmem:[#allocation4 + $0xa8] sm:$0xf]
    %v3018 = vadd.f32 %v2940, %v3015
    %v3019 = vadd.f32 %v2941, %v3016
    %v3020 = vadd.f32 %v2942, %v3017
    %v3021 = vmax.f32 %v3018, 0.0
    %v3022 = vmax.f32 %v3019, 0.0
    %v3023 = vmax.f32 %v3020, 0.0
    %v3024 = vld [vmem:[#allocation11 + $0x20] sm:$0xff]
    %v3025 = vld [vmem:[#allocation11 + $0x1e0] sm:$0xff]
    %v3026 = vld [vmem:[#allocation11 + $0x3a0] sm:$0xf]
    %v3027 = vmul.f32 %v3021, %v3024
    %v3028 = vmul.f32 %v3022, %v3025
    %v3029 = vmul.f32 %v3023, %v3026
    %3030 = vst [vmem:[#allocation5 + $0x20] sm:$0xff] %v3027
    %3031 = vst [vmem:[#allocation5 + $0x58] sm:$0xff] %v3028
    %3032 = vst [vmem:[#allocation5 + $0x90] sm:$0xf] %v3029
    %v3033 = vld [vmem:[#allocation4 + $0x30] sm:$0xff]
    %v3034 = vld [vmem:[#allocation4 + $0x70] sm:$0xff]
    %v3035 = vld [vmem:[#allocation4 + $0xb0] sm:$0xf]
    %v3036 = vadd.f32 %v2940, %v3033
    %v3037 = vadd.f32 %v2941, %v3034
    %v3038 = vadd.f32 %v2942, %v3035
    %v3039 = vmax.f32 %v3036, 0.0
    %v3040 = vmax.f32 %v3037, 0.0
    %v3041 = vmax.f32 %v3038, 0.0
    %v3042 = vld [vmem:[#allocation11 + $0x28] sm:$0xff]
    %v3043 = vld [vmem:[#allocation11 + $0x1e8] sm:$0xff]
    %v3044 = vld [vmem:[#allocation11 + $0x3a8] sm:$0xf]
    %v3045 = vmul.f32 %v3039, %v3042
    %v3046 = vmul.f32 %v3040, %v3043
    %v3047 = vmul.f32 %v3041, %v3044
    %3048 = vst [vmem:[#allocation5 + $0x28] sm:$0xff] %v3045
    %3049 = vst [vmem:[#allocation5 + $0x60] sm:$0xff] %v3046
    %3050 = vst [vmem:[#allocation5 + $0x98] sm:$0xf] %v3047
    %v3051 = vld [vmem:[#allocation4 + $0x38] sm:$0xff]
    %v3052 = vld [vmem:[#allocation4 + $0x78] sm:$0xff]
    %v3053 = vld [vmem:[#allocation4 + $0xb8] sm:$0xf]
    %v3054 = vadd.f32 %v2940, %v3051
    %v3055 = vadd.f32 %v2941, %v3052
    %v3056 = vadd.f32 %v2942, %v3053
    %v3057 = vmax.f32 %v3054, 0.0
    %v3058 = vmax.f32 %v3055, 0.0
    %v3059 = vmax.f32 %v3056, 0.0
    %v3060 = vld [vmem:[#allocation11 + $0x30] sm:$0xff]
    %v3061 = vld [vmem:[#allocation11 + $0x1f0] sm:$0xff]
    %v3062 = vld [vmem:[#allocation11 + $0x3b0] sm:$0xf]
    %v3063 = vmul.f32 %v3057, %v3060
    %v3064 = vmul.f32 %v3058, %v3061
    %v3065 = vmul.f32 %v3059, %v3062
    %3066 = vst [vmem:[#allocation5 + $0x30] sm:$0xff] %v3063
    %3067 = vst [vmem:[#allocation5 + $0x68] sm:$0xff] %v3064
    %3068 = vst [vmem:[#allocation5 + $0xa0] sm:$0xf] %v3065
    %v3069 = vld [vmem:[#allocation5] sm:$0xff]
    %v3070 = vld [vmem:[#allocation5 + $0x8] sm:$0xff]
    %v3071 = vld [vmem:[#allocation5 + $0x10] sm:$0xff]
    %v3072 = vld [vmem:[#allocation5 + $0x18] sm:$0xff]
    %v3073 = vld [vmem:[#allocation5 + $0x20] sm:$0xff]
    %v3074 = vld [vmem:[#allocation5 + $0x28] sm:$0xff]
    %v3075 = vld [vmem:[#allocation5 + $0x30] sm:$0xff]
    %v3076 = vld [vmem:[#allocation5 + $0x38] sm:$0xff]
    %v3077 = vld [vmem:[#allocation5 + $0x40] sm:$0xff]
    %v3078 = vld [vmem:[#allocation5 + $0x48] sm:$0xff]
    %v3079 = vld [vmem:[#allocation5 + $0x50] sm:$0xff]
    %v3080 = vld [vmem:[#allocation5 + $0x58] sm:$0xff]
    %v3081 = vld [vmem:[#allocation5 + $0x60] sm:$0xff]
    %v3082 = vld [vmem:[#allocation5 + $0x68] sm:$0xff]
    %v3083 = vld [vmem:[#allocation5 + $0x70] sm:$0xf]
    %v3084 = vld [vmem:[#allocation5 + $0x78] sm:$0xf]
    %v3085 = vld [vmem:[#allocation5 + $0x80] sm:$0xf]
    %v3086 = vld [vmem:[#allocation5 + $0x88] sm:$0xf]
    %v3087 = vld [vmem:[#allocation5 + $0x90] sm:$0xf]
    %v3088 = vld [vmem:[#allocation5 + $0x98] sm:$0xf]
    %v3089 = vld [vmem:[#allocation5 + $0xa0] sm:$0xf]
    %vm3090 = vcmask 162816
    %v3092 = vsel %vm3090, %v2918, 0
    %v3095 = vsel %vm3090, %v2919, 0
    %v3098 = vsel %vm3090, %v2920, 0
    %v3101 = vsel %vm520, %v3083, 0
    %v3104 = vsel %vm520, %v3084, 0
    %v3107 = vsel %vm520, %v3085, 0
    %v3110 = vsel %vm520, %v3086, 0
    %v3113 = vsel %vm520, %v3087, 0
    %v3116 = vsel %vm520, %v3088, 0
    %v3119 = vsel %vm520, %v3089, 0
    %3121 = vmatpush.msra.mxu0 0.0
    %3122 = vmatpush.msra.mxu0 0.0
    %3123 = vmatpush.msra.mxu0 0.0
    %3124 = vmatpush.msra.mxu0 0.0
    %3125 = vmatpush.msra.mxu0 0.0
    %3126 = vmatpush.msra.mxu0 0.0
    %3127 = vmatpush.msra.mxu0 0.0
    %3128 = vmatpush.msra.mxu0 0.0
    %3129 = vmatpush.msra.mxu0 0.0
    %3130 = vmatpush.msra.mxu0 0.0
    %3131 = vmatpush.msra.mxu0 0.0
    %3132 = vmatpush.msra.mxu0 0.0
    %3133 = vmatpush.msra.mxu0 0.0
    %3134 = vmatpush.msra.mxu0 %v3101
    %3135 = vmatpush.msra.mxu0 %v3076
    %3136 = vmatpush.msra.mxu0 %v3069
    %3137 = vmatmul.f32.gmra.mxu0 %v3092
    %v3138 = vpop.f32.mrf.mxu0
    %v3139 = vadd.f32 %v2928, %v3138
    %3140 = vmatmul.f32.gmra.mxu0 %v3095
    %v3141 = vpop.f32.mrf.mxu0
    %v3142 = vadd.f32 %v2933, %v3141
    %3143 = vmatmul.f32.gmra.mxu0 %v3098
    %v3144 = vpop.f32.mrf.mxu0
    %v3145 = vadd.f32 %v2938, %v3144
    %3146 = vdwg.mxu0
    %3147 = vmatpush.msra.mxu0 0.0
    %3148 = vmatpush.msra.mxu0 0.0
    %3149 = vmatpush.msra.mxu0 0.0
    %3150 = vmatpush.msra.mxu0 0.0
    %3151 = vmatpush.msra.mxu0 0.0
    %3152 = vmatpush.msra.mxu0 0.0
    %3153 = vmatpush.msra.mxu0 0.0
    %3154 = vmatpush.msra.mxu0 0.0
    %3155 = vmatpush.msra.mxu0 0.0
    %3156 = vmatpush.msra.mxu0 0.0
    %3157 = vmatpush.msra.mxu0 0.0
    %3158 = vmatpush.msra.mxu0 0.0
    %3159 = vmatpush.msra.mxu0 0.0
    %3160 = vmatpush.msra.mxu0 %v3104
    %3161 = vmatpush.msra.mxu0 %v3077
    %3162 = vmatpush.msra.mxu0 %v3070
    %3163 = vmatmul.f32.gmra.mxu0 %v3092
    %v3164 = vpop.f32.mrf.mxu0
    %v3165 = vadd.f32 %v2928, %v3164
    %3166 = vmatmul.f32.gmra.mxu0 %v3095
    %v3167 = vpop.f32.mrf.mxu0
    %v3168 = vadd.f32 %v2933, %v3167
    %3169 = vmatmul.f32.gmra.mxu0 %v3098
    %v3170 = vpop.f32.mrf.mxu0
    %v3171 = vadd.f32 %v2938, %v3170
    %3172 = vdwg.mxu0
    %3173 = vmatpush.msra.mxu0 0.0
    %3174 = vmatpush.msra.mxu0 0.0
    %3175 = vmatpush.msra.mxu0 0.0
    %3176 = vmatpush.msra.mxu0 0.0
    %3177 = vmatpush.msra.mxu0 0.0
    %3178 = vmatpush.msra.mxu0 0.0
    %3179 = vmatpush.msra.mxu0 0.0
    %3180 = vmatpush.msra.mxu0 0.0
    %3181 = vmatpush.msra.mxu0 0.0
    %3182 = vmatpush.msra.mxu0 0.0
    %3183 = vmatpush.msra.mxu0 0.0
    %3184 = vmatpush.msra.mxu0 0.0
    %3185 = vmatpush.msra.mxu0 0.0
    %3186 = vmatpush.msra.mxu0 %v3107
    %3187 = vmatpush.msra.mxu0 %v3078
    %3188 = vmatpush.msra.mxu0 %v3071
    %3189 = vmatmul.f32.gmra.mxu0 %v3092
    %v3190 = vpop.f32.mrf.mxu0
    %v3191 = vadd.f32 %v2928, %v3190
    %3192 = vmatmul.f32.gmra.mxu0 %v3095
    %v3193 = vpop.f32.mrf.mxu0
    %v3194 = vadd.f32 %v2933, %v3193
    %3195 = vmatmul.f32.gmra.mxu0 %v3098
    %v3196 = vpop.f32.mrf.mxu0
    %v3197 = vadd.f32 %v2938, %v3196
    %3198 = vdwg.mxu0
    %3199 = vmatpush.msra.mxu0 0.0
    %3200 = vmatpush.msra.mxu0 0.0
    %3201 = vmatpush.msra.mxu0 0.0
    %3202 = vmatpush.msra.mxu0 0.0
    %3203 = vmatpush.msra.mxu0 0.0
    %3204 = vmatpush.msra.mxu0 0.0
    %3205 = vmatpush.msra.mxu0 0.0
    %3206 = vmatpush.msra.mxu0 0.0
    %3207 = vmatpush.msra.mxu0 0.0
    %3208 = vmatpush.msra.mxu0 0.0
    %3209 = vmatpush.msra.mxu0 0.0
    %3210 = vmatpush.msra.mxu0 0.0
    %3211 = vmatpush.msra.mxu0 0.0
    %3212 = vmatpush.msra.mxu0 %v3110
    %3213 = vmatpush.msra.mxu0 %v3079
    %3214 = vmatpush.msra.mxu0 %v3072
    %3215 = vmatmul.f32.gmra.mxu0 %v3092
    %v3216 = vpop.f32.mrf.mxu0
    %v3217 = vadd.f32 %v2928, %v3216
    %3218 = vmatmul.f32.gmra.mxu0 %v3095
    %v3219 = vpop.f32.mrf.mxu0
    %v3220 = vadd.f32 %v2933, %v3219
    %3221 = vmatmul.f32.gmra.mxu0 %v3098
    %v3222 = vpop.f32.mrf.mxu0
    %v3223 = vadd.f32 %v2938, %v3222
    %3224 = vdwg.mxu0
    %3225 = vmatpush.msra.mxu0 0.0
    %3226 = vmatpush.msra.mxu0 0.0
    %3227 = vmatpush.msra.mxu0 0.0
    %3228 = vmatpush.msra.mxu0 0.0
    %3229 = vmatpush.msra.mxu0 0.0
    %3230 = vmatpush.msra.mxu0 0.0
    %3231 = vmatpush.msra.mxu0 0.0
    %3232 = vmatpush.msra.mxu0 0.0
    %3233 = vmatpush.msra.mxu0 0.0
    %3234 = vmatpush.msra.mxu0 0.0
    %3235 = vmatpush.msra.mxu0 0.0
    %3236 = vmatpush.msra.mxu0 0.0
    %3237 = vmatpush.msra.mxu0 0.0
    %3238 = vmatpush.msra.mxu0 %v3113
    %3239 = vmatpush.msra.mxu0 %v3080
    %3240 = vmatpush.msra.mxu0 %v3073
    %3241 = vmatmul.f32.gmra.mxu0 %v3092
    %v3242 = vpop.f32.mrf.mxu0
    %v3243 = vadd.f32 %v2928, %v3242
    %3244 = vmatmul.f32.gmra.mxu0 %v3095
    %v3245 = vpop.f32.mrf.mxu0
    %v3246 = vadd.f32 %v2933, %v3245
    %3247 = vmatmul.f32.gmra.mxu0 %v3098
    %v3248 = vpop.f32.mrf.mxu0
    %v3249 = vadd.f32 %v2938, %v3248
    %3250 = vdwg.mxu0
    %3251 = vmatpush.msra.mxu0 0.0
    %3252 = vmatpush.msra.mxu0 0.0
    %3253 = vmatpush.msra.mxu0 0.0
    %3254 = vmatpush.msra.mxu0 0.0
    %3255 = vmatpush.msra.mxu0 0.0
    %3256 = vmatpush.msra.mxu0 0.0
    %3257 = vmatpush.msra.mxu0 0.0
    %3258 = vmatpush.msra.mxu0 0.0
    %3259 = vmatpush.msra.mxu0 0.0
    %3260 = vmatpush.msra.mxu0 0.0
    %3261 = vmatpush.msra.mxu0 0.0
    %3262 = vmatpush.msra.mxu0 0.0
    %3263 = vmatpush.msra.mxu0 0.0
    %3264 = vmatpush.msra.mxu0 %v3116
    %3265 = vmatpush.msra.mxu0 %v3081
    %3266 = vmatpush.msra.mxu0 %v3074
    %3267 = vmatmul.f32.gmra.mxu0 %v3092
    %v3268 = vpop.f32.mrf.mxu0
    %v3269 = vadd.f32 %v2928, %v3268
    %3270 = vmatmul.f32.gmra.mxu0 %v3095
    %v3271 = vpop.f32.mrf.mxu0
    %v3272 = vadd.f32 %v2933, %v3271
    %3273 = vmatmul.f32.gmra.mxu0 %v3098
    %v3274 = vpop.f32.mrf.mxu0
    %v3275 = vadd.f32 %v2938, %v3274
    %3276 = vdwg.mxu0
    %3277 = vmatpush.msra.mxu0 0.0
    %3278 = vmatpush.msra.mxu0 0.0
    %3279 = vmatpush.msra.mxu0 0.0
    %3280 = vmatpush.msra.mxu0 0.0
    %3281 = vmatpush.msra.mxu0 0.0
    %3282 = vmatpush.msra.mxu0 0.0
    %3283 = vmatpush.msra.mxu0 0.0
    %3284 = vmatpush.msra.mxu0 0.0
    %3285 = vmatpush.msra.mxu0 0.0
    %3286 = vmatpush.msra.mxu0 0.0
    %3287 = vmatpush.msra.mxu0 0.0
    %3288 = vmatpush.msra.mxu0 0.0
    %3289 = vmatpush.msra.mxu0 0.0
    %3290 = vmatpush.msra.mxu0 %v3119
    %3291 = vmatpush.msra.mxu0 %v3082
    %3292 = vmatpush.msra.mxu0 %v3075
    %3293 = vmatmul.f32.gmra.mxu0 %v3092
    %v3294 = vpop.f32.mrf.mxu0
    %v3295 = vadd.f32 %v2928, %v3294
    %3296 = vmatmul.f32.gmra.mxu0 %v3095
    %v3297 = vpop.f32.mrf.mxu0
    %v3298 = vadd.f32 %v2933, %v3297
    %3299 = vmatmul.f32.gmra.mxu0 %v3098
    %v3300 = vpop.f32.mrf.mxu0
    %v3301 = vadd.f32 %v2938, %v3300
    %3302 = vdwg.mxu0
    %v3303 = vmax.f32 %v3139, 0.0
    %v3304 = vmax.f32 %v3165, 0.0
    %v3305 = vmax.f32 %v3191, 0.0
    %v3306 = vmax.f32 %v3217, 0.0
    %v3307 = vmax.f32 %v3243, 0.0
    %v3308 = vmax.f32 %v3269, 0.0
    %v3309 = vmax.f32 %v3295, 0.0
    %v3310 = vmax.f32 %v3142, 0.0
    %v3311 = vmax.f32 %v3168, 0.0
    %v3312 = vmax.f32 %v3194, 0.0
    %v3313 = vmax.f32 %v3220, 0.0
    %v3314 = vmax.f32 %v3246, 0.0
    %v3315 = vmax.f32 %v3272, 0.0
    %v3316 = vmax.f32 %v3298, 0.0
    %v3317 = vmax.f32 %v3145, 0.0
    %v3318 = vmax.f32 %v3171, 0.0
    %v3319 = vmax.f32 %v3197, 0.0
    %v3320 = vmax.f32 %v3223, 0.0
    %v3321 = vmax.f32 %v3249, 0.0
    %v3322 = vmax.f32 %v3275, 0.0
    %v3323 = vmax.f32 %v3301, 0.0
    %v3324 = vadd.f32 %v3303, %v3304
    %v3325 = vadd.f32 %v3310, %v3311
    %v3326 = vadd.f32 %v3317, %v3318
    %v3327 = vadd.f32 %v3324, %v3305
    %v3328 = vadd.f32 %v3325, %v3312
    %v3329 = vadd.f32 %v3326, %v3319
    %v3330 = vadd.f32 %v3327, %v3306
    %v3331 = vadd.f32 %v3328, %v3313
    %v3332 = vadd.f32 %v3329, %v3320
    %v3333 = vadd.f32 %v3330, %v3307
    %v3334 = vadd.f32 %v3331, %v3314
    %v3335 = vadd.f32 %v3332, %v3321
    %v3336 = vadd.f32 %v3333, %v3308
    %v3337 = vadd.f32 %v3334, %v3315
    %v3338 = vadd.f32 %v3335, %v3322
    %v3339 = vadd.f32 %v3336, %v3309
    %v3340 = vadd.f32 %v3337, %v3316
    %v3341 = vadd.f32 %v3338, %v3323
    %v3343 = vsel %vm3090, %v2921, 0
    %v3346 = vsel %vm520, %v3341, 0
    %3348 = vmatpush.msra.mxu0 0.0
    %3349 = vmatpush.msra.mxu0 0.0
    %3350 = vmatpush.msra.mxu0 0.0
    %3351 = vmatpush.msra.mxu0 0.0
    %3352 = vmatpush.msra.mxu0 0.0
    %3353 = vmatpush.msra.mxu0 0.0
    %3354 = vmatpush.msra.mxu0 0.0
    %3355 = vmatpush.msra.mxu0 0.0
    %3356 = vmatpush.msra.mxu0 0.0
    %3357 = vmatpush.msra.mxu0 0.0
    %3358 = vmatpush.msra.mxu0 0.0
    %3359 = vmatpush.msra.mxu0 0.0
    %3360 = vmatpush.msra.mxu0 0.0
    %3361 = vmatpush.msra.mxu0 %v3346
    %3362 = vmatpush.msra.mxu0 %v3340
    %3363 = vmatpush.msra.mxu0 %v3339
    %3364 = vmatmul.f32.gmra.mxu0 %v3343
    %v3365 = vpop.f32.mrf.mxu0
    %v3366 = vadd.f32 0.0, %v3365
    %3367 = vdwg.mxu0
    %v3368 = vld [vmem:[#allocation3 + $0x8] sm:$0xff]
    %v3369 = vld [vmem:[#allocation3 + $0x48] sm:$0xff]
    %v3370 = vld [vmem:[#allocation3 + $0x88] sm:$0xf]
    %v3371 = vld [vmem:[#allocation4] sm:$0xff]
    %v3372 = vld [vmem:[#allocation4 + $0x40] sm:$0xff]
    %v3373 = vld [vmem:[#allocation4 + $0x80] sm:$0xf]
    %v3374 = vadd.f32 %v3368, %v3371
    %v3375 = vadd.f32 %v3369, %v3372
    %v3376 = vadd.f32 %v3370, %v3373
    %v3377 = vmax.f32 %v3374, 0.0
    %v3378 = vmax.f32 %v3375, 0.0
    %v3379 = vmax.f32 %v3376, 0.0
    %v3380 = vld [vmem:[#allocation11 + $0x38] sm:$0xff]
    %v3381 = vld [vmem:[#allocation11 + $0x1f8] sm:$0xff]
    %v3382 = vld [vmem:[#allocation11 + $0x3b8] sm:$0xf]
    %v3383 = vmul.f32 %v3377, %v3380
    %v3384 = vmul.f32 %v3378, %v3381
    %v3385 = vmul.f32 %v3379, %v3382
    %3386 = vst [vmem:[#allocation5] sm:$0xff] %v3383
    %3387 = vst [vmem:[#allocation5 + $0x38] sm:$0xff] %v3384
    %3388 = vst [vmem:[#allocation5 + $0x70] sm:$0xf] %v3385
    %v3389 = vld [vmem:[#allocation4 + $0x10] sm:$0xff]
    %v3390 = vld [vmem:[#allocation4 + $0x50] sm:$0xff]
    %v3391 = vld [vmem:[#allocation4 + $0x90] sm:$0xf]
    %v3392 = vadd.f32 %v3368, %v3389
    %v3393 = vadd.f32 %v3369, %v3390
    %v3394 = vadd.f32 %v3370, %v3391
    %v3395 = vmax.f32 %v3392, 0.0
    %v3396 = vmax.f32 %v3393, 0.0
    %v3397 = vmax.f32 %v3394, 0.0
    %v3398 = vld [vmem:[#allocation11 + $0x40] sm:$0xff]
    %v3399 = vld [vmem:[#allocation11 + $0x200] sm:$0xff]
    %v3400 = vld [vmem:[#allocation11 + $0x3c0] sm:$0xf]
    %v3401 = vmul.f32 %v3395, %v3398
    %v3402 = vmul.f32 %v3396, %v3399
    %v3403 = vmul.f32 %v3397, %v3400
    %3404 = vst [vmem:[#allocation5 + $0x8] sm:$0xff] %v3401
    %3405 = vst [vmem:[#allocation5 + $0x40] sm:$0xff] %v3402
    %3406 = vst [vmem:[#allocation5 + $0x78] sm:$0xf] %v3403
    %v3407 = vld [vmem:[#allocation4 + $0x18] sm:$0xff]
    %v3408 = vld [vmem:[#allocation4 + $0x58] sm:$0xff]
    %v3409 = vld [vmem:[#allocation4 + $0x98] sm:$0xf]
    %v3410 = vadd.f32 %v3368, %v3407
    %v3411 = vadd.f32 %v3369, %v3408
    %v3412 = vadd.f32 %v3370, %v3409
    %v3413 = vmax.f32 %v3410, 0.0
    %v3414 = vmax.f32 %v3411, 0.0
    %v3415 = vmax.f32 %v3412, 0.0
    %v3416 = vld [vmem:[#allocation11 + $0x48] sm:$0xff]
    %v3417 = vld [vmem:[#allocation11 + $0x208] sm:$0xff]
    %v3418 = vld [vmem:[#allocation11 + $0x3c8] sm:$0xf]
    %v3419 = vmul.f32 %v3413, %v3416
    %v3420 = vmul.f32 %v3414, %v3417
    %v3421 = vmul.f32 %v3415, %v3418
    %3422 = vst [vmem:[#allocation5 + $0x10] sm:$0xff] %v3419
    %3423 = vst [vmem:[#allocation5 + $0x48] sm:$0xff] %v3420
    %3424 = vst [vmem:[#allocation5 + $0x80] sm:$0xf] %v3421
    %v3425 = vld [vmem:[#allocation4 + $0x20] sm:$0xff]
    %v3426 = vld [vmem:[#allocation4 + $0x60] sm:$0xff]
    %v3427 = vld [vmem:[#allocation4 + $0xa0] sm:$0xf]
    %v3428 = vadd.f32 %v3368, %v3425
    %v3429 = vadd.f32 %v3369, %v3426
    %v3430 = vadd.f32 %v3370, %v3427
    %v3431 = vmax.f32 %v3428, 0.0
    %v3432 = vmax.f32 %v3429, 0.0
    %v3433 = vmax.f32 %v3430, 0.0
    %v3434 = vld [vmem:[#allocation11 + $0x50] sm:$0xff]
    %v3435 = vld [vmem:[#allocation11 + $0x210] sm:$0xff]
    %v3436 = vld [vmem:[#allocation11 + $0x3d0] sm:$0xf]
    %v3437 = vmul.f32 %v3431, %v3434
    %v3438 = vmul.f32 %v3432, %v3435
    %v3439 = vmul.f32 %v3433, %v3436
    %3440 = vst [vmem:[#allocation5 + $0x18] sm:$0xff] %v3437
    %3441 = vst [vmem:[#allocation5 + $0x50] sm:$0xff] %v3438
    %3442 = vst [vmem:[#allocation5 + $0x88] sm:$0xf] %v3439
    %v3443 = vld [vmem:[#allocation4 + $0x28] sm:$0xff]
    %v3444 = vld [vmem:[#allocation4 + $0x68] sm:$0xff]
    %v3445 = vld [vmem:[#allocation4 + $0xa8] sm:$0xf]
    %v3446 = vadd.f32 %v3368, %v3443
    %v3447 = vadd.f32 %v3369, %v3444
    %v3448 = vadd.f32 %v3370, %v3445
    %v3449 = vmax.f32 %v3446, 0.0
    %v3450 = vmax.f32 %v3447, 0.0
    %v3451 = vmax.f32 %v3448, 0.0
    %v3452 = vld [vmem:[#allocation11 + $0x58] sm:$0xff]
    %v3453 = vld [vmem:[#allocation11 + $0x218] sm:$0xff]
    %v3454 = vld [vmem:[#allocation11 + $0x3d8] sm:$0xf]
    %v3455 = vmul.f32 %v3449, %v3452
    %v3456 = vmul.f32 %v3450, %v3453
    %v3457 = vmul.f32 %v3451, %v3454
    %3458 = vst [vmem:[#allocation5 + $0x20] sm:$0xff] %v3455
    %3459 = vst [vmem:[#allocation5 + $0x58] sm:$0xff] %v3456
    %3460 = vst [vmem:[#allocation5 + $0x90] sm:$0xf] %v3457
    %v3461 = vld [vmem:[#allocation4 + $0x30] sm:$0xff]
    %v3462 = vld [vmem:[#allocation4 + $0x70] sm:$0xff]
    %v3463 = vld [vmem:[#allocation4 + $0xb0] sm:$0xf]
    %v3464 = vadd.f32 %v3368, %v3461
    %v3465 = vadd.f32 %v3369, %v3462
    %v3466 = vadd.f32 %v3370, %v3463
    %v3467 = vmax.f32 %v3464, 0.0
    %v3468 = vmax.f32 %v3465, 0.0
    %v3469 = vmax.f32 %v3466, 0.0
    %v3470 = vld [vmem:[#allocation11 + $0x60] sm:$0xff]
    %v3471 = vld [vmem:[#allocation11 + $0x220] sm:$0xff]
    %v3472 = vld [vmem:[#allocation11 + $0x3e0] sm:$0xf]
    %v3473 = vmul.f32 %v3467, %v3470
    %v3474 = vmul.f32 %v3468, %v3471
    %v3475 = vmul.f32 %v3469, %v3472
    %3476 = vst [vmem:[#allocation5 + $0x28] sm:$0xff] %v3473
    %3477 = vst [vmem:[#allocation5 + $0x60] sm:$0xff] %v3474
    %3478 = vst [vmem:[#allocation5 + $0x98] sm:$0xf] %v3475
    %v3479 = vld [vmem:[#allocation4 + $0x38] sm:$0xff]
    %v3480 = vld [vmem:[#allocation4 + $0x78] sm:$0xff]
    %v3481 = vld [vmem:[#allocation4 + $0xb8] sm:$0xf]
    %v3482 = vadd.f32 %v3368, %v3479
    %v3483 = vadd.f32 %v3369, %v3480
    %v3484 = vadd.f32 %v3370, %v3481
    %v3485 = vmax.f32 %v3482, 0.0
    %v3486 = vmax.f32 %v3483, 0.0
    %v3487 = vmax.f32 %v3484, 0.0
    %v3488 = vld [vmem:[#allocation11 + $0x68] sm:$0xff]
    %v3489 = vld [vmem:[#allocation11 + $0x228] sm:$0xff]
    %v3490 = vld [vmem:[#allocation11 + $0x3e8] sm:$0xf]
    %v3491 = vmul.f32 %v3485, %v3488
    %v3492 = vmul.f32 %v3486, %v3489
    %v3493 = vmul.f32 %v3487, %v3490
    %3494 = vst [vmem:[#allocation5 + $0x30] sm:$0xff] %v3491
    %3495 = vst [vmem:[#allocation5 + $0x68] sm:$0xff] %v3492
    %3496 = vst [vmem:[#allocation5 + $0xa0] sm:$0xf] %v3493
    %v3497 = vld [vmem:[#allocation5] sm:$0xff]
    %v3498 = vld [vmem:[#allocation5 + $0x8] sm:$0xff]
    %v3499 = vld [vmem:[#allocation5 + $0x10] sm:$0xff]
    %v3500 = vld [vmem:[#allocation5 + $0x18] sm:$0xff]
    %v3501 = vld [vmem:[#allocation5 + $0x20] sm:$0xff]
    %v3502 = vld [vmem:[#allocation5 + $0x28] sm:$0xff]
    %v3503 = vld [vmem:[#allocation5 + $0x30] sm:$0xff]
    %v3504 = vld [vmem:[#allocation5 + $0x38] sm:$0xff]
    %v3505 = vld [vmem:[#allocation5 + $0x40] sm:$0xff]
    %v3506 = vld [vmem:[#allocation5 + $0x48] sm:$0xff]
    %v3507 = vld [vmem:[#allocation5 + $0x50] sm:$0xff]
    %v3508 = vld [vmem:[#allocation5 + $0x58] sm:$0xff]
    %v3509 = vld [vmem:[#allocation5 + $0x60] sm:$0xff]
    %v3510 = vld [vmem:[#allocation5 + $0x68] sm:$0xff]
    %v3511 = vld [vmem:[#allocation5 + $0x70] sm:$0xf]
    %v3512 = vld [vmem:[#allocation5 + $0x78] sm:$0xf]
    %v3513 = vld [vmem:[#allocation5 + $0x80] sm:$0xf]
    %v3514 = vld [vmem:[#allocation5 + $0x88] sm:$0xf]
    %v3515 = vld [vmem:[#allocation5 + $0x90] sm:$0xf]
    %v3516 = vld [vmem:[#allocation5 + $0x98] sm:$0xf]
    %v3517 = vld [vmem:[#allocation5 + $0xa0] sm:$0xf]
    %v3519 = vsel %vm520, %v3511, 0
    %v3522 = vsel %vm520, %v3512, 0
    %v3525 = vsel %vm520, %v3513, 0
    %v3528 = vsel %vm520, %v3514, 0
    %v3531 = vsel %vm520, %v3515, 0
    %v3534 = vsel %vm520, %v3516, 0
    %v3537 = vsel %vm520, %v3517, 0
    %3539 = vmatpush.msra.mxu0 0.0
    %3540 = vmatpush.msra.mxu0 0.0
    %3541 = vmatpush.msra.mxu0 0.0
    %3542 = vmatpush.msra.mxu0 0.0
    %3543 = vmatpush.msra.mxu0 0.0
    %3544 = vmatpush.msra.mxu0 0.0
    %3545 = vmatpush.msra.mxu0 0.0
    %3546 = vmatpush.msra.mxu0 0.0
    %3547 = vmatpush.msra.mxu0 0.0
    %3548 = vmatpush.msra.mxu0 0.0
    %3549 = vmatpush.msra.mxu0 0.0
    %3550 = vmatpush.msra.mxu0 0.0
    %3551 = vmatpush.msra.mxu0 0.0
    %3552 = vmatpush.msra.mxu0 %v3519
    %3553 = vmatpush.msra.mxu0 %v3504
    %3554 = vmatpush.msra.mxu0 %v3497
    %3555 = vmatmul.f32.gmra.mxu0 %v3092
    %v3556 = vpop.f32.mrf.mxu0
    %v3557 = vadd.f32 %v2928, %v3556
    %3558 = vmatmul.f32.gmra.mxu0 %v3095
    %v3559 = vpop.f32.mrf.mxu0
    %v3560 = vadd.f32 %v2933, %v3559
    %3561 = vmatmul.f32.gmra.mxu0 %v3098
    %v3562 = vpop.f32.mrf.mxu0
    %v3563 = vadd.f32 %v2938, %v3562
    %3564 = vdwg.mxu0
    %3565 = vmatpush.msra.mxu0 0.0
    %3566 = vmatpush.msra.mxu0 0.0
    %3567 = vmatpush.msra.mxu0 0.0
    %3568 = vmatpush.msra.mxu0 0.0
    %3569 = vmatpush.msra.mxu0 0.0
    %3570 = vmatpush.msra.mxu0 0.0
    %3571 = vmatpush.msra.mxu0 0.0
    %3572 = vmatpush.msra.mxu0 0.0
    %3573 = vmatpush.msra.mxu0 0.0
    %3574 = vmatpush.msra.mxu0 0.0
    %3575 = vmatpush.msra.mxu0 0.0
    %3576 = vmatpush.msra.mxu0 0.0
    %3577 = vmatpush.msra.mxu0 0.0
    %3578 = vmatpush.msra.mxu0 %v3522
    %3579 = vmatpush.msra.mxu0 %v3505
    %3580 = vmatpush.msra.mxu0 %v3498
    %3581 = vmatmul.f32.gmra.mxu0 %v3092
    %v3582 = vpop.f32.mrf.mxu0
    %v3583 = vadd.f32 %v2928, %v3582
    %3584 = vmatmul.f32.gmra.mxu0 %v3095
    %v3585 = vpop.f32.mrf.mxu0
    %v3586 = vadd.f32 %v2933, %v3585
    %3587 = vmatmul.f32.gmra.mxu0 %v3098
    %v3588 = vpop.f32.mrf.mxu0
    %v3589 = vadd.f32 %v2938, %v3588
    %3590 = vdwg.mxu0
    %3591 = vmatpush.msra.mxu0 0.0
    %3592 = vmatpush.msra.mxu0 0.0
    %3593 = vmatpush.msra.mxu0 0.0
    %3594 = vmatpush.msra.mxu0 0.0
    %3595 = vmatpush.msra.mxu0 0.0
    %3596 = vmatpush.msra.mxu0 0.0
    %3597 = vmatpush.msra.mxu0 0.0
    %3598 = vmatpush.msra.mxu0 0.0
    %3599 = vmatpush.msra.mxu0 0.0
    %3600 = vmatpush.msra.mxu0 0.0
    %3601 = vmatpush.msra.mxu0 0.0
    %3602 = vmatpush.msra.mxu0 0.0
    %3603 = vmatpush.msra.mxu0 0.0
    %3604 = vmatpush.msra.mxu0 %v3525
    %3605 = vmatpush.msra.mxu0 %v3506
    %3606 = vmatpush.msra.mxu0 %v3499
    %3607 = vmatmul.f32.gmra.mxu0 %v3092
    %v3608 = vpop.f32.mrf.mxu0
    %v3609 = vadd.f32 %v2928, %v3608
    %3610 = vmatmul.f32.gmra.mxu0 %v3095
    %v3611 = vpop.f32.mrf.mxu0
    %v3612 = vadd.f32 %v2933, %v3611
    %3613 = vmatmul.f32.gmra.mxu0 %v3098
    %v3614 = vpop.f32.mrf.mxu0
    %v3615 = vadd.f32 %v2938, %v3614
    %3616 = vdwg.mxu0
    %3617 = vmatpush.msra.mxu0 0.0
    %3618 = vmatpush.msra.mxu0 0.0
    %3619 = vmatpush.msra.mxu0 0.0
    %3620 = vmatpush.msra.mxu0 0.0
    %3621 = vmatpush.msra.mxu0 0.0
    %3622 = vmatpush.msra.mxu0 0.0
    %3623 = vmatpush.msra.mxu0 0.0
    %3624 = vmatpush.msra.mxu0 0.0
    %3625 = vmatpush.msra.mxu0 0.0
    %3626 = vmatpush.msra.mxu0 0.0
    %3627 = vmatpush.msra.mxu0 0.0
    %3628 = vmatpush.msra.mxu0 0.0
    %3629 = vmatpush.msra.mxu0 0.0
    %3630 = vmatpush.msra.mxu0 %v3528
    %3631 = vmatpush.msra.mxu0 %v3507
    %3632 = vmatpush.msra.mxu0 %v3500
    %3633 = vmatmul.f32.gmra.mxu0 %v3092
    %v3634 = vpop.f32.mrf.mxu0
    %v3635 = vadd.f32 %v2928, %v3634
    %3636 = vmatmul.f32.gmra.mxu0 %v3095
    %v3637 = vpop.f32.mrf.mxu0
    %v3638 = vadd.f32 %v2933, %v3637
    %3639 = vmatmul.f32.gmra.mxu0 %v3098
    %v3640 = vpop.f32.mrf.mxu0
    %v3641 = vadd.f32 %v2938, %v3640
    %3642 = vdwg.mxu0
    %3643 = vmatpush.msra.mxu0 0.0
    %3644 = vmatpush.msra.mxu0 0.0
    %3645 = vmatpush.msra.mxu0 0.0
    %3646 = vmatpush.msra.mxu0 0.0
    %3647 = vmatpush.msra.mxu0 0.0
    %3648 = vmatpush.msra.mxu0 0.0
    %3649 = vmatpush.msra.mxu0 0.0
    %3650 = vmatpush.msra.mxu0 0.0
    %3651 = vmatpush.msra.mxu0 0.0
    %3652 = vmatpush.msra.mxu0 0.0
    %3653 = vmatpush.msra.mxu0 0.0
    %3654 = vmatpush.msra.mxu0 0.0
    %3655 = vmatpush.msra.mxu0 0.0
    %3656 = vmatpush.msra.mxu0 %v3531
    %3657 = vmatpush.msra.mxu0 %v3508
    %3658 = vmatpush.msra.mxu0 %v3501
    %3659 = vmatmul.f32.gmra.mxu0 %v3092
    %v3660 = vpop.f32.mrf.mxu0
    %v3661 = vadd.f32 %v2928, %v3660
    %3662 = vmatmul.f32.gmra.mxu0 %v3095
    %v3663 = vpop.f32.mrf.mxu0
    %v3664 = vadd.f32 %v2933, %v3663
    %3665 = vmatmul.f32.gmra.mxu0 %v3098
    %v3666 = vpop.f32.mrf.mxu0
    %v3667 = vadd.f32 %v2938, %v3666
    %3668 = vdwg.mxu0
    %3669 = vmatpush.msra.mxu0 0.0
    %3670 = vmatpush.msra.mxu0 0.0
    %3671 = vmatpush.msra.mxu0 0.0
    %3672 = vmatpush.msra.mxu0 0.0
    %3673 = vmatpush.msra.mxu0 0.0
    %3674 = vmatpush.msra.mxu0 0.0
    %3675 = vmatpush.msra.mxu0 0.0
    %3676 = vmatpush.msra.mxu0 0.0
    %3677 = vmatpush.msra.mxu0 0.0
    %3678 = vmatpush.msra.mxu0 0.0
    %3679 = vmatpush.msra.mxu0 0.0
    %3680 = vmatpush.msra.mxu0 0.0
    %3681 = vmatpush.msra.mxu0 0.0
    %3682 = vmatpush.msra.mxu0 %v3534
    %3683 = vmatpush.msra.mxu0 %v3509
    %3684 = vmatpush.msra.mxu0 %v3502
    %3685 = vmatmul.f32.gmra.mxu0 %v3092
    %v3686 = vpop.f32.mrf.mxu0
    %v3687 = vadd.f32 %v2928, %v3686
    %3688 = vmatmul.f32.gmra.mxu0 %v3095
    %v3689 = vpop.f32.mrf.mxu0
    %v3690 = vadd.f32 %v2933, %v3689
    %3691 = vmatmul.f32.gmra.mxu0 %v3098
    %v3692 = vpop.f32.mrf.mxu0
    %v3693 = vadd.f32 %v2938, %v3692
    %3694 = vdwg.mxu0
    %3695 = vmatpush.msra.mxu0 0.0
    %3696 = vmatpush.msra.mxu0 0.0
    %3697 = vmatpush.msra.mxu0 0.0
    %3698 = vmatpush.msra.mxu0 0.0
    %3699 = vmatpush.msra.mxu0 0.0
    %3700 = vmatpush.msra.mxu0 0.0
    %3701 = vmatpush.msra.mxu0 0.0
    %3702 = vmatpush.msra.mxu0 0.0
    %3703 = vmatpush.msra.mxu0 0.0
    %3704 = vmatpush.msra.mxu0 0.0
    %3705 = vmatpush.msra.mxu0 0.0
    %3706 = vmatpush.msra.mxu0 0.0
    %3707 = vmatpush.msra.mxu0 0.0
    %3708 = vmatpush.msra.mxu0 %v3537
    %3709 = vmatpush.msra.mxu0 %v3510
    %3710 = vmatpush.msra.mxu0 %v3503
    %3711 = vmatmul.f32.gmra.mxu0 %v3092
    %v3712 = vpop.f32.mrf.mxu0
    %v3713 = vadd.f32 %v2928, %v3712
    %3714 = vmatmul.f32.gmra.mxu0 %v3095
    %v3715 = vpop.f32.mrf.mxu0
    %v3716 = vadd.f32 %v2933, %v3715
    %3717 = vmatmul.f32.gmra.mxu0 %v3098
    %v3718 = vpop.f32.mrf.mxu0
    %v3719 = vadd.f32 %v2938, %v3718
    %3720 = vdwg.mxu0
    %v3721 = vmax.f32 %v3557, 0.0
    %v3722 = vmax.f32 %v3583, 0.0
    %v3723 = vmax.f32 %v3609, 0.0
    %v3724 = vmax.f32 %v3635, 0.0
    %v3725 = vmax.f32 %v3661, 0.0
    %v3726 = vmax.f32 %v3687, 0.0
    %v3727 = vmax.f32 %v3713, 0.0
    %v3728 = vmax.f32 %v3560, 0.0
    %v3729 = vmax.f32 %v3586, 0.0
    %v3730 = vmax.f32 %v3612, 0.0
    %v3731 = vmax.f32 %v3638, 0.0
    %v3732 = vmax.f32 %v3664, 0.0
    %v3733 = vmax.f32 %v3690, 0.0
    %v3734 = vmax.f32 %v3716, 0.0
    %v3735 = vmax.f32 %v3563, 0.0
    %v3736 = vmax.f32 %v3589, 0.0
    %v3737 = vmax.f32 %v3615, 0.0
    %v3738 = vmax.f32 %v3641, 0.0
    %v3739 = vmax.f32 %v3667, 0.0
    %v3740 = vmax.f32 %v3693, 0.0
    %v3741 = vmax.f32 %v3719, 0.0
    %v3742 = vadd.f32 %v3721, %v3722
    %v3743 = vadd.f32 %v3728, %v3729
    %v3744 = vadd.f32 %v3735, %v3736
    %v3745 = vadd.f32 %v3742, %v3723
    %v3746 = vadd.f32 %v3743, %v3730
    %v3747 = vadd.f32 %v3744, %v3737
    %v3748 = vadd.f32 %v3745, %v3724
    %v3749 = vadd.f32 %v3746, %v3731
    %v3750 = vadd.f32 %v3747, %v3738
    %v3751 = vadd.f32 %v3748, %v3725
    %v3752 = vadd.f32 %v3749, %v3732
    %v3753 = vadd.f32 %v3750, %v3739
    %v3754 = vadd.f32 %v3751, %v3726
    %v3755 = vadd.f32 %v3752, %v3733
    %v3756 = vadd.f32 %v3753, %v3740
    %v3757 = vadd.f32 %v3754, %v3727
    %v3758 = vadd.f32 %v3755, %v3734
    %v3759 = vadd.f32 %v3756, %v3741
    %v3761 = vsel %vm520, %v3759, 0
    %3763 = vmatpush.msra.mxu0 0.0
    %3764 = vmatpush.msra.mxu0 0.0
    %3765 = vmatpush.msra.mxu0 0.0
    %3766 = vmatpush.msra.mxu0 0.0
    %3767 = vmatpush.msra.mxu0 0.0
    %3768 = vmatpush.msra.mxu0 0.0
    %3769 = vmatpush.msra.mxu0 0.0
    %3770 = vmatpush.msra.mxu0 0.0
    %3771 = vmatpush.msra.mxu0 0.0
    %3772 = vmatpush.msra.mxu0 0.0
    %3773 = vmatpush.msra.mxu0 0.0
    %3774 = vmatpush.msra.mxu0 0.0
    %3775 = vmatpush.msra.mxu0 0.0
    %3776 = vmatpush.msra.mxu0 %v3761
    %3777 = vmatpush.msra.mxu0 %v3758
    %3778 = vmatpush.msra.mxu0 %v3757
    %3779 = vmatmul.f32.gmra.mxu0 %v3343
    %v3780 = vpop.f32.mrf.mxu0
    %v3781 = vadd.f32 0.0, %v3780
    %3782 = vdwg.mxu0
    %v3783 = vld [vmem:[#allocation3 + $0x10] sm:$0xff]
    %v3784 = vld [vmem:[#allocation3 + $0x50] sm:$0xff]
    %v3785 = vld [vmem:[#allocation3 + $0x90] sm:$0xf]
    %v3786 = vld [vmem:[#allocation4] sm:$0xff]
    %v3787 = vld [vmem:[#allocation4 + $0x40] sm:$0xff]
    %v3788 = vld [vmem:[#allocation4 + $0x80] sm:$0xf]
    %v3789 = vadd.f32 %v3783, %v3786
    %v3790 = vadd.f32 %v3784, %v3787
    %v3791 = vadd.f32 %v3785, %v3788
    %v3792 = vmax.f32 %v3789, 0.0
    %v3793 = vmax.f32 %v3790, 0.0
    %v3794 = vmax.f32 %v3791, 0.0
    %v3795 = vld [vmem:[#allocation11 + $0x70] sm:$0xff]
    %v3796 = vld [vmem:[#allocation11 + $0x230] sm:$0xff]
    %v3797 = vld [vmem:[#allocation11 + $0x3f0] sm:$0xf]
    %v3798 = vmul.f32 %v3792, %v3795
    %v3799 = vmul.f32 %v3793, %v3796
    %v3800 = vmul.f32 %v3794, %v3797
    %3801 = vst [vmem:[#allocation5] sm:$0xff] %v3798
    %3802 = vst [vmem:[#allocation5 + $0x38] sm:$0xff] %v3799
    %3803 = vst [vmem:[#allocation5 + $0x70] sm:$0xf] %v3800
    %v3804 = vld [vmem:[#allocation4 + $0x8] sm:$0xff]
    %v3805 = vld [vmem:[#allocation4 + $0x48] sm:$0xff]
    %v3806 = vld [vmem:[#allocation4 + $0x88] sm:$0xf]
    %v3807 = vadd.f32 %v3783, %v3804
    %v3808 = vadd.f32 %v3784, %v3805
    %v3809 = vadd.f32 %v3785, %v3806
    %v3810 = vmax.f32 %v3807, 0.0
    %v3811 = vmax.f32 %v3808, 0.0
    %v3812 = vmax.f32 %v3809, 0.0
    %v3813 = vld [vmem:[#allocation11 + $0x78] sm:$0xff]
    %v3814 = vld [vmem:[#allocation11 + $0x238] sm:$0xff]
    %v3815 = vld [vmem:[#allocation11 + $0x3f8] sm:$0xf]
    %v3816 = vmul.f32 %v3810, %v3813
    %v3817 = vmul.f32 %v3811, %v3814
    %v3818 = vmul.f32 %v3812, %v3815
    %3819 = vst [vmem:[#allocation5 + $0x8] sm:$0xff] %v3816
    %3820 = vst [vmem:[#allocation5 + $0x40] sm:$0xff] %v3817
    %3821 = vst [vmem:[#allocation5 + $0x78] sm:$0xf] %v3818
    %v3822 = vld [vmem:[#allocation4 + $0x18] sm:$0xff]
    %v3823 = vld [vmem:[#allocation4 + $0x58] sm:$0xff]
    %v3824 = vld [vmem:[#allocation4 + $0x98] sm:$0xf]
    %v3825 = vadd.f32 %v3783, %v3822
    %v3826 = vadd.f32 %v3784, %v3823
    %v3827 = vadd.f32 %v3785, %v3824
    %v3828 = vmax.f32 %v3825, 0.0
    %v3829 = vmax.f32 %v3826, 0.0
    %v3830 = vmax.f32 %v3827, 0.0
    %v3831 = vld [vmem:[#allocation11 + $0x80] sm:$0xff]
    %v3832 = vld [vmem:[#allocation11 + $0x240] sm:$0xff]
    %v3833 = vld [vmem:[#allocation11 + $0x400] sm:$0xf]
    %v3834 = vmul.f32 %v3828, %v3831
    %v3835 = vmul.f32 %v3829, %v3832
    %v3836 = vmul.f32 %v3830, %v3833
    %3837 = vst [vmem:[#allocation5 + $0x10] sm:$0xff] %v3834
    %3838 = vst [vmem:[#allocation5 + $0x48] sm:$0xff] %v3835
    %3839 = vst [vmem:[#allocation5 + $0x80] sm:$0xf] %v3836
    %v3840 = vld [vmem:[#allocation4 + $0x20] sm:$0xff]
    %v3841 = vld [vmem:[#allocation4 + $0x60] sm:$0xff]
    %v3842 = vld [vmem:[#allocation4 + $0xa0] sm:$0xf]
    %v3843 = vadd.f32 %v3783, %v3840
    %v3844 = vadd.f32 %v3784, %v3841
    %v3845 = vadd.f32 %v3785, %v3842
    %v3846 = vmax.f32 %v3843, 0.0
    %v3847 = vmax.f32 %v3844, 0.0
    %v3848 = vmax.f32 %v3845, 0.0
    %v3849 = vld [vmem:[#allocation11 + $0x88] sm:$0xff]
    %v3850 = vld [vmem:[#allocation11 + $0x248] sm:$0xff]
    %v3851 = vld [vmem:[#allocation11 + $0x408] sm:$0xf]
    %v3852 = vmul.f32 %v3846, %v3849
    %v3853 = vmul.f32 %v3847, %v3850
    %v3854 = vmul.f32 %v3848, %v3851
    %3855 = vst [vmem:[#allocation5 + $0x18] sm:$0xff] %v3852
    %3856 = vst [vmem:[#allocation5 + $0x50] sm:$0xff] %v3853
    %3857 = vst [vmem:[#allocation5 + $0x88] sm:$0xf] %v3854
    %v3858 = vld [vmem:[#allocation4 + $0x28] sm:$0xff]
    %v3859 = vld [vmem:[#allocation4 + $0x68] sm:$0xff]
    %v3860 = vld [vmem:[#allocation4 + $0xa8] sm:$0xf]
    %v3861 = vadd.f32 %v3783, %v3858
    %v3862 = vadd.f32 %v3784, %v3859
    %v3863 = vadd.f32 %v3785, %v3860
    %v3864 = vmax.f32 %v3861, 0.0
    %v3865 = vmax.f32 %v3862, 0.0
    %v3866 = vmax.f32 %v3863, 0.0
    %v3867 = vld [vmem:[#allocation11 + $0x90] sm:$0xff]
    %v3868 = vld [vmem:[#allocation11 + $0x250] sm:$0xff]
    %v3869 = vld [vmem:[#allocation11 + $0x410] sm:$0xf]
    %v3870 = vmul.f32 %v3864, %v3867
    %v3871 = vmul.f32 %v3865, %v3868
    %v3872 = vmul.f32 %v3866, %v3869
    %3873 = vst [vmem:[#allocation5 + $0x20] sm:$0xff] %v3870
    %3874 = vst [vmem:[#allocation5 + $0x58] sm:$0xff] %v3871
    %3875 = vst [vmem:[#allocation5 + $0x90] sm:$0xf] %v3872
    %v3876 = vld [vmem:[#allocation4 + $0x30] sm:$0xff]
    %v3877 = vld [vmem:[#allocation4 + $0x70] sm:$0xff]
    %v3878 = vld [vmem:[#allocation4 + $0xb0] sm:$0xf]
    %v3879 = vadd.f32 %v3783, %v3876
    %v3880 = vadd.f32 %v3784, %v3877
    %v3881 = vadd.f32 %v3785, %v3878
    %v3882 = vmax.f32 %v3879, 0.0
    %v3883 = vmax.f32 %v3880, 0.0
    %v3884 = vmax.f32 %v3881, 0.0
    %v3885 = vld [vmem:[#allocation11 + $0x98] sm:$0xff]
    %v3886 = vld [vmem:[#allocation11 + $0x258] sm:$0xff]
    %v3887 = vld [vmem:[#allocation11 + $0x418] sm:$0xf]
    %v3888 = vmul.f32 %v3882, %v3885
    %v3889 = vmul.f32 %v3883, %v3886
    %v3890 = vmul.f32 %v3884, %v3887
    %3891 = vst [vmem:[#allocation5 + $0x28] sm:$0xff] %v3888
    %3892 = vst [vmem:[#allocation5 + $0x60] sm:$0xff] %v3889
    %3893 = vst [vmem:[#allocation5 + $0x98] sm:$0xf] %v3890
    %v3894 = vld [vmem:[#allocation4 + $0x38] sm:$0xff]
    %v3895 = vld [vmem:[#allocation4 + $0x78] sm:$0xff]
    %v3896 = vld [vmem:[#allocation4 + $0xb8] sm:$0xf]
    %v3897 = vadd.f32 %v3783, %v3894
    %v3898 = vadd.f32 %v3784, %v3895
    %v3899 = vadd.f32 %v3785, %v3896
    %v3900 = vmax.f32 %v3897, 0.0
    %v3901 = vmax.f32 %v3898, 0.0
    %v3902 = vmax.f32 %v3899, 0.0
    %v3903 = vld [vmem:[#allocation11 + $0xa0] sm:$0xff]
    %v3904 = vld [vmem:[#allocation11 + $0x260] sm:$0xff]
    %v3905 = vld [vmem:[#allocation11 + $0x420] sm:$0xf]
    %v3906 = vmul.f32 %v3900, %v3903
    %v3907 = vmul.f32 %v3901, %v3904
    %v3908 = vmul.f32 %v3902, %v3905
    %3909 = vst [vmem:[#allocation5 + $0x30] sm:$0xff] %v3906
    %3910 = vst [vmem:[#allocation5 + $0x68] sm:$0xff] %v3907
    %3911 = vst [vmem:[#allocation5 + $0xa0] sm:$0xf] %v3908
    %v3912 = vld [vmem:[#allocation5] sm:$0xff]
    %v3913 = vld [vmem:[#allocation5 + $0x8] sm:$0xff]
    %v3914 = vld [vmem:[#allocation5 + $0x10] sm:$0xff]
    %v3915 = vld [vmem:[#allocation5 + $0x18] sm:$0xff]
    %v3916 = vld [vmem:[#allocation5 + $0x20] sm:$0xff]
    %v3917 = vld [vmem:[#allocation5 + $0x28] sm:$0xff]
    %v3918 = vld [vmem:[#allocation5 + $0x30] sm:$0xff]
    %v3919 = vld [vmem:[#allocation5 + $0x38] sm:$0xff]
    %v3920 = vld [vmem:[#allocation5 + $0x40] sm:$0xff]
    %v3921 = vld [vmem:[#allocation5 + $0x48] sm:$0xff]
    %v3922 = vld [vmem:[#allocation5 + $0x50] sm:$0xff]
    %v3923 = vld [vmem:[#allocation5 + $0x58] sm:$0xff]
    %v3924 = vld [vmem:[#allocation5 + $0x60] sm:$0xff]
    %v3925 = vld [vmem:[#allocation5 + $0x68] sm:$0xff]
    %v3926 = vld [vmem:[#allocation5 + $0x70] sm:$0xf]
    %v3927 = vld [vmem:[#allocation5 + $0x78] sm:$0xf]
    %v3928 = vld [vmem:[#allocation5 + $0x80] sm:$0xf]
    %v3929 = vld [vmem:[#allocation5 + $0x88] sm:$0xf]
    %v3930 = vld [vmem:[#allocation5 + $0x90] sm:$0xf]
    %v3931 = vld [vmem:[#allocation5 + $0x98] sm:$0xf]
    %v3932 = vld [vmem:[#allocation5 + $0xa0] sm:$0xf]
    %v3934 = vsel %vm520, %v3926, 0
    %v3937 = vsel %vm520, %v3927, 0
    %v3940 = vsel %vm520, %v3928, 0
    %v3943 = vsel %vm520, %v3929, 0
    %v3946 = vsel %vm520, %v3930, 0
    %v3949 = vsel %vm520, %v3931, 0
    %v3952 = vsel %vm520, %v3932, 0
    %3954 = vmatpush.msra.mxu0 0.0
    %3955 = vmatpush.msra.mxu0 0.0
    %3956 = vmatpush.msra.mxu0 0.0
    %3957 = vmatpush.msra.mxu0 0.0
    %3958 = vmatpush.msra.mxu0 0.0
    %3959 = vmatpush.msra.mxu0 0.0
    %3960 = vmatpush.msra.mxu0 0.0
    %3961 = vmatpush.msra.mxu0 0.0
    %3962 = vmatpush.msra.mxu0 0.0
    %3963 = vmatpush.msra.mxu0 0.0
    %3964 = vmatpush.msra.mxu0 0.0
    %3965 = vmatpush.msra.mxu0 0.0
    %3966 = vmatpush.msra.mxu0 0.0
    %3967 = vmatpush.msra.mxu0 %v3934
    %3968 = vmatpush.msra.mxu0 %v3919
    %3969 = vmatpush.msra.mxu0 %v3912
    %3970 = vmatmul.f32.gmra.mxu0 %v3092
    %v3971 = vpop.f32.mrf.mxu0
    %v3972 = vadd.f32 %v2928, %v3971
    %3973 = vmatmul.f32.gmra.mxu0 %v3095
    %v3974 = vpop.f32.mrf.mxu0
    %v3975 = vadd.f32 %v2933, %v3974
    %3976 = vmatmul.f32.gmra.mxu0 %v3098
    %v3977 = vpop.f32.mrf.mxu0
    %v3978 = vadd.f32 %v2938, %v3977
    %3979 = vdwg.mxu0
    %3980 = vmatpush.msra.mxu0 0.0
    %3981 = vmatpush.msra.mxu0 0.0
    %3982 = vmatpush.msra.mxu0 0.0
    %3983 = vmatpush.msra.mxu0 0.0
    %3984 = vmatpush.msra.mxu0 0.0
    %3985 = vmatpush.msra.mxu0 0.0
    %3986 = vmatpush.msra.mxu0 0.0
    %3987 = vmatpush.msra.mxu0 0.0
    %3988 = vmatpush.msra.mxu0 0.0
    %3989 = vmatpush.msra.mxu0 0.0
    %3990 = vmatpush.msra.mxu0 0.0
    %3991 = vmatpush.msra.mxu0 0.0
    %3992 = vmatpush.msra.mxu0 0.0
    %3993 = vmatpush.msra.mxu0 %v3937
    %3994 = vmatpush.msra.mxu0 %v3920
    %3995 = vmatpush.msra.mxu0 %v3913
    %3996 = vmatmul.f32.gmra.mxu0 %v3092
    %v3997 = vpop.f32.mrf.mxu0
    %v3998 = vadd.f32 %v2928, %v3997
    %3999 = vmatmul.f32.gmra.mxu0 %v3095
    %v4000 = vpop.f32.mrf.mxu0
    %v4001 = vadd.f32 %v2933, %v4000
    %4002 = vmatmul.f32.gmra.mxu0 %v3098
    %v4003 = vpop.f32.mrf.mxu0
    %v4004 = vadd.f32 %v2938, %v4003
    %4005 = vdwg.mxu0
    %4006 = vmatpush.msra.mxu0 0.0
    %4007 = vmatpush.msra.mxu0 0.0
    %4008 = vmatpush.msra.mxu0 0.0
    %4009 = vmatpush.msra.mxu0 0.0
    %4010 = vmatpush.msra.mxu0 0.0
    %4011 = vmatpush.msra.mxu0 0.0
    %4012 = vmatpush.msra.mxu0 0.0
    %4013 = vmatpush.msra.mxu0 0.0
    %4014 = vmatpush.msra.mxu0 0.0
    %4015 = vmatpush.msra.mxu0 0.0
    %4016 = vmatpush.msra.mxu0 0.0
    %4017 = vmatpush.msra.mxu0 0.0
    %4018 = vmatpush.msra.mxu0 0.0
    %4019 = vmatpush.msra.mxu0 %v3940
    %4020 = vmatpush.msra.mxu0 %v3921
    %4021 = vmatpush.msra.mxu0 %v3914
    %4022 = vmatmul.f32.gmra.mxu0 %v3092
    %v4023 = vpop.f32.mrf.mxu0
    %v4024 = vadd.f32 %v2928, %v4023
    %4025 = vmatmul.f32.gmra.mxu0 %v3095
    %v4026 = vpop.f32.mrf.mxu0
    %v4027 = vadd.f32 %v2933, %v4026
    %4028 = vmatmul.f32.gmra.mxu0 %v3098
    %v4029 = vpop.f32.mrf.mxu0
    %v4030 = vadd.f32 %v2938, %v4029
    %4031 = vdwg.mxu0
    %4032 = vmatpush.msra.mxu0 0.0
    %4033 = vmatpush.msra.mxu0 0.0
    %4034 = vmatpush.msra.mxu0 0.0
    %4035 = vmatpush.msra.mxu0 0.0
    %4036 = vmatpush.msra.mxu0 0.0
    %4037 = vmatpush.msra.mxu0 0.0
    %4038 = vmatpush.msra.mxu0 0.0
    %4039 = vmatpush.msra.mxu0 0.0
    %4040 = vmatpush.msra.mxu0 0.0
    %4041 = vmatpush.msra.mxu0 0.0
    %4042 = vmatpush.msra.mxu0 0.0
    %4043 = vmatpush.msra.mxu0 0.0
    %4044 = vmatpush.msra.mxu0 0.0
    %4045 = vmatpush.msra.mxu0 %v3943
    %4046 = vmatpush.msra.mxu0 %v3922
    %4047 = vmatpush.msra.mxu0 %v3915
    %4048 = vmatmul.f32.gmra.mxu0 %v3092
    %v4049 = vpop.f32.mrf.mxu0
    %v4050 = vadd.f32 %v2928, %v4049
    %4051 = vmatmul.f32.gmra.mxu0 %v3095
    %v4052 = vpop.f32.mrf.mxu0
    %v4053 = vadd.f32 %v2933, %v4052
    %4054 = vmatmul.f32.gmra.mxu0 %v3098
    %v4055 = vpop.f32.mrf.mxu0
    %v4056 = vadd.f32 %v2938, %v4055
    %4057 = vdwg.mxu0
    %4058 = vmatpush.msra.mxu0 0.0
    %4059 = vmatpush.msra.mxu0 0.0
    %4060 = vmatpush.msra.mxu0 0.0
    %4061 = vmatpush.msra.mxu0 0.0
    %4062 = vmatpush.msra.mxu0 0.0
    %4063 = vmatpush.msra.mxu0 0.0
    %4064 = vmatpush.msra.mxu0 0.0
    %4065 = vmatpush.msra.mxu0 0.0
    %4066 = vmatpush.msra.mxu0 0.0
    %4067 = vmatpush.msra.mxu0 0.0
    %4068 = vmatpush.msra.mxu0 0.0
    %4069 = vmatpush.msra.mxu0 0.0
    %4070 = vmatpush.msra.mxu0 0.0
    %4071 = vmatpush.msra.mxu0 %v3946
    %4072 = vmatpush.msra.mxu0 %v3923
    %4073 = vmatpush.msra.mxu0 %v3916
    %4074 = vmatmul.f32.gmra.mxu0 %v3092
    %v4075 = vpop.f32.mrf.mxu0
    %v4076 = vadd.f32 %v2928, %v4075
    %4077 = vmatmul.f32.gmra.mxu0 %v3095
    %v4078 = vpop.f32.mrf.mxu0
    %v4079 = vadd.f32 %v2933, %v4078
    %4080 = vmatmul.f32.gmra.mxu0 %v3098
    %v4081 = vpop.f32.mrf.mxu0
    %v4082 = vadd.f32 %v2938, %v4081
    %4083 = vdwg.mxu0
    %4084 = vmatpush.msra.mxu0 0.0
    %4085 = vmatpush.msra.mxu0 0.0
    %4086 = vmatpush.msra.mxu0 0.0
    %4087 = vmatpush.msra.mxu0 0.0
    %4088 = vmatpush.msra.mxu0 0.0
    %4089 = vmatpush.msra.mxu0 0.0
    %4090 = vmatpush.msra.mxu0 0.0
    %4091 = vmatpush.msra.mxu0 0.0
    %4092 = vmatpush.msra.mxu0 0.0
    %4093 = vmatpush.msra.mxu0 0.0
    %4094 = vmatpush.msra.mxu0 0.0
    %4095 = vmatpush.msra.mxu0 0.0
    %4096 = vmatpush.msra.mxu0 0.0
    %4097 = vmatpush.msra.mxu0 %v3949
    %4098 = vmatpush.msra.mxu0 %v3924
    %4099 = vmatpush.msra.mxu0 %v3917
    %4100 = vmatmul.f32.gmra.mxu0 %v3092
    %v4101 = vpop.f32.mrf.mxu0
    %v4102 = vadd.f32 %v2928, %v4101
    %4103 = vmatmul.f32.gmra.mxu0 %v3095
    %v4104 = vpop.f32.mrf.mxu0
    %v4105 = vadd.f32 %v2933, %v4104
    %4106 = vmatmul.f32.gmra.mxu0 %v3098
    %v4107 = vpop.f32.mrf.mxu0
    %v4108 = vadd.f32 %v2938, %v4107
    %4109 = vdwg.mxu0
    %4110 = vmatpush.msra.mxu0 0.0
    %4111 = vmatpush.msra.mxu0 0.0
    %4112 = vmatpush.msra.mxu0 0.0
    %4113 = vmatpush.msra.mxu0 0.0
    %4114 = vmatpush.msra.mxu0 0.0
    %4115 = vmatpush.msra.mxu0 0.0
    %4116 = vmatpush.msra.mxu0 0.0
    %4117 = vmatpush.msra.mxu0 0.0
    %4118 = vmatpush.msra.mxu0 0.0
    %4119 = vmatpush.msra.mxu0 0.0
    %4120 = vmatpush.msra.mxu0 0.0
    %4121 = vmatpush.msra.mxu0 0.0
    %4122 = vmatpush.msra.mxu0 0.0
    %4123 = vmatpush.msra.mxu0 %v3952
    %4124 = vmatpush.msra.mxu0 %v3925
    %4125 = vmatpush.msra.mxu0 %v3918
    %4126 = vmatmul.f32.gmra.mxu0 %v3092
    %v4127 = vpop.f32.mrf.mxu0
    %v4128 = vadd.f32 %v2928, %v4127
    %4129 = vmatmul.f32.gmra.mxu0 %v3095
    %v4130 = vpop.f32.mrf.mxu0
    %v4131 = vadd.f32 %v2933, %v4130
    %4132 = vmatmul.f32.gmra.mxu0 %v3098
    %v4133 = vpop.f32.mrf.mxu0
    %v4134 = vadd.f32 %v2938, %v4133
    %4135 = vdwg.mxu0
    %v4136 = vmax.f32 %v3972, 0.0
    %v4137 = vmax.f32 %v3998, 0.0
    %v4138 = vmax.f32 %v4024, 0.0
    %v4139 = vmax.f32 %v4050, 0.0
    %v4140 = vmax.f32 %v4076, 0.0
    %v4141 = vmax.f32 %v4102, 0.0
    %v4142 = vmax.f32 %v4128, 0.0
    %v4143 = vmax.f32 %v3975, 0.0
    %v4144 = vmax.f32 %v4001, 0.0
    %v4145 = vmax.f32 %v4027, 0.0
    %v4146 = vmax.f32 %v4053, 0.0
    %v4147 = vmax.f32 %v4079, 0.0
    %v4148 = vmax.f32 %v4105, 0.0
    %v4149 = vmax.f32 %v4131, 0.0
    %v4150 = vmax.f32 %v3978, 0.0
    %v4151 = vmax.f32 %v4004, 0.0
    %v4152 = vmax.f32 %v4030, 0.0
    %v4153 = vmax.f32 %v4056, 0.0
    %v4154 = vmax.f32 %v4082, 0.0
    %v4155 = vmax.f32 %v4108, 0.0
    %v4156 = vmax.f32 %v4134, 0.0
    %v4157 = vadd.f32 %v4136, %v4137
    %v4158 = vadd.f32 %v4143, %v4144
    %v4159 = vadd.f32 %v4150, %v4151
    %v4160 = vadd.f32 %v4157, %v4138
    %v4161 = vadd.f32 %v4158, %v4145
    %v4162 = vadd.f32 %v4159, %v4152
    %v4163 = vadd.f32 %v4160, %v4139
    %v4164 = vadd.f32 %v4161, %v4146
    %v4165 = vadd.f32 %v4162, %v4153
    %v4166 = vadd.f32 %v4163, %v4140
    %v4167 = vadd.f32 %v4164, %v4147
    %v4168 = vadd.f32 %v4165, %v4154
    %v4169 = vadd.f32 %v4166, %v4141
    %v4170 = vadd.f32 %v4167, %v4148
    %v4171 = vadd.f32 %v4168, %v4155
    %v4172 = vadd.f32 %v4169, %v4142
    %v4173 = vadd.f32 %v4170, %v4149
    %v4174 = vadd.f32 %v4171, %v4156
    %v4176 = vsel %vm520, %v4174, 0
    %4178 = vmatpush.msra.mxu0 0.0
    %4179 = vmatpush.msra.mxu0 0.0
    %4180 = vmatpush.msra.mxu0 0.0
    %4181 = vmatpush.msra.mxu0 0.0
    %4182 = vmatpush.msra.mxu0 0.0
    %4183 = vmatpush.msra.mxu0 0.0
    %4184 = vmatpush.msra.mxu0 0.0
    %4185 = vmatpush.msra.mxu0 0.0
    %4186 = vmatpush.msra.mxu0 0.0
    %4187 = vmatpush.msra.mxu0 0.0
    %4188 = vmatpush.msra.mxu0 0.0
    %4189 = vmatpush.msra.mxu0 0.0
    %4190 = vmatpush.msra.mxu0 0.0
    %4191 = vmatpush.msra.mxu0 %v4176
    %4192 = vmatpush.msra.mxu0 %v4173
    %4193 = vmatpush.msra.mxu0 %v4172
    %4194 = vmatmul.f32.gmra.mxu0 %v3343
    %v4195 = vpop.f32.mrf.mxu0
    %v4196 = vadd.f32 0.0, %v4195
    %4197 = vdwg.mxu0
    %v4198 = vld [vmem:[#allocation3 + $0x18] sm:$0xff]
    %v4199 = vld [vmem:[#allocation3 + $0x58] sm:$0xff]
    %v4200 = vld [vmem:[#allocation3 + $0x98] sm:$0xf]
    %v4201 = vld [vmem:[#allocation4] sm:$0xff]
    %v4202 = vld [vmem:[#allocation4 + $0x40] sm:$0xff]
    %v4203 = vld [vmem:[#allocation4 + $0x80] sm:$0xf]
    %v4204 = vadd.f32 %v4198, %v4201
    %v4205 = vadd.f32 %v4199, %v4202
    %v4206 = vadd.f32 %v4200, %v4203
    %v4207 = vmax.f32 %v4204, 0.0
    %v4208 = vmax.f32 %v4205, 0.0
    %v4209 = vmax.f32 %v4206, 0.0
    %v4210 = vld [vmem:[#allocation11 + $0xa8] sm:$0xff]
    %v4211 = vld [vmem:[#allocation11 + $0x268] sm:$0xff]
    %v4212 = vld [vmem:[#allocation11 + $0x428] sm:$0xf]
    %v4213 = vmul.f32 %v4207, %v4210
    %v4214 = vmul.f32 %v4208, %v4211
    %v4215 = vmul.f32 %v4209, %v4212
    %4216 = vst [vmem:[#allocation5] sm:$0xff] %v4213
    %4217 = vst [vmem:[#allocation5 + $0x38] sm:$0xff] %v4214
    %4218 = vst [vmem:[#allocation5 + $0x70] sm:$0xf] %v4215
    %v4219 = vld [vmem:[#allocation4 + $0x8] sm:$0xff]
    %v4220 = vld [vmem:[#allocation4 + $0x48] sm:$0xff]
    %v4221 = vld [vmem:[#allocation4 + $0x88] sm:$0xf]
    %v4222 = vadd.f32 %v4198, %v4219
    %v4223 = vadd.f32 %v4199, %v4220
    %v4224 = vadd.f32 %v4200, %v4221
    %v4225 = vmax.f32 %v4222, 0.0
    %v4226 = vmax.f32 %v4223, 0.0
    %v4227 = vmax.f32 %v4224, 0.0
    %v4228 = vld [vmem:[#allocation11 + $0xb0] sm:$0xff]
    %v4229 = vld [vmem:[#allocation11 + $0x270] sm:$0xff]
    %v4230 = vld [vmem:[#allocation11 + $0x430] sm:$0xf]
    %v4231 = vmul.f32 %v4225, %v4228
    %v4232 = vmul.f32 %v4226, %v4229
    %v4233 = vmul.f32 %v4227, %v4230
    %4234 = vst [vmem:[#allocation5 + $0x8] sm:$0xff] %v4231
    %4235 = vst [vmem:[#allocation5 + $0x40] sm:$0xff] %v4232
    %4236 = vst [vmem:[#allocation5 + $0x78] sm:$0xf] %v4233
    %v4237 = vld [vmem:[#allocation4 + $0x10] sm:$0xff]
    %v4238 = vld [vmem:[#allocation4 + $0x50] sm:$0xff]
    %v4239 = vld [vmem:[#allocation4 + $0x90] sm:$0xf]
    %v4240 = vadd.f32 %v4198, %v4237
    %v4241 = vadd.f32 %v4199, %v4238
    %v4242 = vadd.f32 %v4200, %v4239
    %v4243 = vmax.f32 %v4240, 0.0
    %v4244 = vmax.f32 %v4241, 0.0
    %v4245 = vmax.f32 %v4242, 0.0
    %v4246 = vld [vmem:[#allocation11 + $0xb8] sm:$0xff]
    %v4247 = vld [vmem:[#allocation11 + $0x278] sm:$0xff]
    %v4248 = vld [vmem:[#allocation11 + $0x438] sm:$0xf]
    %v4249 = vmul.f32 %v4243, %v4246
    %v4250 = vmul.f32 %v4244, %v4247
    %v4251 = vmul.f32 %v4245, %v4248
    %4252 = vst [vmem:[#allocation5 + $0x10] sm:$0xff] %v4249
    %4253 = vst [vmem:[#allocation5 + $0x48] sm:$0xff] %v4250
    %4254 = vst [vmem:[#allocation5 + $0x80] sm:$0xf] %v4251
    %v4255 = vld [vmem:[#allocation4 + $0x20] sm:$0xff]
    %v4256 = vld [vmem:[#allocation4 + $0x60] sm:$0xff]
    %v4257 = vld [vmem:[#allocation4 + $0xa0] sm:$0xf]
    %v4258 = vadd.f32 %v4198, %v4255
    %v4259 = vadd.f32 %v4199, %v4256
    %v4260 = vadd.f32 %v4200, %v4257
    %v4261 = vmax.f32 %v4258, 0.0
    %v4262 = vmax.f32 %v4259, 0.0
    %v4263 = vmax.f32 %v4260, 0.0
    %v4264 = vld [vmem:[#allocation11 + $0xc0] sm:$0xff]
    %v4265 = vld [vmem:[#allocation11 + $0x280] sm:$0xff]
    %v4266 = vld [vmem:[#allocation11 + $0x440] sm:$0xf]
    %v4267 = vmul.f32 %v4261, %v4264
    %v4268 = vmul.f32 %v4262, %v4265
    %v4269 = vmul.f32 %v4263, %v4266
    %4270 = vst [vmem:[#allocation5 + $0x18] sm:$0xff] %v4267
    %4271 = vst [vmem:[#allocation5 + $0x50] sm:$0xff] %v4268
    %4272 = vst [vmem:[#allocation5 + $0x88] sm:$0xf] %v4269
    %v4273 = vld [vmem:[#allocation4 + $0x28] sm:$0xff]
    %v4274 = vld [vmem:[#allocation4 + $0x68] sm:$0xff]
    %v4275 = vld [vmem:[#allocation4 + $0xa8] sm:$0xf]
    %v4276 = vadd.f32 %v4198, %v4273
    %v4277 = vadd.f32 %v4199, %v4274
    %v4278 = vadd.f32 %v4200, %v4275
    %v4279 = vmax.f32 %v4276, 0.0
    %v4280 = vmax.f32 %v4277, 0.0
    %v4281 = vmax.f32 %v4278, 0.0
    %v4282 = vld [vmem:[#allocation11 + $0xc8] sm:$0xff]
    %v4283 = vld [vmem:[#allocation11 + $0x288] sm:$0xff]
    %v4284 = vld [vmem:[#allocation11 + $0x448] sm:$0xf]
    %v4285 = vmul.f32 %v4279, %v4282
    %v4286 = vmul.f32 %v4280, %v4283
    %v4287 = vmul.f32 %v4281, %v4284
    %4288 = vst [vmem:[#allocation5 + $0x20] sm:$0xff] %v4285
    %4289 = vst [vmem:[#allocation5 + $0x58] sm:$0xff] %v4286
    %4290 = vst [vmem:[#allocation5 + $0x90] sm:$0xf] %v4287
    %v4291 = vld [vmem:[#allocation4 + $0x30] sm:$0xff]
    %v4292 = vld [vmem:[#allocation4 + $0x70] sm:$0xff]
    %v4293 = vld [vmem:[#allocation4 + $0xb0] sm:$0xf]
    %v4294 = vadd.f32 %v4198, %v4291
    %v4295 = vadd.f32 %v4199, %v4292
    %v4296 = vadd.f32 %v4200, %v4293
    %v4297 = vmax.f32 %v4294, 0.0
    %v4298 = vmax.f32 %v4295, 0.0
    %v4299 = vmax.f32 %v4296, 0.0
    %v4300 = vld [vmem:[#allocation11 + $0xd0] sm:$0xff]
    %v4301 = vld [vmem:[#allocation11 + $0x290] sm:$0xff]
    %v4302 = vld [vmem:[#allocation11 + $0x450] sm:$0xf]
    %v4303 = vmul.f32 %v4297, %v4300
    %v4304 = vmul.f32 %v4298, %v4301
    %v4305 = vmul.f32 %v4299, %v4302
    %4306 = vst [vmem:[#allocation5 + $0x28] sm:$0xff] %v4303
    %4307 = vst [vmem:[#allocation5 + $0x60] sm:$0xff] %v4304
    %4308 = vst [vmem:[#allocation5 + $0x98] sm:$0xf] %v4305
    %v4309 = vld [vmem:[#allocation4 + $0x38] sm:$0xff]
    %v4310 = vld [vmem:[#allocation4 + $0x78] sm:$0xff]
    %v4311 = vld [vmem:[#allocation4 + $0xb8] sm:$0xf]
    %v4312 = vadd.f32 %v4198, %v4309
    %v4313 = vadd.f32 %v4199, %v4310
    %v4314 = vadd.f32 %v4200, %v4311
    %v4315 = vmax.f32 %v4312, 0.0
    %v4316 = vmax.f32 %v4313, 0.0
    %v4317 = vmax.f32 %v4314, 0.0
    %v4318 = vld [vmem:[#allocation11 + $0xd8] sm:$0xff]
    %v4319 = vld [vmem:[#allocation11 + $0x298] sm:$0xff]
    %v4320 = vld [vmem:[#allocation11 + $0x458] sm:$0xf]
    %v4321 = vmul.f32 %v4315, %v4318
    %v4322 = vmul.f32 %v4316, %v4319
    %v4323 = vmul.f32 %v4317, %v4320
    %4324 = vst [vmem:[#allocation5 + $0x30] sm:$0xff] %v4321
    %4325 = vst [vmem:[#allocation5 + $0x68] sm:$0xff] %v4322
    %4326 = vst [vmem:[#allocation5 + $0xa0] sm:$0xf] %v4323
    %v4327 = vld [vmem:[#allocation5] sm:$0xff]
    %v4328 = vld [vmem:[#allocation5 + $0x8] sm:$0xff]
    %v4329 = vld [vmem:[#allocation5 + $0x10] sm:$0xff]
    %v4330 = vld [vmem:[#allocation5 + $0x18] sm:$0xff]
    %v4331 = vld [vmem:[#allocation5 + $0x20] sm:$0xff]
    %v4332 = vld [vmem:[#allocation5 + $0x28] sm:$0xff]
    %v4333 = vld [vmem:[#allocation5 + $0x30] sm:$0xff]
    %v4334 = vld [vmem:[#allocation5 + $0x38] sm:$0xff]
    %v4335 = vld [vmem:[#allocation5 + $0x40] sm:$0xff]
    %v4336 = vld [vmem:[#allocation5 + $0x48] sm:$0xff]
    %v4337 = vld [vmem:[#allocation5 + $0x50] sm:$0xff]
    %v4338 = vld [vmem:[#allocation5 + $0x58] sm:$0xff]
    %v4339 = vld [vmem:[#allocation5 + $0x60] sm:$0xff]
    %v4340 = vld [vmem:[#allocation5 + $0x68] sm:$0xff]
    %v4341 = vld [vmem:[#allocation5 + $0x70] sm:$0xf]
    %v4342 = vld [vmem:[#allocation5 + $0x78] sm:$0xf]
    %v4343 = vld [vmem:[#allocation5 + $0x80] sm:$0xf]
    %v4344 = vld [vmem:[#allocation5 + $0x88] sm:$0xf]
    %v4345 = vld [vmem:[#allocation5 + $0x90] sm:$0xf]
    %v4346 = vld [vmem:[#allocation5 + $0x98] sm:$0xf]
    %v4347 = vld [vmem:[#allocation5 + $0xa0] sm:$0xf]
    %v4349 = vsel %vm520, %v4341, 0
    %v4352 = vsel %vm520, %v4342, 0
    %v4355 = vsel %vm520, %v4343, 0
    %v4358 = vsel %vm520, %v4344, 0
    %v4361 = vsel %vm520, %v4345, 0
    %v4364 = vsel %vm520, %v4346, 0
    %v4367 = vsel %vm520, %v4347, 0
    %4369 = vmatpush.msra.mxu0 0.0
    %4370 = vmatpush.msra.mxu0 0.0
    %4371 = vmatpush.msra.mxu0 0.0
    %4372 = vmatpush.msra.mxu0 0.0
    %4373 = vmatpush.msra.mxu0 0.0
    %4374 = vmatpush.msra.mxu0 0.0
    %4375 = vmatpush.msra.mxu0 0.0
    %4376 = vmatpush.msra.mxu0 0.0
    %4377 = vmatpush.msra.mxu0 0.0
    %4378 = vmatpush.msra.mxu0 0.0
    %4379 = vmatpush.msra.mxu0 0.0
    %4380 = vmatpush.msra.mxu0 0.0
    %4381 = vmatpush.msra.mxu0 0.0
    %4382 = vmatpush.msra.mxu0 %v4349
    %4383 = vmatpush.msra.mxu0 %v4334
    %4384 = vmatpush.msra.mxu0 %v4327
    %4385 = vmatmul.f32.gmra.mxu0 %v3092
    %v4386 = vpop.f32.mrf.mxu0
    %v4387 = vadd.f32 %v2928, %v4386
    %4388 = vmatmul.f32.gmra.mxu0 %v3095
    %v4389 = vpop.f32.mrf.mxu0
    %v4390 = vadd.f32 %v2933, %v4389
    %4391 = vmatmul.f32.gmra.mxu0 %v3098
    %v4392 = vpop.f32.mrf.mxu0
    %v4393 = vadd.f32 %v2938, %v4392
    %4394 = vdwg.mxu0
    %4395 = vmatpush.msra.mxu0 0.0
    %4396 = vmatpush.msra.mxu0 0.0
    %4397 = vmatpush.msra.mxu0 0.0
    %4398 = vmatpush.msra.mxu0 0.0
    %4399 = vmatpush.msra.mxu0 0.0
    %4400 = vmatpush.msra.mxu0 0.0
    %4401 = vmatpush.msra.mxu0 0.0
    %4402 = vmatpush.msra.mxu0 0.0
    %4403 = vmatpush.msra.mxu0 0.0
    %4404 = vmatpush.msra.mxu0 0.0
    %4405 = vmatpush.msra.mxu0 0.0
    %4406 = vmatpush.msra.mxu0 0.0
    %4407 = vmatpush.msra.mxu0 0.0
    %4408 = vmatpush.msra.mxu0 %v4352
    %4409 = vmatpush.msra.mxu0 %v4335
    %4410 = vmatpush.msra.mxu0 %v4328
    %4411 = vmatmul.f32.gmra.mxu0 %v3092
    %v4412 = vpop.f32.mrf.mxu0
    %v4413 = vadd.f32 %v2928, %v4412
    %4414 = vmatmul.f32.gmra.mxu0 %v3095
    %v4415 = vpop.f32.mrf.mxu0
    %v4416 = vadd.f32 %v2933, %v4415
    %4417 = vmatmul.f32.gmra.mxu0 %v3098
    %v4418 = vpop.f32.mrf.mxu0
    %v4419 = vadd.f32 %v2938, %v4418
    %4420 = vdwg.mxu0
    %4421 = vmatpush.msra.mxu0 0.0
    %4422 = vmatpush.msra.mxu0 0.0
    %4423 = vmatpush.msra.mxu0 0.0
    %4424 = vmatpush.msra.mxu0 0.0
    %4425 = vmatpush.msra.mxu0 0.0
    %4426 = vmatpush.msra.mxu0 0.0
    %4427 = vmatpush.msra.mxu0 0.0
    %4428 = vmatpush.msra.mxu0 0.0
    %4429 = vmatpush.msra.mxu0 0.0
    %4430 = vmatpush.msra.mxu0 0.0
    %4431 = vmatpush.msra.mxu0 0.0
    %4432 = vmatpush.msra.mxu0 0.0
    %4433 = vmatpush.msra.mxu0 0.0
    %4434 = vmatpush.msra.mxu0 %v4355
    %4435 = vmatpush.msra.mxu0 %v4336
    %4436 = vmatpush.msra.mxu0 %v4329
    %4437 = vmatmul.f32.gmra.mxu0 %v3092
    %v4438 = vpop.f32.mrf.mxu0
    %v4439 = vadd.f32 %v2928, %v4438
    %4440 = vmatmul.f32.gmra.mxu0 %v3095
    %v4441 = vpop.f32.mrf.mxu0
    %v4442 = vadd.f32 %v2933, %v4441
    %4443 = vmatmul.f32.gmra.mxu0 %v3098
    %v4444 = vpop.f32.mrf.mxu0
    %v4445 = vadd.f32 %v2938, %v4444
    %4446 = vdwg.mxu0
    %4447 = vmatpush.msra.mxu0 0.0
    %4448 = vmatpush.msra.mxu0 0.0
    %4449 = vmatpush.msra.mxu0 0.0
    %4450 = vmatpush.msra.mxu0 0.0
    %4451 = vmatpush.msra.mxu0 0.0
    %4452 = vmatpush.msra.mxu0 0.0
    %4453 = vmatpush.msra.mxu0 0.0
    %4454 = vmatpush.msra.mxu0 0.0
    %4455 = vmatpush.msra.mxu0 0.0
    %4456 = vmatpush.msra.mxu0 0.0
    %4457 = vmatpush.msra.mxu0 0.0
    %4458 = vmatpush.msra.mxu0 0.0
    %4459 = vmatpush.msra.mxu0 0.0
    %4460 = vmatpush.msra.mxu0 %v4358
    %4461 = vmatpush.msra.mxu0 %v4337
    %4462 = vmatpush.msra.mxu0 %v4330
    %4463 = vmatmul.f32.gmra.mxu0 %v3092
    %v4464 = vpop.f32.mrf.mxu0
    %v4465 = vadd.f32 %v2928, %v4464
    %4466 = vmatmul.f32.gmra.mxu0 %v3095
    %v4467 = vpop.f32.mrf.mxu0
    %v4468 = vadd.f32 %v2933, %v4467
    %4469 = vmatmul.f32.gmra.mxu0 %v3098
    %v4470 = vpop.f32.mrf.mxu0
    %v4471 = vadd.f32 %v2938, %v4470
    %4472 = vdwg.mxu0
    %4473 = vmatpush.msra.mxu0 0.0
    %4474 = vmatpush.msra.mxu0 0.0
    %4475 = vmatpush.msra.mxu0 0.0
    %4476 = vmatpush.msra.mxu0 0.0
    %4477 = vmatpush.msra.mxu0 0.0
    %4478 = vmatpush.msra.mxu0 0.0
    %4479 = vmatpush.msra.mxu0 0.0
    %4480 = vmatpush.msra.mxu0 0.0
    %4481 = vmatpush.msra.mxu0 0.0
    %4482 = vmatpush.msra.mxu0 0.0
    %4483 = vmatpush.msra.mxu0 0.0
    %4484 = vmatpush.msra.mxu0 0.0
    %4485 = vmatpush.msra.mxu0 0.0
    %4486 = vmatpush.msra.mxu0 %v4361
    %4487 = vmatpush.msra.mxu0 %v4338
    %4488 = vmatpush.msra.mxu0 %v4331
    %4489 = vmatmul.f32.gmra.mxu0 %v3092
    %v4490 = vpop.f32.mrf.mxu0
    %v4491 = vadd.f32 %v2928, %v4490
    %4492 = vmatmul.f32.gmra.mxu0 %v3095
    %v4493 = vpop.f32.mrf.mxu0
    %v4494 = vadd.f32 %v2933, %v4493
    %4495 = vmatmul.f32.gmra.mxu0 %v3098
    %v4496 = vpop.f32.mrf.mxu0
    %v4497 = vadd.f32 %v2938, %v4496
    %4498 = vdwg.mxu0
    %4499 = vmatpush.msra.mxu0 0.0
    %4500 = vmatpush.msra.mxu0 0.0
    %4501 = vmatpush.msra.mxu0 0.0
    %4502 = vmatpush.msra.mxu0 0.0
    %4503 = vmatpush.msra.mxu0 0.0
    %4504 = vmatpush.msra.mxu0 0.0
    %4505 = vmatpush.msra.mxu0 0.0
    %4506 = vmatpush.msra.mxu0 0.0
    %4507 = vmatpush.msra.mxu0 0.0
    %4508 = vmatpush.msra.mxu0 0.0
    %4509 = vmatpush.msra.mxu0 0.0
    %4510 = vmatpush.msra.mxu0 0.0
    %4511 = vmatpush.msra.mxu0 0.0
    %4512 = vmatpush.msra.mxu0 %v4364
    %4513 = vmatpush.msra.mxu0 %v4339
    %4514 = vmatpush.msra.mxu0 %v4332
    %4515 = vmatmul.f32.gmra.mxu0 %v3092
    %v4516 = vpop.f32.mrf.mxu0
    %v4517 = vadd.f32 %v2928, %v4516
    %4518 = vmatmul.f32.gmra.mxu0 %v3095
    %v4519 = vpop.f32.mrf.mxu0
    %v4520 = vadd.f32 %v2933, %v4519
    %4521 = vmatmul.f32.gmra.mxu0 %v3098
    %v4522 = vpop.f32.mrf.mxu0
    %v4523 = vadd.f32 %v2938, %v4522
    %4524 = vdwg.mxu0
    %4525 = vmatpush.msra.mxu0 0.0
    %4526 = vmatpush.msra.mxu0 0.0
    %4527 = vmatpush.msra.mxu0 0.0
    %4528 = vmatpush.msra.mxu0 0.0
    %4529 = vmatpush.msra.mxu0 0.0
    %4530 = vmatpush.msra.mxu0 0.0
    %4531 = vmatpush.msra.mxu0 0.0
    %4532 = vmatpush.msra.mxu0 0.0
    %4533 = vmatpush.msra.mxu0 0.0
    %4534 = vmatpush.msra.mxu0 0.0
    %4535 = vmatpush.msra.mxu0 0.0
    %4536 = vmatpush.msra.mxu0 0.0
    %4537 = vmatpush.msra.mxu0 0.0
    %4538 = vmatpush.msra.mxu0 %v4367
    %4539 = vmatpush.msra.mxu0 %v4340
    %4540 = vmatpush.msra.mxu0 %v4333
    %4541 = vmatmul.f32.gmra.mxu0 %v3092
    %v4542 = vpop.f32.mrf.mxu0
    %v4543 = vadd.f32 %v2928, %v4542
    %4544 = vmatmul.f32.gmra.mxu0 %v3095
    %v4545 = vpop.f32.mrf.mxu0
    %v4546 = vadd.f32 %v2933, %v4545
    %4547 = vmatmul.f32.gmra.mxu0 %v3098
    %v4548 = vpop.f32.mrf.mxu0
    %v4549 = vadd.f32 %v2938, %v4548
    %4550 = vdwg.mxu0
    %v4551 = vmax.f32 %v4387, 0.0
    %v4552 = vmax.f32 %v4413, 0.0
    %v4553 = vmax.f32 %v4439, 0.0
    %v4554 = vmax.f32 %v4465, 0.0
    %v4555 = vmax.f32 %v4491, 0.0
    %v4556 = vmax.f32 %v4517, 0.0
    %v4557 = vmax.f32 %v4543, 0.0
    %v4558 = vmax.f32 %v4390, 0.0
    %v4559 = vmax.f32 %v4416, 0.0
    %v4560 = vmax.f32 %v4442, 0.0
    %v4561 = vmax.f32 %v4468, 0.0
    %v4562 = vmax.f32 %v4494, 0.0
    %v4563 = vmax.f32 %v4520, 0.0
    %v4564 = vmax.f32 %v4546, 0.0
    %v4565 = vmax.f32 %v4393, 0.0
    %v4566 = vmax.f32 %v4419, 0.0
    %v4567 = vmax.f32 %v4445, 0.0
    %v4568 = vmax.f32 %v4471, 0.0
    %v4569 = vmax.f32 %v4497, 0.0
    %v4570 = vmax.f32 %v4523, 0.0
    %v4571 = vmax.f32 %v4549, 0.0
    %v4572 = vadd.f32 %v4551, %v4552
    %v4573 = vadd.f32 %v4558, %v4559
    %v4574 = vadd.f32 %v4565, %v4566
    %v4575 = vadd.f32 %v4572, %v4553
    %v4576 = vadd.f32 %v4573, %v4560
    %v4577 = vadd.f32 %v4574, %v4567
    %v4578 = vadd.f32 %v4575, %v4554
    %v4579 = vadd.f32 %v4576, %v4561
    %v4580 = vadd.f32 %v4577, %v4568
    %v4581 = vadd.f32 %v4578, %v4555
    %v4582 = vadd.f32 %v4579, %v4562
    %v4583 = vadd.f32 %v4580, %v4569
    %v4584 = vadd.f32 %v4581, %v4556
    %v4585 = vadd.f32 %v4582, %v4563
    %v4586 = vadd.f32 %v4583, %v4570
    %v4587 = vadd.f32 %v4584, %v4557
    %v4588 = vadd.f32 %v4585, %v4564
    %v4589 = vadd.f32 %v4586, %v4571
    %v4591 = vsel %vm520, %v4589, 0
    %4593 = vmatpush.msra.mxu0 0.0
    %4594 = vmatpush.msra.mxu0 0.0
    %4595 = vmatpush.msra.mxu0 0.0
    %4596 = vmatpush.msra.mxu0 0.0
    %4597 = vmatpush.msra.mxu0 0.0
    %4598 = vmatpush.msra.mxu0 0.0
    %4599 = vmatpush.msra.mxu0 0.0
    %4600 = vmatpush.msra.mxu0 0.0
    %4601 = vmatpush.msra.mxu0 0.0
    %4602 = vmatpush.msra.mxu0 0.0
    %4603 = vmatpush.msra.mxu0 0.0
    %4604 = vmatpush.msra.mxu0 0.0
    %4605 = vmatpush.msra.mxu0 0.0
    %4606 = vmatpush.msra.mxu0 %v4591
    %4607 = vmatpush.msra.mxu0 %v4588
    %4608 = vmatpush.msra.mxu0 %v4587
    %4609 = vmatmul.f32.gmra.mxu0 %v3343
    %v4610 = vpop.f32.mrf.mxu0
    %v4611 = vadd.f32 0.0, %v4610
    %4612 = vdwg.mxu0
    %v4613 = vld [vmem:[#allocation3 + $0x20] sm:$0xff]
    %v4614 = vld [vmem:[#allocation3 + $0x60] sm:$0xff]
    %v4615 = vld [vmem:[#allocation3 + $0xa0] sm:$0xf]
    %v4616 = vld [vmem:[#allocation4] sm:$0xff]
    %v4617 = vld [vmem:[#allocation4 + $0x40] sm:$0xff]
    %v4618 = vld [vmem:[#allocation4 + $0x80] sm:$0xf]
    %v4619 = vadd.f32 %v4613, %v4616
    %v4620 = vadd.f32 %v4614, %v4617
    %v4621 = vadd.f32 %v4615, %v4618
    %v4622 = vmax.f32 %v4619, 0.0
    %v4623 = vmax.f32 %v4620, 0.0
    %v4624 = vmax.f32 %v4621, 0.0
    %v4625 = vld [vmem:[#allocation11 + $0xe0] sm:$0xff]
    %v4626 = vld [vmem:[#allocation11 + $0x2a0] sm:$0xff]
    %v4627 = vld [vmem:[#allocation11 + $0x460] sm:$0xf]
    %v4628 = vmul.f32 %v4622, %v4625
    %v4629 = vmul.f32 %v4623, %v4626
    %v4630 = vmul.f32 %v4624, %v4627
    %4631 = vst [vmem:[#allocation5] sm:$0xff] %v4628
    %4632 = vst [vmem:[#allocation5 + $0x38] sm:$0xff] %v4629
    %4633 = vst [vmem:[#allocation5 + $0x70] sm:$0xf] %v4630
    %v4634 = vld [vmem:[#allocation4 + $0x8] sm:$0xff]
    %v4635 = vld [vmem:[#allocation4 + $0x48] sm:$0xff]
    %v4636 = vld [vmem:[#allocation4 + $0x88] sm:$0xf]
    %v4637 = vadd.f32 %v4613, %v4634
    %v4638 = vadd.f32 %v4614, %v4635
    %v4639 = vadd.f32 %v4615, %v4636
    %v4640 = vmax.f32 %v4637, 0.0
    %v4641 = vmax.f32 %v4638, 0.0
    %v4642 = vmax.f32 %v4639, 0.0
    %v4643 = vld [vmem:[#allocation11 + $0xe8] sm:$0xff]
    %v4644 = vld [vmem:[#allocation11 + $0x2a8] sm:$0xff]
    %v4645 = vld [vmem:[#allocation11 + $0x468] sm:$0xf]
    %v4646 = vmul.f32 %v4640, %v4643
    %v4647 = vmul.f32 %v4641, %v4644
    %v4648 = vmul.f32 %v4642, %v4645
    %4649 = vst [vmem:[#allocation5 + $0x8] sm:$0xff] %v4646
    %4650 = vst [vmem:[#allocation5 + $0x40] sm:$0xff] %v4647
    %4651 = vst [vmem:[#allocation5 + $0x78] sm:$0xf] %v4648
    %v4652 = vld [vmem:[#allocation4 + $0x10] sm:$0xff]
    %v4653 = vld [vmem:[#allocation4 + $0x50] sm:$0xff]
    %v4654 = vld [vmem:[#allocation4 + $0x90] sm:$0xf]
    %v4655 = vadd.f32 %v4613, %v4652
    %v4656 = vadd.f32 %v4614, %v4653
    %v4657 = vadd.f32 %v4615, %v4654
    %v4658 = vmax.f32 %v4655, 0.0
    %v4659 = vmax.f32 %v4656, 0.0
    %v4660 = vmax.f32 %v4657, 0.0
    %v4661 = vld [vmem:[#allocation11 + $0xf0] sm:$0xff]
    %v4662 = vld [vmem:[#allocation11 + $0x2b0] sm:$0xff]
    %v4663 = vld [vmem:[#allocation11 + $0x470] sm:$0xf]
    %v4664 = vmul.f32 %v4658, %v4661
    %v4665 = vmul.f32 %v4659, %v4662
    %v4666 = vmul.f32 %v4660, %v4663
    %4667 = vst [vmem:[#allocation5 + $0x10] sm:$0xff] %v4664
    %4668 = vst [vmem:[#allocation5 + $0x48] sm:$0xff] %v4665
    %4669 = vst [vmem:[#allocation5 + $0x80] sm:$0xf] %v4666
    %v4670 = vld [vmem:[#allocation4 + $0x18] sm:$0xff]
    %v4671 = vld [vmem:[#allocation4 + $0x58] sm:$0xff]
    %v4672 = vld [vmem:[#allocation4 + $0x98] sm:$0xf]
    %v4673 = vadd.f32 %v4613, %v4670
    %v4674 = vadd.f32 %v4614, %v4671
    %v4675 = vadd.f32 %v4615, %v4672
    %v4676 = vmax.f32 %v4673, 0.0
    %v4677 = vmax.f32 %v4674, 0.0
    %v4678 = vmax.f32 %v4675, 0.0
    %v4679 = vld [vmem:[#allocation11 + $0xf8] sm:$0xff]
    %v4680 = vld [vmem:[#allocation11 + $0x2b8] sm:$0xff]
    %v4681 = vld [vmem:[#allocation11 + $0x478] sm:$0xf]
    %v4682 = vmul.f32 %v4676, %v4679
    %v4683 = vmul.f32 %v4677, %v4680
    %v4684 = vmul.f32 %v4678, %v4681
    %4685 = vst [vmem:[#allocation5 + $0x18] sm:$0xff] %v4682
    %4686 = vst [vmem:[#allocation5 + $0x50] sm:$0xff] %v4683
    %4687 = vst [vmem:[#allocation5 + $0x88] sm:$0xf] %v4684
    %v4688 = vld [vmem:[#allocation4 + $0x28] sm:$0xff]
    %v4689 = vld [vmem:[#allocation4 + $0x68] sm:$0xff]
    %v4690 = vld [vmem:[#allocation4 + $0xa8] sm:$0xf]
    %v4691 = vadd.f32 %v4613, %v4688
    %v4692 = vadd.f32 %v4614, %v4689
    %v4693 = vadd.f32 %v4615, %v4690
    %v4694 = vmax.f32 %v4691, 0.0
    %v4695 = vmax.f32 %v4692, 0.0
    %v4696 = vmax.f32 %v4693, 0.0
    %v4697 = vld [vmem:[#allocation11 + $0x100] sm:$0xff]
    %v4698 = vld [vmem:[#allocation11 + $0x2c0] sm:$0xff]
    %v4699 = vld [vmem:[#allocation11 + $0x480] sm:$0xf]
    %v4700 = vmul.f32 %v4694, %v4697
    %v4701 = vmul.f32 %v4695, %v4698
    %v4702 = vmul.f32 %v4696, %v4699
    %4703 = vst [vmem:[#allocation5 + $0x20] sm:$0xff] %v4700
    %4704 = vst [vmem:[#allocation5 + $0x58] sm:$0xff] %v4701
    %4705 = vst [vmem:[#allocation5 + $0x90] sm:$0xf] %v4702
    %v4706 = vld [vmem:[#allocation4 + $0x30] sm:$0xff]
    %v4707 = vld [vmem:[#allocation4 + $0x70] sm:$0xff]
    %v4708 = vld [vmem:[#allocation4 + $0xb0] sm:$0xf]
    %v4709 = vadd.f32 %v4613, %v4706
    %v4710 = vadd.f32 %v4614, %v4707
    %v4711 = vadd.f32 %v4615, %v4708
    %v4712 = vmax.f32 %v4709, 0.0
    %v4713 = vmax.f32 %v4710, 0.0
    %v4714 = vmax.f32 %v4711, 0.0
    %v4715 = vld [vmem:[#allocation11 + $0x108] sm:$0xff]
    %v4716 = vld [vmem:[#allocation11 + $0x2c8] sm:$0xff]
    %v4717 = vld [vmem:[#allocation11 + $0x488] sm:$0xf]
    %v4718 = vmul.f32 %v4712, %v4715
    %v4719 = vmul.f32 %v4713, %v4716
    %v4720 = vmul.f32 %v4714, %v4717
    %4721 = vst [vmem:[#allocation5 + $0x28] sm:$0xff] %v4718
    %4722 = vst [vmem:[#allocation5 + $0x60] sm:$0xff] %v4719
    %4723 = vst [vmem:[#allocation5 + $0x98] sm:$0xf] %v4720
    %v4724 = vld [vmem:[#allocation4 + $0x38] sm:$0xff]
    %v4725 = vld [vmem:[#allocation4 + $0x78] sm:$0xff]
    %v4726 = vld [vmem:[#allocation4 + $0xb8] sm:$0xf]
    %v4727 = vadd.f32 %v4613, %v4724
    %v4728 = vadd.f32 %v4614, %v4725
    %v4729 = vadd.f32 %v4615, %v4726
    %v4730 = vmax.f32 %v4727, 0.0
    %v4731 = vmax.f32 %v4728, 0.0
    %v4732 = vmax.f32 %v4729, 0.0
    %v4733 = vld [vmem:[#allocation11 + $0x110] sm:$0xff]
    %v4734 = vld [vmem:[#allocation11 + $0x2d0] sm:$0xff]
    %v4735 = vld [vmem:[#allocation11 + $0x490] sm:$0xf]
    %v4736 = vmul.f32 %v4730, %v4733
    %v4737 = vmul.f32 %v4731, %v4734
    %v4738 = vmul.f32 %v4732, %v4735
    %4739 = vst [vmem:[#allocation5 + $0x30] sm:$0xff] %v4736
    %4740 = vst [vmem:[#allocation5 + $0x68] sm:$0xff] %v4737
    %4741 = vst [vmem:[#allocation5 + $0xa0] sm:$0xf] %v4738
    %v4742 = vld [vmem:[#allocation5] sm:$0xff]
    %v4743 = vld [vmem:[#allocation5 + $0x8] sm:$0xff]
    %v4744 = vld [vmem:[#allocation5 + $0x10] sm:$0xff]
    %v4745 = vld [vmem:[#allocation5 + $0x18] sm:$0xff]
    %v4746 = vld [vmem:[#allocation5 + $0x20] sm:$0xff]
    %v4747 = vld [vmem:[#allocation5 + $0x28] sm:$0xff]
    %v4748 = vld [vmem:[#allocation5 + $0x30] sm:$0xff]
    %v4749 = vld [vmem:[#allocation5 + $0x38] sm:$0xff]
    %v4750 = vld [vmem:[#allocation5 + $0x40] sm:$0xff]
    %v4751 = vld [vmem:[#allocation5 + $0x48] sm:$0xff]
    %v4752 = vld [vmem:[#allocation5 + $0x50] sm:$0xff]
    %v4753 = vld [vmem:[#allocation5 + $0x58] sm:$0xff]
    %v4754 = vld [vmem:[#allocation5 + $0x60] sm:$0xff]
    %v4755 = vld [vmem:[#allocation5 + $0x68] sm:$0xff]
    %v4756 = vld [vmem:[#allocation5 + $0x70] sm:$0xf]
    %v4757 = vld [vmem:[#allocation5 + $0x78] sm:$0xf]
    %v4758 = vld [vmem:[#allocation5 + $0x80] sm:$0xf]
    %v4759 = vld [vmem:[#allocation5 + $0x88] sm:$0xf]
    %v4760 = vld [vmem:[#allocation5 + $0x90] sm:$0xf]
    %v4761 = vld [vmem:[#allocation5 + $0x98] sm:$0xf]
    %v4762 = vld [vmem:[#allocation5 + $0xa0] sm:$0xf]
    %v4764 = vsel %vm520, %v4756, 0
    %v4767 = vsel %vm520, %v4757, 0
    %v4770 = vsel %vm520, %v4758, 0
    %v4773 = vsel %vm520, %v4759, 0
    %v4776 = vsel %vm520, %v4760, 0
    %v4779 = vsel %vm520, %v4761, 0
    %v4782 = vsel %vm520, %v4762, 0
    %4784 = vmatpush.msra.mxu0 0.0
    %4785 = vmatpush.msra.mxu0 0.0
    %4786 = vmatpush.msra.mxu0 0.0
    %4787 = vmatpush.msra.mxu0 0.0
    %4788 = vmatpush.msra.mxu0 0.0
    %4789 = vmatpush.msra.mxu0 0.0
    %4790 = vmatpush.msra.mxu0 0.0
    %4791 = vmatpush.msra.mxu0 0.0
    %4792 = vmatpush.msra.mxu0 0.0
    %4793 = vmatpush.msra.mxu0 0.0
    %4794 = vmatpush.msra.mxu0 0.0
    %4795 = vmatpush.msra.mxu0 0.0
    %4796 = vmatpush.msra.mxu0 0.0
    %4797 = vmatpush.msra.mxu0 %v4764
    %4798 = vmatpush.msra.mxu0 %v4749
    %4799 = vmatpush.msra.mxu0 %v4742
    %4800 = vmatmul.f32.gmra.mxu0 %v3092
    %v4801 = vpop.f32.mrf.mxu0
    %v4802 = vadd.f32 %v2928, %v4801
    %4803 = vmatmul.f32.gmra.mxu0 %v3095
    %v4804 = vpop.f32.mrf.mxu0
    %v4805 = vadd.f32 %v2933, %v4804
    %4806 = vmatmul.f32.gmra.mxu0 %v3098
    %v4807 = vpop.f32.mrf.mxu0
    %v4808 = vadd.f32 %v2938, %v4807
    %4809 = vdwg.mxu0
    %4810 = vmatpush.msra.mxu0 0.0
    %4811 = vmatpush.msra.mxu0 0.0
    %4812 = vmatpush.msra.mxu0 0.0
    %4813 = vmatpush.msra.mxu0 0.0
    %4814 = vmatpush.msra.mxu0 0.0
    %4815 = vmatpush.msra.mxu0 0.0
    %4816 = vmatpush.msra.mxu0 0.0
    %4817 = vmatpush.msra.mxu0 0.0
    %4818 = vmatpush.msra.mxu0 0.0
    %4819 = vmatpush.msra.mxu0 0.0
    %4820 = vmatpush.msra.mxu0 0.0
    %4821 = vmatpush.msra.mxu0 0.0
    %4822 = vmatpush.msra.mxu0 0.0
    %4823 = vmatpush.msra.mxu0 %v4767
    %4824 = vmatpush.msra.mxu0 %v4750
    %4825 = vmatpush.msra.mxu0 %v4743
    %4826 = vmatmul.f32.gmra.mxu0 %v3092
    %v4827 = vpop.f32.mrf.mxu0
    %v4828 = vadd.f32 %v2928, %v4827
    %4829 = vmatmul.f32.gmra.mxu0 %v3095
    %v4830 = vpop.f32.mrf.mxu0
    %v4831 = vadd.f32 %v2933, %v4830
    %4832 = vmatmul.f32.gmra.mxu0 %v3098
    %v4833 = vpop.f32.mrf.mxu0
    %v4834 = vadd.f32 %v2938, %v4833
    %4835 = vdwg.mxu0
    %4836 = vmatpush.msra.mxu0 0.0
    %4837 = vmatpush.msra.mxu0 0.0
    %4838 = vmatpush.msra.mxu0 0.0
    %4839 = vmatpush.msra.mxu0 0.0
    %4840 = vmatpush.msra.mxu0 0.0
    %4841 = vmatpush.msra.mxu0 0.0
    %4842 = vmatpush.msra.mxu0 0.0
    %4843 = vmatpush.msra.mxu0 0.0
    %4844 = vmatpush.msra.mxu0 0.0
    %4845 = vmatpush.msra.mxu0 0.0
    %4846 = vmatpush.msra.mxu0 0.0
    %4847 = vmatpush.msra.mxu0 0.0
    %4848 = vmatpush.msra.mxu0 0.0
    %4849 = vmatpush.msra.mxu0 %v4770
    %4850 = vmatpush.msra.mxu0 %v4751
    %4851 = vmatpush.msra.mxu0 %v4744
    %4852 = vmatmul.f32.gmra.mxu0 %v3092
    %v4853 = vpop.f32.mrf.mxu0
    %v4854 = vadd.f32 %v2928, %v4853
    %4855 = vmatmul.f32.gmra.mxu0 %v3095
    %v4856 = vpop.f32.mrf.mxu0
    %v4857 = vadd.f32 %v2933, %v4856
    %4858 = vmatmul.f32.gmra.mxu0 %v3098
    %v4859 = vpop.f32.mrf.mxu0
    %v4860 = vadd.f32 %v2938, %v4859
    %4861 = vdwg.mxu0
    %4862 = vmatpush.msra.mxu0 0.0
    %4863 = vmatpush.msra.mxu0 0.0
    %4864 = vmatpush.msra.mxu0 0.0
    %4865 = vmatpush.msra.mxu0 0.0
    %4866 = vmatpush.msra.mxu0 0.0
    %4867 = vmatpush.msra.mxu0 0.0
    %4868 = vmatpush.msra.mxu0 0.0
    %4869 = vmatpush.msra.mxu0 0.0
    %4870 = vmatpush.msra.mxu0 0.0
    %4871 = vmatpush.msra.mxu0 0.0
    %4872 = vmatpush.msra.mxu0 0.0
    %4873 = vmatpush.msra.mxu0 0.0
    %4874 = vmatpush.msra.mxu0 0.0
    %4875 = vmatpush.msra.mxu0 %v4773
    %4876 = vmatpush.msra.mxu0 %v4752
    %4877 = vmatpush.msra.mxu0 %v4745
    %4878 = vmatmul.f32.gmra.mxu0 %v3092
    %v4879 = vpop.f32.mrf.mxu0
    %v4880 = vadd.f32 %v2928, %v4879
    %4881 = vmatmul.f32.gmra.mxu0 %v3095
    %v4882 = vpop.f32.mrf.mxu0
    %v4883 = vadd.f32 %v2933, %v4882
    %4884 = vmatmul.f32.gmra.mxu0 %v3098
    %v4885 = vpop.f32.mrf.mxu0
    %v4886 = vadd.f32 %v2938, %v4885
    %4887 = vdwg.mxu0
    %4888 = vmatpush.msra.mxu0 0.0
    %4889 = vmatpush.msra.mxu0 0.0
    %4890 = vmatpush.msra.mxu0 0.0
    %4891 = vmatpush.msra.mxu0 0.0
    %4892 = vmatpush.msra.mxu0 0.0
    %4893 = vmatpush.msra.mxu0 0.0
    %4894 = vmatpush.msra.mxu0 0.0
    %4895 = vmatpush.msra.mxu0 0.0
    %4896 = vmatpush.msra.mxu0 0.0
    %4897 = vmatpush.msra.mxu0 0.0
    %4898 = vmatpush.msra.mxu0 0.0
    %4899 = vmatpush.msra.mxu0 0.0
    %4900 = vmatpush.msra.mxu0 0.0
    %4901 = vmatpush.msra.mxu0 %v4776
    %4902 = vmatpush.msra.mxu0 %v4753
    %4903 = vmatpush.msra.mxu0 %v4746
    %4904 = vmatmul.f32.gmra.mxu0 %v3092
    %v4905 = vpop.f32.mrf.mxu0
    %v4906 = vadd.f32 %v2928, %v4905
    %4907 = vmatmul.f32.gmra.mxu0 %v3095
    %v4908 = vpop.f32.mrf.mxu0
    %v4909 = vadd.f32 %v2933, %v4908
    %4910 = vmatmul.f32.gmra.mxu0 %v3098
    %v4911 = vpop.f32.mrf.mxu0
    %v4912 = vadd.f32 %v2938, %v4911
    %4913 = vdwg.mxu0
    %4914 = vmatpush.msra.mxu0 0.0
    %4915 = vmatpush.msra.mxu0 0.0
    %4916 = vmatpush.msra.mxu0 0.0
    %4917 = vmatpush.msra.mxu0 0.0
    %4918 = vmatpush.msra.mxu0 0.0
    %4919 = vmatpush.msra.mxu0 0.0
    %4920 = vmatpush.msra.mxu0 0.0
    %4921 = vmatpush.msra.mxu0 0.0
    %4922 = vmatpush.msra.mxu0 0.0
    %4923 = vmatpush.msra.mxu0 0.0
    %4924 = vmatpush.msra.mxu0 0.0
    %4925 = vmatpush.msra.mxu0 0.0
    %4926 = vmatpush.msra.mxu0 0.0
    %4927 = vmatpush.msra.mxu0 %v4779
    %4928 = vmatpush.msra.mxu0 %v4754
    %4929 = vmatpush.msra.mxu0 %v4747
    %4930 = vmatmul.f32.gmra.mxu0 %v3092
    %v4931 = vpop.f32.mrf.mxu0
    %v4932 = vadd.f32 %v2928, %v4931
    %4933 = vmatmul.f32.gmra.mxu0 %v3095
    %v4934 = vpop.f32.mrf.mxu0
    %v4935 = vadd.f32 %v2933, %v4934
    %4936 = vmatmul.f32.gmra.mxu0 %v3098
    %v4937 = vpop.f32.mrf.mxu0
    %v4938 = vadd.f32 %v2938, %v4937
    %4939 = vdwg.mxu0
    %4940 = vmatpush.msra.mxu0 0.0
    %4941 = vmatpush.msra.mxu0 0.0
    %4942 = vmatpush.msra.mxu0 0.0
    %4943 = vmatpush.msra.mxu0 0.0
    %4944 = vmatpush.msra.mxu0 0.0
    %4945 = vmatpush.msra.mxu0 0.0
    %4946 = vmatpush.msra.mxu0 0.0
    %4947 = vmatpush.msra.mxu0 0.0
    %4948 = vmatpush.msra.mxu0 0.0
    %4949 = vmatpush.msra.mxu0 0.0
    %4950 = vmatpush.msra.mxu0 0.0
    %4951 = vmatpush.msra.mxu0 0.0
    %4952 = vmatpush.msra.mxu0 0.0
    %4953 = vmatpush.msra.mxu0 %v4782
    %4954 = vmatpush.msra.mxu0 %v4755
    %4955 = vmatpush.msra.mxu0 %v4748
    %4956 = vmatmul.f32.gmra.mxu0 %v3092
    %v4957 = vpop.f32.mrf.mxu0
    %v4958 = vadd.f32 %v2928, %v4957
    %4959 = vmatmul.f32.gmra.mxu0 %v3095
    %v4960 = vpop.f32.mrf.mxu0
    %v4961 = vadd.f32 %v2933, %v4960
    %4962 = vmatmul.f32.gmra.mxu0 %v3098
    %v4963 = vpop.f32.mrf.mxu0
    %v4964 = vadd.f32 %v2938, %v4963
    %4965 = vdwg.mxu0
    %v4966 = vmax.f32 %v4802, 0.0
    %v4967 = vmax.f32 %v4828, 0.0
    %v4968 = vmax.f32 %v4854, 0.0
    %v4969 = vmax.f32 %v4880, 0.0
    %v4970 = vmax.f32 %v4906, 0.0
    %v4971 = vmax.f32 %v4932, 0.0
    %v4972 = vmax.f32 %v4958, 0.0
    %v4973 = vmax.f32 %v4805, 0.0
    %v4974 = vmax.f32 %v4831, 0.0
    %v4975 = vmax.f32 %v4857, 0.0
    %v4976 = vmax.f32 %v4883, 0.0
    %v4977 = vmax.f32 %v4909, 0.0
    %v4978 = vmax.f32 %v4935, 0.0
    %v4979 = vmax.f32 %v4961, 0.0
    %v4980 = vmax.f32 %v4808, 0.0
    %v4981 = vmax.f32 %v4834, 0.0
    %v4982 = vmax.f32 %v4860, 0.0
    %v4983 = vmax.f32 %v4886, 0.0
    %v4984 = vmax.f32 %v4912, 0.0
    %v4985 = vmax.f32 %v4938, 0.0
    %v4986 = vmax.f32 %v4964, 0.0
    %v4987 = vadd.f32 %v4966, %v4967
    %v4988 = vadd.f32 %v4973, %v4974
    %v4989 = vadd.f32 %v4980, %v4981
    %v4990 = vadd.f32 %v4987, %v4968
    %v4991 = vadd.f32 %v4988, %v4975
    %v4992 = vadd.f32 %v4989, %v4982
    %v4993 = vadd.f32 %v4990, %v4969
    %v4994 = vadd.f32 %v4991, %v4976
    %v4995 = vadd.f32 %v4992, %v4983
    %v4996 = vadd.f32 %v4993, %v4970
    %v4997 = vadd.f32 %v4994, %v4977
    %v4998 = vadd.f32 %v4995, %v4984
    %v4999 = vadd.f32 %v4996, %v4971
    %v5000 = vadd.f32 %v4997, %v4978
    %v5001 = vadd.f32 %v4998, %v4985
    %v5002 = vadd.f32 %v4999, %v4972
    %v5003 = vadd.f32 %v5000, %v4979
    %v5004 = vadd.f32 %v5001, %v4986
    %v5006 = vsel %vm520, %v5004, 0
    %5008 = vmatpush.msra.mxu0 0.0
    %5009 = vmatpush.msra.mxu0 0.0
    %5010 = vmatpush.msra.mxu0 0.0
    %5011 = vmatpush.msra.mxu0 0.0
    %5012 = vmatpush.msra.mxu0 0.0
    %5013 = vmatpush.msra.mxu0 0.0
    %5014 = vmatpush.msra.mxu0 0.0
    %5015 = vmatpush.msra.mxu0 0.0
    %5016 = vmatpush.msra.mxu0 0.0
    %5017 = vmatpush.msra.mxu0 0.0
    %5018 = vmatpush.msra.mxu0 0.0
    %5019 = vmatpush.msra.mxu0 0.0
    %5020 = vmatpush.msra.mxu0 0.0
    %5021 = vmatpush.msra.mxu0 %v5006
    %5022 = vmatpush.msra.mxu0 %v5003
    %5023 = vmatpush.msra.mxu0 %v5002
    %5024 = vmatmul.f32.gmra.mxu0 %v3343
    %v5025 = vpop.f32.mrf.mxu0
    %v5026 = vadd.f32 0.0, %v5025
    %5027 = vdwg.mxu0
    %v5028 = vld [vmem:[#allocation3 + $0x28] sm:$0xff]
    %v5029 = vld [vmem:[#allocation3 + $0x68] sm:$0xff]
    %v5030 = vld [vmem:[#allocation3 + $0xa8] sm:$0xf]
    %v5031 = vld [vmem:[#allocation4] sm:$0xff]
    %v5032 = vld [vmem:[#allocation4 + $0x40] sm:$0xff]
    %v5033 = vld [vmem:[#allocation4 + $0x80] sm:$0xf]
    %v5034 = vadd.f32 %v5028, %v5031
    %v5035 = vadd.f32 %v5029, %v5032
    %v5036 = vadd.f32 %v5030, %v5033
    %v5037 = vmax.f32 %v5034, 0.0
    %v5038 = vmax.f32 %v5035, 0.0
    %v5039 = vmax.f32 %v5036, 0.0
    %v5040 = vld [vmem:[#allocation11 + $0x118] sm:$0xff]
    %v5041 = vld [vmem:[#allocation11 + $0x2d8] sm:$0xff]
    %v5042 = vld [vmem:[#allocation11 + $0x498] sm:$0xf]
    %v5043 = vmul.f32 %v5037, %v5040
    %v5044 = vmul.f32 %v5038, %v5041
    %v5045 = vmul.f32 %v5039, %v5042
    %5046 = vst [vmem:[#allocation5] sm:$0xff] %v5043
    %5047 = vst [vmem:[#allocation5 + $0x38] sm:$0xff] %v5044
    %5048 = vst [vmem:[#allocation5 + $0x70] sm:$0xf] %v5045
    %v5049 = vld [vmem:[#allocation4 + $0x8] sm:$0xff]
    %v5050 = vld [vmem:[#allocation4 + $0x48] sm:$0xff]
    %v5051 = vld [vmem:[#allocation4 + $0x88] sm:$0xf]
    %v5052 = vadd.f32 %v5028, %v5049
    %v5053 = vadd.f32 %v5029, %v5050
    %v5054 = vadd.f32 %v5030, %v5051
    %v5055 = vmax.f32 %v5052, 0.0
    %v5056 = vmax.f32 %v5053, 0.0
    %v5057 = vmax.f32 %v5054, 0.0
    %v5058 = vld [vmem:[#allocation11 + $0x120] sm:$0xff]
    %v5059 = vld [vmem:[#allocation11 + $0x2e0] sm:$0xff]
    %v5060 = vld [vmem:[#allocation11 + $0x4a0] sm:$0xf]
    %v5061 = vmul.f32 %v5055, %v5058
    %v5062 = vmul.f32 %v5056, %v5059
    %v5063 = vmul.f32 %v5057, %v5060
    %5064 = vst [vmem:[#allocation5 + $0x8] sm:$0xff] %v5061
    %5065 = vst [vmem:[#allocation5 + $0x40] sm:$0xff] %v5062
    %5066 = vst [vmem:[#allocation5 + $0x78] sm:$0xf] %v5063
    %v5067 = vld [vmem:[#allocation4 + $0x10] sm:$0xff]
    %v5068 = vld [vmem:[#allocation4 + $0x50] sm:$0xff]
    %v5069 = vld [vmem:[#allocation4 + $0x90] sm:$0xf]
    %v5070 = vadd.f32 %v5028, %v5067
    %v5071 = vadd.f32 %v5029, %v5068
    %v5072 = vadd.f32 %v5030, %v5069
    %v5073 = vmax.f32 %v5070, 0.0
    %v5074 = vmax.f32 %v5071, 0.0
    %v5075 = vmax.f32 %v5072, 0.0
    %v5076 = vld [vmem:[#allocation11 + $0x128] sm:$0xff]
    %v5077 = vld [vmem:[#allocation11 + $0x2e8] sm:$0xff]
    %v5078 = vld [vmem:[#allocation11 + $0x4a8] sm:$0xf]
    %v5079 = vmul.f32 %v5073, %v5076
    %v5080 = vmul.f32 %v5074, %v5077
    %v5081 = vmul.f32 %v5075, %v5078
    %5082 = vst [vmem:[#allocation5 + $0x10] sm:$0xff] %v5079
    %5083 = vst [vmem:[#allocation5 + $0x48] sm:$0xff] %v5080
    %5084 = vst [vmem:[#allocation5 + $0x80] sm:$0xf] %v5081
    %v5085 = vld [vmem:[#allocation4 + $0x18] sm:$0xff]
    %v5086 = vld [vmem:[#allocation4 + $0x58] sm:$0xff]
    %v5087 = vld [vmem:[#allocation4 + $0x98] sm:$0xf]
    %v5088 = vadd.f32 %v5028, %v5085
    %v5089 = vadd.f32 %v5029, %v5086
    %v5090 = vadd.f32 %v5030, %v5087
    %v5091 = vmax.f32 %v5088, 0.0
    %v5092 = vmax.f32 %v5089, 0.0
    %v5093 = vmax.f32 %v5090, 0.0
    %v5094 = vld [vmem:[#allocation11 + $0x130] sm:$0xff]
    %v5095 = vld [vmem:[#allocation11 + $0x2f0] sm:$0xff]
    %v5096 = vld [vmem:[#allocation11 + $0x4b0] sm:$0xf]
    %v5097 = vmul.f32 %v5091, %v5094
    %v5098 = vmul.f32 %v5092, %v5095
    %v5099 = vmul.f32 %v5093, %v5096
    %5100 = vst [vmem:[#allocation5 + $0x18] sm:$0xff] %v5097
    %5101 = vst [vmem:[#allocation5 + $0x50] sm:$0xff] %v5098
    %5102 = vst [vmem:[#allocation5 + $0x88] sm:$0xf] %v5099
    %v5103 = vld [vmem:[#allocation4 + $0x20] sm:$0xff]
    %v5104 = vld [vmem:[#allocation4 + $0x60] sm:$0xff]
    %v5105 = vld [vmem:[#allocation4 + $0xa0] sm:$0xf]
    %v5106 = vadd.f32 %v5028, %v5103
    %v5107 = vadd.f32 %v5029, %v5104
    %v5108 = vadd.f32 %v5030, %v5105
    %v5109 = vmax.f32 %v5106, 0.0
    %v5110 = vmax.f32 %v5107, 0.0
    %v5111 = vmax.f32 %v5108, 0.0
    %v5112 = vld [vmem:[#allocation11 + $0x138] sm:$0xff]
    %v5113 = vld [vmem:[#allocation11 + $0x2f8] sm:$0xff]
    %v5114 = vld [vmem:[#allocation11 + $0x4b8] sm:$0xf]
    %v5115 = vmul.f32 %v5109, %v5112
    %v5116 = vmul.f32 %v5110, %v5113
    %v5117 = vmul.f32 %v5111, %v5114
    %5118 = vst [vmem:[#allocation5 + $0x20] sm:$0xff] %v5115
    %5119 = vst [vmem:[#allocation5 + $0x58] sm:$0xff] %v5116
    %5120 = vst [vmem:[#allocation5 + $0x90] sm:$0xf] %v5117
    %v5121 = vld [vmem:[#allocation4 + $0x30] sm:$0xff]
    %v5122 = vld [vmem:[#allocation4 + $0x70] sm:$0xff]
    %v5123 = vld [vmem:[#allocation4 + $0xb0] sm:$0xf]
    %v5124 = vadd.f32 %v5028, %v5121
    %v5125 = vadd.f32 %v5029, %v5122
    %v5126 = vadd.f32 %v5030, %v5123
    %v5127 = vmax.f32 %v5124, 0.0
    %v5128 = vmax.f32 %v5125, 0.0
    %v5129 = vmax.f32 %v5126, 0.0
    %v5130 = vld [vmem:[#allocation11 + $0x140] sm:$0xff]
    %v5131 = vld [vmem:[#allocation11 + $0x300] sm:$0xff]
    %v5132 = vld [vmem:[#allocation11 + $0x4c0] sm:$0xf]
    %v5133 = vmul.f32 %v5127, %v5130
    %v5134 = vmul.f32 %v5128, %v5131
    %v5135 = vmul.f32 %v5129, %v5132
    %5136 = vst [vmem:[#allocation5 + $0x28] sm:$0xff] %v5133
    %5137 = vst [vmem:[#allocation5 + $0x60] sm:$0xff] %v5134
    %5138 = vst [vmem:[#allocation5 + $0x98] sm:$0xf] %v5135
    %v5139 = vld [vmem:[#allocation4 + $0x38] sm:$0xff]
    %v5140 = vld [vmem:[#allocation4 + $0x78] sm:$0xff]
    %v5141 = vld [vmem:[#allocation4 + $0xb8] sm:$0xf]
    %v5142 = vadd.f32 %v5028, %v5139
    %v5143 = vadd.f32 %v5029, %v5140
    %v5144 = vadd.f32 %v5030, %v5141
    %v5145 = vmax.f32 %v5142, 0.0
    %v5146 = vmax.f32 %v5143, 0.0
    %v5147 = vmax.f32 %v5144, 0.0
    %v5148 = vld [vmem:[#allocation11 + $0x148] sm:$0xff]
    %v5149 = vld [vmem:[#allocation11 + $0x308] sm:$0xff]
    %v5150 = vld [vmem:[#allocation11 + $0x4c8] sm:$0xf]
    %v5151 = vmul.f32 %v5145, %v5148
    %v5152 = vmul.f32 %v5146, %v5149
    %v5153 = vmul.f32 %v5147, %v5150
    %5154 = vst [vmem:[#allocation5 + $0x30] sm:$0xff] %v5151
    %5155 = vst [vmem:[#allocation5 + $0x68] sm:$0xff] %v5152
    %5156 = vst [vmem:[#allocation5 + $0xa0] sm:$0xf] %v5153
    %v5157 = vld [vmem:[#allocation5] sm:$0xff]
    %v5158 = vld [vmem:[#allocation5 + $0x8] sm:$0xff]
    %v5159 = vld [vmem:[#allocation5 + $0x10] sm:$0xff]
    %v5160 = vld [vmem:[#allocation5 + $0x18] sm:$0xff]
    %v5161 = vld [vmem:[#allocation5 + $0x20] sm:$0xff]
    %v5162 = vld [vmem:[#allocation5 + $0x28] sm:$0xff]
    %v5163 = vld [vmem:[#allocation5 + $0x30] sm:$0xff]
    %v5164 = vld [vmem:[#allocation5 + $0x38] sm:$0xff]
    %v5165 = vld [vmem:[#allocation5 + $0x40] sm:$0xff]
    %v5166 = vld [vmem:[#allocation5 + $0x48] sm:$0xff]
    %v5167 = vld [vmem:[#allocation5 + $0x50] sm:$0xff]
    %v5168 = vld [vmem:[#allocation5 + $0x58] sm:$0xff]
    %v5169 = vld [vmem:[#allocation5 + $0x60] sm:$0xff]
    %v5170 = vld [vmem:[#allocation5 + $0x68] sm:$0xff]
    %v5171 = vld [vmem:[#allocation5 + $0x70] sm:$0xf]
    %v5172 = vld [vmem:[#allocation5 + $0x78] sm:$0xf]
    %v5173 = vld [vmem:[#allocation5 + $0x80] sm:$0xf]
    %v5174 = vld [vmem:[#allocation5 + $0x88] sm:$0xf]
    %v5175 = vld [vmem:[#allocation5 + $0x90] sm:$0xf]
    %v5176 = vld [vmem:[#allocation5 + $0x98] sm:$0xf]
    %v5177 = vld [vmem:[#allocation5 + $0xa0] sm:$0xf]
    %v5179 = vsel %vm520, %v5171, 0
    %v5182 = vsel %vm520, %v5172, 0
    %v5185 = vsel %vm520, %v5173, 0
    %v5188 = vsel %vm520, %v5174, 0
    %v5191 = vsel %vm520, %v5175, 0
    %v5194 = vsel %vm520, %v5176, 0
    %v5197 = vsel %vm520, %v5177, 0
    %5199 = vmatpush.msra.mxu0 0.0
    %5200 = vmatpush.msra.mxu0 0.0
    %5201 = vmatpush.msra.mxu0 0.0
    %5202 = vmatpush.msra.mxu0 0.0
    %5203 = vmatpush.msra.mxu0 0.0
    %5204 = vmatpush.msra.mxu0 0.0
    %5205 = vmatpush.msra.mxu0 0.0
    %5206 = vmatpush.msra.mxu0 0.0
    %5207 = vmatpush.msra.mxu0 0.0
    %5208 = vmatpush.msra.mxu0 0.0
    %5209 = vmatpush.msra.mxu0 0.0
    %5210 = vmatpush.msra.mxu0 0.0
    %5211 = vmatpush.msra.mxu0 0.0
    %5212 = vmatpush.msra.mxu0 %v5179
    %5213 = vmatpush.msra.mxu0 %v5164
    %5214 = vmatpush.msra.mxu0 %v5157
    %5215 = vmatmul.f32.gmra.mxu0 %v3092
    %v5216 = vpop.f32.mrf.mxu0
    %v5217 = vadd.f32 %v2928, %v5216
    %5218 = vmatmul.f32.gmra.mxu0 %v3095
    %v5219 = vpop.f32.mrf.mxu0
    %v5220 = vadd.f32 %v2933, %v5219
    %5221 = vmatmul.f32.gmra.mxu0 %v3098
    %v5222 = vpop.f32.mrf.mxu0
    %v5223 = vadd.f32 %v2938, %v5222
    %5224 = vdwg.mxu0
    %5225 = vmatpush.msra.mxu0 0.0
    %5226 = vmatpush.msra.mxu0 0.0
    %5227 = vmatpush.msra.mxu0 0.0
    %5228 = vmatpush.msra.mxu0 0.0
    %5229 = vmatpush.msra.mxu0 0.0
    %5230 = vmatpush.msra.mxu0 0.0
    %5231 = vmatpush.msra.mxu0 0.0
    %5232 = vmatpush.msra.mxu0 0.0
    %5233 = vmatpush.msra.mxu0 0.0
    %5234 = vmatpush.msra.mxu0 0.0
    %5235 = vmatpush.msra.mxu0 0.0
    %5236 = vmatpush.msra.mxu0 0.0
    %5237 = vmatpush.msra.mxu0 0.0
    %5238 = vmatpush.msra.mxu0 %v5182
    %5239 = vmatpush.msra.mxu0 %v5165
    %5240 = vmatpush.msra.mxu0 %v5158
    %5241 = vmatmul.f32.gmra.mxu0 %v3092
    %v5242 = vpop.f32.mrf.mxu0
    %v5243 = vadd.f32 %v2928, %v5242
    %5244 = vmatmul.f32.gmra.mxu0 %v3095
    %v5245 = vpop.f32.mrf.mxu0
    %v5246 = vadd.f32 %v2933, %v5245
    %5247 = vmatmul.f32.gmra.mxu0 %v3098
    %v5248 = vpop.f32.mrf.mxu0
    %v5249 = vadd.f32 %v2938, %v5248
    %5250 = vdwg.mxu0
    %5251 = vmatpush.msra.mxu0 0.0
    %5252 = vmatpush.msra.mxu0 0.0
    %5253 = vmatpush.msra.mxu0 0.0
    %5254 = vmatpush.msra.mxu0 0.0
    %5255 = vmatpush.msra.mxu0 0.0
    %5256 = vmatpush.msra.mxu0 0.0
    %5257 = vmatpush.msra.mxu0 0.0
    %5258 = vmatpush.msra.mxu0 0.0
    %5259 = vmatpush.msra.mxu0 0.0
    %5260 = vmatpush.msra.mxu0 0.0
    %5261 = vmatpush.msra.mxu0 0.0
    %5262 = vmatpush.msra.mxu0 0.0
    %5263 = vmatpush.msra.mxu0 0.0
    %5264 = vmatpush.msra.mxu0 %v5185
    %5265 = vmatpush.msra.mxu0 %v5166
    %5266 = vmatpush.msra.mxu0 %v5159
    %5267 = vmatmul.f32.gmra.mxu0 %v3092
    %v5268 = vpop.f32.mrf.mxu0
    %v5269 = vadd.f32 %v2928, %v5268
    %5270 = vmatmul.f32.gmra.mxu0 %v3095
    %v5271 = vpop.f32.mrf.mxu0
    %v5272 = vadd.f32 %v2933, %v5271
    %5273 = vmatmul.f32.gmra.mxu0 %v3098
    %v5274 = vpop.f32.mrf.mxu0
    %v5275 = vadd.f32 %v2938, %v5274
    %5276 = vdwg.mxu0
    %5277 = vmatpush.msra.mxu0 0.0
    %5278 = vmatpush.msra.mxu0 0.0
    %5279 = vmatpush.msra.mxu0 0.0
    %5280 = vmatpush.msra.mxu0 0.0
    %5281 = vmatpush.msra.mxu0 0.0
    %5282 = vmatpush.msra.mxu0 0.0
    %5283 = vmatpush.msra.mxu0 0.0
    %5284 = vmatpush.msra.mxu0 0.0
    %5285 = vmatpush.msra.mxu0 0.0
    %5286 = vmatpush.msra.mxu0 0.0
    %5287 = vmatpush.msra.mxu0 0.0
    %5288 = vmatpush.msra.mxu0 0.0
    %5289 = vmatpush.msra.mxu0 0.0
    %5290 = vmatpush.msra.mxu0 %v5188
    %5291 = vmatpush.msra.mxu0 %v5167
    %5292 = vmatpush.msra.mxu0 %v5160
    %5293 = vmatmul.f32.gmra.mxu0 %v3092
    %v5294 = vpop.f32.mrf.mxu0
    %v5295 = vadd.f32 %v2928, %v5294
    %5296 = vmatmul.f32.gmra.mxu0 %v3095
    %v5297 = vpop.f32.mrf.mxu0
    %v5298 = vadd.f32 %v2933, %v5297
    %5299 = vmatmul.f32.gmra.mxu0 %v3098
    %v5300 = vpop.f32.mrf.mxu0
    %v5301 = vadd.f32 %v2938, %v5300
    %5302 = vdwg.mxu0
    %5303 = vmatpush.msra.mxu0 0.0
    %5304 = vmatpush.msra.mxu0 0.0
    %5305 = vmatpush.msra.mxu0 0.0
    %5306 = vmatpush.msra.mxu0 0.0
    %5307 = vmatpush.msra.mxu0 0.0
    %5308 = vmatpush.msra.mxu0 0.0
    %5309 = vmatpush.msra.mxu0 0.0
    %5310 = vmatpush.msra.mxu0 0.0
    %5311 = vmatpush.msra.mxu0 0.0
    %5312 = vmatpush.msra.mxu0 0.0
    %5313 = vmatpush.msra.mxu0 0.0
    %5314 = vmatpush.msra.mxu0 0.0
    %5315 = vmatpush.msra.mxu0 0.0
    %5316 = vmatpush.msra.mxu0 %v5191
    %5317 = vmatpush.msra.mxu0 %v5168
    %5318 = vmatpush.msra.mxu0 %v5161
    %5319 = vmatmul.f32.gmra.mxu0 %v3092
    %v5320 = vpop.f32.mrf.mxu0
    %v5321 = vadd.f32 %v2928, %v5320
    %5322 = vmatmul.f32.gmra.mxu0 %v3095
    %v5323 = vpop.f32.mrf.mxu0
    %v5324 = vadd.f32 %v2933, %v5323
    %5325 = vmatmul.f32.gmra.mxu0 %v3098
    %v5326 = vpop.f32.mrf.mxu0
    %v5327 = vadd.f32 %v2938, %v5326
    %5328 = vdwg.mxu0
    %5329 = vmatpush.msra.mxu0 0.0
    %5330 = vmatpush.msra.mxu0 0.0
    %5331 = vmatpush.msra.mxu0 0.0
    %5332 = vmatpush.msra.mxu0 0.0
    %5333 = vmatpush.msra.mxu0 0.0
    %5334 = vmatpush.msra.mxu0 0.0
    %5335 = vmatpush.msra.mxu0 0.0
    %5336 = vmatpush.msra.mxu0 0.0
    %5337 = vmatpush.msra.mxu0 0.0
    %5338 = vmatpush.msra.mxu0 0.0
    %5339 = vmatpush.msra.mxu0 0.0
    %5340 = vmatpush.msra.mxu0 0.0
    %5341 = vmatpush.msra.mxu0 0.0
    %5342 = vmatpush.msra.mxu0 %v5194
    %5343 = vmatpush.msra.mxu0 %v5169
    %5344 = vmatpush.msra.mxu0 %v5162
    %5345 = vmatmul.f32.gmra.mxu0 %v3092
    %v5346 = vpop.f32.mrf.mxu0
    %v5347 = vadd.f32 %v2928, %v5346
    %5348 = vmatmul.f32.gmra.mxu0 %v3095
    %v5349 = vpop.f32.mrf.mxu0
    %v5350 = vadd.f32 %v2933, %v5349
    %5351 = vmatmul.f32.gmra.mxu0 %v3098
    %v5352 = vpop.f32.mrf.mxu0
    %v5353 = vadd.f32 %v2938, %v5352
    %5354 = vdwg.mxu0
    %5355 = vmatpush.msra.mxu0 0.0
    %5356 = vmatpush.msra.mxu0 0.0
    %5357 = vmatpush.msra.mxu0 0.0
    %5358 = vmatpush.msra.mxu0 0.0
    %5359 = vmatpush.msra.mxu0 0.0
    %5360 = vmatpush.msra.mxu0 0.0
    %5361 = vmatpush.msra.mxu0 0.0
    %5362 = vmatpush.msra.mxu0 0.0
    %5363 = vmatpush.msra.mxu0 0.0
    %5364 = vmatpush.msra.mxu0 0.0
    %5365 = vmatpush.msra.mxu0 0.0
    %5366 = vmatpush.msra.mxu0 0.0
    %5367 = vmatpush.msra.mxu0 0.0
    %5368 = vmatpush.msra.mxu0 %v5197
    %5369 = vmatpush.msra.mxu0 %v5170
    %5370 = vmatpush.msra.mxu0 %v5163
    %5371 = vmatmul.f32.gmra.mxu0 %v3092
    %v5372 = vpop.f32.mrf.mxu0
    %v5373 = vadd.f32 %v2928, %v5372
    %5374 = vmatmul.f32.gmra.mxu0 %v3095
    %v5375 = vpop.f32.mrf.mxu0
    %v5376 = vadd.f32 %v2933, %v5375
    %5377 = vmatmul.f32.gmra.mxu0 %v3098
    %v5378 = vpop.f32.mrf.mxu0
    %v5379 = vadd.f32 %v2938, %v5378
    %5380 = vdwg.mxu0
    %v5381 = vmax.f32 %v5217, 0.0
    %v5382 = vmax.f32 %v5243, 0.0
    %v5383 = vmax.f32 %v5269, 0.0
    %v5384 = vmax.f32 %v5295, 0.0
    %v5385 = vmax.f32 %v5321, 0.0
    %v5386 = vmax.f32 %v5347, 0.0
    %v5387 = vmax.f32 %v5373, 0.0
    %v5388 = vmax.f32 %v5220, 0.0
    %v5389 = vmax.f32 %v5246, 0.0
    %v5390 = vmax.f32 %v5272, 0.0
    %v5391 = vmax.f32 %v5298, 0.0
    %v5392 = vmax.f32 %v5324, 0.0
    %v5393 = vmax.f32 %v5350, 0.0
    %v5394 = vmax.f32 %v5376, 0.0
    %v5395 = vmax.f32 %v5223, 0.0
    %v5396 = vmax.f32 %v5249, 0.0
    %v5397 = vmax.f32 %v5275, 0.0
    %v5398 = vmax.f32 %v5301, 0.0
    %v5399 = vmax.f32 %v5327, 0.0
    %v5400 = vmax.f32 %v5353, 0.0
    %v5401 = vmax.f32 %v5379, 0.0
    %v5402 = vadd.f32 %v5381, %v5382
    %v5403 = vadd.f32 %v5388, %v5389
    %v5404 = vadd.f32 %v5395, %v5396
    %v5405 = vadd.f32 %v5402, %v5383
    %v5406 = vadd.f32 %v5403, %v5390
    %v5407 = vadd.f32 %v5404, %v5397
    %v5408 = vadd.f32 %v5405, %v5384
    %v5409 = vadd.f32 %v5406, %v5391
    %v5410 = vadd.f32 %v5407, %v5398
    %v5411 = vadd.f32 %v5408, %v5385
    %v5412 = vadd.f32 %v5409, %v5392
    %v5413 = vadd.f32 %v5410, %v5399
    %v5414 = vadd.f32 %v5411, %v5386
    %v5415 = vadd.f32 %v5412, %v5393
    %v5416 = vadd.f32 %v5413, %v5400
    %v5417 = vadd.f32 %v5414, %v5387
    %v5418 = vadd.f32 %v5415, %v5394
    %v5419 = vadd.f32 %v5416, %v5401
    %v5421 = vsel %vm520, %v5419, 0
    %5423 = vmatpush.msra.mxu0 0.0
    %5424 = vmatpush.msra.mxu0 0.0
    %5425 = vmatpush.msra.mxu0 0.0
    %5426 = vmatpush.msra.mxu0 0.0
    %5427 = vmatpush.msra.mxu0 0.0
    %5428 = vmatpush.msra.mxu0 0.0
    %5429 = vmatpush.msra.mxu0 0.0
    %5430 = vmatpush.msra.mxu0 0.0
    %5431 = vmatpush.msra.mxu0 0.0
    %5432 = vmatpush.msra.mxu0 0.0
    %5433 = vmatpush.msra.mxu0 0.0
    %5434 = vmatpush.msra.mxu0 0.0
    %5435 = vmatpush.msra.mxu0 0.0
    %5436 = vmatpush.msra.mxu0 %v5421
    %5437 = vmatpush.msra.mxu0 %v5418
    %5438 = vmatpush.msra.mxu0 %v5417
    %5439 = vmatmul.f32.gmra.mxu0 %v3343
    %v5440 = vpop.f32.mrf.mxu0
    %v5441 = vadd.f32 0.0, %v5440
    %5442 = vdwg.mxu0
    %v5443 = vld [vmem:[#allocation3 + $0x30] sm:$0xff]
    %v5444 = vld [vmem:[#allocation3 + $0x70] sm:$0xff]
    %v5445 = vld [vmem:[#allocation3 + $0xb0] sm:$0xf]
    %v5446 = vld [vmem:[#allocation4] sm:$0xff]
    %v5447 = vld [vmem:[#allocation4 + $0x40] sm:$0xff]
    %v5448 = vld [vmem:[#allocation4 + $0x80] sm:$0xf]
    %v5449 = vadd.f32 %v5443, %v5446
    %v5450 = vadd.f32 %v5444, %v5447
    %v5451 = vadd.f32 %v5445, %v5448
    %v5452 = vmax.f32 %v5449, 0.0
    %v5453 = vmax.f32 %v5450, 0.0
    %v5454 = vmax.f32 %v5451, 0.0
    %v5455 = vld [vmem:[#allocation11 + $0x150] sm:$0xff]
    %v5456 = vld [vmem:[#allocation11 + $0x310] sm:$0xff]
    %v5457 = vld [vmem:[#allocation11 + $0x4d0] sm:$0xf]
    %v5458 = vmul.f32 %v5452, %v5455
    %v5459 = vmul.f32 %v5453, %v5456
    %v5460 = vmul.f32 %v5454, %v5457
    %5461 = vst [vmem:[#allocation5] sm:$0xff] %v5458
    %5462 = vst [vmem:[#allocation5 + $0x38] sm:$0xff] %v5459
    %5463 = vst [vmem:[#allocation5 + $0x70] sm:$0xf] %v5460
    %v5464 = vld [vmem:[#allocation4 + $0x8] sm:$0xff]
    %v5465 = vld [vmem:[#allocation4 + $0x48] sm:$0xff]
    %v5466 = vld [vmem:[#allocation4 + $0x88] sm:$0xf]
    %v5467 = vadd.f32 %v5443, %v5464
    %v5468 = vadd.f32 %v5444, %v5465
    %v5469 = vadd.f32 %v5445, %v5466
    %v5470 = vmax.f32 %v5467, 0.0
    %v5471 = vmax.f32 %v5468, 0.0
    %v5472 = vmax.f32 %v5469, 0.0
    %v5473 = vld [vmem:[#allocation11 + $0x158] sm:$0xff]
    %v5474 = vld [vmem:[#allocation11 + $0x318] sm:$0xff]
    %v5475 = vld [vmem:[#allocation11 + $0x4d8] sm:$0xf]
    %v5476 = vmul.f32 %v5470, %v5473
    %v5477 = vmul.f32 %v5471, %v5474
    %v5478 = vmul.f32 %v5472, %v5475
    %5479 = vst [vmem:[#allocation5 + $0x8] sm:$0xff] %v5476
    %5480 = vst [vmem:[#allocation5 + $0x40] sm:$0xff] %v5477
    %5481 = vst [vmem:[#allocation5 + $0x78] sm:$0xf] %v5478
    %v5482 = vld [vmem:[#allocation4 + $0x10] sm:$0xff]
    %v5483 = vld [vmem:[#allocation4 + $0x50] sm:$0xff]
    %v5484 = vld [vmem:[#allocation4 + $0x90] sm:$0xf]
    %v5485 = vadd.f32 %v5443, %v5482
    %v5486 = vadd.f32 %v5444, %v5483
    %v5487 = vadd.f32 %v5445, %v5484
    %v5488 = vmax.f32 %v5485, 0.0
    %v5489 = vmax.f32 %v5486, 0.0
    %v5490 = vmax.f32 %v5487, 0.0
    %v5491 = vld [vmem:[#allocation11 + $0x160] sm:$0xff]
    %v5492 = vld [vmem:[#allocation11 + $0x320] sm:$0xff]
    %v5493 = vld [vmem:[#allocation11 + $0x4e0] sm:$0xf]
    %v5494 = vmul.f32 %v5488, %v5491
    %v5495 = vmul.f32 %v5489, %v5492
    %v5496 = vmul.f32 %v5490, %v5493
    %5497 = vst [vmem:[#allocation5 + $0x10] sm:$0xff] %v5494
    %5498 = vst [vmem:[#allocation5 + $0x48] sm:$0xff] %v5495
    %5499 = vst [vmem:[#allocation5 + $0x80] sm:$0xf] %v5496
    %v5500 = vld [vmem:[#allocation4 + $0x18] sm:$0xff]
    %v5501 = vld [vmem:[#allocation4 + $0x58] sm:$0xff]
    %v5502 = vld [vmem:[#allocation4 + $0x98] sm:$0xf]
    %v5503 = vadd.f32 %v5443, %v5500
    %v5504 = vadd.f32 %v5444, %v5501
    %v5505 = vadd.f32 %v5445, %v5502
    %v5506 = vmax.f32 %v5503, 0.0
    %v5507 = vmax.f32 %v5504, 0.0
    %v5508 = vmax.f32 %v5505, 0.0
    %v5509 = vld [vmem:[#allocation11 + $0x168] sm:$0xff]
    %v5510 = vld [vmem:[#allocation11 + $0x328] sm:$0xff]
    %v5511 = vld [vmem:[#allocation11 + $0x4e8] sm:$0xf]
    %v5512 = vmul.f32 %v5506, %v5509
    %v5513 = vmul.f32 %v5507, %v5510
    %v5514 = vmul.f32 %v5508, %v5511
    %5515 = vst [vmem:[#allocation5 + $0x18] sm:$0xff] %v5512
    %5516 = vst [vmem:[#allocation5 + $0x50] sm:$0xff] %v5513
    %5517 = vst [vmem:[#allocation5 + $0x88] sm:$0xf] %v5514
    %v5518 = vld [vmem:[#allocation4 + $0x20] sm:$0xff]
    %v5519 = vld [vmem:[#allocation4 + $0x60] sm:$0xff]
    %v5520 = vld [vmem:[#allocation4 + $0xa0] sm:$0xf]
    %v5521 = vadd.f32 %v5443, %v5518
    %v5522 = vadd.f32 %v5444, %v5519
    %v5523 = vadd.f32 %v5445, %v5520
    %v5524 = vmax.f32 %v5521, 0.0
    %v5525 = vmax.f32 %v5522, 0.0
    %v5526 = vmax.f32 %v5523, 0.0
    %v5527 = vld [vmem:[#allocation11 + $0x170] sm:$0xff]
    %v5528 = vld [vmem:[#allocation11 + $0x330] sm:$0xff]
    %v5529 = vld [vmem:[#allocation11 + $0x4f0] sm:$0xf]
    %v5530 = vmul.f32 %v5524, %v5527
    %v5531 = vmul.f32 %v5525, %v5528
    %v5532 = vmul.f32 %v5526, %v5529
    %5533 = vst [vmem:[#allocation5 + $0x20] sm:$0xff] %v5530
    %5534 = vst [vmem:[#allocation5 + $0x58] sm:$0xff] %v5531
    %5535 = vst [vmem:[#allocation5 + $0x90] sm:$0xf] %v5532
    %v5536 = vld [vmem:[#allocation4 + $0x28] sm:$0xff]
    %v5537 = vld [vmem:[#allocation4 + $0x68] sm:$0xff]
    %v5538 = vld [vmem:[#allocation4 + $0xa8] sm:$0xf]
    %v5539 = vadd.f32 %v5443, %v5536
    %v5540 = vadd.f32 %v5444, %v5537
    %v5541 = vadd.f32 %v5445, %v5538
    %v5542 = vmax.f32 %v5539, 0.0
    %v5543 = vmax.f32 %v5540, 0.0
    %v5544 = vmax.f32 %v5541, 0.0
    %v5545 = vld [vmem:[#allocation11 + $0x178] sm:$0xff]
    %v5546 = vld [vmem:[#allocation11 + $0x338] sm:$0xff]
    %v5547 = vld [vmem:[#allocation11 + $0x4f8] sm:$0xf]
    %v5548 = vmul.f32 %v5542, %v5545
    %v5549 = vmul.f32 %v5543, %v5546
    %v5550 = vmul.f32 %v5544, %v5547
    %5551 = vst [vmem:[#allocation5 + $0x28] sm:$0xff] %v5548
    %5552 = vst [vmem:[#allocation5 + $0x60] sm:$0xff] %v5549
    %5553 = vst [vmem:[#allocation5 + $0x98] sm:$0xf] %v5550
    %v5554 = vld [vmem:[#allocation4 + $0x38] sm:$0xff]
    %v5555 = vld [vmem:[#allocation4 + $0x78] sm:$0xff]
    %v5556 = vld [vmem:[#allocation4 + $0xb8] sm:$0xf]
    %v5557 = vadd.f32 %v5443, %v5554
    %v5558 = vadd.f32 %v5444, %v5555
    %v5559 = vadd.f32 %v5445, %v5556
    %v5560 = vmax.f32 %v5557, 0.0
    %v5561 = vmax.f32 %v5558, 0.0
    %v5562 = vmax.f32 %v5559, 0.0
    %v5563 = vld [vmem:[#allocation11 + $0x180] sm:$0xff]
    %v5564 = vld [vmem:[#allocation11 + $0x340] sm:$0xff]
    %v5565 = vld [vmem:[#allocation11 + $0x500] sm:$0xf]
    %v5566 = vmul.f32 %v5560, %v5563
    %v5567 = vmul.f32 %v5561, %v5564
    %v5568 = vmul.f32 %v5562, %v5565
    %5569 = vst [vmem:[#allocation5 + $0x30] sm:$0xff] %v5566
    %5570 = vst [vmem:[#allocation5 + $0x68] sm:$0xff] %v5567
    %5571 = vst [vmem:[#allocation5 + $0xa0] sm:$0xf] %v5568
    %v5572 = vld [vmem:[#allocation5] sm:$0xff]
    %v5573 = vld [vmem:[#allocation5 + $0x8] sm:$0xff]
    %v5574 = vld [vmem:[#allocation5 + $0x10] sm:$0xff]
    %v5575 = vld [vmem:[#allocation5 + $0x18] sm:$0xff]
    %v5576 = vld [vmem:[#allocation5 + $0x20] sm:$0xff]
    %v5577 = vld [vmem:[#allocation5 + $0x28] sm:$0xff]
    %v5578 = vld [vmem:[#allocation5 + $0x30] sm:$0xff]
    %v5579 = vld [vmem:[#allocation5 + $0x38] sm:$0xff]
    %v5580 = vld [vmem:[#allocation5 + $0x40] sm:$0xff]
    %v5581 = vld [vmem:[#allocation5 + $0x48] sm:$0xff]
    %v5582 = vld [vmem:[#allocation5 + $0x50] sm:$0xff]
    %v5583 = vld [vmem:[#allocation5 + $0x58] sm:$0xff]
    %v5584 = vld [vmem:[#allocation5 + $0x60] sm:$0xff]
    %v5585 = vld [vmem:[#allocation5 + $0x68] sm:$0xff]
    %v5586 = vld [vmem:[#allocation5 + $0x70] sm:$0xf]
    %v5587 = vld [vmem:[#allocation5 + $0x78] sm:$0xf]
    %v5588 = vld [vmem:[#allocation5 + $0x80] sm:$0xf]
    %v5589 = vld [vmem:[#allocation5 + $0x88] sm:$0xf]
    %v5590 = vld [vmem:[#allocation5 + $0x90] sm:$0xf]
    %v5591 = vld [vmem:[#allocation5 + $0x98] sm:$0xf]
    %v5592 = vld [vmem:[#allocation5 + $0xa0] sm:$0xf]
    %v5594 = vsel %vm520, %v5586, 0
    %v5597 = vsel %vm520, %v5587, 0
    %v5600 = vsel %vm520, %v5588, 0
    %v5603 = vsel %vm520, %v5589, 0
    %v5606 = vsel %vm520, %v5590, 0
    %v5609 = vsel %vm520, %v5591, 0
    %v5612 = vsel %vm520, %v5592, 0
    %5614 = vmatpush.msra.mxu0 0.0
    %5615 = vmatpush.msra.mxu0 0.0
    %5616 = vmatpush.msra.mxu0 0.0
    %5617 = vmatpush.msra.mxu0 0.0
    %5618 = vmatpush.msra.mxu0 0.0
    %5619 = vmatpush.msra.mxu0 0.0
    %5620 = vmatpush.msra.mxu0 0.0
    %5621 = vmatpush.msra.mxu0 0.0
    %5622 = vmatpush.msra.mxu0 0.0
    %5623 = vmatpush.msra.mxu0 0.0
    %5624 = vmatpush.msra.mxu0 0.0
    %5625 = vmatpush.msra.mxu0 0.0
    %5626 = vmatpush.msra.mxu0 0.0
    %5627 = vmatpush.msra.mxu0 %v5594
    %5628 = vmatpush.msra.mxu0 %v5579
    %5629 = vmatpush.msra.mxu0 %v5572
    %5630 = vmatmul.f32.gmra.mxu0 %v3092
    %v5631 = vpop.f32.mrf.mxu0
    %v5632 = vadd.f32 %v2928, %v5631
    %5633 = vmatmul.f32.gmra.mxu0 %v3095
    %v5634 = vpop.f32.mrf.mxu0
    %v5635 = vadd.f32 %v2933, %v5634
    %5636 = vmatmul.f32.gmra.mxu0 %v3098
    %v5637 = vpop.f32.mrf.mxu0
    %v5638 = vadd.f32 %v2938, %v5637
    %5639 = vdwg.mxu0
    %5640 = vmatpush.msra.mxu0 0.0
    %5641 = vmatpush.msra.mxu0 0.0
    %5642 = vmatpush.msra.mxu0 0.0
    %5643 = vmatpush.msra.mxu0 0.0
    %5644 = vmatpush.msra.mxu0 0.0
    %5645 = vmatpush.msra.mxu0 0.0
    %5646 = vmatpush.msra.mxu0 0.0
    %5647 = vmatpush.msra.mxu0 0.0
    %5648 = vmatpush.msra.mxu0 0.0
    %5649 = vmatpush.msra.mxu0 0.0
    %5650 = vmatpush.msra.mxu0 0.0
    %5651 = vmatpush.msra.mxu0 0.0
    %5652 = vmatpush.msra.mxu0 0.0
    %5653 = vmatpush.msra.mxu0 %v5597
    %5654 = vmatpush.msra.mxu0 %v5580
    %5655 = vmatpush.msra.mxu0 %v5573
    %5656 = vmatmul.f32.gmra.mxu0 %v3092
    %v5657 = vpop.f32.mrf.mxu0
    %v5658 = vadd.f32 %v2928, %v5657
    %5659 = vmatmul.f32.gmra.mxu0 %v3095
    %v5660 = vpop.f32.mrf.mxu0
    %v5661 = vadd.f32 %v2933, %v5660
    %5662 = vmatmul.f32.gmra.mxu0 %v3098
    %v5663 = vpop.f32.mrf.mxu0
    %v5664 = vadd.f32 %v2938, %v5663
    %5665 = vdwg.mxu0
    %5666 = vmatpush.msra.mxu0 0.0
    %5667 = vmatpush.msra.mxu0 0.0
    %5668 = vmatpush.msra.mxu0 0.0
    %5669 = vmatpush.msra.mxu0 0.0
    %5670 = vmatpush.msra.mxu0 0.0
    %5671 = vmatpush.msra.mxu0 0.0
    %5672 = vmatpush.msra.mxu0 0.0
    %5673 = vmatpush.msra.mxu0 0.0
    %5674 = vmatpush.msra.mxu0 0.0
    %5675 = vmatpush.msra.mxu0 0.0
    %5676 = vmatpush.msra.mxu0 0.0
    %5677 = vmatpush.msra.mxu0 0.0
    %5678 = vmatpush.msra.mxu0 0.0
    %5679 = vmatpush.msra.mxu0 %v5600
    %5680 = vmatpush.msra.mxu0 %v5581
    %5681 = vmatpush.msra.mxu0 %v5574
    %5682 = vmatmul.f32.gmra.mxu0 %v3092
    %v5683 = vpop.f32.mrf.mxu0
    %v5684 = vadd.f32 %v2928, %v5683
    %5685 = vmatmul.f32.gmra.mxu0 %v3095
    %v5686 = vpop.f32.mrf.mxu0
    %v5687 = vadd.f32 %v2933, %v5686
    %5688 = vmatmul.f32.gmra.mxu0 %v3098
    %v5689 = vpop.f32.mrf.mxu0
    %v5690 = vadd.f32 %v2938, %v5689
    %5691 = vdwg.mxu0
    %5692 = vmatpush.msra.mxu0 0.0
    %5693 = vmatpush.msra.mxu0 0.0
    %5694 = vmatpush.msra.mxu0 0.0
    %5695 = vmatpush.msra.mxu0 0.0
    %5696 = vmatpush.msra.mxu0 0.0
    %5697 = vmatpush.msra.mxu0 0.0
    %5698 = vmatpush.msra.mxu0 0.0
    %5699 = vmatpush.msra.mxu0 0.0
    %5700 = vmatpush.msra.mxu0 0.0
    %5701 = vmatpush.msra.mxu0 0.0
    %5702 = vmatpush.msra.mxu0 0.0
    %5703 = vmatpush.msra.mxu0 0.0
    %5704 = vmatpush.msra.mxu0 0.0
    %5705 = vmatpush.msra.mxu0 %v5603
    %5706 = vmatpush.msra.mxu0 %v5582
    %5707 = vmatpush.msra.mxu0 %v5575
    %5708 = vmatmul.f32.gmra.mxu0 %v3092
    %v5709 = vpop.f32.mrf.mxu0
    %v5710 = vadd.f32 %v2928, %v5709
    %5711 = vmatmul.f32.gmra.mxu0 %v3095
    %v5712 = vpop.f32.mrf.mxu0
    %v5713 = vadd.f32 %v2933, %v5712
    %5714 = vmatmul.f32.gmra.mxu0 %v3098
    %v5715 = vpop.f32.mrf.mxu0
    %v5716 = vadd.f32 %v2938, %v5715
    %5717 = vdwg.mxu0
    %5718 = vmatpush.msra.mxu0 0.0
    %5719 = vmatpush.msra.mxu0 0.0
    %5720 = vmatpush.msra.mxu0 0.0
    %5721 = vmatpush.msra.mxu0 0.0
    %5722 = vmatpush.msra.mxu0 0.0
    %5723 = vmatpush.msra.mxu0 0.0
    %5724 = vmatpush.msra.mxu0 0.0
    %5725 = vmatpush.msra.mxu0 0.0
    %5726 = vmatpush.msra.mxu0 0.0
    %5727 = vmatpush.msra.mxu0 0.0
    %5728 = vmatpush.msra.mxu0 0.0
    %5729 = vmatpush.msra.mxu0 0.0
    %5730 = vmatpush.msra.mxu0 0.0
    %5731 = vmatpush.msra.mxu0 %v5606
    %5732 = vmatpush.msra.mxu0 %v5583
    %5733 = vmatpush.msra.mxu0 %v5576
    %5734 = vmatmul.f32.gmra.mxu0 %v3092
    %v5735 = vpop.f32.mrf.mxu0
    %v5736 = vadd.f32 %v2928, %v5735
    %5737 = vmatmul.f32.gmra.mxu0 %v3095
    %v5738 = vpop.f32.mrf.mxu0
    %v5739 = vadd.f32 %v2933, %v5738
    %5740 = vmatmul.f32.gmra.mxu0 %v3098
    %v5741 = vpop.f32.mrf.mxu0
    %v5742 = vadd.f32 %v2938, %v5741
    %5743 = vdwg.mxu0
    %5744 = vmatpush.msra.mxu0 0.0
    %5745 = vmatpush.msra.mxu0 0.0
    %5746 = vmatpush.msra.mxu0 0.0
    %5747 = vmatpush.msra.mxu0 0.0
    %5748 = vmatpush.msra.mxu0 0.0
    %5749 = vmatpush.msra.mxu0 0.0
    %5750 = vmatpush.msra.mxu0 0.0
    %5751 = vmatpush.msra.mxu0 0.0
    %5752 = vmatpush.msra.mxu0 0.0
    %5753 = vmatpush.msra.mxu0 0.0
    %5754 = vmatpush.msra.mxu0 0.0
    %5755 = vmatpush.msra.mxu0 0.0
    %5756 = vmatpush.msra.mxu0 0.0
    %5757 = vmatpush.msra.mxu0 %v5609
    %5758 = vmatpush.msra.mxu0 %v5584
    %5759 = vmatpush.msra.mxu0 %v5577
    %5760 = vmatmul.f32.gmra.mxu0 %v3092
    %v5761 = vpop.f32.mrf.mxu0
    %v5762 = vadd.f32 %v2928, %v5761
    %5763 = vmatmul.f32.gmra.mxu0 %v3095
    %v5764 = vpop.f32.mrf.mxu0
    %v5765 = vadd.f32 %v2933, %v5764
    %5766 = vmatmul.f32.gmra.mxu0 %v3098
    %v5767 = vpop.f32.mrf.mxu0
    %v5768 = vadd.f32 %v2938, %v5767
    %5769 = vdwg.mxu0
    %5770 = vmatpush.msra.mxu0 0.0
    %5771 = vmatpush.msra.mxu0 0.0
    %5772 = vmatpush.msra.mxu0 0.0
    %5773 = vmatpush.msra.mxu0 0.0
    %5774 = vmatpush.msra.mxu0 0.0
    %5775 = vmatpush.msra.mxu0 0.0
    %5776 = vmatpush.msra.mxu0 0.0
    %5777 = vmatpush.msra.mxu0 0.0
    %5778 = vmatpush.msra.mxu0 0.0
    %5779 = vmatpush.msra.mxu0 0.0
    %5780 = vmatpush.msra.mxu0 0.0
    %5781 = vmatpush.msra.mxu0 0.0
    %5782 = vmatpush.msra.mxu0 0.0
    %5783 = vmatpush.msra.mxu0 %v5612
    %5784 = vmatpush.msra.mxu0 %v5585
    %5785 = vmatpush.msra.mxu0 %v5578
    %5786 = vmatmul.f32.gmra.mxu0 %v3092
    %v5787 = vpop.f32.mrf.mxu0
    %v5788 = vadd.f32 %v2928, %v5787
    %5789 = vmatmul.f32.gmra.mxu0 %v3095
    %v5790 = vpop.f32.mrf.mxu0
    %v5791 = vadd.f32 %v2933, %v5790
    %5792 = vmatmul.f32.gmra.mxu0 %v3098
    %v5793 = vpop.f32.mrf.mxu0
    %v5794 = vadd.f32 %v2938, %v5793
    %5795 = vdwg.mxu0
    %v5796 = vmax.f32 %v5632, 0.0
    %v5797 = vmax.f32 %v5658, 0.0
    %v5798 = vmax.f32 %v5684, 0.0
    %v5799 = vmax.f32 %v5710, 0.0
    %v5800 = vmax.f32 %v5736, 0.0
    %v5801 = vmax.f32 %v5762, 0.0
    %v5802 = vmax.f32 %v5788, 0.0
    %v5803 = vmax.f32 %v5635, 0.0
    %v5804 = vmax.f32 %v5661, 0.0
    %v5805 = vmax.f32 %v5687, 0.0
    %v5806 = vmax.f32 %v5713, 0.0
    %v5807 = vmax.f32 %v5739, 0.0
    %v5808 = vmax.f32 %v5765, 0.0
    %v5809 = vmax.f32 %v5791, 0.0
    %v5810 = vmax.f32 %v5638, 0.0
    %v5811 = vmax.f32 %v5664, 0.0
    %v5812 = vmax.f32 %v5690, 0.0
    %v5813 = vmax.f32 %v5716, 0.0
    %v5814 = vmax.f32 %v5742, 0.0
    %v5815 = vmax.f32 %v5768, 0.0
    %v5816 = vmax.f32 %v5794, 0.0
    %v5817 = vadd.f32 %v5796, %v5797
    %v5818 = vadd.f32 %v5803, %v5804
    %v5819 = vadd.f32 %v5810, %v5811
    %v5820 = vadd.f32 %v5817, %v5798
    %v5821 = vadd.f32 %v5818, %v5805
    %v5822 = vadd.f32 %v5819, %v5812
    %v5823 = vadd.f32 %v5820, %v5799
    %v5824 = vadd.f32 %v5821, %v5806
    %v5825 = vadd.f32 %v5822, %v5813
    %v5826 = vadd.f32 %v5823, %v5800
    %v5827 = vadd.f32 %v5824, %v5807
    %v5828 = vadd.f32 %v5825, %v5814
    %v5829 = vadd.f32 %v5826, %v5801
    %v5830 = vadd.f32 %v5827, %v5808
    %v5831 = vadd.f32 %v5828, %v5815
    %v5832 = vadd.f32 %v5829, %v5802
    %v5833 = vadd.f32 %v5830, %v5809
    %v5834 = vadd.f32 %v5831, %v5816
    %v5836 = vsel %vm520, %v5834, 0
    %5838 = vmatpush.msra.mxu0 0.0
    %5839 = vmatpush.msra.mxu0 0.0
    %5840 = vmatpush.msra.mxu0 0.0
    %5841 = vmatpush.msra.mxu0 0.0
    %5842 = vmatpush.msra.mxu0 0.0
    %5843 = vmatpush.msra.mxu0 0.0
    %5844 = vmatpush.msra.mxu0 0.0
    %5845 = vmatpush.msra.mxu0 0.0
    %5846 = vmatpush.msra.mxu0 0.0
    %5847 = vmatpush.msra.mxu0 0.0
    %5848 = vmatpush.msra.mxu0 0.0
    %5849 = vmatpush.msra.mxu0 0.0
    %5850 = vmatpush.msra.mxu0 0.0
    %5851 = vmatpush.msra.mxu0 %v5836
    %5852 = vmatpush.msra.mxu0 %v5833
    %5853 = vmatpush.msra.mxu0 %v5832
    %5854 = vmatmul.f32.gmra.mxu0 %v3343
    %v5855 = vpop.f32.mrf.mxu0
    %v5856 = vadd.f32 0.0, %v5855
    %5857 = vdwg.mxu0
    %v5858 = vld [vmem:[#allocation3 + $0x38] sm:$0xff]
    %v5859 = vld [vmem:[#allocation3 + $0x78] sm:$0xff]
    %v5860 = vld [vmem:[#allocation3 + $0xb8] sm:$0xf]
    %v5861 = vld [vmem:[#allocation4] sm:$0xff]
    %v5862 = vld [vmem:[#allocation4 + $0x40] sm:$0xff]
    %v5863 = vld [vmem:[#allocation4 + $0x80] sm:$0xf]
    %v5864 = vadd.f32 %v5858, %v5861
    %v5865 = vadd.f32 %v5859, %v5862
    %v5866 = vadd.f32 %v5860, %v5863
    %v5867 = vmax.f32 %v5864, 0.0
    %v5868 = vmax.f32 %v5865, 0.0
    %v5869 = vmax.f32 %v5866, 0.0
    %v5870 = vld [vmem:[#allocation11 + $0x188] sm:$0xff]
    %v5871 = vld [vmem:[#allocation11 + $0x348] sm:$0xff]
    %v5872 = vld [vmem:[#allocation11 + $0x508] sm:$0xf]
    %v5873 = vmul.f32 %v5867, %v5870
    %v5874 = vmul.f32 %v5868, %v5871
    %v5875 = vmul.f32 %v5869, %v5872
    %5876 = vst [vmem:[#allocation5] sm:$0xff] %v5873
    %5877 = vst [vmem:[#allocation5 + $0x38] sm:$0xff] %v5874
    %5878 = vst [vmem:[#allocation5 + $0x70] sm:$0xf] %v5875
    %v5879 = vld [vmem:[#allocation4 + $0x8] sm:$0xff]
    %v5880 = vld [vmem:[#allocation4 + $0x48] sm:$0xff]
    %v5881 = vld [vmem:[#allocation4 + $0x88] sm:$0xf]
    %v5882 = vadd.f32 %v5858, %v5879
    %v5883 = vadd.f32 %v5859, %v5880
    %v5884 = vadd.f32 %v5860, %v5881
    %v5885 = vmax.f32 %v5882, 0.0
    %v5886 = vmax.f32 %v5883, 0.0
    %v5887 = vmax.f32 %v5884, 0.0
    %v5888 = vld [vmem:[#allocation11 + $0x190] sm:$0xff]
    %v5889 = vld [vmem:[#allocation11 + $0x350] sm:$0xff]
    %v5890 = vld [vmem:[#allocation11 + $0x510] sm:$0xf]
    %v5891 = vmul.f32 %v5885, %v5888
    %v5892 = vmul.f32 %v5886, %v5889
    %v5893 = vmul.f32 %v5887, %v5890
    %5894 = vst [vmem:[#allocation5 + $0x8] sm:$0xff] %v5891
    %5895 = vst [vmem:[#allocation5 + $0x40] sm:$0xff] %v5892
    %5896 = vst [vmem:[#allocation5 + $0x78] sm:$0xf] %v5893
    %v5897 = vld [vmem:[#allocation4 + $0x10] sm:$0xff]
    %v5898 = vld [vmem:[#allocation4 + $0x50] sm:$0xff]
    %v5899 = vld [vmem:[#allocation4 + $0x90] sm:$0xf]
    %v5900 = vadd.f32 %v5858, %v5897
    %v5901 = vadd.f32 %v5859, %v5898
    %v5902 = vadd.f32 %v5860, %v5899
    %v5903 = vmax.f32 %v5900, 0.0
    %v5904 = vmax.f32 %v5901, 0.0
    %v5905 = vmax.f32 %v5902, 0.0
    %v5906 = vld [vmem:[#allocation11 + $0x198] sm:$0xff]
    %v5907 = vld [vmem:[#allocation11 + $0x358] sm:$0xff]
    %v5908 = vld [vmem:[#allocation11 + $0x518] sm:$0xf]
    %v5909 = vmul.f32 %v5903, %v5906
    %v5910 = vmul.f32 %v5904, %v5907
    %v5911 = vmul.f32 %v5905, %v5908
    %5912 = vst [vmem:[#allocation5 + $0x10] sm:$0xff] %v5909
    %5913 = vst [vmem:[#allocation5 + $0x48] sm:$0xff] %v5910
    %5914 = vst [vmem:[#allocation5 + $0x80] sm:$0xf] %v5911
    %v5915 = vld [vmem:[#allocation4 + $0x18] sm:$0xff]
    %v5916 = vld [vmem:[#allocation4 + $0x58] sm:$0xff]
    %v5917 = vld [vmem:[#allocation4 + $0x98] sm:$0xf]
    %v5918 = vadd.f32 %v5858, %v5915
    %v5919 = vadd.f32 %v5859, %v5916
    %v5920 = vadd.f32 %v5860, %v5917
    %v5921 = vmax.f32 %v5918, 0.0
    %v5922 = vmax.f32 %v5919, 0.0
    %v5923 = vmax.f32 %v5920, 0.0
    %v5924 = vld [vmem:[#allocation11 + $0x1a0] sm:$0xff]
    %v5925 = vld [vmem:[#allocation11 + $0x360] sm:$0xff]
    %v5926 = vld [vmem:[#allocation11 + $0x520] sm:$0xf]
    %v5927 = vmul.f32 %v5921, %v5924
    %v5928 = vmul.f32 %v5922, %v5925
    %v5929 = vmul.f32 %v5923, %v5926
    %5930 = vst [vmem:[#allocation5 + $0x18] sm:$0xff] %v5927
    %5931 = vst [vmem:[#allocation5 + $0x50] sm:$0xff] %v5928
    %5932 = vst [vmem:[#allocation5 + $0x88] sm:$0xf] %v5929
    %v5933 = vld [vmem:[#allocation4 + $0x20] sm:$0xff]
    %v5934 = vld [vmem:[#allocation4 + $0x60] sm:$0xff]
    %v5935 = vld [vmem:[#allocation4 + $0xa0] sm:$0xf]
    %v5936 = vadd.f32 %v5858, %v5933
    %v5937 = vadd.f32 %v5859, %v5934
    %v5938 = vadd.f32 %v5860, %v5935
    %v5939 = vmax.f32 %v5936, 0.0
    %v5940 = vmax.f32 %v5937, 0.0
    %v5941 = vmax.f32 %v5938, 0.0
    %v5942 = vld [vmem:[#allocation11 + $0x1a8] sm:$0xff]
    %v5943 = vld [vmem:[#allocation11 + $0x368] sm:$0xff]
    %v5944 = vld [vmem:[#allocation11 + $0x528] sm:$0xf]
    %v5945 = vmul.f32 %v5939, %v5942
    %v5946 = vmul.f32 %v5940, %v5943
    %v5947 = vmul.f32 %v5941, %v5944
    %5948 = vst [vmem:[#allocation5 + $0x20] sm:$0xff] %v5945
    %5949 = vst [vmem:[#allocation5 + $0x58] sm:$0xff] %v5946
    %5950 = vst [vmem:[#allocation5 + $0x90] sm:$0xf] %v5947
    %v5951 = vld [vmem:[#allocation4 + $0x28] sm:$0xff]
    %v5952 = vld [vmem:[#allocation4 + $0x68] sm:$0xff]
    %v5953 = vld [vmem:[#allocation4 + $0xa8] sm:$0xf]
    %v5954 = vadd.f32 %v5858, %v5951
    %v5955 = vadd.f32 %v5859, %v5952
    %v5956 = vadd.f32 %v5860, %v5953
    %v5957 = vmax.f32 %v5954, 0.0
    %v5958 = vmax.f32 %v5955, 0.0
    %v5959 = vmax.f32 %v5956, 0.0
    %v5960 = vld [vmem:[#allocation11 + $0x1b0] sm:$0xff]
    %v5961 = vld [vmem:[#allocation11 + $0x370] sm:$0xff]
    %v5962 = vld [vmem:[#allocation11 + $0x530] sm:$0xf]
    %v5963 = vmul.f32 %v5957, %v5960
    %v5964 = vmul.f32 %v5958, %v5961
    %v5965 = vmul.f32 %v5959, %v5962
    %5966 = vst [vmem:[#allocation5 + $0x28] sm:$0xff] %v5963
    %5967 = vst [vmem:[#allocation5 + $0x60] sm:$0xff] %v5964
    %5968 = vst [vmem:[#allocation5 + $0x98] sm:$0xf] %v5965
    %v5969 = vld [vmem:[#allocation4 + $0x30] sm:$0xff]
    %v5970 = vld [vmem:[#allocation4 + $0x70] sm:$0xff]
    %v5971 = vld [vmem:[#allocation4 + $0xb0] sm:$0xf]
    %v5972 = vadd.f32 %v5858, %v5969
    %v5973 = vadd.f32 %v5859, %v5970
    %v5974 = vadd.f32 %v5860, %v5971
    %v5975 = vmax.f32 %v5972, 0.0
    %v5976 = vmax.f32 %v5973, 0.0
    %v5977 = vmax.f32 %v5974, 0.0
    %v5978 = vld [vmem:[#allocation11 + $0x1b8] sm:$0xff]
    %v5979 = vld [vmem:[#allocation11 + $0x378] sm:$0xff]
    %v5980 = vld [vmem:[#allocation11 + $0x538] sm:$0xf]
    %v5981 = vmul.f32 %v5975, %v5978
    %v5982 = vmul.f32 %v5976, %v5979
    %v5983 = vmul.f32 %v5977, %v5980
    %5984 = vst [vmem:[#allocation5 + $0x30] sm:$0xff] %v5981
    %5985 = vst [vmem:[#allocation5 + $0x68] sm:$0xff] %v5982
    %5986 = vst [vmem:[#allocation5 + $0xa0] sm:$0xf] %v5983
    %v5987 = vld [vmem:[#allocation5] sm:$0xff]
    %v5988 = vld [vmem:[#allocation5 + $0x8] sm:$0xff]
    %v5989 = vld [vmem:[#allocation5 + $0x10] sm:$0xff]
    %v5990 = vld [vmem:[#allocation5 + $0x18] sm:$0xff]
    %v5991 = vld [vmem:[#allocation5 + $0x20] sm:$0xff]
    %v5992 = vld [vmem:[#allocation5 + $0x28] sm:$0xff]
    %v5993 = vld [vmem:[#allocation5 + $0x30] sm:$0xff]
    %v5994 = vld [vmem:[#allocation5 + $0x38] sm:$0xff]
    %v5995 = vld [vmem:[#allocation5 + $0x40] sm:$0xff]
    %v5996 = vld [vmem:[#allocation5 + $0x48] sm:$0xff]
    %v5997 = vld [vmem:[#allocation5 + $0x50] sm:$0xff]
    %v5998 = vld [vmem:[#allocation5 + $0x58] sm:$0xff]
    %v5999 = vld [vmem:[#allocation5 + $0x60] sm:$0xff]
    %v6000 = vld [vmem:[#allocation5 + $0x68] sm:$0xff]
    %v6001 = vld [vmem:[#allocation5 + $0x70] sm:$0xf]
    %v6002 = vld [vmem:[#allocation5 + $0x78] sm:$0xf]
    %v6003 = vld [vmem:[#allocation5 + $0x80] sm:$0xf]
    %v6004 = vld [vmem:[#allocation5 + $0x88] sm:$0xf]
    %v6005 = vld [vmem:[#allocation5 + $0x90] sm:$0xf]
    %v6006 = vld [vmem:[#allocation5 + $0x98] sm:$0xf]
    %v6007 = vld [vmem:[#allocation5 + $0xa0] sm:$0xf]
    %v6009 = vsel %vm520, %v6001, 0
    %v6012 = vsel %vm520, %v6002, 0
    %v6015 = vsel %vm520, %v6003, 0
    %v6018 = vsel %vm520, %v6004, 0
    %v6021 = vsel %vm520, %v6005, 0
    %v6024 = vsel %vm520, %v6006, 0
    %v6027 = vsel %vm520, %v6007, 0
    %6029 = vmatpush.msra.mxu0 0.0
    %6030 = vmatpush.msra.mxu0 0.0
    %6031 = vmatpush.msra.mxu0 0.0
    %6032 = vmatpush.msra.mxu0 0.0
    %6033 = vmatpush.msra.mxu0 0.0
    %6034 = vmatpush.msra.mxu0 0.0
    %6035 = vmatpush.msra.mxu0 0.0
    %6036 = vmatpush.msra.mxu0 0.0
    %6037 = vmatpush.msra.mxu0 0.0
    %6038 = vmatpush.msra.mxu0 0.0
    %6039 = vmatpush.msra.mxu0 0.0
    %6040 = vmatpush.msra.mxu0 0.0
    %6041 = vmatpush.msra.mxu0 0.0
    %6042 = vmatpush.msra.mxu0 %v6009
    %6043 = vmatpush.msra.mxu0 %v5994
    %6044 = vmatpush.msra.mxu0 %v5987
    %6045 = vmatmul.f32.gmra.mxu0 %v3092
    %v6046 = vpop.f32.mrf.mxu0
    %v6047 = vadd.f32 %v2928, %v6046
    %6048 = vmatmul.f32.gmra.mxu0 %v3095
    %v6049 = vpop.f32.mrf.mxu0
    %v6050 = vadd.f32 %v2933, %v6049
    %6051 = vmatmul.f32.gmra.mxu0 %v3098
    %v6052 = vpop.f32.mrf.mxu0
    %v6053 = vadd.f32 %v2938, %v6052
    %6054 = vdwg.mxu0
    %6055 = vmatpush.msra.mxu0 0.0
    %6056 = vmatpush.msra.mxu0 0.0
    %6057 = vmatpush.msra.mxu0 0.0
    %6058 = vmatpush.msra.mxu0 0.0
    %6059 = vmatpush.msra.mxu0 0.0
    %6060 = vmatpush.msra.mxu0 0.0
    %6061 = vmatpush.msra.mxu0 0.0
    %6062 = vmatpush.msra.mxu0 0.0
    %6063 = vmatpush.msra.mxu0 0.0
    %6064 = vmatpush.msra.mxu0 0.0
    %6065 = vmatpush.msra.mxu0 0.0
    %6066 = vmatpush.msra.mxu0 0.0
    %6067 = vmatpush.msra.mxu0 0.0
    %6068 = vmatpush.msra.mxu0 %v6012
    %6069 = vmatpush.msra.mxu0 %v5995
    %6070 = vmatpush.msra.mxu0 %v5988
    %6071 = vmatmul.f32.gmra.mxu0 %v3092
    %v6072 = vpop.f32.mrf.mxu0
    %v6073 = vadd.f32 %v2928, %v6072
    %6074 = vmatmul.f32.gmra.mxu0 %v3095
    %v6075 = vpop.f32.mrf.mxu0
    %v6076 = vadd.f32 %v2933, %v6075
    %6077 = vmatmul.f32.gmra.mxu0 %v3098
    %v6078 = vpop.f32.mrf.mxu0
    %v6079 = vadd.f32 %v2938, %v6078
    %6080 = vdwg.mxu0
    %6081 = vmatpush.msra.mxu0 0.0
    %6082 = vmatpush.msra.mxu0 0.0
    %6083 = vmatpush.msra.mxu0 0.0
    %6084 = vmatpush.msra.mxu0 0.0
    %6085 = vmatpush.msra.mxu0 0.0
    %6086 = vmatpush.msra.mxu0 0.0
    %6087 = vmatpush.msra.mxu0 0.0
    %6088 = vmatpush.msra.mxu0 0.0
    %6089 = vmatpush.msra.mxu0 0.0
    %6090 = vmatpush.msra.mxu0 0.0
    %6091 = vmatpush.msra.mxu0 0.0
    %6092 = vmatpush.msra.mxu0 0.0
    %6093 = vmatpush.msra.mxu0 0.0
    %6094 = vmatpush.msra.mxu0 %v6015
    %6095 = vmatpush.msra.mxu0 %v5996
    %6096 = vmatpush.msra.mxu0 %v5989
    %6097 = vmatmul.f32.gmra.mxu0 %v3092
    %v6098 = vpop.f32.mrf.mxu0
    %v6099 = vadd.f32 %v2928, %v6098
    %6100 = vmatmul.f32.gmra.mxu0 %v3095
    %v6101 = vpop.f32.mrf.mxu0
    %v6102 = vadd.f32 %v2933, %v6101
    %6103 = vmatmul.f32.gmra.mxu0 %v3098
    %v6104 = vpop.f32.mrf.mxu0
    %v6105 = vadd.f32 %v2938, %v6104
    %6106 = vdwg.mxu0
    %6107 = vmatpush.msra.mxu0 0.0
    %6108 = vmatpush.msra.mxu0 0.0
    %6109 = vmatpush.msra.mxu0 0.0
    %6110 = vmatpush.msra.mxu0 0.0
    %6111 = vmatpush.msra.mxu0 0.0
    %6112 = vmatpush.msra.mxu0 0.0
    %6113 = vmatpush.msra.mxu0 0.0
    %6114 = vmatpush.msra.mxu0 0.0
    %6115 = vmatpush.msra.mxu0 0.0
    %6116 = vmatpush.msra.mxu0 0.0
    %6117 = vmatpush.msra.mxu0 0.0
    %6118 = vmatpush.msra.mxu0 0.0
    %6119 = vmatpush.msra.mxu0 0.0
    %6120 = vmatpush.msra.mxu0 %v6018
    %6121 = vmatpush.msra.mxu0 %v5997
    %6122 = vmatpush.msra.mxu0 %v5990
    %6123 = vmatmul.f32.gmra.mxu0 %v3092
    %v6124 = vpop.f32.mrf.mxu0
    %v6125 = vadd.f32 %v2928, %v6124
    %6126 = vmatmul.f32.gmra.mxu0 %v3095
    %v6127 = vpop.f32.mrf.mxu0
    %v6128 = vadd.f32 %v2933, %v6127
    %6129 = vmatmul.f32.gmra.mxu0 %v3098
    %v6130 = vpop.f32.mrf.mxu0
    %v6131 = vadd.f32 %v2938, %v6130
    %6132 = vdwg.mxu0
    %6133 = vmatpush.msra.mxu0 0.0
    %6134 = vmatpush.msra.mxu0 0.0
    %6135 = vmatpush.msra.mxu0 0.0
    %6136 = vmatpush.msra.mxu0 0.0
    %6137 = vmatpush.msra.mxu0 0.0
    %6138 = vmatpush.msra.mxu0 0.0
    %6139 = vmatpush.msra.mxu0 0.0
    %6140 = vmatpush.msra.mxu0 0.0
    %6141 = vmatpush.msra.mxu0 0.0
    %6142 = vmatpush.msra.mxu0 0.0
    %6143 = vmatpush.msra.mxu0 0.0
    %6144 = vmatpush.msra.mxu0 0.0
    %6145 = vmatpush.msra.mxu0 0.0
    %6146 = vmatpush.msra.mxu0 %v6021
    %6147 = vmatpush.msra.mxu0 %v5998
    %6148 = vmatpush.msra.mxu0 %v5991
    %6149 = vmatmul.f32.gmra.mxu0 %v3092
    %v6150 = vpop.f32.mrf.mxu0
    %v6151 = vadd.f32 %v2928, %v6150
    %6152 = vmatmul.f32.gmra.mxu0 %v3095
    %v6153 = vpop.f32.mrf.mxu0
    %v6154 = vadd.f32 %v2933, %v6153
    %6155 = vmatmul.f32.gmra.mxu0 %v3098
    %v6156 = vpop.f32.mrf.mxu0
    %v6157 = vadd.f32 %v2938, %v6156
    %6158 = vdwg.mxu0
    %6159 = vmatpush.msra.mxu0 0.0
    %6160 = vmatpush.msra.mxu0 0.0
    %6161 = vmatpush.msra.mxu0 0.0
    %6162 = vmatpush.msra.mxu0 0.0
    %6163 = vmatpush.msra.mxu0 0.0
    %6164 = vmatpush.msra.mxu0 0.0
    %6165 = vmatpush.msra.mxu0 0.0
    %6166 = vmatpush.msra.mxu0 0.0
    %6167 = vmatpush.msra.mxu0 0.0
    %6168 = vmatpush.msra.mxu0 0.0
    %6169 = vmatpush.msra.mxu0 0.0
    %6170 = vmatpush.msra.mxu0 0.0
    %6171 = vmatpush.msra.mxu0 0.0
    %6172 = vmatpush.msra.mxu0 %v6024
    %6173 = vmatpush.msra.mxu0 %v5999
    %6174 = vmatpush.msra.mxu0 %v5992
    %6175 = vmatmul.f32.gmra.mxu0 %v3092
    %v6176 = vpop.f32.mrf.mxu0
    %v6177 = vadd.f32 %v2928, %v6176
    %6178 = vmatmul.f32.gmra.mxu0 %v3095
    %v6179 = vpop.f32.mrf.mxu0
    %v6180 = vadd.f32 %v2933, %v6179
    %6181 = vmatmul.f32.gmra.mxu0 %v3098
    %v6182 = vpop.f32.mrf.mxu0
    %v6183 = vadd.f32 %v2938, %v6182
    %6184 = vdwg.mxu0
    %6185 = vmatpush.msra.mxu0 0.0
    %6186 = vmatpush.msra.mxu0 0.0
    %6187 = vmatpush.msra.mxu0 0.0
    %6188 = vmatpush.msra.mxu0 0.0
    %6189 = vmatpush.msra.mxu0 0.0
    %6190 = vmatpush.msra.mxu0 0.0
    %6191 = vmatpush.msra.mxu0 0.0
    %6192 = vmatpush.msra.mxu0 0.0
    %6193 = vmatpush.msra.mxu0 0.0
    %6194 = vmatpush.msra.mxu0 0.0
    %6195 = vmatpush.msra.mxu0 0.0
    %6196 = vmatpush.msra.mxu0 0.0
    %6197 = vmatpush.msra.mxu0 0.0
    %6198 = vmatpush.msra.mxu0 %v6027
    %6199 = vmatpush.msra.mxu0 %v6000
    %6200 = vmatpush.msra.mxu0 %v5993
    %6201 = vmatmul.f32.gmra.mxu0 %v3092
    %v6202 = vpop.f32.mrf.mxu0
    %v6203 = vadd.f32 %v2928, %v6202
    %6204 = vmatmul.f32.gmra.mxu0 %v3095
    %v6205 = vpop.f32.mrf.mxu0
    %v6206 = vadd.f32 %v2933, %v6205
    %6207 = vmatmul.f32.gmra.mxu0 %v3098
    %v6208 = vpop.f32.mrf.mxu0
    %v6209 = vadd.f32 %v2938, %v6208
    %6210 = vdwg.mxu0
    %v6211 = vmax.f32 %v6047, 0.0
    %v6212 = vmax.f32 %v6073, 0.0
    %v6213 = vmax.f32 %v6099, 0.0
    %v6214 = vmax.f32 %v6125, 0.0
    %v6215 = vmax.f32 %v6151, 0.0
    %v6216 = vmax.f32 %v6177, 0.0
    %v6217 = vmax.f32 %v6203, 0.0
    %v6218 = vmax.f32 %v6050, 0.0
    %v6219 = vmax.f32 %v6076, 0.0
    %v6220 = vmax.f32 %v6102, 0.0
    %v6221 = vmax.f32 %v6128, 0.0
    %v6222 = vmax.f32 %v6154, 0.0
    %v6223 = vmax.f32 %v6180, 0.0
    %v6224 = vmax.f32 %v6206, 0.0
    %v6225 = vmax.f32 %v6053, 0.0
    %v6226 = vmax.f32 %v6079, 0.0
    %v6227 = vmax.f32 %v6105, 0.0
    %v6228 = vmax.f32 %v6131, 0.0
    %v6229 = vmax.f32 %v6157, 0.0
    %v6230 = vmax.f32 %v6183, 0.0
    %v6231 = vmax.f32 %v6209, 0.0
    %v6232 = vadd.f32 %v6211, %v6212
    %v6233 = vadd.f32 %v6218, %v6219
    %v6234 = vadd.f32 %v6225, %v6226
    %v6235 = vadd.f32 %v6232, %v6213
    %v6236 = vadd.f32 %v6233, %v6220
    %v6237 = vadd.f32 %v6234, %v6227
    %v6238 = vadd.f32 %v6235, %v6214
    %v6239 = vadd.f32 %v6236, %v6221
    %v6240 = vadd.f32 %v6237, %v6228
    %v6241 = vadd.f32 %v6238, %v6215
    %v6242 = vadd.f32 %v6239, %v6222
    %v6243 = vadd.f32 %v6240, %v6229
    %v6244 = vadd.f32 %v6241, %v6216
    %v6245 = vadd.f32 %v6242, %v6223
    %v6246 = vadd.f32 %v6243, %v6230
    %v6247 = vadd.f32 %v6244, %v6217
    %v6248 = vadd.f32 %v6245, %v6224
    %v6249 = vadd.f32 %v6246, %v6231
    %v6251 = vsel %vm520, %v6249, 0
    %6253 = vmatpush.msra.mxu0 0.0
    %6254 = vmatpush.msra.mxu0 0.0
    %6255 = vmatpush.msra.mxu0 0.0
    %6256 = vmatpush.msra.mxu0 0.0
    %6257 = vmatpush.msra.mxu0 0.0
    %6258 = vmatpush.msra.mxu0 0.0
    %6259 = vmatpush.msra.mxu0 0.0
    %6260 = vmatpush.msra.mxu0 0.0
    %6261 = vmatpush.msra.mxu0 0.0
    %6262 = vmatpush.msra.mxu0 0.0
    %6263 = vmatpush.msra.mxu0 0.0
    %6264 = vmatpush.msra.mxu0 0.0
    %6265 = vmatpush.msra.mxu0 0.0
    %6266 = vmatpush.msra.mxu0 %v6251
    %6267 = vmatpush.msra.mxu0 %v6248
    %6268 = vmatpush.msra.mxu0 %v6247
    %6269 = vmatmul.f32.gmra.mxu0 %v3343
    %v6270 = vpop.f32.mrf.mxu0
    %v6271 = vadd.f32 0.0, %v6270
    %6272 = vdwg.mxu0
    %v6273 = vld [vmem:[#allocation13 + $0xd8] sm:$0x1]
    %6275 = vset.pattern.permute.xlu0 0
    %6276 = vperm.xlu0 %6275, %v6273
    %v6277 = vpop.permute.xlu0 %6276
    %v6279 = vadd.f32 %v3366, %v6277
    %v6280 = vadd.f32 %v3781, %v6277
    %v6281 = vadd.f32 %v4196, %v6277
    %v6282 = vadd.f32 %v4611, %v6277
    %v6283 = vadd.f32 %v5026, %v6277
    %v6284 = vadd.f32 %v5441, %v6277
    %v6285 = vadd.f32 %v5856, %v6277
    %v6286 = vadd.f32 %v6271, %v6277
    %v6295 = vrot.slane %v6280, 7
    %v6296 = vrot.slane %v6281, 6
    %v6297 = vrot.slane %v6282, 5
    %v6298 = vrot.slane %v6283, 4
    %v6299 = vrot.slane %v6284, 3
    %v6300 = vrot.slane %v6285, 2
    %v6301 = vrot.slane %v6286, 1
    %vm6302 = vcmask 1040384
    %v6303 = vsel %vm6302, %v6279, %v6295
    %vm6304 = vcmask 1042434
    %v6305 = vsel %vm6304, %v6296, %v6297
    %vm6306 = vcmask 1041408
    %v6307 = vsel %vm6306, %v6303, %v6305
    %vm6308 = vcmask 1044484
    %v6309 = vsel %vm6308, %v6298, %v6299
    %vm6310 = vcmask 1046534
    %v6311 = vsel %vm6310, %v6300, %v6301
    %vm6312 = vcmask 1045508
    %v6313 = vsel %vm6312, %v6309, %v6311
    %v6314 = vsel %vm520, %v6307, %v6313
    %6316 = vst [vmem:[#allocation14] sm:$0xff] %v6314
    // Predicated region
    $region410: #{tpu_custom_call.1} parent=1 // pred_check
      _
    $region411: #{tpu_custom_call.1} parent=1 // pred_check_branch
      %6318 = sbr.rel (0) target = $region413
    $region412: #{tpu_custom_call.1} parent=1 // pred_region
      %6320 = vsyncadd [#allocation10], 0
      %s6322 = sshll.u32 [#allocation14], 4
      %s6323 = int_to_ptr.vmem [resolvable:$true] %s6322
      %s6324 = sshll.u32 %s4, 4
      %s6325 = int_to_ptr.hbm [resolvable:$true] %s6324
      %6327 = dma.vmem_to_hbm [thread:$0]  %s6323, 128, %s6325, [#allocation10]
    $region413: #{tpu_custom_call.1} parent=1 // pred_fallthru
      _
    // Predicated region
    $region414: #{tpu_custom_call.1} parent=1 // pred_check
      _
    $region415: #{tpu_custom_call.1} parent=1 // pred_check_branch
      %6329 = sbr.rel (0) target = $region417
    $region416: #{tpu_custom_call.1} parent=1 // pred_region
      %6331 = dma.done [#allocation10], 128
    $region417: #{tpu_custom_call.1} parent=1 // pred_fallthru
      _
    %6332 = vsyncpa [#allocation9], 1
    %6333 = vsyncpa [#allocation12], 1
    %6334 = vsyncpa [#allocation10], 1

</llo_original>
